<compile_context>
chip_gen: v6e
topology: v6e:2x2x1
jax: 0.10.0
libtpu: 0.0.40
codegen_flags: <defaults>
</compile_context>

<pallas_src>
import functools

import jax
import jax.numpy as jnp
from jax import lax
from jax.experimental import pallas as pl
from jax.experimental.pallas import tpu as pltpu


def _round_up(n, m):
    return ((n + m - 1) // m) * m


def _silu(x):
    # sigmoid via tanh -> transcendental goes to the EUP slot, VALU stays free.
    return x * (0.5 * (jnp.tanh(0.5 * x) + 1.0))


def _pool5(pad_ref):
    """5x5 stride-1 SAME max-pool from a (H+4, Wp+4, C) padded bf16 VMEM ref.

    W-direction taps: 5 shifted ref reads (masked loads, no value relayout).
    H-direction taps: cheap outer-dim value slices. Balanced max trees.
    Returns a (H, Wp, C) bf16 value."""
    Hp4, Wp4, _ = pad_ref.shape
    H, Wp = Hp4 - 4, Wp4 - 4
    w0 = pad_ref[:, pl.ds(0, Wp), :]
    w1 = pad_ref[:, pl.ds(1, Wp), :]
    w2 = pad_ref[:, pl.ds(2, Wp), :]
    w3 = pad_ref[:, pl.ds(3, Wp), :]
    w4 = pad_ref[:, pl.ds(4, Wp), :]
    tw = jnp.maximum(jnp.maximum(jnp.maximum(w0, w1), jnp.maximum(w2, w3)), w4)
    h0 = tw[0:H]
    h1 = tw[1:H + 1]
    h2 = tw[2:H + 2]
    h3 = tw[3:H + 3]
    h4 = tw[4:H + 4]
    return jnp.maximum(jnp.maximum(jnp.maximum(h0, h1), jnp.maximum(h2, h3)), h4)


def sppf_kernel(x_ref, w1_ref, b1_ref, w2_ref, b2_ref, o_ref, pad_ref, cat_ref,
                *, real_w):
    # x_ref: (H, Wp, C1) bf16, batch dim squeezed by BlockSpec. Columns
    # [real_w:Wp] are wrapper zero-padding (only there to keep reshapes
    # sublane-aligned); they never enter the pool cascade and their output
    # columns are sliced off in the wrapper.
    H, Wp, C1 = x_ref.shape
    Cp = w1_ref.shape[1]            # padded hidden channels (multiple of 128)
    C2p = b2_ref.shape[1]           # padded output channels (multiple of 128)
    W = real_w

    neg = jnp.finfo(jnp.bfloat16).min

    # ---- pool-scratch init: border strips + right alignment-pad strip only.
    # The interior [2:2+H, 2:2+W) is always overwritten below, so no
    # full-image refill. Done every grid step (scratch is per-core). ----
    pad_ref[pl.ds(0, 2), :, :] = jnp.full((2, Wp + 4, Cp), neg, jnp.bfloat16)
    pad_ref[pl.ds(H + 2, 2), :, :] = jnp.full((2, Wp + 4, Cp), neg, jnp.bfloat16)
    pad_ref[pl.ds(2, H), pl.ds(0, 2), :] = jnp.full((H, 2, Cp), neg, jnp.bfloat16)
    pad_ref[pl.ds(2, H), pl.ds(2 + W, Wp + 2 - W), :] = jnp.full(
        (H, Wp + 2 - W, Cp), neg, jnp.bfloat16)

    # ---- cv1: 1x1 conv (bf16 MXU, f32 acc) + folded BN + SiLU ----
    xf = x_ref[...].reshape(H * Wp, C1)                              # bf16 view
    h = jnp.dot(xf, w1_ref[...], preferred_element_type=jnp.float32)
    x0 = _silu(h + b1_ref[...]).astype(jnp.bfloat16)                 # (H*Wp, Cp)

    cat_ref[:, pl.ds(0, Cp)] = x0                                    # slab 0
    x0_img = x0.reshape(H, Wp, Cp)
    pad_ref[pl.ds(2, H), pl.ds(2, W), :] = x0_img[:, 0:W, :]

    # ---- max-pool cascade; slabs 1..3 staged into the bf16 concat scratch ----
    for i in range(1, 4):
        y = _pool5(pad_ref)                                          # (H, Wp, Cp)
        cat_ref[:, pl.ds(i * Cp, Cp)] = y.reshape(H * Wp, Cp)
        if i < 3:                                                    # feed cascade
            pad_ref[pl.ds(2, H), pl.ds(2, W), :] = y[:, 0:W, :]

    # ---- cv2: one deep-K (4*Cp) matmul over the staged concat (keeps the
    # 256-deep v6e/v7x MXU busy; no per-slab partial dots / f32 adds) ----
    acc = jnp.dot(cat_ref[...], w2_ref[...], preferred_element_type=jnp.float32)
    o = _silu(acc + b2_ref[...])
    o_ref[...] = o.reshape(H, Wp, C2p).astype(o_ref.dtype)


def sppf_pallas(x_nchw, w1, b1, w2, b2):
    """x_nchw: (N, C1, H, W) f32. w1: (C1, c_), b1: (1, c_),
    w2: (4*c_, C2), b2: (1, C2) -- BN already folded into w/b."""
    N, C1, H, W = x_nchw.shape
    c_ = w1.shape[1]
    C2 = w2.shape[1]
    assert w2.shape[0] == 4 * c_

    Cp = _round_up(c_, 128)
    C2p = _round_up(C2, 128)
    Wp = _round_up(W, 8)      # keep (H,W,C)<->(H*W,C) reshapes sublane-aligned

    # Lane-dense zero padding of weights/biases (semantics preserved: padded
    # hidden channels are SiLU(0)=0 and have zero cv2 weights; padded output
    # channels / padded W columns are sliced off below).
    w1_p = jnp.zeros((C1, Cp), jnp.bfloat16).at[:, :c_].set(w1.astype(jnp.bfloat16))
    b1_p = jnp.zeros((1, Cp), jnp.float32).at[:, :c_].set(b1)
    w2_p = (jnp.zeros((4, Cp, C2p), jnp.bfloat16)
            .at[:, :c_, :C2].set(w2.reshape(4, c_, C2).astype(jnp.bfloat16))
            .reshape(4 * Cp, C2p))
    b2_p = jnp.zeros((1, C2p), jnp.float32).at[:, :C2].set(b2)

    # NCHW -> NHWC in bf16 (halves layout-change + kernel-input HBM traffic).
    x_nhwc = jnp.transpose(x_nchw.astype(jnp.bfloat16), (0, 2, 3, 1))
    if Wp != W:
        x_nhwc = jnp.pad(x_nhwc, ((0, 0), (0, 0), (0, Wp - W), (0, 0)))

    # VMEM budget derived from the actual block / scratch / temporary sizes.
    x_blk = H * Wp * C1 * 2
    o_blk = H * Wp * C2p * 4
    wts = (C1 * Cp + 4 * Cp * C2p) * 2 + (Cp + C2p) * 4
    pad_scr = (H + 4) * (Wp + 4) * Cp * 2
    cat_scr = H * Wp * 4 * Cp * 2
    temps = H * Wp * (Cp + C2p) * 4 + 6 * (H + 4) * Wp * Cp * 2
    vmem_bytes = 2 * (x_blk + o_blk + wts) + pad_scr + cat_scr + temps
    vmem_limit = int(min(112 * 2**20, max(32 * 2**20, 2 * vmem_bytes)))

    kernel = functools.partial(sppf_kernel, real_w=W)

    # TODO(synk): add a row-tiled grid axis (grid=(N, H//TH)) with a 6-row halo
    # (manual make_async_copy) to shard across v7x TensorCores and bound VMEM
    # at large resolutions.
    out_nhwc = pl.pallas_call(
        kernel,
        out_shape=jax.ShapeDtypeStruct((N, H, Wp, C2p), jnp.float32),
        grid_spec=pltpu.PrefetchScalarGridSpec(
            num_scalar_prefetch=0,
            grid=(N,),
            in_specs=[
                pl.BlockSpec((pl.Squeezed(), H, Wp, C1), lambda n: (n, 0, 0, 0)),
                pl.BlockSpec((C1, Cp), lambda n: (0, 0)),
                pl.BlockSpec((1, Cp), lambda n: (0, 0)),
                pl.BlockSpec((4 * Cp, C2p), lambda n: (0, 0)),
                pl.BlockSpec((1, C2p), lambda n: (0, 0)),
            ],
            out_specs=pl.BlockSpec((pl.Squeezed(), H, Wp, C2p),
                                   lambda n: (n, 0, 0, 0)),
            scratch_shapes=[
                pltpu.VMEM((H + 4, Wp + 4, Cp), jnp.bfloat16),   # padded pool img
                pltpu.VMEM((H * Wp, 4 * Cp), jnp.bfloat16),      # concat staging
            ],
        ),
        compiler_params=pltpu.CompilerParams(
            dimension_semantics=("parallel",),
            vmem_limit_bytes=vmem_limit),
    )(x_nhwc, w1_p, b1_p, w2_p, b2_p)

    out = out_nhwc[:, :, :W, :C2] if (Wp != W or C2p != C2) else out_nhwc
    return jnp.transpose(out, (0, 3, 1, 2))          # -> NCHW, f32


# ---------------- parameter construction (deterministic, BN folded) ----------
def fold_bn(w_oi, gamma, beta, mean, var, eps=1e-5):
    """w_oi: (Cin, Cout) 1x1 conv weight (bias-free). Returns folded (w, b)."""
    scale = gamma / jnp.sqrt(var + eps)          # (Cout,)
    w_f = w_oi * scale[None, :]
    b_f = (beta - mean * scale)[None, :]         # (1, Cout)
    return w_f.astype(jnp.float32), b_f.astype(jnp.float32)


def make_params(c1, c2, key):
    c_ = c1 // 2
    ks = jax.random.split(key, 10)
    w1 = jax.random.normal(ks[0], (c1, c_), jnp.float32) * 0.2
    g1 = 1.0 + 0.1 * jax.random.normal(ks[1], (c_,), jnp.float32)
    be1 = 0.05 * jax.random.normal(ks[2], (c_,), jnp.float32)
    m1 = 0.05 * jax.random.normal(ks[3], (c_,), jnp.float32)
    v1 = 1.0 + 0.1 * jax.nn.softplus(jax.random.normal(ks[4], (c_,), jnp.float32))
    w2 = jax.random.normal(ks[5], (4 * c_, c2), jnp.float32) * 0.2
    g2 = 1.0 + 0.1 * jax.random.normal(ks[6], (c2,), jnp.float32)
    be2 = 0.05 * jax.random.normal(ks[7], (c2,), jnp.float32)
    m2 = 0.05 * jax.random.normal(ks[8], (c2,), jnp.float32)
    v2 = 1.0 + 0.1 * jax.nn.softplus(jax.random.normal(ks[9], (c2,), jnp.float32))
    w1f, b1f = fold_bn(w1, g1, be1, m1, v1)
    w2f, b2f = fold_bn(w2, g2, be2, m2, v2)
    return w1f, b1f, w2f, b2f


# ---------------- plain-JAX f32 reference (for verification) -----------------
def sppf_ref(x_nchw, w1, b1, w2, b2):
    x = jnp.transpose(x_nchw, (0, 2, 3, 1))                   # NHWC
    def silu(v): return v * jax.nn.sigmoid(v)
    def mp(v):
        return lax.reduce_window(
            v, -jnp.inf, lax.max, (1, 5, 5, 1), (1, 1, 1, 1),
            [(0, 0), (2, 2), (2, 2), (0, 0)])
    h = silu(jnp.einsum("nhwc,cd->nhwd", x, w1) + b1[0])
    y1 = mp(h)
    y2 = mp(y1)
    y3 = mp(y2)
    cat = jnp.concatenate([h, y1, y2, y3], axis=-1)
    o = silu(jnp.einsum("nhwc,cd->nhwd", cat, w2) + b2[0])
    return jnp.transpose(o, (0, 3, 1, 2))


if __name__ == "__main__":
    key = jax.random.PRNGKey(0)

    def check(N, C1, C2, H, W, k):
        kx, kp = jax.random.split(k)
        x = jax.random.normal(kx, (N, C1, H, W), jnp.float32)     # NCHW input
        w1, b1, w2, b2 = make_params(C1, C2, kp)
        out = jax.block_until_ready(sppf_pallas(x, w1, b1, w2, b2))
        ref = jax.block_until_ready(sppf_ref(x, w1, b1, w2, b2))
        assert out.shape == (N, C2, H, W), out.shape
        # Tolerance reflects bf16 matmul/pool inputs (reference is pure f32).
        err = float(jnp.max(jnp.abs(out - ref)))
        assert jnp.allclose(out, ref, atol=3e-2, rtol=3e-2), err

    k1, k2 = jax.random.split(key)
    check(2, 4, 8, 16, 16, k1)    # lane/sublane-aligned case
    check(1, 8, 16, 12, 12, k2)   # W % 8 != 0 exercises the wrapper W-padding
    print("KERNEL_OK")
</pallas_src>

<mosaic_0001>
module attributes {stable_mosaic.version = 11 : i64} {
  func.func @sppf_kernel(%arg0: i32, %arg1: memref<1x16x16x4xbf16, #tpu.memory_space<vmem>>, %arg2: memref<4x128xbf16, #tpu.memory_space<vmem>>, %arg3: memref<1x128xf32, #tpu.memory_space<vmem>>, %arg4: memref<512x128xbf16, #tpu.memory_space<vmem>>, %arg5: memref<1x128xf32, #tpu.memory_space<vmem>>, %arg6: memref<1x16x16x128xf32, #tpu.memory_space<vmem>>, %arg7: memref<20x20x128xbf16, #tpu.memory_space<vmem>>, %arg8: memref<256x512xbf16, #tpu.memory_space<vmem>>) attributes {dimension_semantics = [#tpu.dimension_semantics<parallel>], iteration_bounds = array<i64: 2>, scalar_prefetch = 0 : i64, scratch_operands = 2 : i64, tpu.core_type = #tpu.core_type<tc>, window_params = [{transform_indices = @transform_0, window_bounds = array<i64: 1, 16, 16, 4>}, {pipeline_mode = #tpu.pipeline_mode<synchronous>, transform_indices = @transform_1, window_bounds = array<i64: 4, 128>}, {pipeline_mode = #tpu.pipeline_mode<synchronous>, transform_indices = @transform_2, window_bounds = array<i64: 1, 128>}, {pipeline_mode = #tpu.pipeline_mode<synchronous>, transform_indices = @transform_3, window_bounds = array<i64: 512, 128>}, {pipeline_mode = #tpu.pipeline_mode<synchronous>, transform_indices = @transform_4, window_bounds = array<i64: 1, 128>}, {transform_indices = @transform_5, window_bounds = array<i64: 1, 16, 16, 128>}]} {
    %cst = arith.constant -3.389530e+38 : bf16
    %0 = vector.broadcast %cst : bf16 to vector<2x20x128xbf16>
    %c0 = arith.constant 0 : index
    %c0_0 = arith.constant 0 : index
    %c0_1 = arith.constant 0 : index
    %1 = vector.load %arg7[%c0, %c0_0, %c0_1] : memref<20x20x128xbf16, #tpu.memory_space<vmem>>, vector<2x20x128xbf16>
    tpu.vector_store %arg7[%c0, %c0_0, %c0_1], %0 {strides = array<i32>} : memref<20x20x128xbf16, #tpu.memory_space<vmem>>, vector<2x20x128xbf16>,
    %cst_2 = arith.constant -3.389530e+38 : bf16
    %2 = vector.broadcast %cst_2 : bf16 to vector<2x20x128xbf16>
    %c18 = arith.constant 18 : index
    %c0_3 = arith.constant 0 : index
    %c0_4 = arith.constant 0 : index
    %3 = vector.load %arg7[%c18, %c0_3, %c0_4] : memref<20x20x128xbf16, #tpu.memory_space<vmem>>, vector<2x20x128xbf16>
    tpu.vector_store %arg7[%c18, %c0_3, %c0_4], %2 {strides = array<i32>} : memref<20x20x128xbf16, #tpu.memory_space<vmem>>, vector<2x20x128xbf16>,
    %cst_5 = arith.constant -3.389530e+38 : bf16
    %4 = vector.broadcast %cst_5 : bf16 to vector<16x2x128xbf16>
    %c2 = arith.constant 2 : index
    %c0_6 = arith.constant 0 : index
    %c0_7 = arith.constant 0 : index
    %5 = vector.load %arg7[%c2, %c0_6, %c0_7] : memref<20x20x128xbf16, #tpu.memory_space<vmem>>, vector<16x2x128xbf16>
    tpu.vector_store %arg7[%c2, %c0_6, %c0_7], %4 {strides = array<i32>} : memref<20x20x128xbf16, #tpu.memory_space<vmem>>, vector<16x2x128xbf16>,
    %cst_8 = arith.constant -3.389530e+38 : bf16
    %6 = vector.broadcast %cst_8 : bf16 to vector<16x2x128xbf16>
    %c2_9 = arith.constant 2 : index
    %c18_10 = arith.constant 18 : index
    %c0_11 = arith.constant 0 : index
    %7 = vector.load %arg7[%c2_9, %c18_10, %c0_11] : memref<20x20x128xbf16, #tpu.memory_space<vmem>>, vector<16x2x128xbf16>
    tpu.vector_store %arg7[%c2_9, %c18_10, %c0_11], %6 {strides = array<i32>} : memref<20x20x128xbf16, #tpu.memory_space<vmem>>, vector<16x2x128xbf16>,
    %c0_12 = arith.constant 0 : index
    %c0_13 = arith.constant 0 : index
    %c0_14 = arith.constant 0 : index
    %c0_15 = arith.constant 0 : index
    %8 = vector.load %arg1[%c0_12, %c0_13, %c0_14, %c0_15] : memref<1x16x16x4xbf16, #tpu.memory_space<vmem>>, vector<1x16x16x4xbf16>
    %9 = vector.shape_cast %8 : vector<1x16x16x4xbf16> to vector<16x16x4xbf16>
    %10 = vector.shape_cast %9 : vector<16x16x4xbf16> to vector<256x4xbf16>
    %c0_16 = arith.constant 0 : index
    %c0_17 = arith.constant 0 : index
    %11 = vector.load %arg2[%c0_16, %c0_17] : memref<4x128xbf16, #tpu.memory_space<vmem>>, vector<4x128xbf16>
    %cst_18 = arith.constant dense<0.000000e+00> : vector<256x128xf32>
    %12 = tpu.matmul %10, %11, %cst_18 {dimension_numbers = #tpu.dot_dimension_numbers<[1], [0], [0], [1], [0, 0, 1, 1], [], []>} : vector<256x4xbf16>, vector<4x128xbf16>, vector<256x128xf32> -> vector<256x128xf32>
    %c0_19 = arith.constant 0 : index
    %c0_20 = arith.constant 0 : index
    %13 = vector.load %arg3[%c0_19, %c0_20] : memref<1x128xf32, #tpu.memory_space<vmem>>, vector<1x128xf32>
    %14 = vector.broadcast %13 : vector<1x128xf32> to vector<256x128xf32>
    %15 = arith.addf %12, %14 : vector<256x128xf32>
    %cst_21 = arith.constant 5.000000e-01 : f32
    %16 = vector.broadcast %cst_21 : f32 to vector<256x128xf32>
    %17 = arith.mulf %16, %15 : vector<256x128xf32>
    %18 = math.tanh %17 : vector<256x128xf32>
    %cst_22 = arith.constant 1.000000e+00 : f32
    %19 = vector.broadcast %cst_22 : f32 to vector<256x128xf32>
    %20 = arith.addf %18, %19 : vector<256x128xf32>
    %cst_23 = arith.constant 5.000000e-01 : f32
    %21 = vector.broadcast %cst_23 : f32 to vector<256x128xf32>
    %22 = arith.mulf %21, %20 : vector<256x128xf32>
    %23 = arith.mulf %15, %22 : vector<256x128xf32>
    %24 = arith.truncf %23 : vector<256x128xf32> to vector<256x128xbf16>
    %c0_24 = arith.constant 0 : index
    %c0_25 = arith.constant 0 : index
    %25 = vector.load %arg8[%c0_24, %c0_25] : memref<256x512xbf16, #tpu.memory_space<vmem>>, vector<256x128xbf16>
    tpu.vector_store %arg8[%c0_24, %c0_25], %24 {strides = array<i32>} : memref<256x512xbf16, #tpu.memory_space<vmem>>, vector<256x128xbf16>,
    %26 = vector.shape_cast %24 : vector<256x128xbf16> to vector<16x16x128xbf16>
    %c2_26 = arith.constant 2 : index
    %c2_27 = arith.constant 2 : index
    %c0_28 = arith.constant 0 : index
    %27 = vector.load %arg7[%c2_26, %c2_27, %c0_28] : memref<20x20x128xbf16, #tpu.memory_space<vmem>>, vector<16x16x128xbf16>
    tpu.vector_store %arg7[%c2_26, %c2_27, %c0_28], %26 {strides = array<i32>} : memref<20x20x128xbf16, #tpu.memory_space<vmem>>, vector<16x16x128xbf16>,
    %c0_29 = arith.constant 0 : index
    %c0_30 = arith.constant 0 : index
    %c0_31 = arith.constant 0 : index
    %28 = vector.load %arg7[%c0_29, %c0_30, %c0_31] : memref<20x20x128xbf16, #tpu.memory_space<vmem>>, vector<20x16x128xbf16>
    %c0_32 = arith.constant 0 : index
    %c1 = arith.constant 1 : index
    %c0_33 = arith.constant 0 : index
    %29 = vector.load %arg7[%c0_32, %c1, %c0_33] : memref<20x20x128xbf16, #tpu.memory_space<vmem>>, vector<20x16x128xbf16>
    %c0_34 = arith.constant 0 : index
    %c2_35 = arith.constant 2 : index
    %c0_36 = arith.constant 0 : index
    %30 = vector.load %arg7[%c0_34, %c2_35, %c0_36] : memref<20x20x128xbf16, #tpu.memory_space<vmem>>, vector<20x16x128xbf16>
    %c0_37 = arith.constant 0 : index
    %c3 = arith.constant 3 : index
    %c0_38 = arith.constant 0 : index
    %31 = vector.load %arg7[%c0_37, %c3, %c0_38] : memref<20x20x128xbf16, #tpu.memory_space<vmem>>, vector<20x16x128xbf16>
    %c0_39 = arith.constant 0 : index
    %c4 = arith.constant 4 : index
    %c0_40 = arith.constant 0 : index
    %32 = vector.load %arg7[%c0_39, %c4, %c0_40] : memref<20x20x128xbf16, #tpu.memory_space<vmem>>, vector<20x16x128xbf16>
    %33 = arith.maximumf %28, %29 : vector<20x16x128xbf16>
    %34 = arith.maximumf %30, %31 : vector<20x16x128xbf16>
    %35 = arith.maximumf %33, %34 : vector<20x16x128xbf16>
    %36 = arith.maximumf %35, %32 : vector<20x16x128xbf16>
    %37 = vector.extract_strided_slice %36 {offsets = [0, 0, 0], sizes = [16, 16, 128], strides = [1, 1, 1]} : vector<20x16x128xbf16> to vector<16x16x128xbf16>
    %38 = vector.extract_strided_slice %36 {offsets = [1, 0, 0], sizes = [16, 16, 128], strides = [1, 1, 1]} : vector<20x16x128xbf16> to vector<16x16x128xbf16>
    %39 = vector.extract_strided_slice %36 {offsets = [2, 0, 0], sizes = [16, 16, 128], strides = [1, 1, 1]} : vector<20x16x128xbf16> to vector<16x16x128xbf16>
    %40 = vector.extract_strided_slice %36 {offsets = [3, 0, 0], sizes = [16, 16, 128], strides = [1, 1, 1]} : vector<20x16x128xbf16> to vector<16x16x128xbf16>
    %41 = vector.extract_strided_slice %36 {offsets = [4, 0, 0], sizes = [16, 16, 128], strides = [1, 1, 1]} : vector<20x16x128xbf16> to vector<16x16x128xbf16>
    %42 = arith.maximumf %37, %38 : vector<16x16x128xbf16>
    %43 = arith.maximumf %39, %40 : vector<16x16x128xbf16>
    %44 = arith.maximumf %42, %43 : vector<16x16x128xbf16>
    %45 = arith.maximumf %44, %41 : vector<16x16x128xbf16>
    %46 = vector.shape_cast %45 : vector<16x16x128xbf16> to vector<256x128xbf16>
    %c0_41 = arith.constant 0 : index
    %c128 = arith.constant 128 : index
    %47 = vector.load %arg8[%c0_41, %c128] : memref<256x512xbf16, #tpu.memory_space<vmem>>, vector<256x128xbf16>
    tpu.vector_store %arg8[%c0_41, %c128], %46 {strides = array<i32>} : memref<256x512xbf16, #tpu.memory_space<vmem>>, vector<256x128xbf16>,
    %c2_42 = arith.constant 2 : index
    %c2_43 = arith.constant 2 : index
    %c0_44 = arith.constant 0 : index
    %48 = vector.load %arg7[%c2_42, %c2_43, %c0_44] : memref<20x20x128xbf16, #tpu.memory_space<vmem>>, vector<16x16x128xbf16>
    tpu.vector_store %arg7[%c2_42, %c2_43, %c0_44], %45 {strides = array<i32>} : memref<20x20x128xbf16, #tpu.memory_space<vmem>>, vector<16x16x128xbf16>,
    %c0_45 = arith.constant 0 : index
    %c0_46 = arith.constant 0 : index
    %c0_47 = arith.constant 0 : index
    %49 = vector.load %arg7[%c0_45, %c0_46, %c0_47] : memref<20x20x128xbf16, #tpu.memory_space<vmem>>, vector<20x16x128xbf16>
    %c0_48 = arith.constant 0 : index
    %c1_49 = arith.constant 1 : index
    %c0_50 = arith.constant 0 : index
    %50 = vector.load %arg7[%c0_48, %c1_49, %c0_50] : memref<20x20x128xbf16, #tpu.memory_space<vmem>>, vector<20x16x128xbf16>
    %c0_51 = arith.constant 0 : index
    %c2_52 = arith.constant 2 : index
    %c0_53 = arith.constant 0 : index
    %51 = vector.load %arg7[%c0_51, %c2_52, %c0_53] : memref<20x20x128xbf16, #tpu.memory_space<vmem>>, vector<20x16x128xbf16>
    %c0_54 = arith.constant 0 : index
    %c3_55 = arith.constant 3 : index
    %c0_56 = arith.constant 0 : index
    %52 = vector.load %arg7[%c0_54, %c3_55, %c0_56] : memref<20x20x128xbf16, #tpu.memory_space<vmem>>, vector<20x16x128xbf16>
    %c0_57 = arith.constant 0 : index
    %c4_58 = arith.constant 4 : index
    %c0_59 = arith.constant 0 : index
    %53 = vector.load %arg7[%c0_57, %c4_58, %c0_59] : memref<20x20x128xbf16, #tpu.memory_space<vmem>>, vector<20x16x128xbf16>
    %54 = arith.maximumf %49, %50 : vector<20x16x128xbf16>
    %55 = arith.maximumf %51, %52 : vector<20x16x128xbf16>
    %56 = arith.maximumf %54, %55 : vector<20x16x128xbf16>
    %57 = arith.maximumf %56, %53 : vector<20x16x128xbf16>
    %58 = vector.extract_strided_slice %57 {offsets = [0, 0, 0], sizes = [16, 16, 128], strides = [1, 1, 1]} : vector<20x16x128xbf16> to vector<16x16x128xbf16>
    %59 = vector.extract_strided_slice %57 {offsets = [1, 0, 0], sizes = [16, 16, 128], strides = [1, 1, 1]} : vector<20x16x128xbf16> to vector<16x16x128xbf16>
    %60 = vector.extract_strided_slice %57 {offsets = [2, 0, 0], sizes = [16, 16, 128], strides = [1, 1, 1]} : vector<20x16x128xbf16> to vector<16x16x128xbf16>
    %61 = vector.extract_strided_slice %57 {offsets = [3, 0, 0], sizes = [16, 16, 128], strides = [1, 1, 1]} : vector<20x16x128xbf16> to vector<16x16x128xbf16>
    %62 = vector.extract_strided_slice %57 {offsets = [4, 0, 0], sizes = [16, 16, 128], strides = [1, 1, 1]} : vector<20x16x128xbf16> to vector<16x16x128xbf16>
    %63 = arith.maximumf %58, %59 : vector<16x16x128xbf16>
    %64 = arith.maximumf %60, %61 : vector<16x16x128xbf16>
    %65 = arith.maximumf %63, %64 : vector<16x16x128xbf16>
    %66 = arith.maximumf %65, %62 : vector<16x16x128xbf16>
    %67 = vector.shape_cast %66 : vector<16x16x128xbf16> to vector<256x128xbf16>
    %c0_60 = arith.constant 0 : index
    %c256 = arith.constant 256 : index
    %68 = vector.load %arg8[%c0_60, %c256] : memref<256x512xbf16, #tpu.memory_space<vmem>>, vector<256x128xbf16>
    tpu.vector_store %arg8[%c0_60, %c256], %67 {strides = array<i32>} : memref<256x512xbf16, #tpu.memory_space<vmem>>, vector<256x128xbf16>,
    %c2_61 = arith.constant 2 : index
    %c2_62 = arith.constant 2 : index
    %c0_63 = arith.constant 0 : index
    %69 = vector.load %arg7[%c2_61, %c2_62, %c0_63] : memref<20x20x128xbf16, #tpu.memory_space<vmem>>, vector<16x16x128xbf16>
    tpu.vector_store %arg7[%c2_61, %c2_62, %c0_63], %66 {strides = array<i32>} : memref<20x20x128xbf16, #tpu.memory_space<vmem>>, vector<16x16x128xbf16>,
    %c0_64 = arith.constant 0 : index
    %c0_65 = arith.constant 0 : index
    %c0_66 = arith.constant 0 : index
    %70 = vector.load %arg7[%c0_64, %c0_65, %c0_66] : memref<20x20x128xbf16, #tpu.memory_space<vmem>>, vector<20x16x128xbf16>
    %c0_67 = arith.constant 0 : index
    %c1_68 = arith.constant 1 : index
    %c0_69 = arith.constant 0 : index
    %71 = vector.load %arg7[%c0_67, %c1_68, %c0_69] : memref<20x20x128xbf16, #tpu.memory_space<vmem>>, vector<20x16x128xbf16>
    %c0_70 = arith.constant 0 : index
    %c2_71 = arith.constant 2 : index
    %c0_72 = arith.constant 0 : index
    %72 = vector.load %arg7[%c0_70, %c2_71, %c0_72] : memref<20x20x128xbf16, #tpu.memory_space<vmem>>, vector<20x16x128xbf16>
    %c0_73 = arith.constant 0 : index
    %c3_74 = arith.constant 3 : index
    %c0_75 = arith.constant 0 : index
    %73 = vector.load %arg7[%c0_73, %c3_74, %c0_75] : memref<20x20x128xbf16, #tpu.memory_space<vmem>>, vector<20x16x128xbf16>
    %c0_76 = arith.constant 0 : index
    %c4_77 = arith.constant 4 : index
    %c0_78 = arith.constant 0 : index
    %74 = vector.load %arg7[%c0_76, %c4_77, %c0_78] : memref<20x20x128xbf16, #tpu.memory_space<vmem>>, vector<20x16x128xbf16>
    %75 = arith.maximumf %70, %71 : vector<20x16x128xbf16>
    %76 = arith.maximumf %72, %73 : vector<20x16x128xbf16>
    %77 = arith.maximumf %75, %76 : vector<20x16x128xbf16>
    %78 = arith.maximumf %77, %74 : vector<20x16x128xbf16>
    %79 = vector.extract_strided_slice %78 {offsets = [0, 0, 0], sizes = [16, 16, 128], strides = [1, 1, 1]} : vector<20x16x128xbf16> to vector<16x16x128xbf16>
    %80 = vector.extract_strided_slice %78 {offsets = [1, 0, 0], sizes = [16, 16, 128], strides = [1, 1, 1]} : vector<20x16x128xbf16> to vector<16x16x128xbf16>
    %81 = vector.extract_strided_slice %78 {offsets = [2, 0, 0], sizes = [16, 16, 128], strides = [1, 1, 1]} : vector<20x16x128xbf16> to vector<16x16x128xbf16>
    %82 = vector.extract_strided_slice %78 {offsets = [3, 0, 0], sizes = [16, 16, 128], strides = [1, 1, 1]} : vector<20x16x128xbf16> to vector<16x16x128xbf16>
    %83 = vector.extract_strided_slice %78 {offsets = [4, 0, 0], sizes = [16, 16, 128], strides = [1, 1, 1]} : vector<20x16x128xbf16> to vector<16x16x128xbf16>
    %84 = arith.maximumf %79, %80 : vector<16x16x128xbf16>
    %85 = arith.maximumf %81, %82 : vector<16x16x128xbf16>
    %86 = arith.maximumf %84, %85 : vector<16x16x128xbf16>
    %87 = arith.maximumf %86, %83 : vector<16x16x128xbf16>
    %88 = vector.shape_cast %87 : vector<16x16x128xbf16> to vector<256x128xbf16>
    %c0_79 = arith.constant 0 : index
    %c384 = arith.constant 384 : index
    %89 = vector.load %arg8[%c0_79, %c384] : memref<256x512xbf16, #tpu.memory_space<vmem>>, vector<256x128xbf16>
    tpu.vector_store %arg8[%c0_79, %c384], %88 {strides = array<i32>} : memref<256x512xbf16, #tpu.memory_space<vmem>>, vector<256x128xbf16>,
    %c0_80 = arith.constant 0 : index
    %c0_81 = arith.constant 0 : index
    %90 = vector.load %arg8[%c0_80, %c0_81] : memref<256x512xbf16, #tpu.memory_space<vmem>>, vector<256x512xbf16>
    %c0_82 = arith.constant 0 : index
    %c0_83 = arith.constant 0 : index
    %91 = vector.load %arg4[%c0_82, %c0_83] : memref<512x128xbf16, #tpu.memory_space<vmem>>, vector<512x128xbf16>
    %cst_84 = arith.constant dense<0.000000e+00> : vector<256x128xf32>
    %92 = tpu.matmul %90, %91, %cst_84 {dimension_numbers = #tpu.dot_dimension_numbers<[1], [0], [0], [1], [0, 0, 1, 1], [], []>} : vector<256x512xbf16>, vector<512x128xbf16>, vector<256x128xf32> -> vector<256x128xf32>
    %c0_85 = arith.constant 0 : index
    %c0_86 = arith.constant 0 : index
    %93 = vector.load %arg5[%c0_85, %c0_86] : memref<1x128xf32, #tpu.memory_space<vmem>>, vector<1x128xf32>
    %94 = vector.broadcast %93 : vector<1x128xf32> to vector<256x128xf32>
    %95 = arith.addf %92, %94 : vector<256x128xf32>
    %cst_87 = arith.constant 5.000000e-01 : f32
    %96 = vector.broadcast %cst_87 : f32 to vector<256x128xf32>
    %97 = arith.mulf %96, %95 : vector<256x128xf32>
    %98 = math.tanh %97 : vector<256x128xf32>
    %cst_88 = arith.constant 1.000000e+00 : f32
    %99 = vector.broadcast %cst_88 : f32 to vector<256x128xf32>
    %100 = arith.addf %98, %99 : vector<256x128xf32>
    %cst_89 = arith.constant 5.000000e-01 : f32
    %101 = vector.broadcast %cst_89 : f32 to vector<256x128xf32>
    %102 = arith.mulf %101, %100 : vector<256x128xf32>
    %103 = arith.mulf %95, %102 : vector<256x128xf32>
    %104 = vector.shape_cast %103 : vector<256x128xf32> to vector<16x16x128xf32>
    %c0_90 = arith.constant 0 : index
    %c0_91 = arith.constant 0 : index
    %c0_92 = arith.constant 0 : index
    %c0_93 = arith.constant 0 : index
    %105 = vector.load %arg6[%c0_90, %c0_91, %c0_92, %c0_93] : memref<1x16x16x128xf32, #tpu.memory_space<vmem>>, vector<1x16x16x128xf32>
    %106 = vector.shape_cast %105 : vector<1x16x16x128xf32> to vector<16x16x128xf32>
    %107 = vector.shape_cast %104 : vector<16x16x128xf32> to vector<1x16x16x128xf32>
    tpu.vector_store %arg6[%c0_90, %c0_91, %c0_92, %c0_93], %107 {strides = array<i32>} : memref<1x16x16x128xf32, #tpu.memory_space<vmem>>, vector<1x16x16x128xf32>,
    return
  }
  func.func @transform_0(%arg0: i32) -> (i32, i32, i32, i32) {
    %c0_i32 = arith.constant 0 : i32
    %c0_i32_0 = arith.constant 0 : i32
    %c0_i32_1 = arith.constant 0 : i32
    %c0_i32_2 = arith.constant 0 : i32
    return %arg0, %c0_i32, %c0_i32_0, %c0_i32_1 : i32, i32, i32, i32
  }
  func.func @transform_1(%arg0: i32) -> (i32, i32) {
    %c0_i32 = arith.constant 0 : i32
    %c0_i32_0 = arith.constant 0 : i32
    %c0_i32_1 = arith.constant 0 : i32
    return %c0_i32, %c0_i32_0 : i32, i32
  }
  func.func @transform_2(%arg0: i32) -> (i32, i32) {
    %c0_i32 = arith.constant 0 : i32
    %c0_i32_0 = arith.constant 0 : i32
    %c0_i32_1 = arith.constant 0 : i32
    return %c0_i32, %c0_i32_0 : i32, i32
  }
  func.func @transform_3(%arg0: i32) -> (i32, i32) {
    %c0_i32 = arith.constant 0 : i32
    %c0_i32_0 = arith.constant 0 : i32
    %c0_i32_1 = arith.constant 0 : i32
    return %c0_i32, %c0_i32_0 : i32, i32
  }
  func.func @transform_4(%arg0: i32) -> (i32, i32) {
    %c0_i32 = arith.constant 0 : i32
    %c0_i32_0 = arith.constant 0 : i32
    %c0_i32_1 = arith.constant 0 : i32
    return %c0_i32, %c0_i32_0 : i32, i32
  }
  func.func @transform_5(%arg0: i32) -> (i32, i32, i32, i32) {
    %c0_i32 = arith.constant 0 : i32
    %c0_i32_0 = arith.constant 0 : i32
    %c0_i32_1 = arith.constant 0 : i32
    %c0_i32_2 = arith.constant 0 : i32
    return %arg0, %c0_i32, %c0_i32_0, %c0_i32_1 : i32, i32, i32, i32
  }
}

</mosaic_0001>

<llo_original>
// kernel: tpu_custom_call.1
$region0: #{tpu_custom_call.1}
  #allocation0 [shape = 'u32[]', space=smem, size = 0x4, offset = 0x4, fixed_abs, tag = 'smem constant byte address 0x4 - core index']
  #allocation1 [shape = 'u32[144,128]{1,0:T(1,128)}', space=vmem, size = 0x12000, scoped, tag = 'internal scratch']
  #allocation2 [shape = 'bf16[20,20,128]{2,1,0:T(8,128)(2,1)}', space=vmem, size = 0x1e000, scoped, tag = 'scratch operand']
  #allocation3 [shape = 'bf16[256,512]{1,0:T(8,128)(2,1)}', space=vmem, size = 0x40000, scoped, tag = 'scratch operand']
  %s0 = inlined_call_operand.vmem [shape: bf16[2,16,16,4], index: 0, kind: input, shape index: {}]
  %s1 = inlined_call_operand.vmem [shape: bf16[4,128], index: 1, kind: input, shape index: {}]
  %s2 = inlined_call_operand.vmem [shape: f32[1,128], index: 2, kind: input, shape index: {}]
  %s3 = inlined_call_operand.vmem [shape: bf16[512,128], index: 3, kind: input, shape index: {}]
  %s4 = inlined_call_operand.vmem [shape: f32[1,128], index: 4, kind: input, shape index: {}]
  %s5 = inlined_call_operand.hbm [shape: f32[2,16,16,128], index: 5, kind: output, shape index: {}]
  %s6 = sld [smem:[#allocation0]]
  $region53: #{tpu_custom_call.1} parent=0
    _
  %s8 = ssub.s32 1, %s6
  %s9 = scalar_select 0, %s8, %s6
  $region1: #{tpu_custom_call.1} parent=0
    #allocation4 [shape = 'u8[262144]{0}', space=vmem, size = 0x40000, scoped, tag = 'output window, operand 0']
    #allocation5 [shape = 's32[2]{0}', space=sflag, size = 0x8, scoped, tag = 'scoped memory for tpu_custom_call.1']
    %10 = vsyncpa [#allocation5], 0
    %s11 = scalar_lea.sflag [#allocation5], 1
    %12 = vsyncpa %s11, 0
    loop: start=0, step=1, limit=4
    $region2: #{tpu_custom_call.1} parent=1 // loop_pre_header
      _
    $region3: #{tpu_custom_call.1} parent=1 // loop_header
      %s14 = sphi 0, %s18
      %p15 = scmp.ge.s32.totalorder %s14, 4
      %s24 = sphi 0, %s26
      %s27 = sphi 0, %s24
      %s28 = sphi 0, %s27
      %s44 = sphi 0, %s28
      %s48 = sphi 0, %s48
      %s50 = sphi 0, %s48
      %s51 = sphi 0, %s50
      %s65 = sphi 0, %s51
      %s69 = sphi 0, %s69
      %s71 = sphi 0, %s69
      %s72 = sphi 0, %s71
      %s86 = sphi 0, %s72
      %s90 = sphi 0, %s90
      %s92 = sphi 0, %s90
      %s93 = sphi 0, %s92
      %s107 = sphi 0, %s93
      %s111 = sphi 0, %s111
      %s113 = sphi 0, %s111
      %s114 = sphi 0, %s113
      %s128 = sphi 0, %s114
      %s134 = sphi 0, %s136
      %s137 = sphi 0, %s134
      %s138 = sphi 0, %s137
      %s154 = sphi 0, %s138
    $region4: #{tpu_custom_call.1} parent=1 // loop_header_branch
      %17 = sbr.rel (%p15) target = $region8
    $region5: #{tpu_custom_call.1} parent=1 // loop_body
      %s19 = ssub.s32 %s14, 1
      %s20 = ssub.s32 %s14, 2
      %s21 = sadd.s32 %s14, 1
      %s22 = ssub.s32 %s14, %s21
      %p23 = scmp.eq.s32.totalorder %s22, 0
      %s25 = sadd.s32 %s24, 1
      %s26 = scalar_select %p23, %s24, %s25
      %p29 = pneg %p23
      %p30 = scmp.eq.s32.totalorder %s14, 1
      %p31 = por %p29, %p30
      %p32 = scmp.ne.s32.totalorder %s24, %s27
      %p33 = scmp.eq.s32.totalorder %s14, 0
      %p34 = por %p32, %p33
      %p35 = scmp.ne.s32.totalorder %s24, %s27
      %p36 = scmp.eq.s32.totalorder %s19, 1
      %p37 = por %p35, %p36
      %p38 = scmp.ne.s32.totalorder %s27, %s28
      %p39 = scmp.eq.s32.totalorder %s19, 0
      %p40 = por %p38, %p39
      %p41 = scmp.ne.s32.totalorder %s27, %s28
      %p42 = scmp.eq.s32.totalorder %s20, 1
      %p43 = por %p41, %p42
      %p45 = scmp.ne.s32.totalorder %s28, %s44
      %p46 = scmp.eq.s32.totalorder %s20, 0
      %p47 = por %p45, %p46
      %s49 = sadd.s32 %s48, 1
      %p52 = scmp.eq.s32.totalorder %s14, 1
      %p53 = scmp.ne.s32.totalorder %s48, %s50
      %p54 = scmp.eq.s32.totalorder %s14, 0
      %p55 = por %p53, %p54
      %p56 = scmp.ne.s32.totalorder %s48, %s50
      %p57 = scmp.eq.s32.totalorder %s19, 1
      %p58 = por %p56, %p57
      %p59 = scmp.ne.s32.totalorder %s50, %s51
      %p60 = scmp.eq.s32.totalorder %s19, 0
      %p61 = por %p59, %p60
      %p62 = scmp.ne.s32.totalorder %s50, %s51
      %p63 = scmp.eq.s32.totalorder %s20, 1
      %p64 = por %p62, %p63
      %p66 = scmp.ne.s32.totalorder %s51, %s65
      %p67 = scmp.eq.s32.totalorder %s20, 0
      %p68 = por %p66, %p67
      %s70 = sadd.s32 %s69, 1
      %p73 = scmp.eq.s32.totalorder %s14, 1
      %p74 = scmp.ne.s32.totalorder %s69, %s71
      %p75 = scmp.eq.s32.totalorder %s14, 0
      %p76 = por %p74, %p75
      %p77 = scmp.ne.s32.totalorder %s69, %s71
      %p78 = scmp.eq.s32.totalorder %s19, 1
      %p79 = por %p77, %p78
      %p80 = scmp.ne.s32.totalorder %s71, %s72
      %p81 = scmp.eq.s32.totalorder %s19, 0
      %p82 = por %p80, %p81
      %p83 = scmp.ne.s32.totalorder %s71, %s72
      %p84 = scmp.eq.s32.totalorder %s20, 1
      %p85 = por %p83, %p84
      %p87 = scmp.ne.s32.totalorder %s72, %s86
      %p88 = scmp.eq.s32.totalorder %s20, 0
      %p89 = por %p87, %p88
      %s91 = sadd.s32 %s90, 1
      %p94 = scmp.eq.s32.totalorder %s14, 1
      %p95 = scmp.ne.s32.totalorder %s90, %s92
      %p96 = scmp.eq.s32.totalorder %s14, 0
      %p97 = por %p95, %p96
      %p98 = scmp.ne.s32.totalorder %s90, %s92
      %p99 = scmp.eq.s32.totalorder %s19, 1
      %p100 = por %p98, %p99
      %p101 = scmp.ne.s32.totalorder %s92, %s93
      %p102 = scmp.eq.s32.totalorder %s19, 0
      %p103 = por %p101, %p102
      %p104 = scmp.ne.s32.totalorder %s92, %s93
      %p105 = scmp.eq.s32.totalorder %s20, 1
      %p106 = por %p104, %p105
      %p108 = scmp.ne.s32.totalorder %s93, %s107
      %p109 = scmp.eq.s32.totalorder %s20, 0
      %p110 = por %p108, %p109
      %s112 = sadd.s32 %s111, 1
      %p115 = scmp.eq.s32.totalorder %s14, 1
      %p116 = scmp.ne.s32.totalorder %s111, %s113
      %p117 = scmp.eq.s32.totalorder %s14, 0
      %p118 = por %p116, %p117
      %p119 = scmp.ne.s32.totalorder %s111, %s113
      %p120 = scmp.eq.s32.totalorder %s19, 1
      %p121 = por %p119, %p120
      %p122 = scmp.ne.s32.totalorder %s113, %s114
      %p123 = scmp.eq.s32.totalorder %s19, 0
      %p124 = por %p122, %p123
      %p125 = scmp.ne.s32.totalorder %s113, %s114
      %p126 = scmp.eq.s32.totalorder %s20, 1
      %p127 = por %p125, %p126
      %p129 = scmp.ne.s32.totalorder %s114, %s128
      %p130 = scmp.eq.s32.totalorder %s20, 0
      %p131 = por %p129, %p130
      %s132 = ssub.s32 %s14, %s21
      %p133 = scmp.eq.s32.totalorder %s132, 0
      %s135 = sadd.s32 %s134, 1
      %s136 = scalar_select %p133, %s134, %s135
      %p139 = pneg %p133
      %p140 = scmp.eq.s32.totalorder %s14, 1
      %p141 = por %p139, %p140
      %p142 = scmp.ne.s32.totalorder %s134, %s137
      %p143 = scmp.eq.s32.totalorder %s14, 0
      %p144 = por %p142, %p143
      %p145 = scmp.ne.s32.totalorder %s134, %s137
      %p146 = scmp.eq.s32.totalorder %s19, 1
      %p147 = por %p145, %p146
      %p148 = scmp.ne.s32.totalorder %s137, %s138
      %p149 = scmp.eq.s32.totalorder %s19, 0
      %p150 = por %p148, %p149
      %p151 = scmp.ne.s32.totalorder %s137, %s138
      %p152 = scmp.eq.s32.totalorder %s20, 1
      %p153 = por %p151, %p152
      %p155 = scmp.ne.s32.totalorder %s138, %s154
      %p156 = scmp.eq.s32.totalorder %s20, 0
      %p157 = por %p155, %p156
      %p158 = scmp.le.s32.totalorder 1, %s14
      %p159 = scmp.lt.s32.totalorder %s14, 3
      %p160 = pnand %p158, %p159
      %p161 = pneg %p160
      // Predicated region
      $region9: #{tpu_custom_call.1} parent=5 // pred_check
        _
      $region10: #{tpu_custom_call.1} parent=5 // pred_check_branch
        %163 = sbr.rel (%p160) target = $region12
      $region11: #{tpu_custom_call.1} parent=5 // pred_region
        %s164 = ssub.s32 %s14, 1
        // Predicated region
        $region13: #{tpu_custom_call.1} parent=11 // pred_check
          %p165 = pneg %p61
        $region14: #{tpu_custom_call.1} parent=11 // pred_check_branch
          %167 = sbr.rel (%p165) target = $region16
        $region15: #{tpu_custom_call.1} parent=11 // pred_region
          _
        $region16: #{tpu_custom_call.1} parent=11 // pred_fallthru
          _
        // Predicated region
        $region17: #{tpu_custom_call.1} parent=11 // pred_check
          %p168 = pneg %p82
        $region18: #{tpu_custom_call.1} parent=11 // pred_check_branch
          %170 = sbr.rel (%p168) target = $region20
        $region19: #{tpu_custom_call.1} parent=11 // pred_region
          _
        $region20: #{tpu_custom_call.1} parent=11 // pred_fallthru
          _
        // Predicated region
        $region21: #{tpu_custom_call.1} parent=11 // pred_check
          %p171 = pneg %p103
        $region22: #{tpu_custom_call.1} parent=11 // pred_check_branch
          %173 = sbr.rel (%p171) target = $region24
        $region23: #{tpu_custom_call.1} parent=11 // pred_region
          _
        $region24: #{tpu_custom_call.1} parent=11 // pred_fallthru
          _
        // Predicated region
        $region25: #{tpu_custom_call.1} parent=11 // pred_check
          %p174 = pneg %p124
        $region26: #{tpu_custom_call.1} parent=11 // pred_check_branch
          %176 = sbr.rel (%p174) target = $region28
        $region27: #{tpu_custom_call.1} parent=11 // pred_region
          _
        $region28: #{tpu_custom_call.1} parent=11 // pred_fallthru
          _
      $region12: #{tpu_custom_call.1} parent=5 // pred_fallthru
        _
      %p177 = scmp.lt.s32.totalorder %s14, 2
      // Predicated region
      $region29: #{tpu_custom_call.1} parent=5 // pred_check
        %p178 = pneg %p177
      $region30: #{tpu_custom_call.1} parent=5 // pred_check_branch
        %180 = sbr.rel (%p178) target = $region32
      $region31: #{tpu_custom_call.1} parent=5 // pred_region
        // Predicated region
        $region33: #{tpu_custom_call.1} parent=31 // pred_check
          %p181 = pneg %p34
        $region34: #{tpu_custom_call.1} parent=31 // pred_check_branch
          %183 = sbr.rel (%p181) target = $region36
        $region35: #{tpu_custom_call.1} parent=31 // pred_region
          %p184 = scmp.lt.s32.totalorder %s14, 1
          %s185 = scalar_select %p184, %s14, 1
          %s186 = smul.addr %s185, 32
          %s187 = smul.addr %s186, 4
          %s188 = scalar_lea.vmem %s0, %s187
        $region36: #{tpu_custom_call.1} parent=31 // pred_fallthru
          _
      $region32: #{tpu_custom_call.1} parent=5 // pred_fallthru
        _
      %p189 = scmp.le.s32.totalorder 1, %s14
      %p190 = scmp.lt.s32.totalorder %s14, 3
      %p191 = pnand %p189, %p190
      %p192 = pneg %p191
      // Predicated region
      $region37: #{tpu_custom_call.1} parent=5 // pred_check
        _
      $region38: #{tpu_custom_call.1} parent=5 // pred_check_branch
        %194 = sbr.rel (%p191) target = $region40
      $region39: #{tpu_custom_call.1} parent=5 // pred_region
        %s195 = ssub.s32 %s14, 1
        %p196 = scmp.lt.s32.totalorder %s19, 1
        %s197 = scalar_select %p196, %s19, 1
        %s198 = smul.addr %s197, 32
        %s199 = smul.addr %s198, 4
        %s200 = scalar_lea.vmem %s0, %s199
        %p201 = pneg %p40
        %p202 = pneg %p37
        %p203 = pneg %p61
        %p204 = pneg %p58
        %p205 = pneg %p82
        %p206 = pneg %p79
        %p207 = pneg %p103
        %p208 = pneg %p100
        %p209 = pneg %p124
        %p210 = pneg %p121
        %p211 = pneg %p150
        %p212 = pneg %p147
        %s213 = sand.u32 %s137, 1
        %s214 = scalar_lea.sflag [#allocation5], %s213
        %s215 = sand.u32 %s137, 1
        %s216 = smul.addr %s215, 256
        %s217 = scalar_lea.vmem [#allocation4], %s216
        %p218 = scmp.lt.s32.totalorder %s19, 1
        %s219 = scalar_select %p218, %s19, 1
        %s220 = smul.addr %s219, 32
        %s221 = smul.addr %s220, 4
        %s222 = scalar_lea.vmem %s0, %s221
        %225 = vst [vmem:[#allocation2] sm:$0xf] 4286578559
        %226 = vst [vmem:[#allocation2 + $0x4] sm:$0xf] 4286578559
        %227 = vst [vmem:[#allocation2 + $0x8] sm:$0x3] 4286578559
        %228 = vst [vmem:[#allocation2 + $0xc] sm:$0xf] 4286578559
        %229 = vst [vmem:[#allocation2 + $0x10] sm:$0xf] 4286578559
        %230 = vst [vmem:[#allocation2 + $0x14] sm:$0x3] 4286578559
        %s231 = scalar_lea.vmem [#allocation2], 216
        %232 = vst [vmem:[%s231] sm:$0xf] 4286578559
        %233 = vst [vmem:[%s231 + $0x4] sm:$0xf] 4286578559
        %234 = vst [vmem:[%s231 + $0x8] sm:$0x3] 4286578559
        %235 = vst [vmem:[%s231 + $0xc] sm:$0xf] 4286578559
        %236 = vst [vmem:[%s231 + $0x10] sm:$0xf] 4286578559
        %237 = vst [vmem:[%s231 + $0x14] sm:$0x3] 4286578559
        %s238 = scalar_lea.vmem [#allocation2], 24
        %239 = vst [vmem:[%s238] sm:$0x1] 4286578559
        %240 = vst [vmem:[%s238 + $0xc] sm:$0x1] 4286578559
        %241 = vst [vmem:[%s238 + $0x18] sm:$0x1] 4286578559
        %242 = vst [vmem:[%s238 + $0x24] sm:$0x1] 4286578559
        %243 = vst [vmem:[%s238 + $0x30] sm:$0x1] 4286578559
        %244 = vst [vmem:[%s238 + $0x3c] sm:$0x1] 4286578559
        %245 = vst [vmem:[%s238 + $0x48] sm:$0x1] 4286578559
        %246 = vst [vmem:[%s238 + $0x54] sm:$0x1] 4286578559
        %247 = vst [vmem:[%s238 + $0x60] sm:$0x1] 4286578559
        %248 = vst [vmem:[%s238 + $0x6c] sm:$0x1] 4286578559
        %249 = vst [vmem:[%s238 + $0x78] sm:$0x1] 4286578559
        %250 = vst [vmem:[%s238 + $0x84] sm:$0x1] 4286578559
        %251 = vst [vmem:[%s238 + $0x90] sm:$0x1] 4286578559
        %252 = vst [vmem:[%s238 + $0x9c] sm:$0x1] 4286578559
        %253 = vst [vmem:[%s238 + $0xa8] sm:$0x1] 4286578559
        %254 = vst [vmem:[%s238 + $0xb4] sm:$0x1] 4286578559
        %255 = vst [vmem:[%s238 + $0x8] sm:$0x2] 4286578559
        %256 = vst [vmem:[%s238 + $0x14] sm:$0x2] 4286578559
        %257 = vst [vmem:[%s238 + $0x20] sm:$0x2] 4286578559
        %258 = vst [vmem:[%s238 + $0x2c] sm:$0x2] 4286578559
        %259 = vst [vmem:[%s238 + $0x38] sm:$0x2] 4286578559
        %260 = vst [vmem:[%s238 + $0x44] sm:$0x2] 4286578559
        %261 = vst [vmem:[%s238 + $0x50] sm:$0x2] 4286578559
        %262 = vst [vmem:[%s238 + $0x5c] sm:$0x2] 4286578559
        %263 = vst [vmem:[%s238 + $0x68] sm:$0x2] 4286578559
        %264 = vst [vmem:[%s238 + $0x74] sm:$0x2] 4286578559
        %265 = vst [vmem:[%s238 + $0x80] sm:$0x2] 4286578559
        %266 = vst [vmem:[%s238 + $0x8c] sm:$0x2] 4286578559
        %267 = vst [vmem:[%s238 + $0x98] sm:$0x2] 4286578559
        %268 = vst [vmem:[%s238 + $0xa4] sm:$0x2] 4286578559
        %269 = vst [vmem:[%s238 + $0xb0] sm:$0x2] 4286578559
        %270 = vst [vmem:[%s238 + $0xbc] sm:$0x2] 4286578559
        %v271 = vld [vmem:[%s222] sm:$0xf]
        %v272 = vld [vmem:[%s222 + $0x4] sm:$0xf]
        %v273 = vld [vmem:[%s222 + $0x8] sm:$0xf]
        %v274 = vld [vmem:[%s222 + $0xc] sm:$0xf]
        %v275 = vld [vmem:[%s222 + $0x10] sm:$0xf]
        %v276 = vld [vmem:[%s222 + $0x14] sm:$0xf]
        %v277 = vld [vmem:[%s222 + $0x18] sm:$0xf]
        %v278 = vld [vmem:[%s222 + $0x1c] sm:$0xf]
        %v279 = vld [vmem:[%s222 + $0x20] sm:$0xf]
        %v280 = vld [vmem:[%s222 + $0x24] sm:$0xf]
        %v281 = vld [vmem:[%s222 + $0x28] sm:$0xf]
        %v282 = vld [vmem:[%s222 + $0x2c] sm:$0xf]
        %v283 = vld [vmem:[%s222 + $0x30] sm:$0xf]
        %v284 = vld [vmem:[%s222 + $0x34] sm:$0xf]
        %v285 = vld [vmem:[%s222 + $0x38] sm:$0xf]
        %v286 = vld [vmem:[%s222 + $0x3c] sm:$0xf]
        %v287 = vld [vmem:[%s222 + $0x40] sm:$0xf]
        %v288 = vld [vmem:[%s222 + $0x44] sm:$0xf]
        %v289 = vld [vmem:[%s222 + $0x48] sm:$0xf]
        %v290 = vld [vmem:[%s222 + $0x4c] sm:$0xf]
        %v291 = vld [vmem:[%s222 + $0x50] sm:$0xf]
        %v292 = vld [vmem:[%s222 + $0x54] sm:$0xf]
        %v293 = vld [vmem:[%s222 + $0x58] sm:$0xf]
        %v294 = vld [vmem:[%s222 + $0x5c] sm:$0xf]
        %v295 = vld [vmem:[%s222 + $0x60] sm:$0xf]
        %v296 = vld [vmem:[%s222 + $0x64] sm:$0xf]
        %v297 = vld [vmem:[%s222 + $0x68] sm:$0xf]
        %v298 = vld [vmem:[%s222 + $0x6c] sm:$0xf]
        %v299 = vld [vmem:[%s222 + $0x70] sm:$0xf]
        %v300 = vld [vmem:[%s222 + $0x74] sm:$0xf]
        %v301 = vld [vmem:[%s222 + $0x78] sm:$0xf]
        %v302 = vld [vmem:[%s222 + $0x7c] sm:$0xf]
        %v303 = vld [vmem:[%s1] sm:$0x3]
        %v304 = vld [vmem:[%s2] sm:$0x1]
        %v306 = vlaneseq
        %v307 = vshrl.u32 %v306, 7
        %v308 = vsub.s32 0, %v307
        %v309 = vrot.slane %v304, %v308
        %v343 = vunpack.c.l.b16 %v271
        %v344 = vunpack.c.l.b16 %v272
        %v345 = vunpack.c.l.b16 %v273
        %v346 = vunpack.c.l.b16 %v274
        %v347 = vunpack.c.l.b16 %v275
        %v348 = vunpack.c.l.b16 %v276
        %v349 = vunpack.c.l.b16 %v277
        %v350 = vunpack.c.l.b16 %v278
        %v351 = vunpack.c.l.b16 %v279
        %v352 = vunpack.c.l.b16 %v280
        %v353 = vunpack.c.l.b16 %v281
        %v354 = vunpack.c.l.b16 %v282
        %v355 = vunpack.c.l.b16 %v283
        %v356 = vunpack.c.l.b16 %v284
        %v357 = vunpack.c.l.b16 %v285
        %v358 = vunpack.c.l.b16 %v286
        %v359 = vunpack.c.l.b16 %v287
        %v360 = vunpack.c.l.b16 %v288
        %v361 = vunpack.c.l.b16 %v289
        %v362 = vunpack.c.l.b16 %v290
        %v363 = vunpack.c.l.b16 %v291
        %v364 = vunpack.c.l.b16 %v292
        %v365 = vunpack.c.l.b16 %v293
        %v366 = vunpack.c.l.b16 %v294
        %v367 = vunpack.c.l.b16 %v295
        %v368 = vunpack.c.l.b16 %v296
        %v369 = vunpack.c.l.b16 %v297
        %v370 = vunpack.c.l.b16 %v298
        %v371 = vunpack.c.l.b16 %v299
        %v372 = vunpack.c.l.b16 %v300
        %v373 = vunpack.c.l.b16 %v301
        %v374 = vunpack.c.l.b16 %v302
        %v375 = vpack.c.b16 %v344, %v343
        %v376 = vpack.c.b16 %v346, %v345
        %v377 = vpack.c.b16 %v348, %v347
        %v378 = vpack.c.b16 %v350, %v349
        %v379 = vpack.c.b16 %v352, %v351
        %v380 = vpack.c.b16 %v354, %v353
        %v381 = vpack.c.b16 %v356, %v355
        %v382 = vpack.c.b16 %v358, %v357
        %v383 = vpack.c.b16 %v360, %v359
        %v384 = vpack.c.b16 %v362, %v361
        %v385 = vpack.c.b16 %v364, %v363
        %v386 = vpack.c.b16 %v366, %v365
        %v387 = vpack.c.b16 %v368, %v367
        %v388 = vpack.c.b16 %v370, %v369
        %v389 = vpack.c.b16 %v372, %v371
        %v390 = vpack.c.b16 %v374, %v373
        %vm391 = vcmask 31744
        %v393 = vsel %vm391, %v375, 0
        %v396 = vsel %vm391, %v376, 0
        %v399 = vsel %vm391, %v377, 0
        %v402 = vsel %vm391, %v378, 0
        %v405 = vsel %vm391, %v379, 0
        %v408 = vsel %vm391, %v380, 0
        %v411 = vsel %vm391, %v381, 0
        %v414 = vsel %vm391, %v382, 0
        %v417 = vsel %vm391, %v383, 0
        %v420 = vsel %vm391, %v384, 0
        %v423 = vsel %vm391, %v385, 0
        %v426 = vsel %vm391, %v386, 0
        %v429 = vsel %vm391, %v387, 0
        %v432 = vsel %vm391, %v388, 0
        %v435 = vsel %vm391, %v389, 0
        %v438 = vsel %vm391, %v390, 0
        %vm440 = vcmask 1041408
        %v442 = vsel %vm440, %v303, 0
        %444 = vmatprep.subr.bf16.mxu0 0
        %445 = vmatpush1.bf16.msra.mxu0 0
        %446 = vmatprep.subr.bf16.mxu0 0
        %447 = vmatpush1.bf16.msra.mxu0 0
        %448 = vmatprep.subr.bf16.mxu0 0
        %449 = vmatpush1.bf16.msra.mxu0 0
        %450 = vmatprep.subr.bf16.mxu0 0
        %451 = vmatpush1.bf16.msra.mxu0 0
        %452 = vmatprep.subr.bf16.mxu0 0
        %453 = vmatpush1.bf16.msra.mxu0 0
        %454 = vmatprep.subr.bf16.mxu0 0
        %455 = vmatpush1.bf16.msra.mxu0 0
        %456 = vmatprep.subr.bf16.mxu0 0
        %457 = vmatpush1.bf16.msra.mxu0 0
        %458 = vmatprep.subr.bf16.mxu0 0
        %459 = vmatpush1.bf16.msra.mxu0 %v442
        %460 = vmatprep.subr.bf16.mxu0 0
        %461 = vmatpush2.bf16.msra.mxu0 0
        %462 = vmatprep.subr.bf16.mxu0 0
        %463 = vmatpush2.bf16.msra.mxu0 0
        %464 = vmatprep.subr.bf16.mxu0 0
        %465 = vmatpush2.bf16.msra.mxu0 0
        %466 = vmatprep.subr.bf16.mxu0 0
        %467 = vmatpush2.bf16.msra.mxu0 0
        %468 = vmatprep.subr.bf16.mxu0 0
        %469 = vmatpush2.bf16.msra.mxu0 0
        %470 = vmatprep.subr.bf16.mxu0 0
        %471 = vmatpush2.bf16.msra.mxu0 0
        %472 = vmatprep.subr.bf16.mxu0 0
        %473 = vmatpush2.bf16.msra.mxu0 0
        %474 = vmatprep.subr.bf16.mxu0 0
        %475 = vmatpush2.bf16.msra.mxu0 0
        %476 = vmatprep.mubr.bf16.mxu0 0
        %477 = vmatmul.mubr.bf16.gmra.mxu0 %v393
        %v478 = vpop.f32.mrf.mxu0
        %v479 = vadd.f32 %v309, %v478
        %v480 = vpop.f32.mrf.mxu0
        %v481 = vpop.f32.mrf.mxu0
        %v482 = vadd.f32 %v309, %v481
        %v483 = vpop.f32.mrf.mxu0
        %484 = vmatprep.mubr.bf16.mxu0 0
        %485 = vmatmul.mubr.bf16.gmra.mxu0 %v396
        %v486 = vpop.f32.mrf.mxu0
        %v487 = vadd.f32 %v309, %v486
        %v488 = vpop.f32.mrf.mxu0
        %v489 = vpop.f32.mrf.mxu0
        %v490 = vadd.f32 %v309, %v489
        %v491 = vpop.f32.mrf.mxu0
        %492 = vmatprep.mubr.bf16.mxu0 0
        %493 = vmatmul.mubr.bf16.gmra.mxu0 %v399
        %v494 = vpop.f32.mrf.mxu0
        %v495 = vadd.f32 %v309, %v494
        %v496 = vpop.f32.mrf.mxu0
        %v497 = vpop.f32.mrf.mxu0
        %v498 = vadd.f32 %v309, %v497
        %v499 = vpop.f32.mrf.mxu0
        %500 = vmatprep.mubr.bf16.mxu0 0
        %501 = vmatmul.mubr.bf16.gmra.mxu0 %v402
        %v502 = vpop.f32.mrf.mxu0
        %v503 = vadd.f32 %v309, %v502
        %v504 = vpop.f32.mrf.mxu0
        %v505 = vpop.f32.mrf.mxu0
        %v506 = vadd.f32 %v309, %v505
        %v507 = vpop.f32.mrf.mxu0
        %508 = vmatprep.mubr.bf16.mxu0 0
        %509 = vmatmul.mubr.bf16.gmra.mxu0 %v405
        %v510 = vpop.f32.mrf.mxu0
        %v511 = vadd.f32 %v309, %v510
        %v512 = vpop.f32.mrf.mxu0
        %v513 = vpop.f32.mrf.mxu0
        %v514 = vadd.f32 %v309, %v513
        %v515 = vpop.f32.mrf.mxu0
        %516 = vmatprep.mubr.bf16.mxu0 0
        %517 = vmatmul.mubr.bf16.gmra.mxu0 %v408
        %v518 = vpop.f32.mrf.mxu0
        %v519 = vadd.f32 %v309, %v518
        %v520 = vpop.f32.mrf.mxu0
        %v521 = vpop.f32.mrf.mxu0
        %v522 = vadd.f32 %v309, %v521
        %v523 = vpop.f32.mrf.mxu0
        %524 = vmatprep.mubr.bf16.mxu0 0
        %525 = vmatmul.mubr.bf16.gmra.mxu0 %v411
        %v526 = vpop.f32.mrf.mxu0
        %v527 = vadd.f32 %v309, %v526
        %v528 = vpop.f32.mrf.mxu0
        %v529 = vpop.f32.mrf.mxu0
        %v530 = vadd.f32 %v309, %v529
        %v531 = vpop.f32.mrf.mxu0
        %532 = vmatprep.mubr.bf16.mxu0 0
        %533 = vmatmul.mubr.bf16.gmra.mxu0 %v414
        %v534 = vpop.f32.mrf.mxu0
        %v535 = vadd.f32 %v309, %v534
        %v536 = vpop.f32.mrf.mxu0
        %v537 = vpop.f32.mrf.mxu0
        %v538 = vadd.f32 %v309, %v537
        %v539 = vpop.f32.mrf.mxu0
        %540 = vmatprep.mubr.bf16.mxu0 0
        %541 = vmatmul.mubr.bf16.gmra.mxu0 %v417
        %v542 = vpop.f32.mrf.mxu0
        %v543 = vadd.f32 %v309, %v542
        %v544 = vpop.f32.mrf.mxu0
        %v545 = vpop.f32.mrf.mxu0
        %v546 = vadd.f32 %v309, %v545
        %v547 = vpop.f32.mrf.mxu0
        %548 = vmatprep.mubr.bf16.mxu0 0
        %549 = vmatmul.mubr.bf16.gmra.mxu0 %v420
        %v550 = vpop.f32.mrf.mxu0
        %v551 = vadd.f32 %v309, %v550
        %v552 = vpop.f32.mrf.mxu0
        %v553 = vpop.f32.mrf.mxu0
        %v554 = vadd.f32 %v309, %v553
        %v555 = vpop.f32.mrf.mxu0
        %556 = vmatprep.mubr.bf16.mxu0 0
        %557 = vmatmul.mubr.bf16.gmra.mxu0 %v423
        %v558 = vpop.f32.mrf.mxu0
        %v559 = vadd.f32 %v309, %v558
        %v560 = vpop.f32.mrf.mxu0
        %v561 = vpop.f32.mrf.mxu0
        %v562 = vadd.f32 %v309, %v561
        %v563 = vpop.f32.mrf.mxu0
        %564 = vmatprep.mubr.bf16.mxu0 0
        %565 = vmatmul.mubr.bf16.gmra.mxu0 %v426
        %v566 = vpop.f32.mrf.mxu0
        %v567 = vadd.f32 %v309, %v566
        %v568 = vpop.f32.mrf.mxu0
        %v569 = vpop.f32.mrf.mxu0
        %v570 = vadd.f32 %v309, %v569
        %v571 = vpop.f32.mrf.mxu0
        %572 = vmatprep.mubr.bf16.mxu0 0
        %573 = vmatmul.mubr.bf16.gmra.mxu0 %v429
        %v574 = vpop.f32.mrf.mxu0
        %v575 = vadd.f32 %v309, %v574
        %v576 = vpop.f32.mrf.mxu0
        %v577 = vpop.f32.mrf.mxu0
        %v578 = vadd.f32 %v309, %v577
        %v579 = vpop.f32.mrf.mxu0
        %580 = vmatprep.mubr.bf16.mxu0 0
        %581 = vmatmul.mubr.bf16.gmra.mxu0 %v432
        %v582 = vpop.f32.mrf.mxu0
        %v583 = vadd.f32 %v309, %v582
        %v584 = vpop.f32.mrf.mxu0
        %v585 = vpop.f32.mrf.mxu0
        %v586 = vadd.f32 %v309, %v585
        %v587 = vpop.f32.mrf.mxu0
        %588 = vmatprep.mubr.bf16.mxu0 0
        %589 = vmatmul.mubr.bf16.gmra.mxu0 %v435
        %v590 = vpop.f32.mrf.mxu0
        %v591 = vadd.f32 %v309, %v590
        %v592 = vpop.f32.mrf.mxu0
        %v593 = vpop.f32.mrf.mxu0
        %v594 = vadd.f32 %v309, %v593
        %v595 = vpop.f32.mrf.mxu0
        %596 = vmatprep.mubr.bf16.mxu0 0
        %597 = vmatmul.mubr.bf16.gmra.mxu0 %v438
        %v598 = vpop.f32.mrf.mxu0
        %v599 = vadd.f32 %v309, %v598
        %v600 = vpop.f32.mrf.mxu0
        %v601 = vpop.f32.mrf.mxu0
        %v602 = vadd.f32 %v309, %v601
        %v603 = vpop.f32.mrf.mxu0
        %604 = vdwg.mxu0
        %v605 = vmul.f32 %v479, 0.5
        %v606 = vmul.f32 %v482, 0.5
        %v607 = vmul.f32 %v487, 0.5
        %v608 = vmul.f32 %v490, 0.5
        %v609 = vmul.f32 %v495, 0.5
        %v610 = vmul.f32 %v498, 0.5
        %v611 = vmul.f32 %v503, 0.5
        %v612 = vmul.f32 %v506, 0.5
        %v613 = vmul.f32 %v511, 0.5
        %v614 = vmul.f32 %v514, 0.5
        %v615 = vmul.f32 %v519, 0.5
        %v616 = vmul.f32 %v522, 0.5
        %v617 = vmul.f32 %v527, 0.5
        %v618 = vmul.f32 %v530, 0.5
        %v619 = vmul.f32 %v535, 0.5
        %v620 = vmul.f32 %v538, 0.5
        %v621 = vmul.f32 %v543, 0.5
        %v622 = vmul.f32 %v546, 0.5
        %v623 = vmul.f32 %v551, 0.5
        %v624 = vmul.f32 %v554, 0.5
        %v625 = vmul.f32 %v559, 0.5
        %v626 = vmul.f32 %v562, 0.5
        %v627 = vmul.f32 %v567, 0.5
        %v628 = vmul.f32 %v570, 0.5
        %v629 = vmul.f32 %v575, 0.5
        %v630 = vmul.f32 %v578, 0.5
        %v631 = vmul.f32 %v583, 0.5
        %v632 = vmul.f32 %v586, 0.5
        %v633 = vmul.f32 %v591, 0.5
        %v634 = vmul.f32 %v594, 0.5
        %v635 = vmul.f32 %v599, 0.5
        %v636 = vmul.f32 %v602, 0.5
        %v637 = vtanh.pop %v605
        %v638 = vtanh.pop %v606
        %v639 = vtanh.pop %v607
        %v640 = vtanh.pop %v608
        %v641 = vtanh.pop %v609
        %v642 = vtanh.pop %v610
        %v643 = vtanh.pop %v611
        %v644 = vtanh.pop %v612
        %v645 = vtanh.pop %v613
        %v646 = vtanh.pop %v614
        %v647 = vtanh.pop %v615
        %v648 = vtanh.pop %v616
        %v649 = vtanh.pop %v617
        %v650 = vtanh.pop %v618
        %v651 = vtanh.pop %v619
        %v652 = vtanh.pop %v620
        %v653 = vtanh.pop %v621
        %v654 = vtanh.pop %v622
        %v655 = vtanh.pop %v623
        %v656 = vtanh.pop %v624
        %v657 = vtanh.pop %v625
        %v658 = vtanh.pop %v626
        %v659 = vtanh.pop %v627
        %v660 = vtanh.pop %v628
        %v661 = vtanh.pop %v629
        %v662 = vtanh.pop %v630
        %v663 = vtanh.pop %v631
        %v664 = vtanh.pop %v632
        %v665 = vtanh.pop %v633
        %v666 = vtanh.pop %v634
        %v667 = vtanh.pop %v635
        %v668 = vtanh.pop %v636
        %v669 = vadd.f32 %v637, 1.0
        %v670 = vadd.f32 %v638, 1.0
        %v671 = vadd.f32 %v639, 1.0
        %v672 = vadd.f32 %v640, 1.0
        %v673 = vadd.f32 %v641, 1.0
        %v674 = vadd.f32 %v642, 1.0
        %v675 = vadd.f32 %v643, 1.0
        %v676 = vadd.f32 %v644, 1.0
        %v677 = vadd.f32 %v645, 1.0
        %v678 = vadd.f32 %v646, 1.0
        %v679 = vadd.f32 %v647, 1.0
        %v680 = vadd.f32 %v648, 1.0
        %v681 = vadd.f32 %v649, 1.0
        %v682 = vadd.f32 %v650, 1.0
        %v683 = vadd.f32 %v651, 1.0
        %v684 = vadd.f32 %v652, 1.0
        %v685 = vadd.f32 %v653, 1.0
        %v686 = vadd.f32 %v654, 1.0
        %v687 = vadd.f32 %v655, 1.0
        %v688 = vadd.f32 %v656, 1.0
        %v689 = vadd.f32 %v657, 1.0
        %v690 = vadd.f32 %v658, 1.0
        %v691 = vadd.f32 %v659, 1.0
        %v692 = vadd.f32 %v660, 1.0
        %v693 = vadd.f32 %v661, 1.0
        %v694 = vadd.f32 %v662, 1.0
        %v695 = vadd.f32 %v663, 1.0
        %v696 = vadd.f32 %v664, 1.0
        %v697 = vadd.f32 %v665, 1.0
        %v698 = vadd.f32 %v666, 1.0
        %v699 = vadd.f32 %v667, 1.0
        %v700 = vadd.f32 %v668, 1.0
        %v701 = vmul.f32 %v669, 0.5
        %v702 = vmul.f32 %v670, 0.5
        %v703 = vmul.f32 %v671, 0.5
        %v704 = vmul.f32 %v672, 0.5
        %v705 = vmul.f32 %v673, 0.5
        %v706 = vmul.f32 %v674, 0.5
        %v707 = vmul.f32 %v675, 0.5
        %v708 = vmul.f32 %v676, 0.5
        %v709 = vmul.f32 %v677, 0.5
        %v710 = vmul.f32 %v678, 0.5
        %v711 = vmul.f32 %v679, 0.5
        %v712 = vmul.f32 %v680, 0.5
        %v713 = vmul.f32 %v681, 0.5
        %v714 = vmul.f32 %v682, 0.5
        %v715 = vmul.f32 %v683, 0.5
        %v716 = vmul.f32 %v684, 0.5
        %v717 = vmul.f32 %v685, 0.5
        %v718 = vmul.f32 %v686, 0.5
        %v719 = vmul.f32 %v687, 0.5
        %v720 = vmul.f32 %v688, 0.5
        %v721 = vmul.f32 %v689, 0.5
        %v722 = vmul.f32 %v690, 0.5
        %v723 = vmul.f32 %v691, 0.5
        %v724 = vmul.f32 %v692, 0.5
        %v725 = vmul.f32 %v693, 0.5
        %v726 = vmul.f32 %v694, 0.5
        %v727 = vmul.f32 %v695, 0.5
        %v728 = vmul.f32 %v696, 0.5
        %v729 = vmul.f32 %v697, 0.5
        %v730 = vmul.f32 %v698, 0.5
        %v731 = vmul.f32 %v699, 0.5
        %v732 = vmul.f32 %v700, 0.5
        %v733 = vmul.f32 %v479, %v701
        %v734 = vmul.f32 %v482, %v702
        %v735 = vmul.f32 %v487, %v703
        %v736 = vmul.f32 %v490, %v704
        %v737 = vmul.f32 %v495, %v705
        %v738 = vmul.f32 %v498, %v706
        %v739 = vmul.f32 %v503, %v707
        %v740 = vmul.f32 %v506, %v708
        %v741 = vmul.f32 %v511, %v709
        %v742 = vmul.f32 %v514, %v710
        %v743 = vmul.f32 %v519, %v711
        %v744 = vmul.f32 %v522, %v712
        %v745 = vmul.f32 %v527, %v713
        %v746 = vmul.f32 %v530, %v714
        %v747 = vmul.f32 %v535, %v715
        %v748 = vmul.f32 %v538, %v716
        %v749 = vmul.f32 %v543, %v717
        %v750 = vmul.f32 %v546, %v718
        %v751 = vmul.f32 %v551, %v719
        %v752 = vmul.f32 %v554, %v720
        %v753 = vmul.f32 %v559, %v721
        %v754 = vmul.f32 %v562, %v722
        %v755 = vmul.f32 %v567, %v723
        %v756 = vmul.f32 %v570, %v724
        %v757 = vmul.f32 %v575, %v725
        %v758 = vmul.f32 %v578, %v726
        %v759 = vmul.f32 %v583, %v727
        %v760 = vmul.f32 %v586, %v728
        %v761 = vmul.f32 %v591, %v729
        %v762 = vmul.f32 %v594, %v730
        %v763 = vmul.f32 %v599, %v731
        %v764 = vmul.f32 %v602, %v732
        %v765 = vpack.c.bf16 %v734, %v733
        %v766 = vpack.c.bf16 %v736, %v735
        %v767 = vpack.c.bf16 %v738, %v737
        %v768 = vpack.c.bf16 %v740, %v739
        %v769 = vpack.c.bf16 %v742, %v741
        %v770 = vpack.c.bf16 %v744, %v743
        %v771 = vpack.c.bf16 %v746, %v745
        %v772 = vpack.c.bf16 %v748, %v747
        %v773 = vpack.c.bf16 %v750, %v749
        %v774 = vpack.c.bf16 %v752, %v751
        %v775 = vpack.c.bf16 %v754, %v753
        %v776 = vpack.c.bf16 %v756, %v755
        %v777 = vpack.c.bf16 %v758, %v757
        %v778 = vpack.c.bf16 %v760, %v759
        %v779 = vpack.c.bf16 %v762, %v761
        %v780 = vpack.c.bf16 %v764, %v763
        %v797 = vunpack.c.l.b16 %v765
        %v798 = vunpack.c.h.b16 %v765
        %v799 = vunpack.c.l.b16 %v766
        %v800 = vunpack.c.h.b16 %v766
        %v801 = vunpack.c.l.b16 %v767
        %v802 = vunpack.c.h.b16 %v767
        %v803 = vunpack.c.l.b16 %v768
        %v804 = vunpack.c.h.b16 %v768
        %v805 = vunpack.c.l.b16 %v769
        %v806 = vunpack.c.h.b16 %v769
        %v807 = vunpack.c.l.b16 %v770
        %v808 = vunpack.c.h.b16 %v770
        %v809 = vunpack.c.l.b16 %v771
        %v810 = vunpack.c.h.b16 %v771
        %v811 = vunpack.c.l.b16 %v772
        %v812 = vunpack.c.h.b16 %v772
        %v813 = vunpack.c.l.b16 %v773
        %v814 = vunpack.c.h.b16 %v773
        %v815 = vunpack.c.l.b16 %v774
        %v816 = vunpack.c.h.b16 %v774
        %v817 = vunpack.c.l.b16 %v775
        %v818 = vunpack.c.h.b16 %v775
        %v819 = vunpack.c.l.b16 %v776
        %v820 = vunpack.c.h.b16 %v776
        %v821 = vunpack.c.l.b16 %v777
        %v822 = vunpack.c.h.b16 %v777
        %v823 = vunpack.c.l.b16 %v778
        %v824 = vunpack.c.h.b16 %v778
        %v825 = vunpack.c.l.b16 %v779
        %v826 = vunpack.c.h.b16 %v779
        %v827 = vunpack.c.l.b16 %v780
        %v828 = vunpack.c.h.b16 %v780
        %v829 = vpack.c.b16 %v797, %v797
        %v830 = vpack.c.b16 %v798, %v798
        %v831 = vpack.c.b16 %v799, %v799
        %v832 = vpack.c.b16 %v800, %v800
        %v833 = vpack.c.b16 %v801, %v801
        %v834 = vpack.c.b16 %v802, %v802
        %v835 = vpack.c.b16 %v803, %v803
        %v836 = vpack.c.b16 %v804, %v804
        %v837 = vpack.c.b16 %v805, %v805
        %v838 = vpack.c.b16 %v806, %v806
        %v839 = vpack.c.b16 %v807, %v807
        %v840 = vpack.c.b16 %v808, %v808
        %v841 = vpack.c.b16 %v809, %v809
        %v842 = vpack.c.b16 %v810, %v810
        %v843 = vpack.c.b16 %v811, %v811
        %v844 = vpack.c.b16 %v812, %v812
        %v845 = vpack.c.b16 %v813, %v813
        %v846 = vpack.c.b16 %v814, %v814
        %v847 = vpack.c.b16 %v815, %v815
        %v848 = vpack.c.b16 %v816, %v816
        %v849 = vpack.c.b16 %v817, %v817
        %v850 = vpack.c.b16 %v818, %v818
        %v851 = vpack.c.b16 %v819, %v819
        %v852 = vpack.c.b16 %v820, %v820
        %v853 = vpack.c.b16 %v821, %v821
        %v854 = vpack.c.b16 %v822, %v822
        %v855 = vpack.c.b16 %v823, %v823
        %v856 = vpack.c.b16 %v824, %v824
        %v857 = vpack.c.b16 %v825, %v825
        %v858 = vpack.c.b16 %v826, %v826
        %v859 = vpack.c.b16 %v827, %v827
        %v860 = vpack.c.b16 %v828, %v828
        %893 = vst [vmem:[#allocation3] sm:$0xf] %v829
        %894 = vst [vmem:[#allocation3 + $0x10] sm:$0xf] %v830
        %895 = vst [vmem:[#allocation3 + $0x20] sm:$0xf] %v831
        %896 = vst [vmem:[#allocation3 + $0x30] sm:$0xf] %v832
        %897 = vst [vmem:[#allocation3 + $0x40] sm:$0xf] %v833
        %898 = vst [vmem:[#allocation3 + $0x50] sm:$0xf] %v834
        %899 = vst [vmem:[#allocation3 + $0x60] sm:$0xf] %v835
        %900 = vst [vmem:[#allocation3 + $0x70] sm:$0xf] %v836
        %901 = vst [vmem:[#allocation3 + $0x80] sm:$0xf] %v837
        %902 = vst [vmem:[#allocation3 + $0x90] sm:$0xf] %v838
        %903 = vst [vmem:[#allocation3 + $0xa0] sm:$0xf] %v839
        %904 = vst [vmem:[#allocation3 + $0xb0] sm:$0xf] %v840
        %905 = vst [vmem:[#allocation3 + $0xc0] sm:$0xf] %v841
        %906 = vst [vmem:[#allocation3 + $0xd0] sm:$0xf] %v842
        %907 = vst [vmem:[#allocation3 + $0xe0] sm:$0xf] %v843
        %908 = vst [vmem:[#allocation3 + $0xf0] sm:$0xf] %v844
        %909 = vst [vmem:[#allocation3 + $0x100] sm:$0xf] %v845
        %910 = vst [vmem:[#allocation3 + $0x110] sm:$0xf] %v846
        %911 = vst [vmem:[#allocation3 + $0x120] sm:$0xf] %v847
        %912 = vst [vmem:[#allocation3 + $0x130] sm:$0xf] %v848
        %913 = vst [vmem:[#allocation3 + $0x140] sm:$0xf] %v849
        %914 = vst [vmem:[#allocation3 + $0x150] sm:$0xf] %v850
        %915 = vst [vmem:[#allocation3 + $0x160] sm:$0xf] %v851
        %916 = vst [vmem:[#allocation3 + $0x170] sm:$0xf] %v852
        %917 = vst [vmem:[#allocation3 + $0x180] sm:$0xf] %v853
        %918 = vst [vmem:[#allocation3 + $0x190] sm:$0xf] %v854
        %919 = vst [vmem:[#allocation3 + $0x1a0] sm:$0xf] %v855
        %920 = vst [vmem:[#allocation3 + $0x1b0] sm:$0xf] %v856
        %921 = vst [vmem:[#allocation3 + $0x1c0] sm:$0xf] %v857
        %922 = vst [vmem:[#allocation3 + $0x1d0] sm:$0xf] %v858
        %923 = vst [vmem:[#allocation3 + $0x1e0] sm:$0xf] %v859
        %924 = vst [vmem:[#allocation3 + $0x1f0] sm:$0xf] %v860
        %vm925 = vcmask 1040384
        %vm926 = vcmask 1044484
        %vm927 = vmor %vm925, %vm926
        %v928 = vrot.slane %v829, 7
        %v929 = vrot.slane %v928, 4
        %v930 = vrot.slane %v830, 7
        %v931 = vsel %vm927, %v929, %v930
        %v932 = vrot.slane %v930, 4
        %v933 = vrot.slane %v831, 7
        %v934 = vrot.slane %v933, 4
        %v935 = vrot.slane %v832, 7
        %v936 = vsel %vm927, %v934, %v935
        %v937 = vrot.slane %v935, 4
        %v938 = vrot.slane %v833, 7
        %v939 = vrot.slane %v938, 4
        %v940 = vrot.slane %v834, 7
        %v941 = vsel %vm927, %v939, %v940
        %v942 = vrot.slane %v940, 4
        %v943 = vrot.slane %v835, 7
        %v944 = vrot.slane %v943, 4
        %v945 = vrot.slane %v836, 7
        %v946 = vsel %vm927, %v944, %v945
        %v947 = vrot.slane %v945, 4
        %v948 = vrot.slane %v837, 7
        %v949 = vrot.slane %v948, 4
        %v950 = vrot.slane %v838, 7
        %v951 = vsel %vm927, %v949, %v950
        %v952 = vrot.slane %v950, 4
        %v953 = vrot.slane %v839, 7
        %v954 = vrot.slane %v953, 4
        %v955 = vrot.slane %v840, 7
        %v956 = vsel %vm927, %v954, %v955
        %v957 = vrot.slane %v955, 4
        %v958 = vrot.slane %v841, 7
        %v959 = vrot.slane %v958, 4
        %v960 = vrot.slane %v842, 7
        %v961 = vsel %vm927, %v959, %v960
        %v962 = vrot.slane %v960, 4
        %v963 = vrot.slane %v843, 7
        %v964 = vrot.slane %v963, 4
        %v965 = vrot.slane %v844, 7
        %v966 = vsel %vm927, %v964, %v965
        %v967 = vrot.slane %v965, 4
        %v968 = vrot.slane %v845, 7
        %v969 = vrot.slane %v968, 4
        %v970 = vrot.slane %v846, 7
        %v971 = vsel %vm927, %v969, %v970
        %v972 = vrot.slane %v970, 4
        %v973 = vrot.slane %v847, 7
        %v974 = vrot.slane %v973, 4
        %v975 = vrot.slane %v848, 7
        %v976 = vsel %vm927, %v974, %v975
        %v977 = vrot.slane %v975, 4
        %v978 = vrot.slane %v849, 7
        %v979 = vrot.slane %v978, 4
        %v980 = vrot.slane %v850, 7
        %v981 = vsel %vm927, %v979, %v980
        %v982 = vrot.slane %v980, 4
        %v983 = vrot.slane %v851, 7
        %v984 = vrot.slane %v983, 4
        %v985 = vrot.slane %v852, 7
        %v986 = vsel %vm927, %v984, %v985
        %v987 = vrot.slane %v985, 4
        %v988 = vrot.slane %v853, 7
        %v989 = vrot.slane %v988, 4
        %v990 = vrot.slane %v854, 7
        %v991 = vsel %vm927, %v989, %v990
        %v992 = vrot.slane %v990, 4
        %v993 = vrot.slane %v855, 7
        %v994 = vrot.slane %v993, 4
        %v995 = vrot.slane %v856, 7
        %v996 = vsel %vm927, %v994, %v995
        %v997 = vrot.slane %v995, 4
        %v998 = vrot.slane %v857, 7
        %v999 = vrot.slane %v998, 4
        %v1000 = vrot.slane %v858, 7
        %v1001 = vsel %vm927, %v999, %v1000
        %v1002 = vrot.slane %v1000, 4
        %v1003 = vrot.slane %v859, 7
        %v1004 = vrot.slane %v1003, 4
        %v1005 = vrot.slane %v860, 7
        %v1006 = vsel %vm927, %v1004, %v1005
        %v1007 = vrot.slane %v1005, 4
        %1056 = vst [vmem:[%s238] sm:$0xe] %v928
        %1057 = vst [vmem:[%s238 + $0x4] sm:$0xf] %v931
        %1058 = vst [vmem:[%s238 + $0x8] sm:$0x1] %v932
        %1059 = vst [vmem:[%s238 + $0xc] sm:$0xe] %v933
        %1060 = vst [vmem:[%s238 + $0x10] sm:$0xf] %v936
        %1061 = vst [vmem:[%s238 + $0x14] sm:$0x1] %v937
        %1062 = vst [vmem:[%s238 + $0x18] sm:$0xe] %v938
        %1063 = vst [vmem:[%s238 + $0x1c] sm:$0xf] %v941
        %1064 = vst [vmem:[%s238 + $0x20] sm:$0x1] %v942
        %1065 = vst [vmem:[%s238 + $0x24] sm:$0xe] %v943
        %1066 = vst [vmem:[%s238 + $0x28] sm:$0xf] %v946
        %1067 = vst [vmem:[%s238 + $0x2c] sm:$0x1] %v947
        %1068 = vst [vmem:[%s238 + $0x30] sm:$0xe] %v948
        %1069 = vst [vmem:[%s238 + $0x34] sm:$0xf] %v951
        %1070 = vst [vmem:[%s238 + $0x38] sm:$0x1] %v952
        %1071 = vst [vmem:[%s238 + $0x3c] sm:$0xe] %v953
        %1072 = vst [vmem:[%s238 + $0x40] sm:$0xf] %v956
        %1073 = vst [vmem:[%s238 + $0x44] sm:$0x1] %v957
        %1074 = vst [vmem:[%s238 + $0x48] sm:$0xe] %v958
        %1075 = vst [vmem:[%s238 + $0x4c] sm:$0xf] %v961
        %1076 = vst [vmem:[%s238 + $0x50] sm:$0x1] %v962
        %1077 = vst [vmem:[%s238 + $0x54] sm:$0xe] %v963
        %1078 = vst [vmem:[%s238 + $0x58] sm:$0xf] %v966
        %1079 = vst [vmem:[%s238 + $0x5c] sm:$0x1] %v967
        %1080 = vst [vmem:[%s238 + $0x60] sm:$0xe] %v968
        %1081 = vst [vmem:[%s238 + $0x64] sm:$0xf] %v971
        %1082 = vst [vmem:[%s238 + $0x68] sm:$0x1] %v972
        %1083 = vst [vmem:[%s238 + $0x6c] sm:$0xe] %v973
        %1084 = vst [vmem:[%s238 + $0x70] sm:$0xf] %v976
        %1085 = vst [vmem:[%s238 + $0x74] sm:$0x1] %v977
        %1086 = vst [vmem:[%s238 + $0x78] sm:$0xe] %v978
        %1087 = vst [vmem:[%s238 + $0x7c] sm:$0xf] %v981
        %1088 = vst [vmem:[%s238 + $0x80] sm:$0x1] %v982
        %1089 = vst [vmem:[%s238 + $0x84] sm:$0xe] %v983
        %1090 = vst [vmem:[%s238 + $0x88] sm:$0xf] %v986
        %1091 = vst [vmem:[%s238 + $0x8c] sm:$0x1] %v987
        %1092 = vst [vmem:[%s238 + $0x90] sm:$0xe] %v988
        %1093 = vst [vmem:[%s238 + $0x94] sm:$0xf] %v991
        %1094 = vst [vmem:[%s238 + $0x98] sm:$0x1] %v992
        %1095 = vst [vmem:[%s238 + $0x9c] sm:$0xe] %v993
        %1096 = vst [vmem:[%s238 + $0xa0] sm:$0xf] %v996
        %1097 = vst [vmem:[%s238 + $0xa4] sm:$0x1] %v997
        %1098 = vst [vmem:[%s238 + $0xa8] sm:$0xe] %v998
        %1099 = vst [vmem:[%s238 + $0xac] sm:$0xf] %v1001
        %1100 = vst [vmem:[%s238 + $0xb0] sm:$0x1] %v1002
        %1101 = vst [vmem:[%s238 + $0xb4] sm:$0xe] %v1003
        %1102 = vst [vmem:[%s238 + $0xb8] sm:$0xf] %v1006
        %1103 = vst [vmem:[%s238 + $0xbc] sm:$0x1] %v1007
        %v1104 = vld [vmem:[#allocation2] sm:$0xf]
        %v1105 = vld [vmem:[#allocation2 + $0x4] sm:$0xf]
        %v1106 = vld [vmem:[#allocation2 + $0xc] sm:$0xf]
        %v1107 = vld [vmem:[#allocation2 + $0x10] sm:$0xf]
        %v1108 = vld [vmem:[#allocation2 + $0x18] sm:$0xf]
        %v1109 = vld [vmem:[#allocation2 + $0x1c] sm:$0xf]
        %v1110 = vld [vmem:[#allocation2 + $0x24] sm:$0xf]
        %v1111 = vld [vmem:[#allocation2 + $0x28] sm:$0xf]
        %v1112 = vld [vmem:[#allocation2 + $0x30] sm:$0xf]
        %v1113 = vld [vmem:[#allocation2 + $0x34] sm:$0xf]
        %v1114 = vld [vmem:[#allocation2 + $0x3c] sm:$0xf]
        %v1115 = vld [vmem:[#allocation2 + $0x40] sm:$0xf]
        %v1116 = vld [vmem:[#allocation2 + $0x48] sm:$0xf]
        %v1117 = vld [vmem:[#allocation2 + $0x4c] sm:$0xf]
        %v1118 = vld [vmem:[#allocation2 + $0x54] sm:$0xf]
        %v1119 = vld [vmem:[#allocation2 + $0x58] sm:$0xf]
        %v1120 = vld [vmem:[#allocation2 + $0x60] sm:$0xf]
        %v1121 = vld [vmem:[#allocation2 + $0x64] sm:$0xf]
        %v1122 = vld [vmem:[#allocation2 + $0x6c] sm:$0xf]
        %v1123 = vld [vmem:[#allocation2 + $0x70] sm:$0xf]
        %v1124 = vld [vmem:[#allocation2 + $0x78] sm:$0xf]
        %v1125 = vld [vmem:[#allocation2 + $0x7c] sm:$0xf]
        %v1126 = vld [vmem:[#allocation2 + $0x84] sm:$0xf]
        %v1127 = vld [vmem:[#allocation2 + $0x88] sm:$0xf]
        %v1128 = vld [vmem:[#allocation2 + $0x90] sm:$0xf]
        %v1129 = vld [vmem:[#allocation2 + $0x94] sm:$0xf]
        %v1130 = vld [vmem:[#allocation2 + $0x9c] sm:$0xf]
        %v1131 = vld [vmem:[#allocation2 + $0xa0] sm:$0xf]
        %v1132 = vld [vmem:[#allocation2 + $0xa8] sm:$0xf]
        %v1133 = vld [vmem:[#allocation2 + $0xac] sm:$0xf]
        %v1134 = vld [vmem:[#allocation2 + $0xb4] sm:$0xf]
        %v1135 = vld [vmem:[#allocation2 + $0xb8] sm:$0xf]
        %v1136 = vld [vmem:[#allocation2 + $0xc0] sm:$0xf]
        %v1137 = vld [vmem:[#allocation2 + $0xc4] sm:$0xf]
        %v1138 = vld [vmem:[#allocation2 + $0xcc] sm:$0xf]
        %v1139 = vld [vmem:[#allocation2 + $0xd0] sm:$0xf]
        %v1140 = vld [vmem:[#allocation2 + $0xd8] sm:$0xf]
        %v1141 = vld [vmem:[#allocation2 + $0xdc] sm:$0xf]
        %v1142 = vld [vmem:[#allocation2 + $0xe4] sm:$0xf]
        %v1143 = vld [vmem:[#allocation2 + $0xe8] sm:$0xf]
        %v1144 = vld [vmem:[#allocation2 + $0x8] sm:$0x1]
        %v1145 = vld [vmem:[#allocation2 + $0x14] sm:$0x1]
        %v1146 = vld [vmem:[#allocation2 + $0x20] sm:$0x1]
        %v1147 = vld [vmem:[#allocation2 + $0x2c] sm:$0x1]
        %v1148 = vld [vmem:[#allocation2 + $0x38] sm:$0x1]
        %v1149 = vld [vmem:[#allocation2 + $0x44] sm:$0x1]
        %v1150 = vld [vmem:[#allocation2 + $0x50] sm:$0x1]
        %v1151 = vld [vmem:[#allocation2 + $0x5c] sm:$0x1]
        %v1152 = vld [vmem:[#allocation2 + $0x68] sm:$0x1]
        %v1153 = vld [vmem:[#allocation2 + $0x74] sm:$0x1]
        %v1154 = vld [vmem:[#allocation2 + $0x80] sm:$0x1]
        %v1155 = vld [vmem:[#allocation2 + $0x8c] sm:$0x1]
        %v1156 = vld [vmem:[#allocation2 + $0x98] sm:$0x1]
        %v1157 = vld [vmem:[#allocation2 + $0xa4] sm:$0x1]
        %v1158 = vld [vmem:[#allocation2 + $0xb0] sm:$0x1]
        %v1159 = vld [vmem:[#allocation2 + $0xbc] sm:$0x1]
        %v1160 = vld [vmem:[#allocation2 + $0xc8] sm:$0x1]
        %v1161 = vld [vmem:[#allocation2 + $0xd4] sm:$0x1]
        %v1162 = vld [vmem:[#allocation2 + $0xe0] sm:$0x1]
        %v1163 = vld [vmem:[#allocation2 + $0xec] sm:$0x1]
        %v1164 = vld [vmem:[#allocation2] sm:$0xe]
        %v1165 = vld [vmem:[#allocation2 + $0xc] sm:$0xe]
        %v1166 = vld [vmem:[#allocation2 + $0x18] sm:$0xe]
        %v1167 = vld [vmem:[#allocation2 + $0x24] sm:$0xe]
        %v1168 = vld [vmem:[#allocation2 + $0x30] sm:$0xe]
        %v1169 = vld [vmem:[#allocation2 + $0x3c] sm:$0xe]
        %v1170 = vld [vmem:[#allocation2 + $0x48] sm:$0xe]
        %v1171 = vld [vmem:[#allocation2 + $0x54] sm:$0xe]
        %v1172 = vld [vmem:[#allocation2 + $0x60] sm:$0xe]
        %v1173 = vld [vmem:[#allocation2 + $0x6c] sm:$0xe]
        %v1174 = vld [vmem:[#allocation2 + $0x78] sm:$0xe]
        %v1175 = vld [vmem:[#allocation2 + $0x84] sm:$0xe]
        %v1176 = vld [vmem:[#allocation2 + $0x90] sm:$0xe]
        %v1177 = vld [vmem:[#allocation2 + $0x9c] sm:$0xe]
        %v1178 = vld [vmem:[#allocation2 + $0xa8] sm:$0xe]
        %v1179 = vld [vmem:[#allocation2 + $0xb4] sm:$0xe]
        %v1180 = vld [vmem:[#allocation2 + $0xc0] sm:$0xe]
        %v1181 = vld [vmem:[#allocation2 + $0xcc] sm:$0xe]
        %v1182 = vld [vmem:[#allocation2 + $0xd8] sm:$0xe]
        %v1183 = vld [vmem:[#allocation2 + $0xe4] sm:$0xe]
        %v1184 = vld [vmem:[#allocation2 + $0x8] sm:$0x3]
        %v1185 = vld [vmem:[#allocation2 + $0x14] sm:$0x3]
        %v1186 = vld [vmem:[#allocation2 + $0x20] sm:$0x3]
        %v1187 = vld [vmem:[#allocation2 + $0x2c] sm:$0x3]
        %v1188 = vld [vmem:[#allocation2 + $0x38] sm:$0x3]
        %v1189 = vld [vmem:[#allocation2 + $0x44] sm:$0x3]
        %v1190 = vld [vmem:[#allocation2 + $0x50] sm:$0x3]
        %v1191 = vld [vmem:[#allocation2 + $0x5c] sm:$0x3]
        %v1192 = vld [vmem:[#allocation2 + $0x68] sm:$0x3]
        %v1193 = vld [vmem:[#allocation2 + $0x74] sm:$0x3]
        %v1194 = vld [vmem:[#allocation2 + $0x80] sm:$0x3]
        %v1195 = vld [vmem:[#allocation2 + $0x8c] sm:$0x3]
        %v1196 = vld [vmem:[#allocation2 + $0x98] sm:$0x3]
        %v1197 = vld [vmem:[#allocation2 + $0xa4] sm:$0x3]
        %v1198 = vld [vmem:[#allocation2 + $0xb0] sm:$0x3]
        %v1199 = vld [vmem:[#allocation2 + $0xbc] sm:$0x3]
        %v1200 = vld [vmem:[#allocation2 + $0xc8] sm:$0x3]
        %v1201 = vld [vmem:[#allocation2 + $0xd4] sm:$0x3]
        %v1202 = vld [vmem:[#allocation2 + $0xe0] sm:$0x3]
        %v1203 = vld [vmem:[#allocation2 + $0xec] sm:$0x3]
        %v1204 = vld [vmem:[#allocation2] sm:$0xc]
        %v1205 = vld [vmem:[#allocation2 + $0xc] sm:$0xc]
        %v1206 = vld [vmem:[#allocation2 + $0x18] sm:$0xc]
        %v1207 = vld [vmem:[#allocation2 + $0x24] sm:$0xc]
        %v1208 = vld [vmem:[#allocation2 + $0x30] sm:$0xc]
        %v1209 = vld [vmem:[#allocation2 + $0x3c] sm:$0xc]
        %v1210 = vld [vmem:[#allocation2 + $0x48] sm:$0xc]
        %v1211 = vld [vmem:[#allocation2 + $0x54] sm:$0xc]
        %v1212 = vld [vmem:[#allocation2 + $0x60] sm:$0xc]
        %v1213 = vld [vmem:[#allocation2 + $0x6c] sm:$0xc]
        %v1214 = vld [vmem:[#allocation2 + $0x78] sm:$0xc]
        %v1215 = vld [vmem:[#allocation2 + $0x84] sm:$0xc]
        %v1216 = vld [vmem:[#allocation2 + $0x90] sm:$0xc]
        %v1217 = vld [vmem:[#allocation2 + $0x9c] sm:$0xc]
        %v1218 = vld [vmem:[#allocation2 + $0xa8] sm:$0xc]
        %v1219 = vld [vmem:[#allocation2 + $0xb4] sm:$0xc]
        %v1220 = vld [vmem:[#allocation2 + $0xc0] sm:$0xc]
        %v1221 = vld [vmem:[#allocation2 + $0xcc] sm:$0xc]
        %v1222 = vld [vmem:[#allocation2 + $0xd8] sm:$0xc]
        %v1223 = vld [vmem:[#allocation2 + $0xe4] sm:$0xc]
        %vm1224 = vsmask.f32 3328
        %vm1225 = vsmask.f32 7440
        %vm1226 = vmor %vm1224, %vm1225
        %v1228 = vshrl.u32 %v1104, 16
        %v1230 = vrot.slane %v1228, 4
        %v1231 = vshll.u32 %v1104, 16
        %v1233 = vrot.slane %v1231, 5
        %v1234 = vor.u32 %v1230, %v1233
        %v1235 = vrot.slane %v1234, 4
        %v1237 = vshll.u32 %v1105, 16
        %v1239 = vrot.slane %v1237, 5
        %v1240 = vsel %vm1226, %v1235, %v1239
        %v1241 = vshrl.u32 %v1105, 16
        %v1243 = vrot.slane %v1241, 4
        %v1244 = vor.u32 %v1243, %v1239
        %v1245 = vrot.slane %v1244, 4
        %v1247 = vshll.u32 %v1144, 16
        %v1249 = vrot.slane %v1247, 5
        %v1250 = vsel %vm1226, %v1245, %v1249
        %v1252 = vshrl.u32 %v1106, 16
        %v1254 = vrot.slane %v1252, 4
        %v1255 = vshll.u32 %v1106, 16
        %v1257 = vrot.slane %v1255, 5
        %v1258 = vor.u32 %v1254, %v1257
        %v1259 = vrot.slane %v1258, 4
        %v1261 = vshll.u32 %v1107, 16
        %v1263 = vrot.slane %v1261, 5
        %v1264 = vsel %vm1226, %v1259, %v1263
        %v1265 = vshrl.u32 %v1107, 16
        %v1267 = vrot.slane %v1265, 4
        %v1268 = vor.u32 %v1267, %v1263
        %v1269 = vrot.slane %v1268, 4
        %v1271 = vshll.u32 %v1145, 16
        %v1273 = vrot.slane %v1271, 5
        %v1274 = vsel %vm1226, %v1269, %v1273
        %v1276 = vshrl.u32 %v1108, 16
        %v1278 = vrot.slane %v1276, 4
        %v1279 = vshll.u32 %v1108, 16
        %v1281 = vrot.slane %v1279, 5
        %v1282 = vor.u32 %v1278, %v1281
        %v1283 = vrot.slane %v1282, 4
        %v1285 = vshll.u32 %v1109, 16
        %v1287 = vrot.slane %v1285, 5
        %v1288 = vsel %vm1226, %v1283, %v1287
        %v1289 = vshrl.u32 %v1109, 16
        %v1291 = vrot.slane %v1289, 4
        %v1292 = vor.u32 %v1291, %v1287
        %v1293 = vrot.slane %v1292, 4
        %v1295 = vshll.u32 %v1146, 16
        %v1297 = vrot.slane %v1295, 5
        %v1298 = vsel %vm1226, %v1293, %v1297
        %v1300 = vshrl.u32 %v1110, 16
        %v1302 = vrot.slane %v1300, 4
        %v1303 = vshll.u32 %v1110, 16
        %v1305 = vrot.slane %v1303, 5
        %v1306 = vor.u32 %v1302, %v1305
        %v1307 = vrot.slane %v1306, 4
        %v1309 = vshll.u32 %v1111, 16
        %v1311 = vrot.slane %v1309, 5
        %v1312 = vsel %vm1226, %v1307, %v1311
        %v1313 = vshrl.u32 %v1111, 16
        %v1315 = vrot.slane %v1313, 4
        %v1316 = vor.u32 %v1315, %v1311
        %v1317 = vrot.slane %v1316, 4
        %v1319 = vshll.u32 %v1147, 16
        %v1321 = vrot.slane %v1319, 5
        %v1322 = vsel %vm1226, %v1317, %v1321
        %v1324 = vshrl.u32 %v1112, 16
        %v1326 = vrot.slane %v1324, 4
        %v1327 = vshll.u32 %v1112, 16
        %v1329 = vrot.slane %v1327, 5
        %v1330 = vor.u32 %v1326, %v1329
        %v1331 = vrot.slane %v1330, 4
        %v1333 = vshll.u32 %v1113, 16
        %v1335 = vrot.slane %v1333, 5
        %v1336 = vsel %vm1226, %v1331, %v1335
        %v1337 = vshrl.u32 %v1113, 16
        %v1339 = vrot.slane %v1337, 4
        %v1340 = vor.u32 %v1339, %v1335
        %v1341 = vrot.slane %v1340, 4
        %v1343 = vshll.u32 %v1148, 16
        %v1345 = vrot.slane %v1343, 5
        %v1346 = vsel %vm1226, %v1341, %v1345
        %v1348 = vshrl.u32 %v1114, 16
        %v1350 = vrot.slane %v1348, 4
        %v1351 = vshll.u32 %v1114, 16
        %v1353 = vrot.slane %v1351, 5
        %v1354 = vor.u32 %v1350, %v1353
        %v1355 = vrot.slane %v1354, 4
        %v1357 = vshll.u32 %v1115, 16
        %v1359 = vrot.slane %v1357, 5
        %v1360 = vsel %vm1226, %v1355, %v1359
        %v1361 = vshrl.u32 %v1115, 16
        %v1363 = vrot.slane %v1361, 4
        %v1364 = vor.u32 %v1363, %v1359
        %v1365 = vrot.slane %v1364, 4
        %v1367 = vshll.u32 %v1149, 16
        %v1369 = vrot.slane %v1367, 5
        %v1370 = vsel %vm1226, %v1365, %v1369
        %v1372 = vshrl.u32 %v1116, 16
        %v1374 = vrot.slane %v1372, 4
        %v1375 = vshll.u32 %v1116, 16
        %v1377 = vrot.slane %v1375, 5
        %v1378 = vor.u32 %v1374, %v1377
        %v1379 = vrot.slane %v1378, 4
        %v1381 = vshll.u32 %v1117, 16
        %v1383 = vrot.slane %v1381, 5
        %v1384 = vsel %vm1226, %v1379, %v1383
        %v1385 = vshrl.u32 %v1117, 16
        %v1387 = vrot.slane %v1385, 4
        %v1388 = vor.u32 %v1387, %v1383
        %v1389 = vrot.slane %v1388, 4
        %v1391 = vshll.u32 %v1150, 16
        %v1393 = vrot.slane %v1391, 5
        %v1394 = vsel %vm1226, %v1389, %v1393
        %v1396 = vshrl.u32 %v1118, 16
        %v1398 = vrot.slane %v1396, 4
        %v1399 = vshll.u32 %v1118, 16
        %v1401 = vrot.slane %v1399, 5
        %v1402 = vor.u32 %v1398, %v1401
        %v1403 = vrot.slane %v1402, 4
        %v1405 = vshll.u32 %v1119, 16
        %v1407 = vrot.slane %v1405, 5
        %v1408 = vsel %vm1226, %v1403, %v1407
        %v1409 = vshrl.u32 %v1119, 16
        %v1411 = vrot.slane %v1409, 4
        %v1412 = vor.u32 %v1411, %v1407
        %v1413 = vrot.slane %v1412, 4
        %v1415 = vshll.u32 %v1151, 16
        %v1417 = vrot.slane %v1415, 5
        %v1418 = vsel %vm1226, %v1413, %v1417
        %v1420 = vshrl.u32 %v1120, 16
        %v1422 = vrot.slane %v1420, 4
        %v1423 = vshll.u32 %v1120, 16
        %v1425 = vrot.slane %v1423, 5
        %v1426 = vor.u32 %v1422, %v1425
        %v1427 = vrot.slane %v1426, 4
        %v1429 = vshll.u32 %v1121, 16
        %v1431 = vrot.slane %v1429, 5
        %v1432 = vsel %vm1226, %v1427, %v1431
        %v1433 = vshrl.u32 %v1121, 16
        %v1435 = vrot.slane %v1433, 4
        %v1436 = vor.u32 %v1435, %v1431
        %v1437 = vrot.slane %v1436, 4
        %v1439 = vshll.u32 %v1152, 16
        %v1441 = vrot.slane %v1439, 5
        %v1442 = vsel %vm1226, %v1437, %v1441
        %v1444 = vshrl.u32 %v1122, 16
        %v1446 = vrot.slane %v1444, 4
        %v1447 = vshll.u32 %v1122, 16
        %v1449 = vrot.slane %v1447, 5
        %v1450 = vor.u32 %v1446, %v1449
        %v1451 = vrot.slane %v1450, 4
        %v1453 = vshll.u32 %v1123, 16
        %v1455 = vrot.slane %v1453, 5
        %v1456 = vsel %vm1226, %v1451, %v1455
        %v1457 = vshrl.u32 %v1123, 16
        %v1459 = vrot.slane %v1457, 4
        %v1460 = vor.u32 %v1459, %v1455
        %v1461 = vrot.slane %v1460, 4
        %v1463 = vshll.u32 %v1153, 16
        %v1465 = vrot.slane %v1463, 5
        %v1466 = vsel %vm1226, %v1461, %v1465
        %v1468 = vshrl.u32 %v1124, 16
        %v1470 = vrot.slane %v1468, 4
        %v1471 = vshll.u32 %v1124, 16
        %v1473 = vrot.slane %v1471, 5
        %v1474 = vor.u32 %v1470, %v1473
        %v1475 = vrot.slane %v1474, 4
        %v1477 = vshll.u32 %v1125, 16
        %v1479 = vrot.slane %v1477, 5
        %v1480 = vsel %vm1226, %v1475, %v1479
        %v1481 = vshrl.u32 %v1125, 16
        %v1483 = vrot.slane %v1481, 4
        %v1484 = vor.u32 %v1483, %v1479
        %v1485 = vrot.slane %v1484, 4
        %v1487 = vshll.u32 %v1154, 16
        %v1489 = vrot.slane %v1487, 5
        %v1490 = vsel %vm1226, %v1485, %v1489
        %v1492 = vshrl.u32 %v1126, 16
        %v1494 = vrot.slane %v1492, 4
        %v1495 = vshll.u32 %v1126, 16
        %v1497 = vrot.slane %v1495, 5
        %v1498 = vor.u32 %v1494, %v1497
        %v1499 = vrot.slane %v1498, 4
        %v1501 = vshll.u32 %v1127, 16
        %v1503 = vrot.slane %v1501, 5
        %v1504 = vsel %vm1226, %v1499, %v1503
        %v1505 = vshrl.u32 %v1127, 16
        %v1507 = vrot.slane %v1505, 4
        %v1508 = vor.u32 %v1507, %v1503
        %v1509 = vrot.slane %v1508, 4
        %v1511 = vshll.u32 %v1155, 16
        %v1513 = vrot.slane %v1511, 5
        %v1514 = vsel %vm1226, %v1509, %v1513
        %v1516 = vshrl.u32 %v1128, 16
        %v1518 = vrot.slane %v1516, 4
        %v1519 = vshll.u32 %v1128, 16
        %v1521 = vrot.slane %v1519, 5
        %v1522 = vor.u32 %v1518, %v1521
        %v1523 = vrot.slane %v1522, 4
        %v1525 = vshll.u32 %v1129, 16
        %v1527 = vrot.slane %v1525, 5
        %v1528 = vsel %vm1226, %v1523, %v1527
        %v1529 = vshrl.u32 %v1129, 16
        %v1531 = vrot.slane %v1529, 4
        %v1532 = vor.u32 %v1531, %v1527
        %v1533 = vrot.slane %v1532, 4
        %v1535 = vshll.u32 %v1156, 16
        %v1537 = vrot.slane %v1535, 5
        %v1538 = vsel %vm1226, %v1533, %v1537
        %v1540 = vshrl.u32 %v1130, 16
        %v1542 = vrot.slane %v1540, 4
        %v1543 = vshll.u32 %v1130, 16
        %v1545 = vrot.slane %v1543, 5
        %v1546 = vor.u32 %v1542, %v1545
        %v1547 = vrot.slane %v1546, 4
        %v1549 = vshll.u32 %v1131, 16
        %v1551 = vrot.slane %v1549, 5
        %v1552 = vsel %vm1226, %v1547, %v1551
        %v1553 = vshrl.u32 %v1131, 16
        %v1555 = vrot.slane %v1553, 4
        %v1556 = vor.u32 %v1555, %v1551
        %v1557 = vrot.slane %v1556, 4
        %v1559 = vshll.u32 %v1157, 16
        %v1561 = vrot.slane %v1559, 5
        %v1562 = vsel %vm1226, %v1557, %v1561
        %v1564 = vshrl.u32 %v1132, 16
        %v1566 = vrot.slane %v1564, 4
        %v1567 = vshll.u32 %v1132, 16
        %v1569 = vrot.slane %v1567, 5
        %v1570 = vor.u32 %v1566, %v1569
        %v1571 = vrot.slane %v1570, 4
        %v1573 = vshll.u32 %v1133, 16
        %v1575 = vrot.slane %v1573, 5
        %v1576 = vsel %vm1226, %v1571, %v1575
        %v1577 = vshrl.u32 %v1133, 16
        %v1579 = vrot.slane %v1577, 4
        %v1580 = vor.u32 %v1579, %v1575
        %v1581 = vrot.slane %v1580, 4
        %v1583 = vshll.u32 %v1158, 16
        %v1585 = vrot.slane %v1583, 5
        %v1586 = vsel %vm1226, %v1581, %v1585
        %v1588 = vshrl.u32 %v1134, 16
        %v1590 = vrot.slane %v1588, 4
        %v1591 = vshll.u32 %v1134, 16
        %v1593 = vrot.slane %v1591, 5
        %v1594 = vor.u32 %v1590, %v1593
        %v1595 = vrot.slane %v1594, 4
        %v1597 = vshll.u32 %v1135, 16
        %v1599 = vrot.slane %v1597, 5
        %v1600 = vsel %vm1226, %v1595, %v1599
        %v1601 = vshrl.u32 %v1135, 16
        %v1603 = vrot.slane %v1601, 4
        %v1604 = vor.u32 %v1603, %v1599
        %v1605 = vrot.slane %v1604, 4
        %v1607 = vshll.u32 %v1159, 16
        %v1609 = vrot.slane %v1607, 5
        %v1610 = vsel %vm1226, %v1605, %v1609
        %v1612 = vshrl.u32 %v1136, 16
        %v1614 = vrot.slane %v1612, 4
        %v1615 = vshll.u32 %v1136, 16
        %v1617 = vrot.slane %v1615, 5
        %v1618 = vor.u32 %v1614, %v1617
        %v1619 = vrot.slane %v1618, 4
        %v1621 = vshll.u32 %v1137, 16
        %v1623 = vrot.slane %v1621, 5
        %v1624 = vsel %vm1226, %v1619, %v1623
        %v1625 = vshrl.u32 %v1137, 16
        %v1627 = vrot.slane %v1625, 4
        %v1628 = vor.u32 %v1627, %v1623
        %v1629 = vrot.slane %v1628, 4
        %v1631 = vshll.u32 %v1160, 16
        %v1633 = vrot.slane %v1631, 5
        %v1634 = vsel %vm1226, %v1629, %v1633
        %v1636 = vshrl.u32 %v1138, 16
        %v1638 = vrot.slane %v1636, 4
        %v1639 = vshll.u32 %v1138, 16
        %v1641 = vrot.slane %v1639, 5
        %v1642 = vor.u32 %v1638, %v1641
        %v1643 = vrot.slane %v1642, 4
        %v1645 = vshll.u32 %v1139, 16
        %v1647 = vrot.slane %v1645, 5
        %v1648 = vsel %vm1226, %v1643, %v1647
        %v1649 = vshrl.u32 %v1139, 16
        %v1651 = vrot.slane %v1649, 4
        %v1652 = vor.u32 %v1651, %v1647
        %v1653 = vrot.slane %v1652, 4
        %v1655 = vshll.u32 %v1161, 16
        %v1657 = vrot.slane %v1655, 5
        %v1658 = vsel %vm1226, %v1653, %v1657
        %v1660 = vshrl.u32 %v1140, 16
        %v1662 = vrot.slane %v1660, 4
        %v1663 = vshll.u32 %v1140, 16
        %v1665 = vrot.slane %v1663, 5
        %v1666 = vor.u32 %v1662, %v1665
        %v1667 = vrot.slane %v1666, 4
        %v1669 = vshll.u32 %v1141, 16
        %v1671 = vrot.slane %v1669, 5
        %v1672 = vsel %vm1226, %v1667, %v1671
        %v1673 = vshrl.u32 %v1141, 16
        %v1675 = vrot.slane %v1673, 4
        %v1676 = vor.u32 %v1675, %v1671
        %v1677 = vrot.slane %v1676, 4
        %v1679 = vshll.u32 %v1162, 16
        %v1681 = vrot.slane %v1679, 5
        %v1682 = vsel %vm1226, %v1677, %v1681
        %v1684 = vshrl.u32 %v1142, 16
        %v1686 = vrot.slane %v1684, 4
        %v1687 = vshll.u32 %v1142, 16
        %v1689 = vrot.slane %v1687, 5
        %v1690 = vor.u32 %v1686, %v1689
        %v1691 = vrot.slane %v1690, 4
        %v1693 = vshll.u32 %v1143, 16
        %v1695 = vrot.slane %v1693, 5
        %v1696 = vsel %vm1226, %v1691, %v1695
        %v1697 = vshrl.u32 %v1143, 16
        %v1699 = vrot.slane %v1697, 4
        %v1700 = vor.u32 %v1699, %v1695
        %v1701 = vrot.slane %v1700, 4
        %v1703 = vshll.u32 %v1163, 16
        %v1705 = vrot.slane %v1703, 5
        %v1706 = vsel %vm1226, %v1701, %v1705
        %v1747 = vmax.bf16 %v1104, %v1240
        %v1748 = vmax.bf16 %v1105, %v1250
        %v1749 = vmax.bf16 %v1106, %v1264
        %v1750 = vmax.bf16 %v1107, %v1274
        %v1751 = vmax.bf16 %v1108, %v1288
        %v1752 = vmax.bf16 %v1109, %v1298
        %v1753 = vmax.bf16 %v1110, %v1312
        %v1754 = vmax.bf16 %v1111, %v1322
        %v1755 = vmax.bf16 %v1112, %v1336
        %v1756 = vmax.bf16 %v1113, %v1346
        %v1757 = vmax.bf16 %v1114, %v1360
        %v1758 = vmax.bf16 %v1115, %v1370
        %v1759 = vmax.bf16 %v1116, %v1384
        %v1760 = vmax.bf16 %v1117, %v1394
        %v1761 = vmax.bf16 %v1118, %v1408
        %v1762 = vmax.bf16 %v1119, %v1418
        %v1763 = vmax.bf16 %v1120, %v1432
        %v1764 = vmax.bf16 %v1121, %v1442
        %v1765 = vmax.bf16 %v1122, %v1456
        %v1766 = vmax.bf16 %v1123, %v1466
        %v1767 = vmax.bf16 %v1124, %v1480
        %v1768 = vmax.bf16 %v1125, %v1490
        %v1769 = vmax.bf16 %v1126, %v1504
        %v1770 = vmax.bf16 %v1127, %v1514
        %v1771 = vmax.bf16 %v1128, %v1528
        %v1772 = vmax.bf16 %v1129, %v1538
        %v1773 = vmax.bf16 %v1130, %v1552
        %v1774 = vmax.bf16 %v1131, %v1562
        %v1775 = vmax.bf16 %v1132, %v1576
        %v1776 = vmax.bf16 %v1133, %v1586
        %v1777 = vmax.bf16 %v1134, %v1600
        %v1778 = vmax.bf16 %v1135, %v1610
        %v1779 = vmax.bf16 %v1136, %v1624
        %v1780 = vmax.bf16 %v1137, %v1634
        %v1781 = vmax.bf16 %v1138, %v1648
        %v1782 = vmax.bf16 %v1139, %v1658
        %v1783 = vmax.bf16 %v1140, %v1672
        %v1784 = vmax.bf16 %v1141, %v1682
        %v1785 = vmax.bf16 %v1142, %v1696
        %v1786 = vmax.bf16 %v1143, %v1706
        %v1788 = vshrl.u32 %v1164, 16
        %v1790 = vrot.slane %v1788, 4
        %v1791 = vshll.u32 %v1164, 16
        %v1793 = vrot.slane %v1791, 5
        %v1794 = vor.u32 %v1790, %v1793
        %v1795 = vrot.slane %v1794, 4
        %v1796 = vsel %vm1226, %v1795, %v1239
        %v1798 = vshll.u32 %v1184, 16
        %v1800 = vrot.slane %v1798, 5
        %v1801 = vsel %vm1226, %v1245, %v1800
        %v1802 = vshrl.u32 %v1184, 16
        %v1804 = vrot.slane %v1802, 4
        %v1805 = vor.u32 %v1804, %v1800
        %v1806 = vrot.slane %v1805, 4
        %v1808 = vshrl.u32 %v1165, 16
        %v1810 = vrot.slane %v1808, 4
        %v1811 = vshll.u32 %v1165, 16
        %v1813 = vrot.slane %v1811, 5
        %v1814 = vor.u32 %v1810, %v1813
        %v1815 = vrot.slane %v1814, 4
        %v1816 = vsel %vm1226, %v1815, %v1263
        %v1818 = vshll.u32 %v1185, 16
        %v1820 = vrot.slane %v1818, 5
        %v1821 = vsel %vm1226, %v1269, %v1820
        %v1822 = vshrl.u32 %v1185, 16
        %v1824 = vrot.slane %v1822, 4
        %v1825 = vor.u32 %v1824, %v1820
        %v1826 = vrot.slane %v1825, 4
        %v1828 = vshrl.u32 %v1166, 16
        %v1830 = vrot.slane %v1828, 4
        %v1831 = vshll.u32 %v1166, 16
        %v1833 = vrot.slane %v1831, 5
        %v1834 = vor.u32 %v1830, %v1833
        %v1835 = vrot.slane %v1834, 4
        %v1836 = vsel %vm1226, %v1835, %v1287
        %v1838 = vshll.u32 %v1186, 16
        %v1840 = vrot.slane %v1838, 5
        %v1841 = vsel %vm1226, %v1293, %v1840
        %v1842 = vshrl.u32 %v1186, 16
        %v1844 = vrot.slane %v1842, 4
        %v1845 = vor.u32 %v1844, %v1840
        %v1846 = vrot.slane %v1845, 4
        %v1848 = vshrl.u32 %v1167, 16
        %v1850 = vrot.slane %v1848, 4
        %v1851 = vshll.u32 %v1167, 16
        %v1853 = vrot.slane %v1851, 5
        %v1854 = vor.u32 %v1850, %v1853
        %v1855 = vrot.slane %v1854, 4
        %v1856 = vsel %vm1226, %v1855, %v1311
        %v1858 = vshll.u32 %v1187, 16
        %v1860 = vrot.slane %v1858, 5
        %v1861 = vsel %vm1226, %v1317, %v1860
        %v1862 = vshrl.u32 %v1187, 16
        %v1864 = vrot.slane %v1862, 4
        %v1865 = vor.u32 %v1864, %v1860
        %v1866 = vrot.slane %v1865, 4
        %v1868 = vshrl.u32 %v1168, 16
        %v1870 = vrot.slane %v1868, 4
        %v1871 = vshll.u32 %v1168, 16
        %v1873 = vrot.slane %v1871, 5
        %v1874 = vor.u32 %v1870, %v1873
        %v1875 = vrot.slane %v1874, 4
        %v1876 = vsel %vm1226, %v1875, %v1335
        %v1878 = vshll.u32 %v1188, 16
        %v1880 = vrot.slane %v1878, 5
        %v1881 = vsel %vm1226, %v1341, %v1880
        %v1882 = vshrl.u32 %v1188, 16
        %v1884 = vrot.slane %v1882, 4
        %v1885 = vor.u32 %v1884, %v1880
        %v1886 = vrot.slane %v1885, 4
        %v1888 = vshrl.u32 %v1169, 16
        %v1890 = vrot.slane %v1888, 4
        %v1891 = vshll.u32 %v1169, 16
        %v1893 = vrot.slane %v1891, 5
        %v1894 = vor.u32 %v1890, %v1893
        %v1895 = vrot.slane %v1894, 4
        %v1896 = vsel %vm1226, %v1895, %v1359
        %v1898 = vshll.u32 %v1189, 16
        %v1900 = vrot.slane %v1898, 5
        %v1901 = vsel %vm1226, %v1365, %v1900
        %v1902 = vshrl.u32 %v1189, 16
        %v1904 = vrot.slane %v1902, 4
        %v1905 = vor.u32 %v1904, %v1900
        %v1906 = vrot.slane %v1905, 4
        %v1908 = vshrl.u32 %v1170, 16
        %v1910 = vrot.slane %v1908, 4
        %v1911 = vshll.u32 %v1170, 16
        %v1913 = vrot.slane %v1911, 5
        %v1914 = vor.u32 %v1910, %v1913
        %v1915 = vrot.slane %v1914, 4
        %v1916 = vsel %vm1226, %v1915, %v1383
        %v1918 = vshll.u32 %v1190, 16
        %v1920 = vrot.slane %v1918, 5
        %v1921 = vsel %vm1226, %v1389, %v1920
        %v1922 = vshrl.u32 %v1190, 16
        %v1924 = vrot.slane %v1922, 4
        %v1925 = vor.u32 %v1924, %v1920
        %v1926 = vrot.slane %v1925, 4
        %v1928 = vshrl.u32 %v1171, 16
        %v1930 = vrot.slane %v1928, 4
        %v1931 = vshll.u32 %v1171, 16
        %v1933 = vrot.slane %v1931, 5
        %v1934 = vor.u32 %v1930, %v1933
        %v1935 = vrot.slane %v1934, 4
        %v1936 = vsel %vm1226, %v1935, %v1407
        %v1938 = vshll.u32 %v1191, 16
        %v1940 = vrot.slane %v1938, 5
        %v1941 = vsel %vm1226, %v1413, %v1940
        %v1942 = vshrl.u32 %v1191, 16
        %v1944 = vrot.slane %v1942, 4
        %v1945 = vor.u32 %v1944, %v1940
        %v1946 = vrot.slane %v1945, 4
        %v1948 = vshrl.u32 %v1172, 16
        %v1950 = vrot.slane %v1948, 4
        %v1951 = vshll.u32 %v1172, 16
        %v1953 = vrot.slane %v1951, 5
        %v1954 = vor.u32 %v1950, %v1953
        %v1955 = vrot.slane %v1954, 4
        %v1956 = vsel %vm1226, %v1955, %v1431
        %v1958 = vshll.u32 %v1192, 16
        %v1960 = vrot.slane %v1958, 5
        %v1961 = vsel %vm1226, %v1437, %v1960
        %v1962 = vshrl.u32 %v1192, 16
        %v1964 = vrot.slane %v1962, 4
        %v1965 = vor.u32 %v1964, %v1960
        %v1966 = vrot.slane %v1965, 4
        %v1968 = vshrl.u32 %v1173, 16
        %v1970 = vrot.slane %v1968, 4
        %v1971 = vshll.u32 %v1173, 16
        %v1973 = vrot.slane %v1971, 5
        %v1974 = vor.u32 %v1970, %v1973
        %v1975 = vrot.slane %v1974, 4
        %v1976 = vsel %vm1226, %v1975, %v1455
        %v1978 = vshll.u32 %v1193, 16
        %v1980 = vrot.slane %v1978, 5
        %v1981 = vsel %vm1226, %v1461, %v1980
        %v1982 = vshrl.u32 %v1193, 16
        %v1984 = vrot.slane %v1982, 4
        %v1985 = vor.u32 %v1984, %v1980
        %v1986 = vrot.slane %v1985, 4
        %v1988 = vshrl.u32 %v1174, 16
        %v1990 = vrot.slane %v1988, 4
        %v1991 = vshll.u32 %v1174, 16
        %v1993 = vrot.slane %v1991, 5
        %v1994 = vor.u32 %v1990, %v1993
        %v1995 = vrot.slane %v1994, 4
        %v1996 = vsel %vm1226, %v1995, %v1479
        %v1998 = vshll.u32 %v1194, 16
        %v2000 = vrot.slane %v1998, 5
        %v2001 = vsel %vm1226, %v1485, %v2000
        %v2002 = vshrl.u32 %v1194, 16
        %v2004 = vrot.slane %v2002, 4
        %v2005 = vor.u32 %v2004, %v2000
        %v2006 = vrot.slane %v2005, 4
        %v2008 = vshrl.u32 %v1175, 16
        %v2010 = vrot.slane %v2008, 4
        %v2011 = vshll.u32 %v1175, 16
        %v2013 = vrot.slane %v2011, 5
        %v2014 = vor.u32 %v2010, %v2013
        %v2015 = vrot.slane %v2014, 4
        %v2016 = vsel %vm1226, %v2015, %v1503
        %v2018 = vshll.u32 %v1195, 16
        %v2020 = vrot.slane %v2018, 5
        %v2021 = vsel %vm1226, %v1509, %v2020
        %v2022 = vshrl.u32 %v1195, 16
        %v2024 = vrot.slane %v2022, 4
        %v2025 = vor.u32 %v2024, %v2020
        %v2026 = vrot.slane %v2025, 4
        %v2028 = vshrl.u32 %v1176, 16
        %v2030 = vrot.slane %v2028, 4
        %v2031 = vshll.u32 %v1176, 16
        %v2033 = vrot.slane %v2031, 5
        %v2034 = vor.u32 %v2030, %v2033
        %v2035 = vrot.slane %v2034, 4
        %v2036 = vsel %vm1226, %v2035, %v1527
        %v2038 = vshll.u32 %v1196, 16
        %v2040 = vrot.slane %v2038, 5
        %v2041 = vsel %vm1226, %v1533, %v2040
        %v2042 = vshrl.u32 %v1196, 16
        %v2044 = vrot.slane %v2042, 4
        %v2045 = vor.u32 %v2044, %v2040
        %v2046 = vrot.slane %v2045, 4
        %v2048 = vshrl.u32 %v1177, 16
        %v2050 = vrot.slane %v2048, 4
        %v2051 = vshll.u32 %v1177, 16
        %v2053 = vrot.slane %v2051, 5
        %v2054 = vor.u32 %v2050, %v2053
        %v2055 = vrot.slane %v2054, 4
        %v2056 = vsel %vm1226, %v2055, %v1551
        %v2058 = vshll.u32 %v1197, 16
        %v2060 = vrot.slane %v2058, 5
        %v2061 = vsel %vm1226, %v1557, %v2060
        %v2062 = vshrl.u32 %v1197, 16
        %v2064 = vrot.slane %v2062, 4
        %v2065 = vor.u32 %v2064, %v2060
        %v2066 = vrot.slane %v2065, 4
        %v2068 = vshrl.u32 %v1178, 16
        %v2070 = vrot.slane %v2068, 4
        %v2071 = vshll.u32 %v1178, 16
        %v2073 = vrot.slane %v2071, 5
        %v2074 = vor.u32 %v2070, %v2073
        %v2075 = vrot.slane %v2074, 4
        %v2076 = vsel %vm1226, %v2075, %v1575
        %v2078 = vshll.u32 %v1198, 16
        %v2080 = vrot.slane %v2078, 5
        %v2081 = vsel %vm1226, %v1581, %v2080
        %v2082 = vshrl.u32 %v1198, 16
        %v2084 = vrot.slane %v2082, 4
        %v2085 = vor.u32 %v2084, %v2080
        %v2086 = vrot.slane %v2085, 4
        %v2088 = vshrl.u32 %v1179, 16
        %v2090 = vrot.slane %v2088, 4
        %v2091 = vshll.u32 %v1179, 16
        %v2093 = vrot.slane %v2091, 5
        %v2094 = vor.u32 %v2090, %v2093
        %v2095 = vrot.slane %v2094, 4
        %v2096 = vsel %vm1226, %v2095, %v1599
        %v2098 = vshll.u32 %v1199, 16
        %v2100 = vrot.slane %v2098, 5
        %v2101 = vsel %vm1226, %v1605, %v2100
        %v2102 = vshrl.u32 %v1199, 16
        %v2104 = vrot.slane %v2102, 4
        %v2105 = vor.u32 %v2104, %v2100
        %v2106 = vrot.slane %v2105, 4
        %v2108 = vshrl.u32 %v1180, 16
        %v2110 = vrot.slane %v2108, 4
        %v2111 = vshll.u32 %v1180, 16
        %v2113 = vrot.slane %v2111, 5
        %v2114 = vor.u32 %v2110, %v2113
        %v2115 = vrot.slane %v2114, 4
        %v2116 = vsel %vm1226, %v2115, %v1623
        %v2118 = vshll.u32 %v1200, 16
        %v2120 = vrot.slane %v2118, 5
        %v2121 = vsel %vm1226, %v1629, %v2120
        %v2122 = vshrl.u32 %v1200, 16
        %v2124 = vrot.slane %v2122, 4
        %v2125 = vor.u32 %v2124, %v2120
        %v2126 = vrot.slane %v2125, 4
        %v2128 = vshrl.u32 %v1181, 16
        %v2130 = vrot.slane %v2128, 4
        %v2131 = vshll.u32 %v1181, 16
        %v2133 = vrot.slane %v2131, 5
        %v2134 = vor.u32 %v2130, %v2133
        %v2135 = vrot.slane %v2134, 4
        %v2136 = vsel %vm1226, %v2135, %v1647
        %v2138 = vshll.u32 %v1201, 16
        %v2140 = vrot.slane %v2138, 5
        %v2141 = vsel %vm1226, %v1653, %v2140
        %v2142 = vshrl.u32 %v1201, 16
        %v2144 = vrot.slane %v2142, 4
        %v2145 = vor.u32 %v2144, %v2140
        %v2146 = vrot.slane %v2145, 4
        %v2148 = vshrl.u32 %v1182, 16
        %v2150 = vrot.slane %v2148, 4
        %v2151 = vshll.u32 %v1182, 16
        %v2153 = vrot.slane %v2151, 5
        %v2154 = vor.u32 %v2150, %v2153
        %v2155 = vrot.slane %v2154, 4
        %v2156 = vsel %vm1226, %v2155, %v1671
        %v2158 = vshll.u32 %v1202, 16
        %v2160 = vrot.slane %v2158, 5
        %v2161 = vsel %vm1226, %v1677, %v2160
        %v2162 = vshrl.u32 %v1202, 16
        %v2164 = vrot.slane %v2162, 4
        %v2165 = vor.u32 %v2164, %v2160
        %v2166 = vrot.slane %v2165, 4
        %v2168 = vshrl.u32 %v1183, 16
        %v2170 = vrot.slane %v2168, 4
        %v2171 = vshll.u32 %v1183, 16
        %v2173 = vrot.slane %v2171, 5
        %v2174 = vor.u32 %v2170, %v2173
        %v2175 = vrot.slane %v2174, 4
        %v2176 = vsel %vm1226, %v2175, %v1695
        %v2178 = vshll.u32 %v1203, 16
        %v2180 = vrot.slane %v2178, 5
        %v2181 = vsel %vm1226, %v1701, %v2180
        %v2182 = vshrl.u32 %v1203, 16
        %v2184 = vrot.slane %v2182, 4
        %v2185 = vor.u32 %v2184, %v2180
        %v2186 = vrot.slane %v2185, 4
        %v2247 = vmax.bf16 %v1164, %v1796
        %v2248 = vmax.bf16 %v1105, %v1801
        %v2249 = vmax.bf16 %v1144, %v1806
        %v2250 = vmax.bf16 %v1165, %v1816
        %v2251 = vmax.bf16 %v1107, %v1821
        %v2252 = vmax.bf16 %v1145, %v1826
        %v2253 = vmax.bf16 %v1166, %v1836
        %v2254 = vmax.bf16 %v1109, %v1841
        %v2255 = vmax.bf16 %v1146, %v1846
        %v2256 = vmax.bf16 %v1167, %v1856
        %v2257 = vmax.bf16 %v1111, %v1861
        %v2258 = vmax.bf16 %v1147, %v1866
        %v2259 = vmax.bf16 %v1168, %v1876
        %v2260 = vmax.bf16 %v1113, %v1881
        %v2261 = vmax.bf16 %v1148, %v1886
        %v2262 = vmax.bf16 %v1169, %v1896
        %v2263 = vmax.bf16 %v1115, %v1901
        %v2264 = vmax.bf16 %v1149, %v1906
        %v2265 = vmax.bf16 %v1170, %v1916
        %v2266 = vmax.bf16 %v1117, %v1921
        %v2267 = vmax.bf16 %v1150, %v1926
        %v2268 = vmax.bf16 %v1171, %v1936
        %v2269 = vmax.bf16 %v1119, %v1941
        %v2270 = vmax.bf16 %v1151, %v1946
        %v2271 = vmax.bf16 %v1172, %v1956
        %v2272 = vmax.bf16 %v1121, %v1961
        %v2273 = vmax.bf16 %v1152, %v1966
        %v2274 = vmax.bf16 %v1173, %v1976
        %v2275 = vmax.bf16 %v1123, %v1981
        %v2276 = vmax.bf16 %v1153, %v1986
        %v2277 = vmax.bf16 %v1174, %v1996
        %v2278 = vmax.bf16 %v1125, %v2001
        %v2279 = vmax.bf16 %v1154, %v2006
        %v2280 = vmax.bf16 %v1175, %v2016
        %v2281 = vmax.bf16 %v1127, %v2021
        %v2282 = vmax.bf16 %v1155, %v2026
        %v2283 = vmax.bf16 %v1176, %v2036
        %v2284 = vmax.bf16 %v1129, %v2041
        %v2285 = vmax.bf16 %v1156, %v2046
        %v2286 = vmax.bf16 %v1177, %v2056
        %v2287 = vmax.bf16 %v1131, %v2061
        %v2288 = vmax.bf16 %v1157, %v2066
        %v2289 = vmax.bf16 %v1178, %v2076
        %v2290 = vmax.bf16 %v1133, %v2081
        %v2291 = vmax.bf16 %v1158, %v2086
        %v2292 = vmax.bf16 %v1179, %v2096
        %v2293 = vmax.bf16 %v1135, %v2101
        %v2294 = vmax.bf16 %v1159, %v2106
        %v2295 = vmax.bf16 %v1180, %v2116
        %v2296 = vmax.bf16 %v1137, %v2121
        %v2297 = vmax.bf16 %v1160, %v2126
        %v2298 = vmax.bf16 %v1181, %v2136
        %v2299 = vmax.bf16 %v1139, %v2141
        %v2300 = vmax.bf16 %v1161, %v2146
        %v2301 = vmax.bf16 %v1182, %v2156
        %v2302 = vmax.bf16 %v1141, %v2161
        %v2303 = vmax.bf16 %v1162, %v2166
        %v2304 = vmax.bf16 %v1183, %v2176
        %v2305 = vmax.bf16 %v1143, %v2181
        %v2306 = vmax.bf16 %v1163, %v2186
        %vm2367 = vcmask 1042432
        %vm2368 = vcmask 1046532
        %vm2369 = vmor %vm2367, %vm2368
        %v2370 = vrot.slane %v2247, 5
        %v2371 = vrot.slane %v2370, 4
        %v2372 = vrot.slane %v2248, 5
        %v2373 = vsel %vm2369, %v2371, %v2372
        %v2374 = vrot.slane %v2372, 4
        %v2375 = vrot.slane %v2249, 5
        %v2376 = vsel %vm2369, %v2374, %v2375
        %v2377 = vrot.slane %v2250, 5
        %v2378 = vrot.slane %v2377, 4
        %v2379 = vrot.slane %v2251, 5
        %v2380 = vsel %vm2369, %v2378, %v2379
        %v2381 = vrot.slane %v2379, 4
        %v2382 = vrot.slane %v2252, 5
        %v2383 = vsel %vm2369, %v2381, %v2382
        %v2384 = vrot.slane %v2253, 5
        %v2385 = vrot.slane %v2384, 4
        %v2386 = vrot.slane %v2254, 5
        %v2387 = vsel %vm2369, %v2385, %v2386
        %v2388 = vrot.slane %v2386, 4
        %v2389 = vrot.slane %v2255, 5
        %v2390 = vsel %vm2369, %v2388, %v2389
        %v2391 = vrot.slane %v2256, 5
        %v2392 = vrot.slane %v2391, 4
        %v2393 = vrot.slane %v2257, 5
        %v2394 = vsel %vm2369, %v2392, %v2393
        %v2395 = vrot.slane %v2393, 4
        %v2396 = vrot.slane %v2258, 5
        %v2397 = vsel %vm2369, %v2395, %v2396
        %v2398 = vrot.slane %v2259, 5
        %v2399 = vrot.slane %v2398, 4
        %v2400 = vrot.slane %v2260, 5
        %v2401 = vsel %vm2369, %v2399, %v2400
        %v2402 = vrot.slane %v2400, 4
        %v2403 = vrot.slane %v2261, 5
        %v2404 = vsel %vm2369, %v2402, %v2403
        %v2405 = vrot.slane %v2262, 5
        %v2406 = vrot.slane %v2405, 4
        %v2407 = vrot.slane %v2263, 5
        %v2408 = vsel %vm2369, %v2406, %v2407
        %v2409 = vrot.slane %v2407, 4
        %v2410 = vrot.slane %v2264, 5
        %v2411 = vsel %vm2369, %v2409, %v2410
        %v2412 = vrot.slane %v2265, 5
        %v2413 = vrot.slane %v2412, 4
        %v2414 = vrot.slane %v2266, 5
        %v2415 = vsel %vm2369, %v2413, %v2414
        %v2416 = vrot.slane %v2414, 4
        %v2417 = vrot.slane %v2267, 5
        %v2418 = vsel %vm2369, %v2416, %v2417
        %v2419 = vrot.slane %v2268, 5
        %v2420 = vrot.slane %v2419, 4
        %v2421 = vrot.slane %v2269, 5
        %v2422 = vsel %vm2369, %v2420, %v2421
        %v2423 = vrot.slane %v2421, 4
        %v2424 = vrot.slane %v2270, 5
        %v2425 = vsel %vm2369, %v2423, %v2424
        %v2426 = vrot.slane %v2271, 5
        %v2427 = vrot.slane %v2426, 4
        %v2428 = vrot.slane %v2272, 5
        %v2429 = vsel %vm2369, %v2427, %v2428
        %v2430 = vrot.slane %v2428, 4
        %v2431 = vrot.slane %v2273, 5
        %v2432 = vsel %vm2369, %v2430, %v2431
        %v2433 = vrot.slane %v2274, 5
        %v2434 = vrot.slane %v2433, 4
        %v2435 = vrot.slane %v2275, 5
        %v2436 = vsel %vm2369, %v2434, %v2435
        %v2437 = vrot.slane %v2435, 4
        %v2438 = vrot.slane %v2276, 5
        %v2439 = vsel %vm2369, %v2437, %v2438
        %v2440 = vrot.slane %v2277, 5
        %v2441 = vrot.slane %v2440, 4
        %v2442 = vrot.slane %v2278, 5
        %v2443 = vsel %vm2369, %v2441, %v2442
        %v2444 = vrot.slane %v2442, 4
        %v2445 = vrot.slane %v2279, 5
        %v2446 = vsel %vm2369, %v2444, %v2445
        %v2447 = vrot.slane %v2280, 5
        %v2448 = vrot.slane %v2447, 4
        %v2449 = vrot.slane %v2281, 5
        %v2450 = vsel %vm2369, %v2448, %v2449
        %v2451 = vrot.slane %v2449, 4
        %v2452 = vrot.slane %v2282, 5
        %v2453 = vsel %vm2369, %v2451, %v2452
        %v2454 = vrot.slane %v2283, 5
        %v2455 = vrot.slane %v2454, 4
        %v2456 = vrot.slane %v2284, 5
        %v2457 = vsel %vm2369, %v2455, %v2456
        %v2458 = vrot.slane %v2456, 4
        %v2459 = vrot.slane %v2285, 5
        %v2460 = vsel %vm2369, %v2458, %v2459
        %v2461 = vrot.slane %v2286, 5
        %v2462 = vrot.slane %v2461, 4
        %v2463 = vrot.slane %v2287, 5
        %v2464 = vsel %vm2369, %v2462, %v2463
        %v2465 = vrot.slane %v2463, 4
        %v2466 = vrot.slane %v2288, 5
        %v2467 = vsel %vm2369, %v2465, %v2466
        %v2468 = vrot.slane %v2289, 5
        %v2469 = vrot.slane %v2468, 4
        %v2470 = vrot.slane %v2290, 5
        %v2471 = vsel %vm2369, %v2469, %v2470
        %v2472 = vrot.slane %v2470, 4
        %v2473 = vrot.slane %v2291, 5
        %v2474 = vsel %vm2369, %v2472, %v2473
        %v2475 = vrot.slane %v2292, 5
        %v2476 = vrot.slane %v2475, 4
        %v2477 = vrot.slane %v2293, 5
        %v2478 = vsel %vm2369, %v2476, %v2477
        %v2479 = vrot.slane %v2477, 4
        %v2480 = vrot.slane %v2294, 5
        %v2481 = vsel %vm2369, %v2479, %v2480
        %v2482 = vrot.slane %v2295, 5
        %v2483 = vrot.slane %v2482, 4
        %v2484 = vrot.slane %v2296, 5
        %v2485 = vsel %vm2369, %v2483, %v2484
        %v2486 = vrot.slane %v2484, 4
        %v2487 = vrot.slane %v2297, 5
        %v2488 = vsel %vm2369, %v2486, %v2487
        %v2489 = vrot.slane %v2298, 5
        %v2490 = vrot.slane %v2489, 4
        %v2491 = vrot.slane %v2299, 5
        %v2492 = vsel %vm2369, %v2490, %v2491
        %v2493 = vrot.slane %v2491, 4
        %v2494 = vrot.slane %v2300, 5
        %v2495 = vsel %vm2369, %v2493, %v2494
        %v2496 = vrot.slane %v2301, 5
        %v2497 = vrot.slane %v2496, 4
        %v2498 = vrot.slane %v2302, 5
        %v2499 = vsel %vm2369, %v2497, %v2498
        %v2500 = vrot.slane %v2498, 4
        %v2501 = vrot.slane %v2303, 5
        %v2502 = vsel %vm2369, %v2500, %v2501
        %v2503 = vrot.slane %v2304, 5
        %v2504 = vrot.slane %v2503, 4
        %v2505 = vrot.slane %v2305, 5
        %v2506 = vsel %vm2369, %v2504, %v2505
        %v2507 = vrot.slane %v2505, 4
        %v2508 = vrot.slane %v2306, 5
        %v2509 = vsel %vm2369, %v2507, %v2508
        %v2550 = vmax.bf16 %v1747, %v2373
        %v2551 = vmax.bf16 %v1748, %v2376
        %v2552 = vmax.bf16 %v1749, %v2380
        %v2553 = vmax.bf16 %v1750, %v2383
        %v2554 = vmax.bf16 %v1751, %v2387
        %v2555 = vmax.bf16 %v1752, %v2390
        %v2556 = vmax.bf16 %v1753, %v2394
        %v2557 = vmax.bf16 %v1754, %v2397
        %v2558 = vmax.bf16 %v1755, %v2401
        %v2559 = vmax.bf16 %v1756, %v2404
        %v2560 = vmax.bf16 %v1757, %v2408
        %v2561 = vmax.bf16 %v1758, %v2411
        %v2562 = vmax.bf16 %v1759, %v2415
        %v2563 = vmax.bf16 %v1760, %v2418
        %v2564 = vmax.bf16 %v1761, %v2422
        %v2565 = vmax.bf16 %v1762, %v2425
        %v2566 = vmax.bf16 %v1763, %v2429
        %v2567 = vmax.bf16 %v1764, %v2432
        %v2568 = vmax.bf16 %v1765, %v2436
        %v2569 = vmax.bf16 %v1766, %v2439
        %v2570 = vmax.bf16 %v1767, %v2443
        %v2571 = vmax.bf16 %v1768, %v2446
        %v2572 = vmax.bf16 %v1769, %v2450
        %v2573 = vmax.bf16 %v1770, %v2453
        %v2574 = vmax.bf16 %v1771, %v2457
        %v2575 = vmax.bf16 %v1772, %v2460
        %v2576 = vmax.bf16 %v1773, %v2464
        %v2577 = vmax.bf16 %v1774, %v2467
        %v2578 = vmax.bf16 %v1775, %v2471
        %v2579 = vmax.bf16 %v1776, %v2474
        %v2580 = vmax.bf16 %v1777, %v2478
        %v2581 = vmax.bf16 %v1778, %v2481
        %v2582 = vmax.bf16 %v1779, %v2485
        %v2583 = vmax.bf16 %v1780, %v2488
        %v2584 = vmax.bf16 %v1781, %v2492
        %v2585 = vmax.bf16 %v1782, %v2495
        %v2586 = vmax.bf16 %v1783, %v2499
        %v2587 = vmax.bf16 %v1784, %v2502
        %v2588 = vmax.bf16 %v1785, %v2506
        %v2589 = vmax.bf16 %v1786, %v2509
        %vm2650 = vcmask 1041408
        %vm2651 = vcmask 1045508
        %vm2652 = vmor %vm2650, %vm2651
        %v2653 = vrot.slane %v1204, 6
        %v2654 = vrot.slane %v2653, 4
        %v2655 = vrot.slane %v1105, 6
        %v2656 = vsel %vm2652, %v2654, %v2655
        %v2657 = vrot.slane %v2655, 4
        %v2658 = vrot.slane %v1184, 6
        %v2659 = vsel %vm2652, %v2657, %v2658
        %v2660 = vrot.slane %v1205, 6
        %v2661 = vrot.slane %v2660, 4
        %v2662 = vrot.slane %v1107, 6
        %v2663 = vsel %vm2652, %v2661, %v2662
        %v2664 = vrot.slane %v2662, 4
        %v2665 = vrot.slane %v1185, 6
        %v2666 = vsel %vm2652, %v2664, %v2665
        %v2667 = vrot.slane %v1206, 6
        %v2668 = vrot.slane %v2667, 4
        %v2669 = vrot.slane %v1109, 6
        %v2670 = vsel %vm2652, %v2668, %v2669
        %v2671 = vrot.slane %v2669, 4
        %v2672 = vrot.slane %v1186, 6
        %v2673 = vsel %vm2652, %v2671, %v2672
        %v2674 = vrot.slane %v1207, 6
        %v2675 = vrot.slane %v2674, 4
        %v2676 = vrot.slane %v1111, 6
        %v2677 = vsel %vm2652, %v2675, %v2676
        %v2678 = vrot.slane %v2676, 4
        %v2679 = vrot.slane %v1187, 6
        %v2680 = vsel %vm2652, %v2678, %v2679
        %v2681 = vrot.slane %v1208, 6
        %v2682 = vrot.slane %v2681, 4
        %v2683 = vrot.slane %v1113, 6
        %v2684 = vsel %vm2652, %v2682, %v2683
        %v2685 = vrot.slane %v2683, 4
        %v2686 = vrot.slane %v1188, 6
        %v2687 = vsel %vm2652, %v2685, %v2686
        %v2688 = vrot.slane %v1209, 6
        %v2689 = vrot.slane %v2688, 4
        %v2690 = vrot.slane %v1115, 6
        %v2691 = vsel %vm2652, %v2689, %v2690
        %v2692 = vrot.slane %v2690, 4
        %v2693 = vrot.slane %v1189, 6
        %v2694 = vsel %vm2652, %v2692, %v2693
        %v2695 = vrot.slane %v1210, 6
        %v2696 = vrot.slane %v2695, 4
        %v2697 = vrot.slane %v1117, 6
        %v2698 = vsel %vm2652, %v2696, %v2697
        %v2699 = vrot.slane %v2697, 4
        %v2700 = vrot.slane %v1190, 6
        %v2701 = vsel %vm2652, %v2699, %v2700
        %v2702 = vrot.slane %v1211, 6
        %v2703 = vrot.slane %v2702, 4
        %v2704 = vrot.slane %v1119, 6
        %v2705 = vsel %vm2652, %v2703, %v2704
        %v2706 = vrot.slane %v2704, 4
        %v2707 = vrot.slane %v1191, 6
        %v2708 = vsel %vm2652, %v2706, %v2707
        %v2709 = vrot.slane %v1212, 6
        %v2710 = vrot.slane %v2709, 4
        %v2711 = vrot.slane %v1121, 6
        %v2712 = vsel %vm2652, %v2710, %v2711
        %v2713 = vrot.slane %v2711, 4
        %v2714 = vrot.slane %v1192, 6
        %v2715 = vsel %vm2652, %v2713, %v2714
        %v2716 = vrot.slane %v1213, 6
        %v2717 = vrot.slane %v2716, 4
        %v2718 = vrot.slane %v1123, 6
        %v2719 = vsel %vm2652, %v2717, %v2718
        %v2720 = vrot.slane %v2718, 4
        %v2721 = vrot.slane %v1193, 6
        %v2722 = vsel %vm2652, %v2720, %v2721
        %v2723 = vrot.slane %v1214, 6
        %v2724 = vrot.slane %v2723, 4
        %v2725 = vrot.slane %v1125, 6
        %v2726 = vsel %vm2652, %v2724, %v2725
        %v2727 = vrot.slane %v2725, 4
        %v2728 = vrot.slane %v1194, 6
        %v2729 = vsel %vm2652, %v2727, %v2728
        %v2730 = vrot.slane %v1215, 6
        %v2731 = vrot.slane %v2730, 4
        %v2732 = vrot.slane %v1127, 6
        %v2733 = vsel %vm2652, %v2731, %v2732
        %v2734 = vrot.slane %v2732, 4
        %v2735 = vrot.slane %v1195, 6
        %v2736 = vsel %vm2652, %v2734, %v2735
        %v2737 = vrot.slane %v1216, 6
        %v2738 = vrot.slane %v2737, 4
        %v2739 = vrot.slane %v1129, 6
        %v2740 = vsel %vm2652, %v2738, %v2739
        %v2741 = vrot.slane %v2739, 4
        %v2742 = vrot.slane %v1196, 6
        %v2743 = vsel %vm2652, %v2741, %v2742
        %v2744 = vrot.slane %v1217, 6
        %v2745 = vrot.slane %v2744, 4
        %v2746 = vrot.slane %v1131, 6
        %v2747 = vsel %vm2652, %v2745, %v2746
        %v2748 = vrot.slane %v2746, 4
        %v2749 = vrot.slane %v1197, 6
        %v2750 = vsel %vm2652, %v2748, %v2749
        %v2751 = vrot.slane %v1218, 6
        %v2752 = vrot.slane %v2751, 4
        %v2753 = vrot.slane %v1133, 6
        %v2754 = vsel %vm2652, %v2752, %v2753
        %v2755 = vrot.slane %v2753, 4
        %v2756 = vrot.slane %v1198, 6
        %v2757 = vsel %vm2652, %v2755, %v2756
        %v2758 = vrot.slane %v1219, 6
        %v2759 = vrot.slane %v2758, 4
        %v2760 = vrot.slane %v1135, 6
        %v2761 = vsel %vm2652, %v2759, %v2760
        %v2762 = vrot.slane %v2760, 4
        %v2763 = vrot.slane %v1199, 6
        %v2764 = vsel %vm2652, %v2762, %v2763
        %v2765 = vrot.slane %v1220, 6
        %v2766 = vrot.slane %v2765, 4
        %v2767 = vrot.slane %v1137, 6
        %v2768 = vsel %vm2652, %v2766, %v2767
        %v2769 = vrot.slane %v2767, 4
        %v2770 = vrot.slane %v1200, 6
        %v2771 = vsel %vm2652, %v2769, %v2770
        %v2772 = vrot.slane %v1221, 6
        %v2773 = vrot.slane %v2772, 4
        %v2774 = vrot.slane %v1139, 6
        %v2775 = vsel %vm2652, %v2773, %v2774
        %v2776 = vrot.slane %v2774, 4
        %v2777 = vrot.slane %v1201, 6
        %v2778 = vsel %vm2652, %v2776, %v2777
        %v2779 = vrot.slane %v1222, 6
        %v2780 = vrot.slane %v2779, 4
        %v2781 = vrot.slane %v1141, 6
        %v2782 = vsel %vm2652, %v2780, %v2781
        %v2783 = vrot.slane %v2781, 4
        %v2784 = vrot.slane %v1202, 6
        %v2785 = vsel %vm2652, %v2783, %v2784
        %v2786 = vrot.slane %v1223, 6
        %v2787 = vrot.slane %v2786, 4
        %v2788 = vrot.slane %v1143, 6
        %v2789 = vsel %vm2652, %v2787, %v2788
        %v2790 = vrot.slane %v2788, 4
        %v2791 = vrot.slane %v1203, 6
        %v2792 = vsel %vm2652, %v2790, %v2791
        %v2833 = vmax.bf16 %v2550, %v2656
        %v2834 = vmax.bf16 %v2551, %v2659
        %v2835 = vmax.bf16 %v2552, %v2663
        %v2836 = vmax.bf16 %v2553, %v2666
        %v2837 = vmax.bf16 %v2554, %v2670
        %v2838 = vmax.bf16 %v2555, %v2673
        %v2839 = vmax.bf16 %v2556, %v2677
        %v2840 = vmax.bf16 %v2557, %v2680
        %v2841 = vmax.bf16 %v2558, %v2684
        %v2842 = vmax.bf16 %v2559, %v2687
        %v2843 = vmax.bf16 %v2560, %v2691
        %v2844 = vmax.bf16 %v2561, %v2694
        %v2845 = vmax.bf16 %v2562, %v2698
        %v2846 = vmax.bf16 %v2563, %v2701
        %v2847 = vmax.bf16 %v2564, %v2705
        %v2848 = vmax.bf16 %v2565, %v2708
        %v2849 = vmax.bf16 %v2566, %v2712
        %v2850 = vmax.bf16 %v2567, %v2715
        %v2851 = vmax.bf16 %v2568, %v2719
        %v2852 = vmax.bf16 %v2569, %v2722
        %v2853 = vmax.bf16 %v2570, %v2726
        %v2854 = vmax.bf16 %v2571, %v2729
        %v2855 = vmax.bf16 %v2572, %v2733
        %v2856 = vmax.bf16 %v2573, %v2736
        %v2857 = vmax.bf16 %v2574, %v2740
        %v2858 = vmax.bf16 %v2575, %v2743
        %v2859 = vmax.bf16 %v2576, %v2747
        %v2860 = vmax.bf16 %v2577, %v2750
        %v2861 = vmax.bf16 %v2578, %v2754
        %v2862 = vmax.bf16 %v2579, %v2757
        %v2863 = vmax.bf16 %v2580, %v2761
        %v2864 = vmax.bf16 %v2581, %v2764
        %v2865 = vmax.bf16 %v2582, %v2768
        %v2866 = vmax.bf16 %v2583, %v2771
        %v2867 = vmax.bf16 %v2584, %v2775
        %v2868 = vmax.bf16 %v2585, %v2778
        %v2869 = vmax.bf16 %v2586, %v2782
        %v2870 = vmax.bf16 %v2587, %v2785
        %v2871 = vmax.bf16 %v2588, %v2789
        %v2872 = vmax.bf16 %v2589, %v2792
        %v2873 = vmax.bf16 %v2833, %v2835
        %v2874 = vmax.bf16 %v2834, %v2836
        %v2875 = vmax.bf16 %v2835, %v2837
        %v2876 = vmax.bf16 %v2836, %v2838
        %v2877 = vmax.bf16 %v2837, %v2839
        %v2878 = vmax.bf16 %v2838, %v2840
        %v2879 = vmax.bf16 %v2839, %v2841
        %v2880 = vmax.bf16 %v2840, %v2842
        %v2881 = vmax.bf16 %v2841, %v2843
        %v2882 = vmax.bf16 %v2842, %v2844
        %v2883 = vmax.bf16 %v2843, %v2845
        %v2884 = vmax.bf16 %v2844, %v2846
        %v2885 = vmax.bf16 %v2845, %v2847
        %v2886 = vmax.bf16 %v2846, %v2848
        %v2887 = vmax.bf16 %v2847, %v2849
        %v2888 = vmax.bf16 %v2848, %v2850
        %v2889 = vmax.bf16 %v2849, %v2851
        %v2890 = vmax.bf16 %v2850, %v2852
        %v2891 = vmax.bf16 %v2851, %v2853
        %v2892 = vmax.bf16 %v2852, %v2854
        %v2893 = vmax.bf16 %v2853, %v2855
        %v2894 = vmax.bf16 %v2854, %v2856
        %v2895 = vmax.bf16 %v2855, %v2857
        %v2896 = vmax.bf16 %v2856, %v2858
        %v2897 = vmax.bf16 %v2857, %v2859
        %v2898 = vmax.bf16 %v2858, %v2860
        %v2899 = vmax.bf16 %v2859, %v2861
        %v2900 = vmax.bf16 %v2860, %v2862
        %v2901 = vmax.bf16 %v2861, %v2863
        %v2902 = vmax.bf16 %v2862, %v2864
        %v2903 = vmax.bf16 %v2863, %v2865
        %v2904 = vmax.bf16 %v2864, %v2866
        %v2905 = vmax.bf16 %v2865, %v2867
        %v2906 = vmax.bf16 %v2866, %v2868
        %v2907 = vmax.bf16 %v2867, %v2869
        %v2908 = vmax.bf16 %v2868, %v2870
        %v2909 = vmax.bf16 %v2873, %v2877
        %v2910 = vmax.bf16 %v2874, %v2878
        %v2911 = vmax.bf16 %v2875, %v2879
        %v2912 = vmax.bf16 %v2876, %v2880
        %v2913 = vmax.bf16 %v2877, %v2881
        %v2914 = vmax.bf16 %v2878, %v2882
        %v2915 = vmax.bf16 %v2879, %v2883
        %v2916 = vmax.bf16 %v2880, %v2884
        %v2917 = vmax.bf16 %v2881, %v2885
        %v2918 = vmax.bf16 %v2882, %v2886
        %v2919 = vmax.bf16 %v2883, %v2887
        %v2920 = vmax.bf16 %v2884, %v2888
        %v2921 = vmax.bf16 %v2885, %v2889
        %v2922 = vmax.bf16 %v2886, %v2890
        %v2923 = vmax.bf16 %v2887, %v2891
        %v2924 = vmax.bf16 %v2888, %v2892
        %v2925 = vmax.bf16 %v2889, %v2893
        %v2926 = vmax.bf16 %v2890, %v2894
        %v2927 = vmax.bf16 %v2891, %v2895
        %v2928 = vmax.bf16 %v2892, %v2896
        %v2929 = vmax.bf16 %v2893, %v2897
        %v2930 = vmax.bf16 %v2894, %v2898
        %v2931 = vmax.bf16 %v2895, %v2899
        %v2932 = vmax.bf16 %v2896, %v2900
        %v2933 = vmax.bf16 %v2897, %v2901
        %v2934 = vmax.bf16 %v2898, %v2902
        %v2935 = vmax.bf16 %v2899, %v2903
        %v2936 = vmax.bf16 %v2900, %v2904
        %v2937 = vmax.bf16 %v2901, %v2905
        %v2938 = vmax.bf16 %v2902, %v2906
        %v2939 = vmax.bf16 %v2903, %v2907
        %v2940 = vmax.bf16 %v2904, %v2908
        %v2941 = vmax.bf16 %v2909, %v2841
        %v2942 = vmax.bf16 %v2910, %v2842
        %v2943 = vmax.bf16 %v2911, %v2843
        %v2944 = vmax.bf16 %v2912, %v2844
        %v2945 = vmax.bf16 %v2913, %v2845
        %v2946 = vmax.bf16 %v2914, %v2846
        %v2947 = vmax.bf16 %v2915, %v2847
        %v2948 = vmax.bf16 %v2916, %v2848
        %v2949 = vmax.bf16 %v2917, %v2849
        %v2950 = vmax.bf16 %v2918, %v2850
        %v2951 = vmax.bf16 %v2919, %v2851
        %v2952 = vmax.bf16 %v2920, %v2852
        %v2953 = vmax.bf16 %v2921, %v2853
        %v2954 = vmax.bf16 %v2922, %v2854
        %v2955 = vmax.bf16 %v2923, %v2855
        %v2956 = vmax.bf16 %v2924, %v2856
        %v2957 = vmax.bf16 %v2925, %v2857
        %v2958 = vmax.bf16 %v2926, %v2858
        %v2959 = vmax.bf16 %v2927, %v2859
        %v2960 = vmax.bf16 %v2928, %v2860
        %v2961 = vmax.bf16 %v2929, %v2861
        %v2962 = vmax.bf16 %v2930, %v2862
        %v2963 = vmax.bf16 %v2931, %v2863
        %v2964 = vmax.bf16 %v2932, %v2864
        %v2965 = vmax.bf16 %v2933, %v2865
        %v2966 = vmax.bf16 %v2934, %v2866
        %v2967 = vmax.bf16 %v2935, %v2867
        %v2968 = vmax.bf16 %v2936, %v2868
        %v2969 = vmax.bf16 %v2937, %v2869
        %v2970 = vmax.bf16 %v2938, %v2870
        %v2971 = vmax.bf16 %v2939, %v2871
        %v2972 = vmax.bf16 %v2940, %v2872
        %2973 = vst [vmem:[#allocation3 + $0x4] sm:$0xf] %v2941
        %2974 = vst [vmem:[#allocation3 + $0x14] sm:$0xf] %v2942
        %2975 = vst [vmem:[#allocation3 + $0x24] sm:$0xf] %v2943
        %2976 = vst [vmem:[#allocation3 + $0x34] sm:$0xf] %v2944
        %2977 = vst [vmem:[#allocation3 + $0x44] sm:$0xf] %v2945
        %2978 = vst [vmem:[#allocation3 + $0x54] sm:$0xf] %v2946
        %2979 = vst [vmem:[#allocation3 + $0x64] sm:$0xf] %v2947
        %2980 = vst [vmem:[#allocation3 + $0x74] sm:$0xf] %v2948
        %2981 = vst [vmem:[#allocation3 + $0x84] sm:$0xf] %v2949
        %2982 = vst [vmem:[#allocation3 + $0x94] sm:$0xf] %v2950
        %2983 = vst [vmem:[#allocation3 + $0xa4] sm:$0xf] %v2951
        %2984 = vst [vmem:[#allocation3 + $0xb4] sm:$0xf] %v2952
        %2985 = vst [vmem:[#allocation3 + $0xc4] sm:$0xf] %v2953
        %2986 = vst [vmem:[#allocation3 + $0xd4] sm:$0xf] %v2954
        %2987 = vst [vmem:[#allocation3 + $0xe4] sm:$0xf] %v2955
        %2988 = vst [vmem:[#allocation3 + $0xf4] sm:$0xf] %v2956
        %2989 = vst [vmem:[#allocation3 + $0x104] sm:$0xf] %v2957
        %2990 = vst [vmem:[#allocation3 + $0x114] sm:$0xf] %v2958
        %2991 = vst [vmem:[#allocation3 + $0x124] sm:$0xf] %v2959
        %2992 = vst [vmem:[#allocation3 + $0x134] sm:$0xf] %v2960
        %2993 = vst [vmem:[#allocation3 + $0x144] sm:$0xf] %v2961
        %2994 = vst [vmem:[#allocation3 + $0x154] sm:$0xf] %v2962
        %2995 = vst [vmem:[#allocation3 + $0x164] sm:$0xf] %v2963
        %2996 = vst [vmem:[#allocation3 + $0x174] sm:$0xf] %v2964
        %2997 = vst [vmem:[#allocation3 + $0x184] sm:$0xf] %v2965
        %2998 = vst [vmem:[#allocation3 + $0x194] sm:$0xf] %v2966
        %2999 = vst [vmem:[#allocation3 + $0x1a4] sm:$0xf] %v2967
        %3000 = vst [vmem:[#allocation3 + $0x1b4] sm:$0xf] %v2968
        %3001 = vst [vmem:[#allocation3 + $0x1c4] sm:$0xf] %v2969
        %3002 = vst [vmem:[#allocation3 + $0x1d4] sm:$0xf] %v2970
        %3003 = vst [vmem:[#allocation3 + $0x1e4] sm:$0xf] %v2971
        %3004 = vst [vmem:[#allocation3 + $0x1f4] sm:$0xf] %v2972
        %v3037 = vrot.slane %v2941, 7
        %v3038 = vrot.slane %v3037, 4
        %v3039 = vrot.slane %v2942, 7
        %v3040 = vsel %vm927, %v3038, %v3039
        %v3041 = vrot.slane %v3039, 4
        %v3042 = vrot.slane %v2943, 7
        %v3043 = vrot.slane %v3042, 4
        %v3044 = vrot.slane %v2944, 7
        %v3045 = vsel %vm927, %v3043, %v3044
        %v3046 = vrot.slane %v3044, 4
        %v3047 = vrot.slane %v2945, 7
        %v3048 = vrot.slane %v3047, 4
        %v3049 = vrot.slane %v2946, 7
        %v3050 = vsel %vm927, %v3048, %v3049
        %v3051 = vrot.slane %v3049, 4
        %v3052 = vrot.slane %v2947, 7
        %v3053 = vrot.slane %v3052, 4
        %v3054 = vrot.slane %v2948, 7
        %v3055 = vsel %vm927, %v3053, %v3054
        %v3056 = vrot.slane %v3054, 4
        %v3057 = vrot.slane %v2949, 7
        %v3058 = vrot.slane %v3057, 4
        %v3059 = vrot.slane %v2950, 7
        %v3060 = vsel %vm927, %v3058, %v3059
        %v3061 = vrot.slane %v3059, 4
        %v3062 = vrot.slane %v2951, 7
        %v3063 = vrot.slane %v3062, 4
        %v3064 = vrot.slane %v2952, 7
        %v3065 = vsel %vm927, %v3063, %v3064
        %v3066 = vrot.slane %v3064, 4
        %v3067 = vrot.slane %v2953, 7
        %v3068 = vrot.slane %v3067, 4
        %v3069 = vrot.slane %v2954, 7
        %v3070 = vsel %vm927, %v3068, %v3069
        %v3071 = vrot.slane %v3069, 4
        %v3072 = vrot.slane %v2955, 7
        %v3073 = vrot.slane %v3072, 4
        %v3074 = vrot.slane %v2956, 7
        %v3075 = vsel %vm927, %v3073, %v3074
        %v3076 = vrot.slane %v3074, 4
        %v3077 = vrot.slane %v2957, 7
        %v3078 = vrot.slane %v3077, 4
        %v3079 = vrot.slane %v2958, 7
        %v3080 = vsel %vm927, %v3078, %v3079
        %v3081 = vrot.slane %v3079, 4
        %v3082 = vrot.slane %v2959, 7
        %v3083 = vrot.slane %v3082, 4
        %v3084 = vrot.slane %v2960, 7
        %v3085 = vsel %vm927, %v3083, %v3084
        %v3086 = vrot.slane %v3084, 4
        %v3087 = vrot.slane %v2961, 7
        %v3088 = vrot.slane %v3087, 4
        %v3089 = vrot.slane %v2962, 7
        %v3090 = vsel %vm927, %v3088, %v3089
        %v3091 = vrot.slane %v3089, 4
        %v3092 = vrot.slane %v2963, 7
        %v3093 = vrot.slane %v3092, 4
        %v3094 = vrot.slane %v2964, 7
        %v3095 = vsel %vm927, %v3093, %v3094
        %v3096 = vrot.slane %v3094, 4
        %v3097 = vrot.slane %v2965, 7
        %v3098 = vrot.slane %v3097, 4
        %v3099 = vrot.slane %v2966, 7
        %v3100 = vsel %vm927, %v3098, %v3099
        %v3101 = vrot.slane %v3099, 4
        %v3102 = vrot.slane %v2967, 7
        %v3103 = vrot.slane %v3102, 4
        %v3104 = vrot.slane %v2968, 7
        %v3105 = vsel %vm927, %v3103, %v3104
        %v3106 = vrot.slane %v3104, 4
        %v3107 = vrot.slane %v2969, 7
        %v3108 = vrot.slane %v3107, 4
        %v3109 = vrot.slane %v2970, 7
        %v3110 = vsel %vm927, %v3108, %v3109
        %v3111 = vrot.slane %v3109, 4
        %v3112 = vrot.slane %v2971, 7
        %v3113 = vrot.slane %v3112, 4
        %v3114 = vrot.slane %v2972, 7
        %v3115 = vsel %vm927, %v3113, %v3114
        %v3116 = vrot.slane %v3114, 4
        %3165 = vst [vmem:[%s238] sm:$0xe] %v3037
        %3166 = vst [vmem:[%s238 + $0x4] sm:$0xf] %v3040
        %3167 = vst [vmem:[%s238 + $0x8] sm:$0x1] %v3041
        %3168 = vst [vmem:[%s238 + $0xc] sm:$0xe] %v3042
        %3169 = vst [vmem:[%s238 + $0x10] sm:$0xf] %v3045
        %3170 = vst [vmem:[%s238 + $0x14] sm:$0x1] %v3046
        %3171 = vst [vmem:[%s238 + $0x18] sm:$0xe] %v3047
        %3172 = vst [vmem:[%s238 + $0x1c] sm:$0xf] %v3050
        %3173 = vst [vmem:[%s238 + $0x20] sm:$0x1] %v3051
        %3174 = vst [vmem:[%s238 + $0x24] sm:$0xe] %v3052
        %3175 = vst [vmem:[%s238 + $0x28] sm:$0xf] %v3055
        %3176 = vst [vmem:[%s238 + $0x2c] sm:$0x1] %v3056
        %3177 = vst [vmem:[%s238 + $0x30] sm:$0xe] %v3057
        %3178 = vst [vmem:[%s238 + $0x34] sm:$0xf] %v3060
        %3179 = vst [vmem:[%s238 + $0x38] sm:$0x1] %v3061
        %3180 = vst [vmem:[%s238 + $0x3c] sm:$0xe] %v3062
        %3181 = vst [vmem:[%s238 + $0x40] sm:$0xf] %v3065
        %3182 = vst [vmem:[%s238 + $0x44] sm:$0x1] %v3066
        %3183 = vst [vmem:[%s238 + $0x48] sm:$0xe] %v3067
        %3184 = vst [vmem:[%s238 + $0x4c] sm:$0xf] %v3070
        %3185 = vst [vmem:[%s238 + $0x50] sm:$0x1] %v3071
        %3186 = vst [vmem:[%s238 + $0x54] sm:$0xe] %v3072
        %3187 = vst [vmem:[%s238 + $0x58] sm:$0xf] %v3075
        %3188 = vst [vmem:[%s238 + $0x5c] sm:$0x1] %v3076
        %3189 = vst [vmem:[%s238 + $0x60] sm:$0xe] %v3077
        %3190 = vst [vmem:[%s238 + $0x64] sm:$0xf] %v3080
        %3191 = vst [vmem:[%s238 + $0x68] sm:$0x1] %v3081
        %3192 = vst [vmem:[%s238 + $0x6c] sm:$0xe] %v3082
        %3193 = vst [vmem:[%s238 + $0x70] sm:$0xf] %v3085
        %3194 = vst [vmem:[%s238 + $0x74] sm:$0x1] %v3086
        %3195 = vst [vmem:[%s238 + $0x78] sm:$0xe] %v3087
        %3196 = vst [vmem:[%s238 + $0x7c] sm:$0xf] %v3090
        %3197 = vst [vmem:[%s238 + $0x80] sm:$0x1] %v3091
        %3198 = vst [vmem:[%s238 + $0x84] sm:$0xe] %v3092
        %3199 = vst [vmem:[%s238 + $0x88] sm:$0xf] %v3095
        %3200 = vst [vmem:[%s238 + $0x8c] sm:$0x1] %v3096
        %3201 = vst [vmem:[%s238 + $0x90] sm:$0xe] %v3097
        %3202 = vst [vmem:[%s238 + $0x94] sm:$0xf] %v3100
        %3203 = vst [vmem:[%s238 + $0x98] sm:$0x1] %v3101
        %3204 = vst [vmem:[%s238 + $0x9c] sm:$0xe] %v3102
        %3205 = vst [vmem:[%s238 + $0xa0] sm:$0xf] %v3105
        %3206 = vst [vmem:[%s238 + $0xa4] sm:$0x1] %v3106
        %3207 = vst [vmem:[%s238 + $0xa8] sm:$0xe] %v3107
        %3208 = vst [vmem:[%s238 + $0xac] sm:$0xf] %v3110
        %3209 = vst [vmem:[%s238 + $0xb0] sm:$0x1] %v3111
        %3210 = vst [vmem:[%s238 + $0xb4] sm:$0xe] %v3112
        %3211 = vst [vmem:[%s238 + $0xb8] sm:$0xf] %v3115
        %3212 = vst [vmem:[%s238 + $0xbc] sm:$0x1] %v3116
        %v3213 = vld [vmem:[#allocation2] sm:$0xf]
        %v3214 = vld [vmem:[#allocation2 + $0x4] sm:$0xf]
        %v3215 = vld [vmem:[#allocation2 + $0xc] sm:$0xf]
        %v3216 = vld [vmem:[#allocation2 + $0x10] sm:$0xf]
        %v3217 = vld [vmem:[#allocation2 + $0x18] sm:$0xf]
        %v3218 = vld [vmem:[#allocation2 + $0x1c] sm:$0xf]
        %v3219 = vld [vmem:[#allocation2 + $0x24] sm:$0xf]
        %v3220 = vld [vmem:[#allocation2 + $0x28] sm:$0xf]
        %v3221 = vld [vmem:[#allocation2 + $0x30] sm:$0xf]
        %v3222 = vld [vmem:[#allocation2 + $0x34] sm:$0xf]
        %v3223 = vld [vmem:[#allocation2 + $0x3c] sm:$0xf]
        %v3224 = vld [vmem:[#allocation2 + $0x40] sm:$0xf]
        %v3225 = vld [vmem:[#allocation2 + $0x48] sm:$0xf]
        %v3226 = vld [vmem:[#allocation2 + $0x4c] sm:$0xf]
        %v3227 = vld [vmem:[#allocation2 + $0x54] sm:$0xf]
        %v3228 = vld [vmem:[#allocation2 + $0x58] sm:$0xf]
        %v3229 = vld [vmem:[#allocation2 + $0x60] sm:$0xf]
        %v3230 = vld [vmem:[#allocation2 + $0x64] sm:$0xf]
        %v3231 = vld [vmem:[#allocation2 + $0x6c] sm:$0xf]
        %v3232 = vld [vmem:[#allocation2 + $0x70] sm:$0xf]
        %v3233 = vld [vmem:[#allocation2 + $0x78] sm:$0xf]
        %v3234 = vld [vmem:[#allocation2 + $0x7c] sm:$0xf]
        %v3235 = vld [vmem:[#allocation2 + $0x84] sm:$0xf]
        %v3236 = vld [vmem:[#allocation2 + $0x88] sm:$0xf]
        %v3237 = vld [vmem:[#allocation2 + $0x90] sm:$0xf]
        %v3238 = vld [vmem:[#allocation2 + $0x94] sm:$0xf]
        %v3239 = vld [vmem:[#allocation2 + $0x9c] sm:$0xf]
        %v3240 = vld [vmem:[#allocation2 + $0xa0] sm:$0xf]
        %v3241 = vld [vmem:[#allocation2 + $0xa8] sm:$0xf]
        %v3242 = vld [vmem:[#allocation2 + $0xac] sm:$0xf]
        %v3243 = vld [vmem:[#allocation2 + $0xb4] sm:$0xf]
        %v3244 = vld [vmem:[#allocation2 + $0xb8] sm:$0xf]
        %v3245 = vld [vmem:[#allocation2 + $0xc0] sm:$0xf]
        %v3246 = vld [vmem:[#allocation2 + $0xc4] sm:$0xf]
        %v3247 = vld [vmem:[#allocation2 + $0xcc] sm:$0xf]
        %v3248 = vld [vmem:[#allocation2 + $0xd0] sm:$0xf]
        %v3249 = vld [vmem:[#allocation2 + $0xd8] sm:$0xf]
        %v3250 = vld [vmem:[#allocation2 + $0xdc] sm:$0xf]
        %v3251 = vld [vmem:[#allocation2 + $0xe4] sm:$0xf]
        %v3252 = vld [vmem:[#allocation2 + $0xe8] sm:$0xf]
        %v3253 = vld [vmem:[#allocation2 + $0x8] sm:$0x1]
        %v3254 = vld [vmem:[#allocation2 + $0x14] sm:$0x1]
        %v3255 = vld [vmem:[#allocation2 + $0x20] sm:$0x1]
        %v3256 = vld [vmem:[#allocation2 + $0x2c] sm:$0x1]
        %v3257 = vld [vmem:[#allocation2 + $0x38] sm:$0x1]
        %v3258 = vld [vmem:[#allocation2 + $0x44] sm:$0x1]
        %v3259 = vld [vmem:[#allocation2 + $0x50] sm:$0x1]
        %v3260 = vld [vmem:[#allocation2 + $0x5c] sm:$0x1]
        %v3261 = vld [vmem:[#allocation2 + $0x68] sm:$0x1]
        %v3262 = vld [vmem:[#allocation2 + $0x74] sm:$0x1]
        %v3263 = vld [vmem:[#allocation2 + $0x80] sm:$0x1]
        %v3264 = vld [vmem:[#allocation2 + $0x8c] sm:$0x1]
        %v3265 = vld [vmem:[#allocation2 + $0x98] sm:$0x1]
        %v3266 = vld [vmem:[#allocation2 + $0xa4] sm:$0x1]
        %v3267 = vld [vmem:[#allocation2 + $0xb0] sm:$0x1]
        %v3268 = vld [vmem:[#allocation2 + $0xbc] sm:$0x1]
        %v3269 = vld [vmem:[#allocation2 + $0xc8] sm:$0x1]
        %v3270 = vld [vmem:[#allocation2 + $0xd4] sm:$0x1]
        %v3271 = vld [vmem:[#allocation2 + $0xe0] sm:$0x1]
        %v3272 = vld [vmem:[#allocation2 + $0xec] sm:$0x1]
        %v3273 = vld [vmem:[#allocation2] sm:$0xe]
        %v3274 = vld [vmem:[#allocation2 + $0xc] sm:$0xe]
        %v3275 = vld [vmem:[#allocation2 + $0x18] sm:$0xe]
        %v3276 = vld [vmem:[#allocation2 + $0x24] sm:$0xe]
        %v3277 = vld [vmem:[#allocation2 + $0x30] sm:$0xe]
        %v3278 = vld [vmem:[#allocation2 + $0x3c] sm:$0xe]
        %v3279 = vld [vmem:[#allocation2 + $0x48] sm:$0xe]
        %v3280 = vld [vmem:[#allocation2 + $0x54] sm:$0xe]
        %v3281 = vld [vmem:[#allocation2 + $0x60] sm:$0xe]
        %v3282 = vld [vmem:[#allocation2 + $0x6c] sm:$0xe]
        %v3283 = vld [vmem:[#allocation2 + $0x78] sm:$0xe]
        %v3284 = vld [vmem:[#allocation2 + $0x84] sm:$0xe]
        %v3285 = vld [vmem:[#allocation2 + $0x90] sm:$0xe]
        %v3286 = vld [vmem:[#allocation2 + $0x9c] sm:$0xe]
        %v3287 = vld [vmem:[#allocation2 + $0xa8] sm:$0xe]
        %v3288 = vld [vmem:[#allocation2 + $0xb4] sm:$0xe]
        %v3289 = vld [vmem:[#allocation2 + $0xc0] sm:$0xe]
        %v3290 = vld [vmem:[#allocation2 + $0xcc] sm:$0xe]
        %v3291 = vld [vmem:[#allocation2 + $0xd8] sm:$0xe]
        %v3292 = vld [vmem:[#allocation2 + $0xe4] sm:$0xe]
        %v3293 = vld [vmem:[#allocation2 + $0x8] sm:$0x3]
        %v3294 = vld [vmem:[#allocation2 + $0x14] sm:$0x3]
        %v3295 = vld [vmem:[#allocation2 + $0x20] sm:$0x3]
        %v3296 = vld [vmem:[#allocation2 + $0x2c] sm:$0x3]
        %v3297 = vld [vmem:[#allocation2 + $0x38] sm:$0x3]
        %v3298 = vld [vmem:[#allocation2 + $0x44] sm:$0x3]
        %v3299 = vld [vmem:[#allocation2 + $0x50] sm:$0x3]
        %v3300 = vld [vmem:[#allocation2 + $0x5c] sm:$0x3]
        %v3301 = vld [vmem:[#allocation2 + $0x68] sm:$0x3]
        %v3302 = vld [vmem:[#allocation2 + $0x74] sm:$0x3]
        %v3303 = vld [vmem:[#allocation2 + $0x80] sm:$0x3]
        %v3304 = vld [vmem:[#allocation2 + $0x8c] sm:$0x3]
        %v3305 = vld [vmem:[#allocation2 + $0x98] sm:$0x3]
        %v3306 = vld [vmem:[#allocation2 + $0xa4] sm:$0x3]
        %v3307 = vld [vmem:[#allocation2 + $0xb0] sm:$0x3]
        %v3308 = vld [vmem:[#allocation2 + $0xbc] sm:$0x3]
        %v3309 = vld [vmem:[#allocation2 + $0xc8] sm:$0x3]
        %v3310 = vld [vmem:[#allocation2 + $0xd4] sm:$0x3]
        %v3311 = vld [vmem:[#allocation2 + $0xe0] sm:$0x3]
        %v3312 = vld [vmem:[#allocation2 + $0xec] sm:$0x3]
        %v3313 = vld [vmem:[#allocation2] sm:$0xc]
        %v3314 = vld [vmem:[#allocation2 + $0xc] sm:$0xc]
        %v3315 = vld [vmem:[#allocation2 + $0x18] sm:$0xc]
        %v3316 = vld [vmem:[#allocation2 + $0x24] sm:$0xc]
        %v3317 = vld [vmem:[#allocation2 + $0x30] sm:$0xc]
        %v3318 = vld [vmem:[#allocation2 + $0x3c] sm:$0xc]
        %v3319 = vld [vmem:[#allocation2 + $0x48] sm:$0xc]
        %v3320 = vld [vmem:[#allocation2 + $0x54] sm:$0xc]
        %v3321 = vld [vmem:[#allocation2 + $0x60] sm:$0xc]
        %v3322 = vld [vmem:[#allocation2 + $0x6c] sm:$0xc]
        %v3323 = vld [vmem:[#allocation2 + $0x78] sm:$0xc]
        %v3324 = vld [vmem:[#allocation2 + $0x84] sm:$0xc]
        %v3325 = vld [vmem:[#allocation2 + $0x90] sm:$0xc]
        %v3326 = vld [vmem:[#allocation2 + $0x9c] sm:$0xc]
        %v3327 = vld [vmem:[#allocation2 + $0xa8] sm:$0xc]
        %v3328 = vld [vmem:[#allocation2 + $0xb4] sm:$0xc]
        %v3329 = vld [vmem:[#allocation2 + $0xc0] sm:$0xc]
        %v3330 = vld [vmem:[#allocation2 + $0xcc] sm:$0xc]
        %v3331 = vld [vmem:[#allocation2 + $0xd8] sm:$0xc]
        %v3332 = vld [vmem:[#allocation2 + $0xe4] sm:$0xc]
        %v3334 = vshrl.u32 %v3213, 16
        %v3336 = vrot.slane %v3334, 4
        %v3337 = vshll.u32 %v3213, 16
        %v3339 = vrot.slane %v3337, 5
        %v3340 = vor.u32 %v3336, %v3339
        %v3341 = vrot.slane %v3340, 4
        %v3343 = vshll.u32 %v3214, 16
        %v3345 = vrot.slane %v3343, 5
        %v3346 = vsel %vm1226, %v3341, %v3345
        %v3347 = vshrl.u32 %v3214, 16
        %v3349 = vrot.slane %v3347, 4
        %v3350 = vor.u32 %v3349, %v3345
        %v3351 = vrot.slane %v3350, 4
        %v3353 = vshll.u32 %v3253, 16
        %v3355 = vrot.slane %v3353, 5
        %v3356 = vsel %vm1226, %v3351, %v3355
        %v3358 = vshrl.u32 %v3215, 16
        %v3360 = vrot.slane %v3358, 4
        %v3361 = vshll.u32 %v3215, 16
        %v3363 = vrot.slane %v3361, 5
        %v3364 = vor.u32 %v3360, %v3363
        %v3365 = vrot.slane %v3364, 4
        %v3367 = vshll.u32 %v3216, 16
        %v3369 = vrot.slane %v3367, 5
        %v3370 = vsel %vm1226, %v3365, %v3369
        %v3371 = vshrl.u32 %v3216, 16
        %v3373 = vrot.slane %v3371, 4
        %v3374 = vor.u32 %v3373, %v3369
        %v3375 = vrot.slane %v3374, 4
        %v3377 = vshll.u32 %v3254, 16
        %v3379 = vrot.slane %v3377, 5
        %v3380 = vsel %vm1226, %v3375, %v3379
        %v3382 = vshrl.u32 %v3217, 16
        %v3384 = vrot.slane %v3382, 4
        %v3385 = vshll.u32 %v3217, 16
        %v3387 = vrot.slane %v3385, 5
        %v3388 = vor.u32 %v3384, %v3387
        %v3389 = vrot.slane %v3388, 4
        %v3391 = vshll.u32 %v3218, 16
        %v3393 = vrot.slane %v3391, 5
        %v3394 = vsel %vm1226, %v3389, %v3393
        %v3395 = vshrl.u32 %v3218, 16
        %v3397 = vrot.slane %v3395, 4
        %v3398 = vor.u32 %v3397, %v3393
        %v3399 = vrot.slane %v3398, 4
        %v3401 = vshll.u32 %v3255, 16
        %v3403 = vrot.slane %v3401, 5
        %v3404 = vsel %vm1226, %v3399, %v3403
        %v3406 = vshrl.u32 %v3219, 16
        %v3408 = vrot.slane %v3406, 4
        %v3409 = vshll.u32 %v3219, 16
        %v3411 = vrot.slane %v3409, 5
        %v3412 = vor.u32 %v3408, %v3411
        %v3413 = vrot.slane %v3412, 4
        %v3415 = vshll.u32 %v3220, 16
        %v3417 = vrot.slane %v3415, 5
        %v3418 = vsel %vm1226, %v3413, %v3417
        %v3419 = vshrl.u32 %v3220, 16
        %v3421 = vrot.slane %v3419, 4
        %v3422 = vor.u32 %v3421, %v3417
        %v3423 = vrot.slane %v3422, 4
        %v3425 = vshll.u32 %v3256, 16
        %v3427 = vrot.slane %v3425, 5
        %v3428 = vsel %vm1226, %v3423, %v3427
        %v3430 = vshrl.u32 %v3221, 16
        %v3432 = vrot.slane %v3430, 4
        %v3433 = vshll.u32 %v3221, 16
        %v3435 = vrot.slane %v3433, 5
        %v3436 = vor.u32 %v3432, %v3435
        %v3437 = vrot.slane %v3436, 4
        %v3439 = vshll.u32 %v3222, 16
        %v3441 = vrot.slane %v3439, 5
        %v3442 = vsel %vm1226, %v3437, %v3441
        %v3443 = vshrl.u32 %v3222, 16
        %v3445 = vrot.slane %v3443, 4
        %v3446 = vor.u32 %v3445, %v3441
        %v3447 = vrot.slane %v3446, 4
        %v3449 = vshll.u32 %v3257, 16
        %v3451 = vrot.slane %v3449, 5
        %v3452 = vsel %vm1226, %v3447, %v3451
        %v3454 = vshrl.u32 %v3223, 16
        %v3456 = vrot.slane %v3454, 4
        %v3457 = vshll.u32 %v3223, 16
        %v3459 = vrot.slane %v3457, 5
        %v3460 = vor.u32 %v3456, %v3459
        %v3461 = vrot.slane %v3460, 4
        %v3463 = vshll.u32 %v3224, 16
        %v3465 = vrot.slane %v3463, 5
        %v3466 = vsel %vm1226, %v3461, %v3465
        %v3467 = vshrl.u32 %v3224, 16
        %v3469 = vrot.slane %v3467, 4
        %v3470 = vor.u32 %v3469, %v3465
        %v3471 = vrot.slane %v3470, 4
        %v3473 = vshll.u32 %v3258, 16
        %v3475 = vrot.slane %v3473, 5
        %v3476 = vsel %vm1226, %v3471, %v3475
        %v3478 = vshrl.u32 %v3225, 16
        %v3480 = vrot.slane %v3478, 4
        %v3481 = vshll.u32 %v3225, 16
        %v3483 = vrot.slane %v3481, 5
        %v3484 = vor.u32 %v3480, %v3483
        %v3485 = vrot.slane %v3484, 4
        %v3487 = vshll.u32 %v3226, 16
        %v3489 = vrot.slane %v3487, 5
        %v3490 = vsel %vm1226, %v3485, %v3489
        %v3491 = vshrl.u32 %v3226, 16
        %v3493 = vrot.slane %v3491, 4
        %v3494 = vor.u32 %v3493, %v3489
        %v3495 = vrot.slane %v3494, 4
        %v3497 = vshll.u32 %v3259, 16
        %v3499 = vrot.slane %v3497, 5
        %v3500 = vsel %vm1226, %v3495, %v3499
        %v3502 = vshrl.u32 %v3227, 16
        %v3504 = vrot.slane %v3502, 4
        %v3505 = vshll.u32 %v3227, 16
        %v3507 = vrot.slane %v3505, 5
        %v3508 = vor.u32 %v3504, %v3507
        %v3509 = vrot.slane %v3508, 4
        %v3511 = vshll.u32 %v3228, 16
        %v3513 = vrot.slane %v3511, 5
        %v3514 = vsel %vm1226, %v3509, %v3513
        %v3515 = vshrl.u32 %v3228, 16
        %v3517 = vrot.slane %v3515, 4
        %v3518 = vor.u32 %v3517, %v3513
        %v3519 = vrot.slane %v3518, 4
        %v3521 = vshll.u32 %v3260, 16
        %v3523 = vrot.slane %v3521, 5
        %v3524 = vsel %vm1226, %v3519, %v3523
        %v3526 = vshrl.u32 %v3229, 16
        %v3528 = vrot.slane %v3526, 4
        %v3529 = vshll.u32 %v3229, 16
        %v3531 = vrot.slane %v3529, 5
        %v3532 = vor.u32 %v3528, %v3531
        %v3533 = vrot.slane %v3532, 4
        %v3535 = vshll.u32 %v3230, 16
        %v3537 = vrot.slane %v3535, 5
        %v3538 = vsel %vm1226, %v3533, %v3537
        %v3539 = vshrl.u32 %v3230, 16
        %v3541 = vrot.slane %v3539, 4
        %v3542 = vor.u32 %v3541, %v3537
        %v3543 = vrot.slane %v3542, 4
        %v3545 = vshll.u32 %v3261, 16
        %v3547 = vrot.slane %v3545, 5
        %v3548 = vsel %vm1226, %v3543, %v3547
        %v3550 = vshrl.u32 %v3231, 16
        %v3552 = vrot.slane %v3550, 4
        %v3553 = vshll.u32 %v3231, 16
        %v3555 = vrot.slane %v3553, 5
        %v3556 = vor.u32 %v3552, %v3555
        %v3557 = vrot.slane %v3556, 4
        %v3559 = vshll.u32 %v3232, 16
        %v3561 = vrot.slane %v3559, 5
        %v3562 = vsel %vm1226, %v3557, %v3561
        %v3563 = vshrl.u32 %v3232, 16
        %v3565 = vrot.slane %v3563, 4
        %v3566 = vor.u32 %v3565, %v3561
        %v3567 = vrot.slane %v3566, 4
        %v3569 = vshll.u32 %v3262, 16
        %v3571 = vrot.slane %v3569, 5
        %v3572 = vsel %vm1226, %v3567, %v3571
        %v3574 = vshrl.u32 %v3233, 16
        %v3576 = vrot.slane %v3574, 4
        %v3577 = vshll.u32 %v3233, 16
        %v3579 = vrot.slane %v3577, 5
        %v3580 = vor.u32 %v3576, %v3579
        %v3581 = vrot.slane %v3580, 4
        %v3583 = vshll.u32 %v3234, 16
        %v3585 = vrot.slane %v3583, 5
        %v3586 = vsel %vm1226, %v3581, %v3585
        %v3587 = vshrl.u32 %v3234, 16
        %v3589 = vrot.slane %v3587, 4
        %v3590 = vor.u32 %v3589, %v3585
        %v3591 = vrot.slane %v3590, 4
        %v3593 = vshll.u32 %v3263, 16
        %v3595 = vrot.slane %v3593, 5
        %v3596 = vsel %vm1226, %v3591, %v3595
        %v3598 = vshrl.u32 %v3235, 16
        %v3600 = vrot.slane %v3598, 4
        %v3601 = vshll.u32 %v3235, 16
        %v3603 = vrot.slane %v3601, 5
        %v3604 = vor.u32 %v3600, %v3603
        %v3605 = vrot.slane %v3604, 4
        %v3607 = vshll.u32 %v3236, 16
        %v3609 = vrot.slane %v3607, 5
        %v3610 = vsel %vm1226, %v3605, %v3609
        %v3611 = vshrl.u32 %v3236, 16
        %v3613 = vrot.slane %v3611, 4
        %v3614 = vor.u32 %v3613, %v3609
        %v3615 = vrot.slane %v3614, 4
        %v3617 = vshll.u32 %v3264, 16
        %v3619 = vrot.slane %v3617, 5
        %v3620 = vsel %vm1226, %v3615, %v3619
        %v3622 = vshrl.u32 %v3237, 16
        %v3624 = vrot.slane %v3622, 4
        %v3625 = vshll.u32 %v3237, 16
        %v3627 = vrot.slane %v3625, 5
        %v3628 = vor.u32 %v3624, %v3627
        %v3629 = vrot.slane %v3628, 4
        %v3631 = vshll.u32 %v3238, 16
        %v3633 = vrot.slane %v3631, 5
        %v3634 = vsel %vm1226, %v3629, %v3633
        %v3635 = vshrl.u32 %v3238, 16
        %v3637 = vrot.slane %v3635, 4
        %v3638 = vor.u32 %v3637, %v3633
        %v3639 = vrot.slane %v3638, 4
        %v3641 = vshll.u32 %v3265, 16
        %v3643 = vrot.slane %v3641, 5
        %v3644 = vsel %vm1226, %v3639, %v3643
        %v3646 = vshrl.u32 %v3239, 16
        %v3648 = vrot.slane %v3646, 4
        %v3649 = vshll.u32 %v3239, 16
        %v3651 = vrot.slane %v3649, 5
        %v3652 = vor.u32 %v3648, %v3651
        %v3653 = vrot.slane %v3652, 4
        %v3655 = vshll.u32 %v3240, 16
        %v3657 = vrot.slane %v3655, 5
        %v3658 = vsel %vm1226, %v3653, %v3657
        %v3659 = vshrl.u32 %v3240, 16
        %v3661 = vrot.slane %v3659, 4
        %v3662 = vor.u32 %v3661, %v3657
        %v3663 = vrot.slane %v3662, 4
        %v3665 = vshll.u32 %v3266, 16
        %v3667 = vrot.slane %v3665, 5
        %v3668 = vsel %vm1226, %v3663, %v3667
        %v3670 = vshrl.u32 %v3241, 16
        %v3672 = vrot.slane %v3670, 4
        %v3673 = vshll.u32 %v3241, 16
        %v3675 = vrot.slane %v3673, 5
        %v3676 = vor.u32 %v3672, %v3675
        %v3677 = vrot.slane %v3676, 4
        %v3679 = vshll.u32 %v3242, 16
        %v3681 = vrot.slane %v3679, 5
        %v3682 = vsel %vm1226, %v3677, %v3681
        %v3683 = vshrl.u32 %v3242, 16
        %v3685 = vrot.slane %v3683, 4
        %v3686 = vor.u32 %v3685, %v3681
        %v3687 = vrot.slane %v3686, 4
        %v3689 = vshll.u32 %v3267, 16
        %v3691 = vrot.slane %v3689, 5
        %v3692 = vsel %vm1226, %v3687, %v3691
        %v3694 = vshrl.u32 %v3243, 16
        %v3696 = vrot.slane %v3694, 4
        %v3697 = vshll.u32 %v3243, 16
        %v3699 = vrot.slane %v3697, 5
        %v3700 = vor.u32 %v3696, %v3699
        %v3701 = vrot.slane %v3700, 4
        %v3703 = vshll.u32 %v3244, 16
        %v3705 = vrot.slane %v3703, 5
        %v3706 = vsel %vm1226, %v3701, %v3705
        %v3707 = vshrl.u32 %v3244, 16
        %v3709 = vrot.slane %v3707, 4
        %v3710 = vor.u32 %v3709, %v3705
        %v3711 = vrot.slane %v3710, 4
        %v3713 = vshll.u32 %v3268, 16
        %v3715 = vrot.slane %v3713, 5
        %v3716 = vsel %vm1226, %v3711, %v3715
        %v3718 = vshrl.u32 %v3245, 16
        %v3720 = vrot.slane %v3718, 4
        %v3721 = vshll.u32 %v3245, 16
        %v3723 = vrot.slane %v3721, 5
        %v3724 = vor.u32 %v3720, %v3723
        %v3725 = vrot.slane %v3724, 4
        %v3727 = vshll.u32 %v3246, 16
        %v3729 = vrot.slane %v3727, 5
        %v3730 = vsel %vm1226, %v3725, %v3729
        %v3731 = vshrl.u32 %v3246, 16
        %v3733 = vrot.slane %v3731, 4
        %v3734 = vor.u32 %v3733, %v3729
        %v3735 = vrot.slane %v3734, 4
        %v3737 = vshll.u32 %v3269, 16
        %v3739 = vrot.slane %v3737, 5
        %v3740 = vsel %vm1226, %v3735, %v3739
        %v3742 = vshrl.u32 %v3247, 16
        %v3744 = vrot.slane %v3742, 4
        %v3745 = vshll.u32 %v3247, 16
        %v3747 = vrot.slane %v3745, 5
        %v3748 = vor.u32 %v3744, %v3747
        %v3749 = vrot.slane %v3748, 4
        %v3751 = vshll.u32 %v3248, 16
        %v3753 = vrot.slane %v3751, 5
        %v3754 = vsel %vm1226, %v3749, %v3753
        %v3755 = vshrl.u32 %v3248, 16
        %v3757 = vrot.slane %v3755, 4
        %v3758 = vor.u32 %v3757, %v3753
        %v3759 = vrot.slane %v3758, 4
        %v3761 = vshll.u32 %v3270, 16
        %v3763 = vrot.slane %v3761, 5
        %v3764 = vsel %vm1226, %v3759, %v3763
        %v3766 = vshrl.u32 %v3249, 16
        %v3768 = vrot.slane %v3766, 4
        %v3769 = vshll.u32 %v3249, 16
        %v3771 = vrot.slane %v3769, 5
        %v3772 = vor.u32 %v3768, %v3771
        %v3773 = vrot.slane %v3772, 4
        %v3775 = vshll.u32 %v3250, 16
        %v3777 = vrot.slane %v3775, 5
        %v3778 = vsel %vm1226, %v3773, %v3777
        %v3779 = vshrl.u32 %v3250, 16
        %v3781 = vrot.slane %v3779, 4
        %v3782 = vor.u32 %v3781, %v3777
        %v3783 = vrot.slane %v3782, 4
        %v3785 = vshll.u32 %v3271, 16
        %v3787 = vrot.slane %v3785, 5
        %v3788 = vsel %vm1226, %v3783, %v3787
        %v3790 = vshrl.u32 %v3251, 16
        %v3792 = vrot.slane %v3790, 4
        %v3793 = vshll.u32 %v3251, 16
        %v3795 = vrot.slane %v3793, 5
        %v3796 = vor.u32 %v3792, %v3795
        %v3797 = vrot.slane %v3796, 4
        %v3799 = vshll.u32 %v3252, 16
        %v3801 = vrot.slane %v3799, 5
        %v3802 = vsel %vm1226, %v3797, %v3801
        %v3803 = vshrl.u32 %v3252, 16
        %v3805 = vrot.slane %v3803, 4
        %v3806 = vor.u32 %v3805, %v3801
        %v3807 = vrot.slane %v3806, 4
        %v3809 = vshll.u32 %v3272, 16
        %v3811 = vrot.slane %v3809, 5
        %v3812 = vsel %vm1226, %v3807, %v3811
        %v3853 = vmax.bf16 %v3213, %v3346
        %v3854 = vmax.bf16 %v3214, %v3356
        %v3855 = vmax.bf16 %v3215, %v3370
        %v3856 = vmax.bf16 %v3216, %v3380
        %v3857 = vmax.bf16 %v3217, %v3394
        %v3858 = vmax.bf16 %v3218, %v3404
        %v3859 = vmax.bf16 %v3219, %v3418
        %v3860 = vmax.bf16 %v3220, %v3428
        %v3861 = vmax.bf16 %v3221, %v3442
        %v3862 = vmax.bf16 %v3222, %v3452
        %v3863 = vmax.bf16 %v3223, %v3466
        %v3864 = vmax.bf16 %v3224, %v3476
        %v3865 = vmax.bf16 %v3225, %v3490
        %v3866 = vmax.bf16 %v3226, %v3500
        %v3867 = vmax.bf16 %v3227, %v3514
        %v3868 = vmax.bf16 %v3228, %v3524
        %v3869 = vmax.bf16 %v3229, %v3538
        %v3870 = vmax.bf16 %v3230, %v3548
        %v3871 = vmax.bf16 %v3231, %v3562
        %v3872 = vmax.bf16 %v3232, %v3572
        %v3873 = vmax.bf16 %v3233, %v3586
        %v3874 = vmax.bf16 %v3234, %v3596
        %v3875 = vmax.bf16 %v3235, %v3610
        %v3876 = vmax.bf16 %v3236, %v3620
        %v3877 = vmax.bf16 %v3237, %v3634
        %v3878 = vmax.bf16 %v3238, %v3644
        %v3879 = vmax.bf16 %v3239, %v3658
        %v3880 = vmax.bf16 %v3240, %v3668
        %v3881 = vmax.bf16 %v3241, %v3682
        %v3882 = vmax.bf16 %v3242, %v3692
        %v3883 = vmax.bf16 %v3243, %v3706
        %v3884 = vmax.bf16 %v3244, %v3716
        %v3885 = vmax.bf16 %v3245, %v3730
        %v3886 = vmax.bf16 %v3246, %v3740
        %v3887 = vmax.bf16 %v3247, %v3754
        %v3888 = vmax.bf16 %v3248, %v3764
        %v3889 = vmax.bf16 %v3249, %v3778
        %v3890 = vmax.bf16 %v3250, %v3788
        %v3891 = vmax.bf16 %v3251, %v3802
        %v3892 = vmax.bf16 %v3252, %v3812
        %v3894 = vshrl.u32 %v3273, 16
        %v3896 = vrot.slane %v3894, 4
        %v3897 = vshll.u32 %v3273, 16
        %v3899 = vrot.slane %v3897, 5
        %v3900 = vor.u32 %v3896, %v3899
        %v3901 = vrot.slane %v3900, 4
        %v3902 = vsel %vm1226, %v3901, %v3345
        %v3904 = vshll.u32 %v3293, 16
        %v3906 = vrot.slane %v3904, 5
        %v3907 = vsel %vm1226, %v3351, %v3906
        %v3908 = vshrl.u32 %v3293, 16
        %v3910 = vrot.slane %v3908, 4
        %v3911 = vor.u32 %v3910, %v3906
        %v3912 = vrot.slane %v3911, 4
        %v3914 = vshrl.u32 %v3274, 16
        %v3916 = vrot.slane %v3914, 4
        %v3917 = vshll.u32 %v3274, 16
        %v3919 = vrot.slane %v3917, 5
        %v3920 = vor.u32 %v3916, %v3919
        %v3921 = vrot.slane %v3920, 4
        %v3922 = vsel %vm1226, %v3921, %v3369
        %v3924 = vshll.u32 %v3294, 16
        %v3926 = vrot.slane %v3924, 5
        %v3927 = vsel %vm1226, %v3375, %v3926
        %v3928 = vshrl.u32 %v3294, 16
        %v3930 = vrot.slane %v3928, 4
        %v3931 = vor.u32 %v3930, %v3926
        %v3932 = vrot.slane %v3931, 4
        %v3934 = vshrl.u32 %v3275, 16
        %v3936 = vrot.slane %v3934, 4
        %v3937 = vshll.u32 %v3275, 16
        %v3939 = vrot.slane %v3937, 5
        %v3940 = vor.u32 %v3936, %v3939
        %v3941 = vrot.slane %v3940, 4
        %v3942 = vsel %vm1226, %v3941, %v3393
        %v3944 = vshll.u32 %v3295, 16
        %v3946 = vrot.slane %v3944, 5
        %v3947 = vsel %vm1226, %v3399, %v3946
        %v3948 = vshrl.u32 %v3295, 16
        %v3950 = vrot.slane %v3948, 4
        %v3951 = vor.u32 %v3950, %v3946
        %v3952 = vrot.slane %v3951, 4
        %v3954 = vshrl.u32 %v3276, 16
        %v3956 = vrot.slane %v3954, 4
        %v3957 = vshll.u32 %v3276, 16
        %v3959 = vrot.slane %v3957, 5
        %v3960 = vor.u32 %v3956, %v3959
        %v3961 = vrot.slane %v3960, 4
        %v3962 = vsel %vm1226, %v3961, %v3417
        %v3964 = vshll.u32 %v3296, 16
        %v3966 = vrot.slane %v3964, 5
        %v3967 = vsel %vm1226, %v3423, %v3966
        %v3968 = vshrl.u32 %v3296, 16
        %v3970 = vrot.slane %v3968, 4
        %v3971 = vor.u32 %v3970, %v3966
        %v3972 = vrot.slane %v3971, 4
        %v3974 = vshrl.u32 %v3277, 16
        %v3976 = vrot.slane %v3974, 4
        %v3977 = vshll.u32 %v3277, 16
        %v3979 = vrot.slane %v3977, 5
        %v3980 = vor.u32 %v3976, %v3979
        %v3981 = vrot.slane %v3980, 4
        %v3982 = vsel %vm1226, %v3981, %v3441
        %v3984 = vshll.u32 %v3297, 16
        %v3986 = vrot.slane %v3984, 5
        %v3987 = vsel %vm1226, %v3447, %v3986
        %v3988 = vshrl.u32 %v3297, 16
        %v3990 = vrot.slane %v3988, 4
        %v3991 = vor.u32 %v3990, %v3986
        %v3992 = vrot.slane %v3991, 4
        %v3994 = vshrl.u32 %v3278, 16
        %v3996 = vrot.slane %v3994, 4
        %v3997 = vshll.u32 %v3278, 16
        %v3999 = vrot.slane %v3997, 5
        %v4000 = vor.u32 %v3996, %v3999
        %v4001 = vrot.slane %v4000, 4
        %v4002 = vsel %vm1226, %v4001, %v3465
        %v4004 = vshll.u32 %v3298, 16
        %v4006 = vrot.slane %v4004, 5
        %v4007 = vsel %vm1226, %v3471, %v4006
        %v4008 = vshrl.u32 %v3298, 16
        %v4010 = vrot.slane %v4008, 4
        %v4011 = vor.u32 %v4010, %v4006
        %v4012 = vrot.slane %v4011, 4
        %v4014 = vshrl.u32 %v3279, 16
        %v4016 = vrot.slane %v4014, 4
        %v4017 = vshll.u32 %v3279, 16
        %v4019 = vrot.slane %v4017, 5
        %v4020 = vor.u32 %v4016, %v4019
        %v4021 = vrot.slane %v4020, 4
        %v4022 = vsel %vm1226, %v4021, %v3489
        %v4024 = vshll.u32 %v3299, 16
        %v4026 = vrot.slane %v4024, 5
        %v4027 = vsel %vm1226, %v3495, %v4026
        %v4028 = vshrl.u32 %v3299, 16
        %v4030 = vrot.slane %v4028, 4
        %v4031 = vor.u32 %v4030, %v4026
        %v4032 = vrot.slane %v4031, 4
        %v4034 = vshrl.u32 %v3280, 16
        %v4036 = vrot.slane %v4034, 4
        %v4037 = vshll.u32 %v3280, 16
        %v4039 = vrot.slane %v4037, 5
        %v4040 = vor.u32 %v4036, %v4039
        %v4041 = vrot.slane %v4040, 4
        %v4042 = vsel %vm1226, %v4041, %v3513
        %v4044 = vshll.u32 %v3300, 16
        %v4046 = vrot.slane %v4044, 5
        %v4047 = vsel %vm1226, %v3519, %v4046
        %v4048 = vshrl.u32 %v3300, 16
        %v4050 = vrot.slane %v4048, 4
        %v4051 = vor.u32 %v4050, %v4046
        %v4052 = vrot.slane %v4051, 4
        %v4054 = vshrl.u32 %v3281, 16
        %v4056 = vrot.slane %v4054, 4
        %v4057 = vshll.u32 %v3281, 16
        %v4059 = vrot.slane %v4057, 5
        %v4060 = vor.u32 %v4056, %v4059
        %v4061 = vrot.slane %v4060, 4
        %v4062 = vsel %vm1226, %v4061, %v3537
        %v4064 = vshll.u32 %v3301, 16
        %v4066 = vrot.slane %v4064, 5
        %v4067 = vsel %vm1226, %v3543, %v4066
        %v4068 = vshrl.u32 %v3301, 16
        %v4070 = vrot.slane %v4068, 4
        %v4071 = vor.u32 %v4070, %v4066
        %v4072 = vrot.slane %v4071, 4
        %v4074 = vshrl.u32 %v3282, 16
        %v4076 = vrot.slane %v4074, 4
        %v4077 = vshll.u32 %v3282, 16
        %v4079 = vrot.slane %v4077, 5
        %v4080 = vor.u32 %v4076, %v4079
        %v4081 = vrot.slane %v4080, 4
        %v4082 = vsel %vm1226, %v4081, %v3561
        %v4084 = vshll.u32 %v3302, 16
        %v4086 = vrot.slane %v4084, 5
        %v4087 = vsel %vm1226, %v3567, %v4086
        %v4088 = vshrl.u32 %v3302, 16
        %v4090 = vrot.slane %v4088, 4
        %v4091 = vor.u32 %v4090, %v4086
        %v4092 = vrot.slane %v4091, 4
        %v4094 = vshrl.u32 %v3283, 16
        %v4096 = vrot.slane %v4094, 4
        %v4097 = vshll.u32 %v3283, 16
        %v4099 = vrot.slane %v4097, 5
        %v4100 = vor.u32 %v4096, %v4099
        %v4101 = vrot.slane %v4100, 4
        %v4102 = vsel %vm1226, %v4101, %v3585
        %v4104 = vshll.u32 %v3303, 16
        %v4106 = vrot.slane %v4104, 5
        %v4107 = vsel %vm1226, %v3591, %v4106
        %v4108 = vshrl.u32 %v3303, 16
        %v4110 = vrot.slane %v4108, 4
        %v4111 = vor.u32 %v4110, %v4106
        %v4112 = vrot.slane %v4111, 4
        %v4114 = vshrl.u32 %v3284, 16
        %v4116 = vrot.slane %v4114, 4
        %v4117 = vshll.u32 %v3284, 16
        %v4119 = vrot.slane %v4117, 5
        %v4120 = vor.u32 %v4116, %v4119
        %v4121 = vrot.slane %v4120, 4
        %v4122 = vsel %vm1226, %v4121, %v3609
        %v4124 = vshll.u32 %v3304, 16
        %v4126 = vrot.slane %v4124, 5
        %v4127 = vsel %vm1226, %v3615, %v4126
        %v4128 = vshrl.u32 %v3304, 16
        %v4130 = vrot.slane %v4128, 4
        %v4131 = vor.u32 %v4130, %v4126
        %v4132 = vrot.slane %v4131, 4
        %v4134 = vshrl.u32 %v3285, 16
        %v4136 = vrot.slane %v4134, 4
        %v4137 = vshll.u32 %v3285, 16
        %v4139 = vrot.slane %v4137, 5
        %v4140 = vor.u32 %v4136, %v4139
        %v4141 = vrot.slane %v4140, 4
        %v4142 = vsel %vm1226, %v4141, %v3633
        %v4144 = vshll.u32 %v3305, 16
        %v4146 = vrot.slane %v4144, 5
        %v4147 = vsel %vm1226, %v3639, %v4146
        %v4148 = vshrl.u32 %v3305, 16
        %v4150 = vrot.slane %v4148, 4
        %v4151 = vor.u32 %v4150, %v4146
        %v4152 = vrot.slane %v4151, 4
        %v4154 = vshrl.u32 %v3286, 16
        %v4156 = vrot.slane %v4154, 4
        %v4157 = vshll.u32 %v3286, 16
        %v4159 = vrot.slane %v4157, 5
        %v4160 = vor.u32 %v4156, %v4159
        %v4161 = vrot.slane %v4160, 4
        %v4162 = vsel %vm1226, %v4161, %v3657
        %v4164 = vshll.u32 %v3306, 16
        %v4166 = vrot.slane %v4164, 5
        %v4167 = vsel %vm1226, %v3663, %v4166
        %v4168 = vshrl.u32 %v3306, 16
        %v4170 = vrot.slane %v4168, 4
        %v4171 = vor.u32 %v4170, %v4166
        %v4172 = vrot.slane %v4171, 4
        %v4174 = vshrl.u32 %v3287, 16
        %v4176 = vrot.slane %v4174, 4
        %v4177 = vshll.u32 %v3287, 16
        %v4179 = vrot.slane %v4177, 5
        %v4180 = vor.u32 %v4176, %v4179
        %v4181 = vrot.slane %v4180, 4
        %v4182 = vsel %vm1226, %v4181, %v3681
        %v4184 = vshll.u32 %v3307, 16
        %v4186 = vrot.slane %v4184, 5
        %v4187 = vsel %vm1226, %v3687, %v4186
        %v4188 = vshrl.u32 %v3307, 16
        %v4190 = vrot.slane %v4188, 4
        %v4191 = vor.u32 %v4190, %v4186
        %v4192 = vrot.slane %v4191, 4
        %v4194 = vshrl.u32 %v3288, 16
        %v4196 = vrot.slane %v4194, 4
        %v4197 = vshll.u32 %v3288, 16
        %v4199 = vrot.slane %v4197, 5
        %v4200 = vor.u32 %v4196, %v4199
        %v4201 = vrot.slane %v4200, 4
        %v4202 = vsel %vm1226, %v4201, %v3705
        %v4204 = vshll.u32 %v3308, 16
        %v4206 = vrot.slane %v4204, 5
        %v4207 = vsel %vm1226, %v3711, %v4206
        %v4208 = vshrl.u32 %v3308, 16
        %v4210 = vrot.slane %v4208, 4
        %v4211 = vor.u32 %v4210, %v4206
        %v4212 = vrot.slane %v4211, 4
        %v4214 = vshrl.u32 %v3289, 16
        %v4216 = vrot.slane %v4214, 4
        %v4217 = vshll.u32 %v3289, 16
        %v4219 = vrot.slane %v4217, 5
        %v4220 = vor.u32 %v4216, %v4219
        %v4221 = vrot.slane %v4220, 4
        %v4222 = vsel %vm1226, %v4221, %v3729
        %v4224 = vshll.u32 %v3309, 16
        %v4226 = vrot.slane %v4224, 5
        %v4227 = vsel %vm1226, %v3735, %v4226
        %v4228 = vshrl.u32 %v3309, 16
        %v4230 = vrot.slane %v4228, 4
        %v4231 = vor.u32 %v4230, %v4226
        %v4232 = vrot.slane %v4231, 4
        %v4234 = vshrl.u32 %v3290, 16
        %v4236 = vrot.slane %v4234, 4
        %v4237 = vshll.u32 %v3290, 16
        %v4239 = vrot.slane %v4237, 5
        %v4240 = vor.u32 %v4236, %v4239
        %v4241 = vrot.slane %v4240, 4
        %v4242 = vsel %vm1226, %v4241, %v3753
        %v4244 = vshll.u32 %v3310, 16
        %v4246 = vrot.slane %v4244, 5
        %v4247 = vsel %vm1226, %v3759, %v4246
        %v4248 = vshrl.u32 %v3310, 16
        %v4250 = vrot.slane %v4248, 4
        %v4251 = vor.u32 %v4250, %v4246
        %v4252 = vrot.slane %v4251, 4
        %v4254 = vshrl.u32 %v3291, 16
        %v4256 = vrot.slane %v4254, 4
        %v4257 = vshll.u32 %v3291, 16
        %v4259 = vrot.slane %v4257, 5
        %v4260 = vor.u32 %v4256, %v4259
        %v4261 = vrot.slane %v4260, 4
        %v4262 = vsel %vm1226, %v4261, %v3777
        %v4264 = vshll.u32 %v3311, 16
        %v4266 = vrot.slane %v4264, 5
        %v4267 = vsel %vm1226, %v3783, %v4266
        %v4268 = vshrl.u32 %v3311, 16
        %v4270 = vrot.slane %v4268, 4
        %v4271 = vor.u32 %v4270, %v4266
        %v4272 = vrot.slane %v4271, 4
        %v4274 = vshrl.u32 %v3292, 16
        %v4276 = vrot.slane %v4274, 4
        %v4277 = vshll.u32 %v3292, 16
        %v4279 = vrot.slane %v4277, 5
        %v4280 = vor.u32 %v4276, %v4279
        %v4281 = vrot.slane %v4280, 4
        %v4282 = vsel %vm1226, %v4281, %v3801
        %v4284 = vshll.u32 %v3312, 16
        %v4286 = vrot.slane %v4284, 5
        %v4287 = vsel %vm1226, %v3807, %v4286
        %v4288 = vshrl.u32 %v3312, 16
        %v4290 = vrot.slane %v4288, 4
        %v4291 = vor.u32 %v4290, %v4286
        %v4292 = vrot.slane %v4291, 4
        %v4353 = vmax.bf16 %v3273, %v3902
        %v4354 = vmax.bf16 %v3214, %v3907
        %v4355 = vmax.bf16 %v3253, %v3912
        %v4356 = vmax.bf16 %v3274, %v3922
        %v4357 = vmax.bf16 %v3216, %v3927
        %v4358 = vmax.bf16 %v3254, %v3932
        %v4359 = vmax.bf16 %v3275, %v3942
        %v4360 = vmax.bf16 %v3218, %v3947
        %v4361 = vmax.bf16 %v3255, %v3952
        %v4362 = vmax.bf16 %v3276, %v3962
        %v4363 = vmax.bf16 %v3220, %v3967
        %v4364 = vmax.bf16 %v3256, %v3972
        %v4365 = vmax.bf16 %v3277, %v3982
        %v4366 = vmax.bf16 %v3222, %v3987
        %v4367 = vmax.bf16 %v3257, %v3992
        %v4368 = vmax.bf16 %v3278, %v4002
        %v4369 = vmax.bf16 %v3224, %v4007
        %v4370 = vmax.bf16 %v3258, %v4012
        %v4371 = vmax.bf16 %v3279, %v4022
        %v4372 = vmax.bf16 %v3226, %v4027
        %v4373 = vmax.bf16 %v3259, %v4032
        %v4374 = vmax.bf16 %v3280, %v4042
        %v4375 = vmax.bf16 %v3228, %v4047
        %v4376 = vmax.bf16 %v3260, %v4052
        %v4377 = vmax.bf16 %v3281, %v4062
        %v4378 = vmax.bf16 %v3230, %v4067
        %v4379 = vmax.bf16 %v3261, %v4072
        %v4380 = vmax.bf16 %v3282, %v4082
        %v4381 = vmax.bf16 %v3232, %v4087
        %v4382 = vmax.bf16 %v3262, %v4092
        %v4383 = vmax.bf16 %v3283, %v4102
        %v4384 = vmax.bf16 %v3234, %v4107
        %v4385 = vmax.bf16 %v3263, %v4112
        %v4386 = vmax.bf16 %v3284, %v4122
        %v4387 = vmax.bf16 %v3236, %v4127
        %v4388 = vmax.bf16 %v3264, %v4132
        %v4389 = vmax.bf16 %v3285, %v4142
        %v4390 = vmax.bf16 %v3238, %v4147
        %v4391 = vmax.bf16 %v3265, %v4152
        %v4392 = vmax.bf16 %v3286, %v4162
        %v4393 = vmax.bf16 %v3240, %v4167
        %v4394 = vmax.bf16 %v3266, %v4172
        %v4395 = vmax.bf16 %v3287, %v4182
        %v4396 = vmax.bf16 %v3242, %v4187
        %v4397 = vmax.bf16 %v3267, %v4192
        %v4398 = vmax.bf16 %v3288, %v4202
        %v4399 = vmax.bf16 %v3244, %v4207
        %v4400 = vmax.bf16 %v3268, %v4212
        %v4401 = vmax.bf16 %v3289, %v4222
        %v4402 = vmax.bf16 %v3246, %v4227
        %v4403 = vmax.bf16 %v3269, %v4232
        %v4404 = vmax.bf16 %v3290, %v4242
        %v4405 = vmax.bf16 %v3248, %v4247
        %v4406 = vmax.bf16 %v3270, %v4252
        %v4407 = vmax.bf16 %v3291, %v4262
        %v4408 = vmax.bf16 %v3250, %v4267
        %v4409 = vmax.bf16 %v3271, %v4272
        %v4410 = vmax.bf16 %v3292, %v4282
        %v4411 = vmax.bf16 %v3252, %v4287
        %v4412 = vmax.bf16 %v3272, %v4292
        %v4473 = vrot.slane %v4353, 5
        %v4474 = vrot.slane %v4473, 4
        %v4475 = vrot.slane %v4354, 5
        %v4476 = vsel %vm2369, %v4474, %v4475
        %v4477 = vrot.slane %v4475, 4
        %v4478 = vrot.slane %v4355, 5
        %v4479 = vsel %vm2369, %v4477, %v4478
        %v4480 = vrot.slane %v4356, 5
        %v4481 = vrot.slane %v4480, 4
        %v4482 = vrot.slane %v4357, 5
        %v4483 = vsel %vm2369, %v4481, %v4482
        %v4484 = vrot.slane %v4482, 4
        %v4485 = vrot.slane %v4358, 5
        %v4486 = vsel %vm2369, %v4484, %v4485
        %v4487 = vrot.slane %v4359, 5
        %v4488 = vrot.slane %v4487, 4
        %v4489 = vrot.slane %v4360, 5
        %v4490 = vsel %vm2369, %v4488, %v4489
        %v4491 = vrot.slane %v4489, 4
        %v4492 = vrot.slane %v4361, 5
        %v4493 = vsel %vm2369, %v4491, %v4492
        %v4494 = vrot.slane %v4362, 5
        %v4495 = vrot.slane %v4494, 4
        %v4496 = vrot.slane %v4363, 5
        %v4497 = vsel %vm2369, %v4495, %v4496
        %v4498 = vrot.slane %v4496, 4
        %v4499 = vrot.slane %v4364, 5
        %v4500 = vsel %vm2369, %v4498, %v4499
        %v4501 = vrot.slane %v4365, 5
        %v4502 = vrot.slane %v4501, 4
        %v4503 = vrot.slane %v4366, 5
        %v4504 = vsel %vm2369, %v4502, %v4503
        %v4505 = vrot.slane %v4503, 4
        %v4506 = vrot.slane %v4367, 5
        %v4507 = vsel %vm2369, %v4505, %v4506
        %v4508 = vrot.slane %v4368, 5
        %v4509 = vrot.slane %v4508, 4
        %v4510 = vrot.slane %v4369, 5
        %v4511 = vsel %vm2369, %v4509, %v4510
        %v4512 = vrot.slane %v4510, 4
        %v4513 = vrot.slane %v4370, 5
        %v4514 = vsel %vm2369, %v4512, %v4513
        %v4515 = vrot.slane %v4371, 5
        %v4516 = vrot.slane %v4515, 4
        %v4517 = vrot.slane %v4372, 5
        %v4518 = vsel %vm2369, %v4516, %v4517
        %v4519 = vrot.slane %v4517, 4
        %v4520 = vrot.slane %v4373, 5
        %v4521 = vsel %vm2369, %v4519, %v4520
        %v4522 = vrot.slane %v4374, 5
        %v4523 = vrot.slane %v4522, 4
        %v4524 = vrot.slane %v4375, 5
        %v4525 = vsel %vm2369, %v4523, %v4524
        %v4526 = vrot.slane %v4524, 4
        %v4527 = vrot.slane %v4376, 5
        %v4528 = vsel %vm2369, %v4526, %v4527
        %v4529 = vrot.slane %v4377, 5
        %v4530 = vrot.slane %v4529, 4
        %v4531 = vrot.slane %v4378, 5
        %v4532 = vsel %vm2369, %v4530, %v4531
        %v4533 = vrot.slane %v4531, 4
        %v4534 = vrot.slane %v4379, 5
        %v4535 = vsel %vm2369, %v4533, %v4534
        %v4536 = vrot.slane %v4380, 5
        %v4537 = vrot.slane %v4536, 4
        %v4538 = vrot.slane %v4381, 5
        %v4539 = vsel %vm2369, %v4537, %v4538
        %v4540 = vrot.slane %v4538, 4
        %v4541 = vrot.slane %v4382, 5
        %v4542 = vsel %vm2369, %v4540, %v4541
        %v4543 = vrot.slane %v4383, 5
        %v4544 = vrot.slane %v4543, 4
        %v4545 = vrot.slane %v4384, 5
        %v4546 = vsel %vm2369, %v4544, %v4545
        %v4547 = vrot.slane %v4545, 4
        %v4548 = vrot.slane %v4385, 5
        %v4549 = vsel %vm2369, %v4547, %v4548
        %v4550 = vrot.slane %v4386, 5
        %v4551 = vrot.slane %v4550, 4
        %v4552 = vrot.slane %v4387, 5
        %v4553 = vsel %vm2369, %v4551, %v4552
        %v4554 = vrot.slane %v4552, 4
        %v4555 = vrot.slane %v4388, 5
        %v4556 = vsel %vm2369, %v4554, %v4555
        %v4557 = vrot.slane %v4389, 5
        %v4558 = vrot.slane %v4557, 4
        %v4559 = vrot.slane %v4390, 5
        %v4560 = vsel %vm2369, %v4558, %v4559
        %v4561 = vrot.slane %v4559, 4
        %v4562 = vrot.slane %v4391, 5
        %v4563 = vsel %vm2369, %v4561, %v4562
        %v4564 = vrot.slane %v4392, 5
        %v4565 = vrot.slane %v4564, 4
        %v4566 = vrot.slane %v4393, 5
        %v4567 = vsel %vm2369, %v4565, %v4566
        %v4568 = vrot.slane %v4566, 4
        %v4569 = vrot.slane %v4394, 5
        %v4570 = vsel %vm2369, %v4568, %v4569
        %v4571 = vrot.slane %v4395, 5
        %v4572 = vrot.slane %v4571, 4
        %v4573 = vrot.slane %v4396, 5
        %v4574 = vsel %vm2369, %v4572, %v4573
        %v4575 = vrot.slane %v4573, 4
        %v4576 = vrot.slane %v4397, 5
        %v4577 = vsel %vm2369, %v4575, %v4576
        %v4578 = vrot.slane %v4398, 5
        %v4579 = vrot.slane %v4578, 4
        %v4580 = vrot.slane %v4399, 5
        %v4581 = vsel %vm2369, %v4579, %v4580
        %v4582 = vrot.slane %v4580, 4
        %v4583 = vrot.slane %v4400, 5
        %v4584 = vsel %vm2369, %v4582, %v4583
        %v4585 = vrot.slane %v4401, 5
        %v4586 = vrot.slane %v4585, 4
        %v4587 = vrot.slane %v4402, 5
        %v4588 = vsel %vm2369, %v4586, %v4587
        %v4589 = vrot.slane %v4587, 4
        %v4590 = vrot.slane %v4403, 5
        %v4591 = vsel %vm2369, %v4589, %v4590
        %v4592 = vrot.slane %v4404, 5
        %v4593 = vrot.slane %v4592, 4
        %v4594 = vrot.slane %v4405, 5
        %v4595 = vsel %vm2369, %v4593, %v4594
        %v4596 = vrot.slane %v4594, 4
        %v4597 = vrot.slane %v4406, 5
        %v4598 = vsel %vm2369, %v4596, %v4597
        %v4599 = vrot.slane %v4407, 5
        %v4600 = vrot.slane %v4599, 4
        %v4601 = vrot.slane %v4408, 5
        %v4602 = vsel %vm2369, %v4600, %v4601
        %v4603 = vrot.slane %v4601, 4
        %v4604 = vrot.slane %v4409, 5
        %v4605 = vsel %vm2369, %v4603, %v4604
        %v4606 = vrot.slane %v4410, 5
        %v4607 = vrot.slane %v4606, 4
        %v4608 = vrot.slane %v4411, 5
        %v4609 = vsel %vm2369, %v4607, %v4608
        %v4610 = vrot.slane %v4608, 4
        %v4611 = vrot.slane %v4412, 5
        %v4612 = vsel %vm2369, %v4610, %v4611
        %v4653 = vmax.bf16 %v3853, %v4476
        %v4654 = vmax.bf16 %v3854, %v4479
        %v4655 = vmax.bf16 %v3855, %v4483
        %v4656 = vmax.bf16 %v3856, %v4486
        %v4657 = vmax.bf16 %v3857, %v4490
        %v4658 = vmax.bf16 %v3858, %v4493
        %v4659 = vmax.bf16 %v3859, %v4497
        %v4660 = vmax.bf16 %v3860, %v4500
        %v4661 = vmax.bf16 %v3861, %v4504
        %v4662 = vmax.bf16 %v3862, %v4507
        %v4663 = vmax.bf16 %v3863, %v4511
        %v4664 = vmax.bf16 %v3864, %v4514
        %v4665 = vmax.bf16 %v3865, %v4518
        %v4666 = vmax.bf16 %v3866, %v4521
        %v4667 = vmax.bf16 %v3867, %v4525
        %v4668 = vmax.bf16 %v3868, %v4528
        %v4669 = vmax.bf16 %v3869, %v4532
        %v4670 = vmax.bf16 %v3870, %v4535
        %v4671 = vmax.bf16 %v3871, %v4539
        %v4672 = vmax.bf16 %v3872, %v4542
        %v4673 = vmax.bf16 %v3873, %v4546
        %v4674 = vmax.bf16 %v3874, %v4549
        %v4675 = vmax.bf16 %v3875, %v4553
        %v4676 = vmax.bf16 %v3876, %v4556
        %v4677 = vmax.bf16 %v3877, %v4560
        %v4678 = vmax.bf16 %v3878, %v4563
        %v4679 = vmax.bf16 %v3879, %v4567
        %v4680 = vmax.bf16 %v3880, %v4570
        %v4681 = vmax.bf16 %v3881, %v4574
        %v4682 = vmax.bf16 %v3882, %v4577
        %v4683 = vmax.bf16 %v3883, %v4581
        %v4684 = vmax.bf16 %v3884, %v4584
        %v4685 = vmax.bf16 %v3885, %v4588
        %v4686 = vmax.bf16 %v3886, %v4591
        %v4687 = vmax.bf16 %v3887, %v4595
        %v4688 = vmax.bf16 %v3888, %v4598
        %v4689 = vmax.bf16 %v3889, %v4602
        %v4690 = vmax.bf16 %v3890, %v4605
        %v4691 = vmax.bf16 %v3891, %v4609
        %v4692 = vmax.bf16 %v3892, %v4612
        %v4753 = vrot.slane %v3313, 6
        %v4754 = vrot.slane %v4753, 4
        %v4755 = vrot.slane %v3214, 6
        %v4756 = vsel %vm2652, %v4754, %v4755
        %v4757 = vrot.slane %v4755, 4
        %v4758 = vrot.slane %v3293, 6
        %v4759 = vsel %vm2652, %v4757, %v4758
        %v4760 = vrot.slane %v3314, 6
        %v4761 = vrot.slane %v4760, 4
        %v4762 = vrot.slane %v3216, 6
        %v4763 = vsel %vm2652, %v4761, %v4762
        %v4764 = vrot.slane %v4762, 4
        %v4765 = vrot.slane %v3294, 6
        %v4766 = vsel %vm2652, %v4764, %v4765
        %v4767 = vrot.slane %v3315, 6
        %v4768 = vrot.slane %v4767, 4
        %v4769 = vrot.slane %v3218, 6
        %v4770 = vsel %vm2652, %v4768, %v4769
        %v4771 = vrot.slane %v4769, 4
        %v4772 = vrot.slane %v3295, 6
        %v4773 = vsel %vm2652, %v4771, %v4772
        %v4774 = vrot.slane %v3316, 6
        %v4775 = vrot.slane %v4774, 4
        %v4776 = vrot.slane %v3220, 6
        %v4777 = vsel %vm2652, %v4775, %v4776
        %v4778 = vrot.slane %v4776, 4
        %v4779 = vrot.slane %v3296, 6
        %v4780 = vsel %vm2652, %v4778, %v4779
        %v4781 = vrot.slane %v3317, 6
        %v4782 = vrot.slane %v4781, 4
        %v4783 = vrot.slane %v3222, 6
        %v4784 = vsel %vm2652, %v4782, %v4783
        %v4785 = vrot.slane %v4783, 4
        %v4786 = vrot.slane %v3297, 6
        %v4787 = vsel %vm2652, %v4785, %v4786
        %v4788 = vrot.slane %v3318, 6
        %v4789 = vrot.slane %v4788, 4
        %v4790 = vrot.slane %v3224, 6
        %v4791 = vsel %vm2652, %v4789, %v4790
        %v4792 = vrot.slane %v4790, 4
        %v4793 = vrot.slane %v3298, 6
        %v4794 = vsel %vm2652, %v4792, %v4793
        %v4795 = vrot.slane %v3319, 6
        %v4796 = vrot.slane %v4795, 4
        %v4797 = vrot.slane %v3226, 6
        %v4798 = vsel %vm2652, %v4796, %v4797
        %v4799 = vrot.slane %v4797, 4
        %v4800 = vrot.slane %v3299, 6
        %v4801 = vsel %vm2652, %v4799, %v4800
        %v4802 = vrot.slane %v3320, 6
        %v4803 = vrot.slane %v4802, 4
        %v4804 = vrot.slane %v3228, 6
        %v4805 = vsel %vm2652, %v4803, %v4804
        %v4806 = vrot.slane %v4804, 4
        %v4807 = vrot.slane %v3300, 6
        %v4808 = vsel %vm2652, %v4806, %v4807
        %v4809 = vrot.slane %v3321, 6
        %v4810 = vrot.slane %v4809, 4
        %v4811 = vrot.slane %v3230, 6
        %v4812 = vsel %vm2652, %v4810, %v4811
        %v4813 = vrot.slane %v4811, 4
        %v4814 = vrot.slane %v3301, 6
        %v4815 = vsel %vm2652, %v4813, %v4814
        %v4816 = vrot.slane %v3322, 6
        %v4817 = vrot.slane %v4816, 4
        %v4818 = vrot.slane %v3232, 6
        %v4819 = vsel %vm2652, %v4817, %v4818
        %v4820 = vrot.slane %v4818, 4
        %v4821 = vrot.slane %v3302, 6
        %v4822 = vsel %vm2652, %v4820, %v4821
        %v4823 = vrot.slane %v3323, 6
        %v4824 = vrot.slane %v4823, 4
        %v4825 = vrot.slane %v3234, 6
        %v4826 = vsel %vm2652, %v4824, %v4825
        %v4827 = vrot.slane %v4825, 4
        %v4828 = vrot.slane %v3303, 6
        %v4829 = vsel %vm2652, %v4827, %v4828
        %v4830 = vrot.slane %v3324, 6
        %v4831 = vrot.slane %v4830, 4
        %v4832 = vrot.slane %v3236, 6
        %v4833 = vsel %vm2652, %v4831, %v4832
        %v4834 = vrot.slane %v4832, 4
        %v4835 = vrot.slane %v3304, 6
        %v4836 = vsel %vm2652, %v4834, %v4835
        %v4837 = vrot.slane %v3325, 6
        %v4838 = vrot.slane %v4837, 4
        %v4839 = vrot.slane %v3238, 6
        %v4840 = vsel %vm2652, %v4838, %v4839
        %v4841 = vrot.slane %v4839, 4
        %v4842 = vrot.slane %v3305, 6
        %v4843 = vsel %vm2652, %v4841, %v4842
        %v4844 = vrot.slane %v3326, 6
        %v4845 = vrot.slane %v4844, 4
        %v4846 = vrot.slane %v3240, 6
        %v4847 = vsel %vm2652, %v4845, %v4846
        %v4848 = vrot.slane %v4846, 4
        %v4849 = vrot.slane %v3306, 6
        %v4850 = vsel %vm2652, %v4848, %v4849
        %v4851 = vrot.slane %v3327, 6
        %v4852 = vrot.slane %v4851, 4
        %v4853 = vrot.slane %v3242, 6
        %v4854 = vsel %vm2652, %v4852, %v4853
        %v4855 = vrot.slane %v4853, 4
        %v4856 = vrot.slane %v3307, 6
        %v4857 = vsel %vm2652, %v4855, %v4856
        %v4858 = vrot.slane %v3328, 6
        %v4859 = vrot.slane %v4858, 4
        %v4860 = vrot.slane %v3244, 6
        %v4861 = vsel %vm2652, %v4859, %v4860
        %v4862 = vrot.slane %v4860, 4
        %v4863 = vrot.slane %v3308, 6
        %v4864 = vsel %vm2652, %v4862, %v4863
        %v4865 = vrot.slane %v3329, 6
        %v4866 = vrot.slane %v4865, 4
        %v4867 = vrot.slane %v3246, 6
        %v4868 = vsel %vm2652, %v4866, %v4867
        %v4869 = vrot.slane %v4867, 4
        %v4870 = vrot.slane %v3309, 6
        %v4871 = vsel %vm2652, %v4869, %v4870
        %v4872 = vrot.slane %v3330, 6
        %v4873 = vrot.slane %v4872, 4
        %v4874 = vrot.slane %v3248, 6
        %v4875 = vsel %vm2652, %v4873, %v4874
        %v4876 = vrot.slane %v4874, 4
        %v4877 = vrot.slane %v3310, 6
        %v4878 = vsel %vm2652, %v4876, %v4877
        %v4879 = vrot.slane %v3331, 6
        %v4880 = vrot.slane %v4879, 4
        %v4881 = vrot.slane %v3250, 6
        %v4882 = vsel %vm2652, %v4880, %v4881
        %v4883 = vrot.slane %v4881, 4
        %v4884 = vrot.slane %v3311, 6
        %v4885 = vsel %vm2652, %v4883, %v4884
        %v4886 = vrot.slane %v3332, 6
        %v4887 = vrot.slane %v4886, 4
        %v4888 = vrot.slane %v3252, 6
        %v4889 = vsel %vm2652, %v4887, %v4888
        %v4890 = vrot.slane %v4888, 4
        %v4891 = vrot.slane %v3312, 6
        %v4892 = vsel %vm2652, %v4890, %v4891
        %v4933 = vmax.bf16 %v4653, %v4756
        %v4934 = vmax.bf16 %v4654, %v4759
        %v4935 = vmax.bf16 %v4655, %v4763
        %v4936 = vmax.bf16 %v4656, %v4766
        %v4937 = vmax.bf16 %v4657, %v4770
        %v4938 = vmax.bf16 %v4658, %v4773
        %v4939 = vmax.bf16 %v4659, %v4777
        %v4940 = vmax.bf16 %v4660, %v4780
        %v4941 = vmax.bf16 %v4661, %v4784
        %v4942 = vmax.bf16 %v4662, %v4787
        %v4943 = vmax.bf16 %v4663, %v4791
        %v4944 = vmax.bf16 %v4664, %v4794
        %v4945 = vmax.bf16 %v4665, %v4798
        %v4946 = vmax.bf16 %v4666, %v4801
        %v4947 = vmax.bf16 %v4667, %v4805
        %v4948 = vmax.bf16 %v4668, %v4808
        %v4949 = vmax.bf16 %v4669, %v4812
        %v4950 = vmax.bf16 %v4670, %v4815
        %v4951 = vmax.bf16 %v4671, %v4819
        %v4952 = vmax.bf16 %v4672, %v4822
        %v4953 = vmax.bf16 %v4673, %v4826
        %v4954 = vmax.bf16 %v4674, %v4829
        %v4955 = vmax.bf16 %v4675, %v4833
        %v4956 = vmax.bf16 %v4676, %v4836
        %v4957 = vmax.bf16 %v4677, %v4840
        %v4958 = vmax.bf16 %v4678, %v4843
        %v4959 = vmax.bf16 %v4679, %v4847
        %v4960 = vmax.bf16 %v4680, %v4850
        %v4961 = vmax.bf16 %v4681, %v4854
        %v4962 = vmax.bf16 %v4682, %v4857
        %v4963 = vmax.bf16 %v4683, %v4861
        %v4964 = vmax.bf16 %v4684, %v4864
        %v4965 = vmax.bf16 %v4685, %v4868
        %v4966 = vmax.bf16 %v4686, %v4871
        %v4967 = vmax.bf16 %v4687, %v4875
        %v4968 = vmax.bf16 %v4688, %v4878
        %v4969 = vmax.bf16 %v4689, %v4882
        %v4970 = vmax.bf16 %v4690, %v4885
        %v4971 = vmax.bf16 %v4691, %v4889
        %v4972 = vmax.bf16 %v4692, %v4892
        %v4973 = vmax.bf16 %v4933, %v4935
        %v4974 = vmax.bf16 %v4934, %v4936
        %v4975 = vmax.bf16 %v4935, %v4937
        %v4976 = vmax.bf16 %v4936, %v4938
        %v4977 = vmax.bf16 %v4937, %v4939
        %v4978 = vmax.bf16 %v4938, %v4940
        %v4979 = vmax.bf16 %v4939, %v4941
        %v4980 = vmax.bf16 %v4940, %v4942
        %v4981 = vmax.bf16 %v4941, %v4943
        %v4982 = vmax.bf16 %v4942, %v4944
        %v4983 = vmax.bf16 %v4943, %v4945
        %v4984 = vmax.bf16 %v4944, %v4946
        %v4985 = vmax.bf16 %v4945, %v4947
        %v4986 = vmax.bf16 %v4946, %v4948
        %v4987 = vmax.bf16 %v4947, %v4949
        %v4988 = vmax.bf16 %v4948, %v4950
        %v4989 = vmax.bf16 %v4949, %v4951
        %v4990 = vmax.bf16 %v4950, %v4952
        %v4991 = vmax.bf16 %v4951, %v4953
        %v4992 = vmax.bf16 %v4952, %v4954
        %v4993 = vmax.bf16 %v4953, %v4955
        %v4994 = vmax.bf16 %v4954, %v4956
        %v4995 = vmax.bf16 %v4955, %v4957
        %v4996 = vmax.bf16 %v4956, %v4958
        %v4997 = vmax.bf16 %v4957, %v4959
        %v4998 = vmax.bf16 %v4958, %v4960
        %v4999 = vmax.bf16 %v4959, %v4961
        %v5000 = vmax.bf16 %v4960, %v4962
        %v5001 = vmax.bf16 %v4961, %v4963
        %v5002 = vmax.bf16 %v4962, %v4964
        %v5003 = vmax.bf16 %v4963, %v4965
        %v5004 = vmax.bf16 %v4964, %v4966
        %v5005 = vmax.bf16 %v4965, %v4967
        %v5006 = vmax.bf16 %v4966, %v4968
        %v5007 = vmax.bf16 %v4967, %v4969
        %v5008 = vmax.bf16 %v4968, %v4970
        %v5009 = vmax.bf16 %v4973, %v4977
        %v5010 = vmax.bf16 %v4974, %v4978
        %v5011 = vmax.bf16 %v4975, %v4979
        %v5012 = vmax.bf16 %v4976, %v4980
        %v5013 = vmax.bf16 %v4977, %v4981
        %v5014 = vmax.bf16 %v4978, %v4982
        %v5015 = vmax.bf16 %v4979, %v4983
        %v5016 = vmax.bf16 %v4980, %v4984
        %v5017 = vmax.bf16 %v4981, %v4985
        %v5018 = vmax.bf16 %v4982, %v4986
        %v5019 = vmax.bf16 %v4983, %v4987
        %v5020 = vmax.bf16 %v4984, %v4988
        %v5021 = vmax.bf16 %v4985, %v4989
        %v5022 = vmax.bf16 %v4986, %v4990
        %v5023 = vmax.bf16 %v4987, %v4991
        %v5024 = vmax.bf16 %v4988, %v4992
        %v5025 = vmax.bf16 %v4989, %v4993
        %v5026 = vmax.bf16 %v4990, %v4994
        %v5027 = vmax.bf16 %v4991, %v4995
        %v5028 = vmax.bf16 %v4992, %v4996
        %v5029 = vmax.bf16 %v4993, %v4997
        %v5030 = vmax.bf16 %v4994, %v4998
        %v5031 = vmax.bf16 %v4995, %v4999
        %v5032 = vmax.bf16 %v4996, %v5000
        %v5033 = vmax.bf16 %v4997, %v5001
        %v5034 = vmax.bf16 %v4998, %v5002
        %v5035 = vmax.bf16 %v4999, %v5003
        %v5036 = vmax.bf16 %v5000, %v5004
        %v5037 = vmax.bf16 %v5001, %v5005
        %v5038 = vmax.bf16 %v5002, %v5006
        %v5039 = vmax.bf16 %v5003, %v5007
        %v5040 = vmax.bf16 %v5004, %v5008
        %v5041 = vmax.bf16 %v5009, %v4941
        %v5042 = vmax.bf16 %v5010, %v4942
        %v5043 = vmax.bf16 %v5011, %v4943
        %v5044 = vmax.bf16 %v5012, %v4944
        %v5045 = vmax.bf16 %v5013, %v4945
        %v5046 = vmax.bf16 %v5014, %v4946
        %v5047 = vmax.bf16 %v5015, %v4947
        %v5048 = vmax.bf16 %v5016, %v4948
        %v5049 = vmax.bf16 %v5017, %v4949
        %v5050 = vmax.bf16 %v5018, %v4950
        %v5051 = vmax.bf16 %v5019, %v4951
        %v5052 = vmax.bf16 %v5020, %v4952
        %v5053 = vmax.bf16 %v5021, %v4953
        %v5054 = vmax.bf16 %v5022, %v4954
        %v5055 = vmax.bf16 %v5023, %v4955
        %v5056 = vmax.bf16 %v5024, %v4956
        %v5057 = vmax.bf16 %v5025, %v4957
        %v5058 = vmax.bf16 %v5026, %v4958
        %v5059 = vmax.bf16 %v5027, %v4959
        %v5060 = vmax.bf16 %v5028, %v4960
        %v5061 = vmax.bf16 %v5029, %v4961
        %v5062 = vmax.bf16 %v5030, %v4962
        %v5063 = vmax.bf16 %v5031, %v4963
        %v5064 = vmax.bf16 %v5032, %v4964
        %v5065 = vmax.bf16 %v5033, %v4965
        %v5066 = vmax.bf16 %v5034, %v4966
        %v5067 = vmax.bf16 %v5035, %v4967
        %v5068 = vmax.bf16 %v5036, %v4968
        %v5069 = vmax.bf16 %v5037, %v4969
        %v5070 = vmax.bf16 %v5038, %v4970
        %v5071 = vmax.bf16 %v5039, %v4971
        %v5072 = vmax.bf16 %v5040, %v4972
        %5073 = vst [vmem:[#allocation3 + $0x8] sm:$0xf] %v5041
        %5074 = vst [vmem:[#allocation3 + $0x18] sm:$0xf] %v5042
        %5075 = vst [vmem:[#allocation3 + $0x28] sm:$0xf] %v5043
        %5076 = vst [vmem:[#allocation3 + $0x38] sm:$0xf] %v5044
        %5077 = vst [vmem:[#allocation3 + $0x48] sm:$0xf] %v5045
        %5078 = vst [vmem:[#allocation3 + $0x58] sm:$0xf] %v5046
        %5079 = vst [vmem:[#allocation3 + $0x68] sm:$0xf] %v5047
        %5080 = vst [vmem:[#allocation3 + $0x78] sm:$0xf] %v5048
        %5081 = vst [vmem:[#allocation3 + $0x88] sm:$0xf] %v5049
        %5082 = vst [vmem:[#allocation3 + $0x98] sm:$0xf] %v5050
        %5083 = vst [vmem:[#allocation3 + $0xa8] sm:$0xf] %v5051
        %5084 = vst [vmem:[#allocation3 + $0xb8] sm:$0xf] %v5052
        %5085 = vst [vmem:[#allocation3 + $0xc8] sm:$0xf] %v5053
        %5086 = vst [vmem:[#allocation3 + $0xd8] sm:$0xf] %v5054
        %5087 = vst [vmem:[#allocation3 + $0xe8] sm:$0xf] %v5055
        %5088 = vst [vmem:[#allocation3 + $0xf8] sm:$0xf] %v5056
        %5089 = vst [vmem:[#allocation3 + $0x108] sm:$0xf] %v5057
        %5090 = vst [vmem:[#allocation3 + $0x118] sm:$0xf] %v5058
        %5091 = vst [vmem:[#allocation3 + $0x128] sm:$0xf] %v5059
        %5092 = vst [vmem:[#allocation3 + $0x138] sm:$0xf] %v5060
        %5093 = vst [vmem:[#allocation3 + $0x148] sm:$0xf] %v5061
        %5094 = vst [vmem:[#allocation3 + $0x158] sm:$0xf] %v5062
        %5095 = vst [vmem:[#allocation3 + $0x168] sm:$0xf] %v5063
        %5096 = vst [vmem:[#allocation3 + $0x178] sm:$0xf] %v5064
        %5097 = vst [vmem:[#allocation3 + $0x188] sm:$0xf] %v5065
        %5098 = vst [vmem:[#allocation3 + $0x198] sm:$0xf] %v5066
        %5099 = vst [vmem:[#allocation3 + $0x1a8] sm:$0xf] %v5067
        %5100 = vst [vmem:[#allocation3 + $0x1b8] sm:$0xf] %v5068
        %5101 = vst [vmem:[#allocation3 + $0x1c8] sm:$0xf] %v5069
        %5102 = vst [vmem:[#allocation3 + $0x1d8] sm:$0xf] %v5070
        %5103 = vst [vmem:[#allocation3 + $0x1e8] sm:$0xf] %v5071
        %5104 = vst [vmem:[#allocation3 + $0x1f8] sm:$0xf] %v5072
        %v5137 = vrot.slane %v5041, 7
        %v5138 = vrot.slane %v5137, 4
        %v5139 = vrot.slane %v5042, 7
        %v5140 = vsel %vm927, %v5138, %v5139
        %v5141 = vrot.slane %v5139, 4
        %v5142 = vrot.slane %v5043, 7
        %v5143 = vrot.slane %v5142, 4
        %v5144 = vrot.slane %v5044, 7
        %v5145 = vsel %vm927, %v5143, %v5144
        %v5146 = vrot.slane %v5144, 4
        %v5147 = vrot.slane %v5045, 7
        %v5148 = vrot.slane %v5147, 4
        %v5149 = vrot.slane %v5046, 7
        %v5150 = vsel %vm927, %v5148, %v5149
        %v5151 = vrot.slane %v5149, 4
        %v5152 = vrot.slane %v5047, 7
        %v5153 = vrot.slane %v5152, 4
        %v5154 = vrot.slane %v5048, 7
        %v5155 = vsel %vm927, %v5153, %v5154
        %v5156 = vrot.slane %v5154, 4
        %v5157 = vrot.slane %v5049, 7
        %v5158 = vrot.slane %v5157, 4
        %v5159 = vrot.slane %v5050, 7
        %v5160 = vsel %vm927, %v5158, %v5159
        %v5161 = vrot.slane %v5159, 4
        %v5162 = vrot.slane %v5051, 7
        %v5163 = vrot.slane %v5162, 4
        %v5164 = vrot.slane %v5052, 7
        %v5165 = vsel %vm927, %v5163, %v5164
        %v5166 = vrot.slane %v5164, 4
        %v5167 = vrot.slane %v5053, 7
        %v5168 = vrot.slane %v5167, 4
        %v5169 = vrot.slane %v5054, 7
        %v5170 = vsel %vm927, %v5168, %v5169
        %v5171 = vrot.slane %v5169, 4
        %v5172 = vrot.slane %v5055, 7
        %v5173 = vrot.slane %v5172, 4
        %v5174 = vrot.slane %v5056, 7
        %v5175 = vsel %vm927, %v5173, %v5174
        %v5176 = vrot.slane %v5174, 4
        %v5177 = vrot.slane %v5057, 7
        %v5178 = vrot.slane %v5177, 4
        %v5179 = vrot.slane %v5058, 7
        %v5180 = vsel %vm927, %v5178, %v5179
        %v5181 = vrot.slane %v5179, 4
        %v5182 = vrot.slane %v5059, 7
        %v5183 = vrot.slane %v5182, 4
        %v5184 = vrot.slane %v5060, 7
        %v5185 = vsel %vm927, %v5183, %v5184
        %v5186 = vrot.slane %v5184, 4
        %v5187 = vrot.slane %v5061, 7
        %v5188 = vrot.slane %v5187, 4
        %v5189 = vrot.slane %v5062, 7
        %v5190 = vsel %vm927, %v5188, %v5189
        %v5191 = vrot.slane %v5189, 4
        %v5192 = vrot.slane %v5063, 7
        %v5193 = vrot.slane %v5192, 4
        %v5194 = vrot.slane %v5064, 7
        %v5195 = vsel %vm927, %v5193, %v5194
        %v5196 = vrot.slane %v5194, 4
        %v5197 = vrot.slane %v5065, 7
        %v5198 = vrot.slane %v5197, 4
        %v5199 = vrot.slane %v5066, 7
        %v5200 = vsel %vm927, %v5198, %v5199
        %v5201 = vrot.slane %v5199, 4
        %v5202 = vrot.slane %v5067, 7
        %v5203 = vrot.slane %v5202, 4
        %v5204 = vrot.slane %v5068, 7
        %v5205 = vsel %vm927, %v5203, %v5204
        %v5206 = vrot.slane %v5204, 4
        %v5207 = vrot.slane %v5069, 7
        %v5208 = vrot.slane %v5207, 4
        %v5209 = vrot.slane %v5070, 7
        %v5210 = vsel %vm927, %v5208, %v5209
        %v5211 = vrot.slane %v5209, 4
        %v5212 = vrot.slane %v5071, 7
        %v5213 = vrot.slane %v5212, 4
        %v5214 = vrot.slane %v5072, 7
        %v5215 = vsel %vm927, %v5213, %v5214
        %v5216 = vrot.slane %v5214, 4
        %5265 = vst [vmem:[%s238] sm:$0xe] %v5137
        %5266 = vst [vmem:[%s238 + $0x4] sm:$0xf] %v5140
        %5267 = vst [vmem:[%s238 + $0x8] sm:$0x1] %v5141
        %5268 = vst [vmem:[%s238 + $0xc] sm:$0xe] %v5142
        %5269 = vst [vmem:[%s238 + $0x10] sm:$0xf] %v5145
        %5270 = vst [vmem:[%s238 + $0x14] sm:$0x1] %v5146
        %5271 = vst [vmem:[%s238 + $0x18] sm:$0xe] %v5147
        %5272 = vst [vmem:[%s238 + $0x1c] sm:$0xf] %v5150
        %5273 = vst [vmem:[%s238 + $0x20] sm:$0x1] %v5151
        %5274 = vst [vmem:[%s238 + $0x24] sm:$0xe] %v5152
        %5275 = vst [vmem:[%s238 + $0x28] sm:$0xf] %v5155
        %5276 = vst [vmem:[%s238 + $0x2c] sm:$0x1] %v5156
        %5277 = vst [vmem:[%s238 + $0x30] sm:$0xe] %v5157
        %5278 = vst [vmem:[%s238 + $0x34] sm:$0xf] %v5160
        %5279 = vst [vmem:[%s238 + $0x38] sm:$0x1] %v5161
        %5280 = vst [vmem:[%s238 + $0x3c] sm:$0xe] %v5162
        %5281 = vst [vmem:[%s238 + $0x40] sm:$0xf] %v5165
        %5282 = vst [vmem:[%s238 + $0x44] sm:$0x1] %v5166
        %5283 = vst [vmem:[%s238 + $0x48] sm:$0xe] %v5167
        %5284 = vst [vmem:[%s238 + $0x4c] sm:$0xf] %v5170
        %5285 = vst [vmem:[%s238 + $0x50] sm:$0x1] %v5171
        %5286 = vst [vmem:[%s238 + $0x54] sm:$0xe] %v5172
        %5287 = vst [vmem:[%s238 + $0x58] sm:$0xf] %v5175
        %5288 = vst [vmem:[%s238 + $0x5c] sm:$0x1] %v5176
        %5289 = vst [vmem:[%s238 + $0x60] sm:$0xe] %v5177
        %5290 = vst [vmem:[%s238 + $0x64] sm:$0xf] %v5180
        %5291 = vst [vmem:[%s238 + $0x68] sm:$0x1] %v5181
        %5292 = vst [vmem:[%s238 + $0x6c] sm:$0xe] %v5182
        %5293 = vst [vmem:[%s238 + $0x70] sm:$0xf] %v5185
        %5294 = vst [vmem:[%s238 + $0x74] sm:$0x1] %v5186
        %5295 = vst [vmem:[%s238 + $0x78] sm:$0xe] %v5187
        %5296 = vst [vmem:[%s238 + $0x7c] sm:$0xf] %v5190
        %5297 = vst [vmem:[%s238 + $0x80] sm:$0x1] %v5191
        %5298 = vst [vmem:[%s238 + $0x84] sm:$0xe] %v5192
        %5299 = vst [vmem:[%s238 + $0x88] sm:$0xf] %v5195
        %5300 = vst [vmem:[%s238 + $0x8c] sm:$0x1] %v5196
        %5301 = vst [vmem:[%s238 + $0x90] sm:$0xe] %v5197
        %5302 = vst [vmem:[%s238 + $0x94] sm:$0xf] %v5200
        %5303 = vst [vmem:[%s238 + $0x98] sm:$0x1] %v5201
        %5304 = vst [vmem:[%s238 + $0x9c] sm:$0xe] %v5202
        %5305 = vst [vmem:[%s238 + $0xa0] sm:$0xf] %v5205
        %5306 = vst [vmem:[%s238 + $0xa4] sm:$0x1] %v5206
        %5307 = vst [vmem:[%s238 + $0xa8] sm:$0xe] %v5207
        %5308 = vst [vmem:[%s238 + $0xac] sm:$0xf] %v5210
        %5309 = vst [vmem:[%s238 + $0xb0] sm:$0x1] %v5211
        %5310 = vst [vmem:[%s238 + $0xb4] sm:$0xe] %v5212
        %5311 = vst [vmem:[%s238 + $0xb8] sm:$0xf] %v5215
        %5312 = vst [vmem:[%s238 + $0xbc] sm:$0x1] %v5216
        %v5313 = vld [vmem:[#allocation2] sm:$0xf]
        %v5314 = vld [vmem:[#allocation2 + $0x4] sm:$0xf]
        %v5315 = vld [vmem:[#allocation2 + $0xc] sm:$0xf]
        %v5316 = vld [vmem:[#allocation2 + $0x10] sm:$0xf]
        %v5317 = vld [vmem:[#allocation2 + $0x18] sm:$0xf]
        %v5318 = vld [vmem:[#allocation2 + $0x1c] sm:$0xf]
        %v5319 = vld [vmem:[#allocation2 + $0x24] sm:$0xf]
        %v5320 = vld [vmem:[#allocation2 + $0x28] sm:$0xf]
        %v5321 = vld [vmem:[#allocation2 + $0x30] sm:$0xf]
        %v5322 = vld [vmem:[#allocation2 + $0x34] sm:$0xf]
        %v5323 = vld [vmem:[#allocation2 + $0x3c] sm:$0xf]
        %v5324 = vld [vmem:[#allocation2 + $0x40] sm:$0xf]
        %v5325 = vld [vmem:[#allocation2 + $0x48] sm:$0xf]
        %v5326 = vld [vmem:[#allocation2 + $0x4c] sm:$0xf]
        %v5327 = vld [vmem:[#allocation2 + $0x54] sm:$0xf]
        %v5328 = vld [vmem:[#allocation2 + $0x58] sm:$0xf]
        %v5329 = vld [vmem:[#allocation2 + $0x60] sm:$0xf]
        %v5330 = vld [vmem:[#allocation2 + $0x64] sm:$0xf]
        %v5331 = vld [vmem:[#allocation2 + $0x6c] sm:$0xf]
        %v5332 = vld [vmem:[#allocation2 + $0x70] sm:$0xf]
        %v5333 = vld [vmem:[#allocation2 + $0x78] sm:$0xf]
        %v5334 = vld [vmem:[#allocation2 + $0x7c] sm:$0xf]
        %v5335 = vld [vmem:[#allocation2 + $0x84] sm:$0xf]
        %v5336 = vld [vmem:[#allocation2 + $0x88] sm:$0xf]
        %v5337 = vld [vmem:[#allocation2 + $0x90] sm:$0xf]
        %v5338 = vld [vmem:[#allocation2 + $0x94] sm:$0xf]
        %v5339 = vld [vmem:[#allocation2 + $0x9c] sm:$0xf]
        %v5340 = vld [vmem:[#allocation2 + $0xa0] sm:$0xf]
        %v5341 = vld [vmem:[#allocation2 + $0xa8] sm:$0xf]
        %v5342 = vld [vmem:[#allocation2 + $0xac] sm:$0xf]
        %v5343 = vld [vmem:[#allocation2 + $0xb4] sm:$0xf]
        %v5344 = vld [vmem:[#allocation2 + $0xb8] sm:$0xf]
        %v5345 = vld [vmem:[#allocation2 + $0xc0] sm:$0xf]
        %v5346 = vld [vmem:[#allocation2 + $0xc4] sm:$0xf]
        %v5347 = vld [vmem:[#allocation2 + $0xcc] sm:$0xf]
        %v5348 = vld [vmem:[#allocation2 + $0xd0] sm:$0xf]
        %v5349 = vld [vmem:[#allocation2 + $0xd8] sm:$0xf]
        %v5350 = vld [vmem:[#allocation2 + $0xdc] sm:$0xf]
        %v5351 = vld [vmem:[#allocation2 + $0xe4] sm:$0xf]
        %v5352 = vld [vmem:[#allocation2 + $0xe8] sm:$0xf]
        %v5353 = vld [vmem:[#allocation2 + $0x8] sm:$0x1]
        %v5354 = vld [vmem:[#allocation2 + $0x14] sm:$0x1]
        %v5355 = vld [vmem:[#allocation2 + $0x20] sm:$0x1]
        %v5356 = vld [vmem:[#allocation2 + $0x2c] sm:$0x1]
        %v5357 = vld [vmem:[#allocation2 + $0x38] sm:$0x1]
        %v5358 = vld [vmem:[#allocation2 + $0x44] sm:$0x1]
        %v5359 = vld [vmem:[#allocation2 + $0x50] sm:$0x1]
        %v5360 = vld [vmem:[#allocation2 + $0x5c] sm:$0x1]
        %v5361 = vld [vmem:[#allocation2 + $0x68] sm:$0x1]
        %v5362 = vld [vmem:[#allocation2 + $0x74] sm:$0x1]
        %v5363 = vld [vmem:[#allocation2 + $0x80] sm:$0x1]
        %v5364 = vld [vmem:[#allocation2 + $0x8c] sm:$0x1]
        %v5365 = vld [vmem:[#allocation2 + $0x98] sm:$0x1]
        %v5366 = vld [vmem:[#allocation2 + $0xa4] sm:$0x1]
        %v5367 = vld [vmem:[#allocation2 + $0xb0] sm:$0x1]
        %v5368 = vld [vmem:[#allocation2 + $0xbc] sm:$0x1]
        %v5369 = vld [vmem:[#allocation2 + $0xc8] sm:$0x1]
        %v5370 = vld [vmem:[#allocation2 + $0xd4] sm:$0x1]
        %v5371 = vld [vmem:[#allocation2 + $0xe0] sm:$0x1]
        %v5372 = vld [vmem:[#allocation2 + $0xec] sm:$0x1]
        %v5373 = vld [vmem:[#allocation2] sm:$0xe]
        %v5374 = vld [vmem:[#allocation2 + $0xc] sm:$0xe]
        %v5375 = vld [vmem:[#allocation2 + $0x18] sm:$0xe]
        %v5376 = vld [vmem:[#allocation2 + $0x24] sm:$0xe]
        %v5377 = vld [vmem:[#allocation2 + $0x30] sm:$0xe]
        %v5378 = vld [vmem:[#allocation2 + $0x3c] sm:$0xe]
        %v5379 = vld [vmem:[#allocation2 + $0x48] sm:$0xe]
        %v5380 = vld [vmem:[#allocation2 + $0x54] sm:$0xe]
        %v5381 = vld [vmem:[#allocation2 + $0x60] sm:$0xe]
        %v5382 = vld [vmem:[#allocation2 + $0x6c] sm:$0xe]
        %v5383 = vld [vmem:[#allocation2 + $0x78] sm:$0xe]
        %v5384 = vld [vmem:[#allocation2 + $0x84] sm:$0xe]
        %v5385 = vld [vmem:[#allocation2 + $0x90] sm:$0xe]
        %v5386 = vld [vmem:[#allocation2 + $0x9c] sm:$0xe]
        %v5387 = vld [vmem:[#allocation2 + $0xa8] sm:$0xe]
        %v5388 = vld [vmem:[#allocation2 + $0xb4] sm:$0xe]
        %v5389 = vld [vmem:[#allocation2 + $0xc0] sm:$0xe]
        %v5390 = vld [vmem:[#allocation2 + $0xcc] sm:$0xe]
        %v5391 = vld [vmem:[#allocation2 + $0xd8] sm:$0xe]
        %v5392 = vld [vmem:[#allocation2 + $0xe4] sm:$0xe]
        %v5393 = vld [vmem:[#allocation2 + $0x8] sm:$0x3]
        %v5394 = vld [vmem:[#allocation2 + $0x14] sm:$0x3]
        %v5395 = vld [vmem:[#allocation2 + $0x20] sm:$0x3]
        %v5396 = vld [vmem:[#allocation2 + $0x2c] sm:$0x3]
        %v5397 = vld [vmem:[#allocation2 + $0x38] sm:$0x3]
        %v5398 = vld [vmem:[#allocation2 + $0x44] sm:$0x3]
        %v5399 = vld [vmem:[#allocation2 + $0x50] sm:$0x3]
        %v5400 = vld [vmem:[#allocation2 + $0x5c] sm:$0x3]
        %v5401 = vld [vmem:[#allocation2 + $0x68] sm:$0x3]
        %v5402 = vld [vmem:[#allocation2 + $0x74] sm:$0x3]
        %v5403 = vld [vmem:[#allocation2 + $0x80] sm:$0x3]
        %v5404 = vld [vmem:[#allocation2 + $0x8c] sm:$0x3]
        %v5405 = vld [vmem:[#allocation2 + $0x98] sm:$0x3]
        %v5406 = vld [vmem:[#allocation2 + $0xa4] sm:$0x3]
        %v5407 = vld [vmem:[#allocation2 + $0xb0] sm:$0x3]
        %v5408 = vld [vmem:[#allocation2 + $0xbc] sm:$0x3]
        %v5409 = vld [vmem:[#allocation2 + $0xc8] sm:$0x3]
        %v5410 = vld [vmem:[#allocation2 + $0xd4] sm:$0x3]
        %v5411 = vld [vmem:[#allocation2 + $0xe0] sm:$0x3]
        %v5412 = vld [vmem:[#allocation2 + $0xec] sm:$0x3]
        %v5413 = vld [vmem:[#allocation2] sm:$0xc]
        %v5414 = vld [vmem:[#allocation2 + $0xc] sm:$0xc]
        %v5415 = vld [vmem:[#allocation2 + $0x18] sm:$0xc]
        %v5416 = vld [vmem:[#allocation2 + $0x24] sm:$0xc]
        %v5417 = vld [vmem:[#allocation2 + $0x30] sm:$0xc]
        %v5418 = vld [vmem:[#allocation2 + $0x3c] sm:$0xc]
        %v5419 = vld [vmem:[#allocation2 + $0x48] sm:$0xc]
        %v5420 = vld [vmem:[#allocation2 + $0x54] sm:$0xc]
        %v5421 = vld [vmem:[#allocation2 + $0x60] sm:$0xc]
        %v5422 = vld [vmem:[#allocation2 + $0x6c] sm:$0xc]
        %v5423 = vld [vmem:[#allocation2 + $0x78] sm:$0xc]
        %v5424 = vld [vmem:[#allocation2 + $0x84] sm:$0xc]
        %v5425 = vld [vmem:[#allocation2 + $0x90] sm:$0xc]
        %v5426 = vld [vmem:[#allocation2 + $0x9c] sm:$0xc]
        %v5427 = vld [vmem:[#allocation2 + $0xa8] sm:$0xc]
        %v5428 = vld [vmem:[#allocation2 + $0xb4] sm:$0xc]
        %v5429 = vld [vmem:[#allocation2 + $0xc0] sm:$0xc]
        %v5430 = vld [vmem:[#allocation2 + $0xcc] sm:$0xc]
        %v5431 = vld [vmem:[#allocation2 + $0xd8] sm:$0xc]
        %v5432 = vld [vmem:[#allocation2 + $0xe4] sm:$0xc]
        %v5434 = vshrl.u32 %v5313, 16
        %v5436 = vrot.slane %v5434, 4
        %v5437 = vshll.u32 %v5313, 16
        %v5439 = vrot.slane %v5437, 5
        %v5440 = vor.u32 %v5436, %v5439
        %v5441 = vrot.slane %v5440, 4
        %v5443 = vshll.u32 %v5314, 16
        %v5445 = vrot.slane %v5443, 5
        %v5446 = vsel %vm1226, %v5441, %v5445
        %v5447 = vshrl.u32 %v5314, 16
        %v5449 = vrot.slane %v5447, 4
        %v5450 = vor.u32 %v5449, %v5445
        %v5451 = vrot.slane %v5450, 4
        %v5453 = vshll.u32 %v5353, 16
        %v5455 = vrot.slane %v5453, 5
        %v5456 = vsel %vm1226, %v5451, %v5455
        %v5458 = vshrl.u32 %v5315, 16
        %v5460 = vrot.slane %v5458, 4
        %v5461 = vshll.u32 %v5315, 16
        %v5463 = vrot.slane %v5461, 5
        %v5464 = vor.u32 %v5460, %v5463
        %v5465 = vrot.slane %v5464, 4
        %v5467 = vshll.u32 %v5316, 16
        %v5469 = vrot.slane %v5467, 5
        %v5470 = vsel %vm1226, %v5465, %v5469
        %v5471 = vshrl.u32 %v5316, 16
        %v5473 = vrot.slane %v5471, 4
        %v5474 = vor.u32 %v5473, %v5469
        %v5475 = vrot.slane %v5474, 4
        %v5477 = vshll.u32 %v5354, 16
        %v5479 = vrot.slane %v5477, 5
        %v5480 = vsel %vm1226, %v5475, %v5479
        %v5482 = vshrl.u32 %v5317, 16
        %v5484 = vrot.slane %v5482, 4
        %v5485 = vshll.u32 %v5317, 16
        %v5487 = vrot.slane %v5485, 5
        %v5488 = vor.u32 %v5484, %v5487
        %v5489 = vrot.slane %v5488, 4
        %v5491 = vshll.u32 %v5318, 16
        %v5493 = vrot.slane %v5491, 5
        %v5494 = vsel %vm1226, %v5489, %v5493
        %v5495 = vshrl.u32 %v5318, 16
        %v5497 = vrot.slane %v5495, 4
        %v5498 = vor.u32 %v5497, %v5493
        %v5499 = vrot.slane %v5498, 4
        %v5501 = vshll.u32 %v5355, 16
        %v5503 = vrot.slane %v5501, 5
        %v5504 = vsel %vm1226, %v5499, %v5503
        %v5506 = vshrl.u32 %v5319, 16
        %v5508 = vrot.slane %v5506, 4
        %v5509 = vshll.u32 %v5319, 16
        %v5511 = vrot.slane %v5509, 5
        %v5512 = vor.u32 %v5508, %v5511
        %v5513 = vrot.slane %v5512, 4
        %v5515 = vshll.u32 %v5320, 16
        %v5517 = vrot.slane %v5515, 5
        %v5518 = vsel %vm1226, %v5513, %v5517
        %v5519 = vshrl.u32 %v5320, 16
        %v5521 = vrot.slane %v5519, 4
        %v5522 = vor.u32 %v5521, %v5517
        %v5523 = vrot.slane %v5522, 4
        %v5525 = vshll.u32 %v5356, 16
        %v5527 = vrot.slane %v5525, 5
        %v5528 = vsel %vm1226, %v5523, %v5527
        %v5530 = vshrl.u32 %v5321, 16
        %v5532 = vrot.slane %v5530, 4
        %v5533 = vshll.u32 %v5321, 16
        %v5535 = vrot.slane %v5533, 5
        %v5536 = vor.u32 %v5532, %v5535
        %v5537 = vrot.slane %v5536, 4
        %v5539 = vshll.u32 %v5322, 16
        %v5541 = vrot.slane %v5539, 5
        %v5542 = vsel %vm1226, %v5537, %v5541
        %v5543 = vshrl.u32 %v5322, 16
        %v5545 = vrot.slane %v5543, 4
        %v5546 = vor.u32 %v5545, %v5541
        %v5547 = vrot.slane %v5546, 4
        %v5549 = vshll.u32 %v5357, 16
        %v5551 = vrot.slane %v5549, 5
        %v5552 = vsel %vm1226, %v5547, %v5551
        %v5554 = vshrl.u32 %v5323, 16
        %v5556 = vrot.slane %v5554, 4
        %v5557 = vshll.u32 %v5323, 16
        %v5559 = vrot.slane %v5557, 5
        %v5560 = vor.u32 %v5556, %v5559
        %v5561 = vrot.slane %v5560, 4
        %v5563 = vshll.u32 %v5324, 16
        %v5565 = vrot.slane %v5563, 5
        %v5566 = vsel %vm1226, %v5561, %v5565
        %v5567 = vshrl.u32 %v5324, 16
        %v5569 = vrot.slane %v5567, 4
        %v5570 = vor.u32 %v5569, %v5565
        %v5571 = vrot.slane %v5570, 4
        %v5573 = vshll.u32 %v5358, 16
        %v5575 = vrot.slane %v5573, 5
        %v5576 = vsel %vm1226, %v5571, %v5575
        %v5578 = vshrl.u32 %v5325, 16
        %v5580 = vrot.slane %v5578, 4
        %v5581 = vshll.u32 %v5325, 16
        %v5583 = vrot.slane %v5581, 5
        %v5584 = vor.u32 %v5580, %v5583
        %v5585 = vrot.slane %v5584, 4
        %v5587 = vshll.u32 %v5326, 16
        %v5589 = vrot.slane %v5587, 5
        %v5590 = vsel %vm1226, %v5585, %v5589
        %v5591 = vshrl.u32 %v5326, 16
        %v5593 = vrot.slane %v5591, 4
        %v5594 = vor.u32 %v5593, %v5589
        %v5595 = vrot.slane %v5594, 4
        %v5597 = vshll.u32 %v5359, 16
        %v5599 = vrot.slane %v5597, 5
        %v5600 = vsel %vm1226, %v5595, %v5599
        %v5602 = vshrl.u32 %v5327, 16
        %v5604 = vrot.slane %v5602, 4
        %v5605 = vshll.u32 %v5327, 16
        %v5607 = vrot.slane %v5605, 5
        %v5608 = vor.u32 %v5604, %v5607
        %v5609 = vrot.slane %v5608, 4
        %v5611 = vshll.u32 %v5328, 16
        %v5613 = vrot.slane %v5611, 5
        %v5614 = vsel %vm1226, %v5609, %v5613
        %v5615 = vshrl.u32 %v5328, 16
        %v5617 = vrot.slane %v5615, 4
        %v5618 = vor.u32 %v5617, %v5613
        %v5619 = vrot.slane %v5618, 4
        %v5621 = vshll.u32 %v5360, 16
        %v5623 = vrot.slane %v5621, 5
        %v5624 = vsel %vm1226, %v5619, %v5623
        %v5626 = vshrl.u32 %v5329, 16
        %v5628 = vrot.slane %v5626, 4
        %v5629 = vshll.u32 %v5329, 16
        %v5631 = vrot.slane %v5629, 5
        %v5632 = vor.u32 %v5628, %v5631
        %v5633 = vrot.slane %v5632, 4
        %v5635 = vshll.u32 %v5330, 16
        %v5637 = vrot.slane %v5635, 5
        %v5638 = vsel %vm1226, %v5633, %v5637
        %v5639 = vshrl.u32 %v5330, 16
        %v5641 = vrot.slane %v5639, 4
        %v5642 = vor.u32 %v5641, %v5637
        %v5643 = vrot.slane %v5642, 4
        %v5645 = vshll.u32 %v5361, 16
        %v5647 = vrot.slane %v5645, 5
        %v5648 = vsel %vm1226, %v5643, %v5647
        %v5650 = vshrl.u32 %v5331, 16
        %v5652 = vrot.slane %v5650, 4
        %v5653 = vshll.u32 %v5331, 16
        %v5655 = vrot.slane %v5653, 5
        %v5656 = vor.u32 %v5652, %v5655
        %v5657 = vrot.slane %v5656, 4
        %v5659 = vshll.u32 %v5332, 16
        %v5661 = vrot.slane %v5659, 5
        %v5662 = vsel %vm1226, %v5657, %v5661
        %v5663 = vshrl.u32 %v5332, 16
        %v5665 = vrot.slane %v5663, 4
        %v5666 = vor.u32 %v5665, %v5661
        %v5667 = vrot.slane %v5666, 4
        %v5669 = vshll.u32 %v5362, 16
        %v5671 = vrot.slane %v5669, 5
        %v5672 = vsel %vm1226, %v5667, %v5671
        %v5674 = vshrl.u32 %v5333, 16
        %v5676 = vrot.slane %v5674, 4
        %v5677 = vshll.u32 %v5333, 16
        %v5679 = vrot.slane %v5677, 5
        %v5680 = vor.u32 %v5676, %v5679
        %v5681 = vrot.slane %v5680, 4
        %v5683 = vshll.u32 %v5334, 16
        %v5685 = vrot.slane %v5683, 5
        %v5686 = vsel %vm1226, %v5681, %v5685
        %v5687 = vshrl.u32 %v5334, 16
        %v5689 = vrot.slane %v5687, 4
        %v5690 = vor.u32 %v5689, %v5685
        %v5691 = vrot.slane %v5690, 4
        %v5693 = vshll.u32 %v5363, 16
        %v5695 = vrot.slane %v5693, 5
        %v5696 = vsel %vm1226, %v5691, %v5695
        %v5698 = vshrl.u32 %v5335, 16
        %v5700 = vrot.slane %v5698, 4
        %v5701 = vshll.u32 %v5335, 16
        %v5703 = vrot.slane %v5701, 5
        %v5704 = vor.u32 %v5700, %v5703
        %v5705 = vrot.slane %v5704, 4
        %v5707 = vshll.u32 %v5336, 16
        %v5709 = vrot.slane %v5707, 5
        %v5710 = vsel %vm1226, %v5705, %v5709
        %v5711 = vshrl.u32 %v5336, 16
        %v5713 = vrot.slane %v5711, 4
        %v5714 = vor.u32 %v5713, %v5709
        %v5715 = vrot.slane %v5714, 4
        %v5717 = vshll.u32 %v5364, 16
        %v5719 = vrot.slane %v5717, 5
        %v5720 = vsel %vm1226, %v5715, %v5719
        %v5722 = vshrl.u32 %v5337, 16
        %v5724 = vrot.slane %v5722, 4
        %v5725 = vshll.u32 %v5337, 16
        %v5727 = vrot.slane %v5725, 5
        %v5728 = vor.u32 %v5724, %v5727
        %v5729 = vrot.slane %v5728, 4
        %v5731 = vshll.u32 %v5338, 16
        %v5733 = vrot.slane %v5731, 5
        %v5734 = vsel %vm1226, %v5729, %v5733
        %v5735 = vshrl.u32 %v5338, 16
        %v5737 = vrot.slane %v5735, 4
        %v5738 = vor.u32 %v5737, %v5733
        %v5739 = vrot.slane %v5738, 4
        %v5741 = vshll.u32 %v5365, 16
        %v5743 = vrot.slane %v5741, 5
        %v5744 = vsel %vm1226, %v5739, %v5743
        %v5746 = vshrl.u32 %v5339, 16
        %v5748 = vrot.slane %v5746, 4
        %v5749 = vshll.u32 %v5339, 16
        %v5751 = vrot.slane %v5749, 5
        %v5752 = vor.u32 %v5748, %v5751
        %v5753 = vrot.slane %v5752, 4
        %v5755 = vshll.u32 %v5340, 16
        %v5757 = vrot.slane %v5755, 5
        %v5758 = vsel %vm1226, %v5753, %v5757
        %v5759 = vshrl.u32 %v5340, 16
        %v5761 = vrot.slane %v5759, 4
        %v5762 = vor.u32 %v5761, %v5757
        %v5763 = vrot.slane %v5762, 4
        %v5765 = vshll.u32 %v5366, 16
        %v5767 = vrot.slane %v5765, 5
        %v5768 = vsel %vm1226, %v5763, %v5767
        %v5770 = vshrl.u32 %v5341, 16
        %v5772 = vrot.slane %v5770, 4
        %v5773 = vshll.u32 %v5341, 16
        %v5775 = vrot.slane %v5773, 5
        %v5776 = vor.u32 %v5772, %v5775
        %v5777 = vrot.slane %v5776, 4
        %v5779 = vshll.u32 %v5342, 16
        %v5781 = vrot.slane %v5779, 5
        %v5782 = vsel %vm1226, %v5777, %v5781
        %v5783 = vshrl.u32 %v5342, 16
        %v5785 = vrot.slane %v5783, 4
        %v5786 = vor.u32 %v5785, %v5781
        %v5787 = vrot.slane %v5786, 4
        %v5789 = vshll.u32 %v5367, 16
        %v5791 = vrot.slane %v5789, 5
        %v5792 = vsel %vm1226, %v5787, %v5791
        %v5794 = vshrl.u32 %v5343, 16
        %v5796 = vrot.slane %v5794, 4
        %v5797 = vshll.u32 %v5343, 16
        %v5799 = vrot.slane %v5797, 5
        %v5800 = vor.u32 %v5796, %v5799
        %v5801 = vrot.slane %v5800, 4
        %v5803 = vshll.u32 %v5344, 16
        %v5805 = vrot.slane %v5803, 5
        %v5806 = vsel %vm1226, %v5801, %v5805
        %v5807 = vshrl.u32 %v5344, 16
        %v5809 = vrot.slane %v5807, 4
        %v5810 = vor.u32 %v5809, %v5805
        %v5811 = vrot.slane %v5810, 4
        %v5813 = vshll.u32 %v5368, 16
        %v5815 = vrot.slane %v5813, 5
        %v5816 = vsel %vm1226, %v5811, %v5815
        %v5818 = vshrl.u32 %v5345, 16
        %v5820 = vrot.slane %v5818, 4
        %v5821 = vshll.u32 %v5345, 16
        %v5823 = vrot.slane %v5821, 5
        %v5824 = vor.u32 %v5820, %v5823
        %v5825 = vrot.slane %v5824, 4
        %v5827 = vshll.u32 %v5346, 16
        %v5829 = vrot.slane %v5827, 5
        %v5830 = vsel %vm1226, %v5825, %v5829
        %v5831 = vshrl.u32 %v5346, 16
        %v5833 = vrot.slane %v5831, 4
        %v5834 = vor.u32 %v5833, %v5829
        %v5835 = vrot.slane %v5834, 4
        %v5837 = vshll.u32 %v5369, 16
        %v5839 = vrot.slane %v5837, 5
        %v5840 = vsel %vm1226, %v5835, %v5839
        %v5842 = vshrl.u32 %v5347, 16
        %v5844 = vrot.slane %v5842, 4
        %v5845 = vshll.u32 %v5347, 16
        %v5847 = vrot.slane %v5845, 5
        %v5848 = vor.u32 %v5844, %v5847
        %v5849 = vrot.slane %v5848, 4
        %v5851 = vshll.u32 %v5348, 16
        %v5853 = vrot.slane %v5851, 5
        %v5854 = vsel %vm1226, %v5849, %v5853
        %v5855 = vshrl.u32 %v5348, 16
        %v5857 = vrot.slane %v5855, 4
        %v5858 = vor.u32 %v5857, %v5853
        %v5859 = vrot.slane %v5858, 4
        %v5861 = vshll.u32 %v5370, 16
        %v5863 = vrot.slane %v5861, 5
        %v5864 = vsel %vm1226, %v5859, %v5863
        %v5866 = vshrl.u32 %v5349, 16
        %v5868 = vrot.slane %v5866, 4
        %v5869 = vshll.u32 %v5349, 16
        %v5871 = vrot.slane %v5869, 5
        %v5872 = vor.u32 %v5868, %v5871
        %v5873 = vrot.slane %v5872, 4
        %v5875 = vshll.u32 %v5350, 16
        %v5877 = vrot.slane %v5875, 5
        %v5878 = vsel %vm1226, %v5873, %v5877
        %v5879 = vshrl.u32 %v5350, 16
        %v5881 = vrot.slane %v5879, 4
        %v5882 = vor.u32 %v5881, %v5877
        %v5883 = vrot.slane %v5882, 4
        %v5885 = vshll.u32 %v5371, 16
        %v5887 = vrot.slane %v5885, 5
        %v5888 = vsel %vm1226, %v5883, %v5887
        %v5890 = vshrl.u32 %v5351, 16
        %v5892 = vrot.slane %v5890, 4
        %v5893 = vshll.u32 %v5351, 16
        %v5895 = vrot.slane %v5893, 5
        %v5896 = vor.u32 %v5892, %v5895
        %v5897 = vrot.slane %v5896, 4
        %v5899 = vshll.u32 %v5352, 16
        %v5901 = vrot.slane %v5899, 5
        %v5902 = vsel %vm1226, %v5897, %v5901
        %v5903 = vshrl.u32 %v5352, 16
        %v5905 = vrot.slane %v5903, 4
        %v5906 = vor.u32 %v5905, %v5901
        %v5907 = vrot.slane %v5906, 4
        %v5909 = vshll.u32 %v5372, 16
        %v5911 = vrot.slane %v5909, 5
        %v5912 = vsel %vm1226, %v5907, %v5911
        %v5953 = vmax.bf16 %v5313, %v5446
        %v5954 = vmax.bf16 %v5314, %v5456
        %v5955 = vmax.bf16 %v5315, %v5470
        %v5956 = vmax.bf16 %v5316, %v5480
        %v5957 = vmax.bf16 %v5317, %v5494
        %v5958 = vmax.bf16 %v5318, %v5504
        %v5959 = vmax.bf16 %v5319, %v5518
        %v5960 = vmax.bf16 %v5320, %v5528
        %v5961 = vmax.bf16 %v5321, %v5542
        %v5962 = vmax.bf16 %v5322, %v5552
        %v5963 = vmax.bf16 %v5323, %v5566
        %v5964 = vmax.bf16 %v5324, %v5576
        %v5965 = vmax.bf16 %v5325, %v5590
        %v5966 = vmax.bf16 %v5326, %v5600
        %v5967 = vmax.bf16 %v5327, %v5614
        %v5968 = vmax.bf16 %v5328, %v5624
        %v5969 = vmax.bf16 %v5329, %v5638
        %v5970 = vmax.bf16 %v5330, %v5648
        %v5971 = vmax.bf16 %v5331, %v5662
        %v5972 = vmax.bf16 %v5332, %v5672
        %v5973 = vmax.bf16 %v5333, %v5686
        %v5974 = vmax.bf16 %v5334, %v5696
        %v5975 = vmax.bf16 %v5335, %v5710
        %v5976 = vmax.bf16 %v5336, %v5720
        %v5977 = vmax.bf16 %v5337, %v5734
        %v5978 = vmax.bf16 %v5338, %v5744
        %v5979 = vmax.bf16 %v5339, %v5758
        %v5980 = vmax.bf16 %v5340, %v5768
        %v5981 = vmax.bf16 %v5341, %v5782
        %v5982 = vmax.bf16 %v5342, %v5792
        %v5983 = vmax.bf16 %v5343, %v5806
        %v5984 = vmax.bf16 %v5344, %v5816
        %v5985 = vmax.bf16 %v5345, %v5830
        %v5986 = vmax.bf16 %v5346, %v5840
        %v5987 = vmax.bf16 %v5347, %v5854
        %v5988 = vmax.bf16 %v5348, %v5864
        %v5989 = vmax.bf16 %v5349, %v5878
        %v5990 = vmax.bf16 %v5350, %v5888
        %v5991 = vmax.bf16 %v5351, %v5902
        %v5992 = vmax.bf16 %v5352, %v5912
        %v5994 = vshrl.u32 %v5373, 16
        %v5996 = vrot.slane %v5994, 4
        %v5997 = vshll.u32 %v5373, 16
        %v5999 = vrot.slane %v5997, 5
        %v6000 = vor.u32 %v5996, %v5999
        %v6001 = vrot.slane %v6000, 4
        %v6002 = vsel %vm1226, %v6001, %v5445
        %v6004 = vshll.u32 %v5393, 16
        %v6006 = vrot.slane %v6004, 5
        %v6007 = vsel %vm1226, %v5451, %v6006
        %v6008 = vshrl.u32 %v5393, 16
        %v6010 = vrot.slane %v6008, 4
        %v6011 = vor.u32 %v6010, %v6006
        %v6012 = vrot.slane %v6011, 4
        %v6014 = vshrl.u32 %v5374, 16
        %v6016 = vrot.slane %v6014, 4
        %v6017 = vshll.u32 %v5374, 16
        %v6019 = vrot.slane %v6017, 5
        %v6020 = vor.u32 %v6016, %v6019
        %v6021 = vrot.slane %v6020, 4
        %v6022 = vsel %vm1226, %v6021, %v5469
        %v6024 = vshll.u32 %v5394, 16
        %v6026 = vrot.slane %v6024, 5
        %v6027 = vsel %vm1226, %v5475, %v6026
        %v6028 = vshrl.u32 %v5394, 16
        %v6030 = vrot.slane %v6028, 4
        %v6031 = vor.u32 %v6030, %v6026
        %v6032 = vrot.slane %v6031, 4
        %v6034 = vshrl.u32 %v5375, 16
        %v6036 = vrot.slane %v6034, 4
        %v6037 = vshll.u32 %v5375, 16
        %v6039 = vrot.slane %v6037, 5
        %v6040 = vor.u32 %v6036, %v6039
        %v6041 = vrot.slane %v6040, 4
        %v6042 = vsel %vm1226, %v6041, %v5493
        %v6044 = vshll.u32 %v5395, 16
        %v6046 = vrot.slane %v6044, 5
        %v6047 = vsel %vm1226, %v5499, %v6046
        %v6048 = vshrl.u32 %v5395, 16
        %v6050 = vrot.slane %v6048, 4
        %v6051 = vor.u32 %v6050, %v6046
        %v6052 = vrot.slane %v6051, 4
        %v6054 = vshrl.u32 %v5376, 16
        %v6056 = vrot.slane %v6054, 4
        %v6057 = vshll.u32 %v5376, 16
        %v6059 = vrot.slane %v6057, 5
        %v6060 = vor.u32 %v6056, %v6059
        %v6061 = vrot.slane %v6060, 4
        %v6062 = vsel %vm1226, %v6061, %v5517
        %v6064 = vshll.u32 %v5396, 16
        %v6066 = vrot.slane %v6064, 5
        %v6067 = vsel %vm1226, %v5523, %v6066
        %v6068 = vshrl.u32 %v5396, 16
        %v6070 = vrot.slane %v6068, 4
        %v6071 = vor.u32 %v6070, %v6066
        %v6072 = vrot.slane %v6071, 4
        %v6074 = vshrl.u32 %v5377, 16
        %v6076 = vrot.slane %v6074, 4
        %v6077 = vshll.u32 %v5377, 16
        %v6079 = vrot.slane %v6077, 5
        %v6080 = vor.u32 %v6076, %v6079
        %v6081 = vrot.slane %v6080, 4
        %v6082 = vsel %vm1226, %v6081, %v5541
        %v6084 = vshll.u32 %v5397, 16
        %v6086 = vrot.slane %v6084, 5
        %v6087 = vsel %vm1226, %v5547, %v6086
        %v6088 = vshrl.u32 %v5397, 16
        %v6090 = vrot.slane %v6088, 4
        %v6091 = vor.u32 %v6090, %v6086
        %v6092 = vrot.slane %v6091, 4
        %v6094 = vshrl.u32 %v5378, 16
        %v6096 = vrot.slane %v6094, 4
        %v6097 = vshll.u32 %v5378, 16
        %v6099 = vrot.slane %v6097, 5
        %v6100 = vor.u32 %v6096, %v6099
        %v6101 = vrot.slane %v6100, 4
        %v6102 = vsel %vm1226, %v6101, %v5565
        %v6104 = vshll.u32 %v5398, 16
        %v6106 = vrot.slane %v6104, 5
        %v6107 = vsel %vm1226, %v5571, %v6106
        %v6108 = vshrl.u32 %v5398, 16
        %v6110 = vrot.slane %v6108, 4
        %v6111 = vor.u32 %v6110, %v6106
        %v6112 = vrot.slane %v6111, 4
        %v6114 = vshrl.u32 %v5379, 16
        %v6116 = vrot.slane %v6114, 4
        %v6117 = vshll.u32 %v5379, 16
        %v6119 = vrot.slane %v6117, 5
        %v6120 = vor.u32 %v6116, %v6119
        %v6121 = vrot.slane %v6120, 4
        %v6122 = vsel %vm1226, %v6121, %v5589
        %v6124 = vshll.u32 %v5399, 16
        %v6126 = vrot.slane %v6124, 5
        %v6127 = vsel %vm1226, %v5595, %v6126
        %v6128 = vshrl.u32 %v5399, 16
        %v6130 = vrot.slane %v6128, 4
        %v6131 = vor.u32 %v6130, %v6126
        %v6132 = vrot.slane %v6131, 4
        %v6134 = vshrl.u32 %v5380, 16
        %v6136 = vrot.slane %v6134, 4
        %v6137 = vshll.u32 %v5380, 16
        %v6139 = vrot.slane %v6137, 5
        %v6140 = vor.u32 %v6136, %v6139
        %v6141 = vrot.slane %v6140, 4
        %v6142 = vsel %vm1226, %v6141, %v5613
        %v6144 = vshll.u32 %v5400, 16
        %v6146 = vrot.slane %v6144, 5
        %v6147 = vsel %vm1226, %v5619, %v6146
        %v6148 = vshrl.u32 %v5400, 16
        %v6150 = vrot.slane %v6148, 4
        %v6151 = vor.u32 %v6150, %v6146
        %v6152 = vrot.slane %v6151, 4
        %v6154 = vshrl.u32 %v5381, 16
        %v6156 = vrot.slane %v6154, 4
        %v6157 = vshll.u32 %v5381, 16
        %v6159 = vrot.slane %v6157, 5
        %v6160 = vor.u32 %v6156, %v6159
        %v6161 = vrot.slane %v6160, 4
        %v6162 = vsel %vm1226, %v6161, %v5637
        %v6164 = vshll.u32 %v5401, 16
        %v6166 = vrot.slane %v6164, 5
        %v6167 = vsel %vm1226, %v5643, %v6166
        %v6168 = vshrl.u32 %v5401, 16
        %v6170 = vrot.slane %v6168, 4
        %v6171 = vor.u32 %v6170, %v6166
        %v6172 = vrot.slane %v6171, 4
        %v6174 = vshrl.u32 %v5382, 16
        %v6176 = vrot.slane %v6174, 4
        %v6177 = vshll.u32 %v5382, 16
        %v6179 = vrot.slane %v6177, 5
        %v6180 = vor.u32 %v6176, %v6179
        %v6181 = vrot.slane %v6180, 4
        %v6182 = vsel %vm1226, %v6181, %v5661
        %v6184 = vshll.u32 %v5402, 16
        %v6186 = vrot.slane %v6184, 5
        %v6187 = vsel %vm1226, %v5667, %v6186
        %v6188 = vshrl.u32 %v5402, 16
        %v6190 = vrot.slane %v6188, 4
        %v6191 = vor.u32 %v6190, %v6186
        %v6192 = vrot.slane %v6191, 4
        %v6194 = vshrl.u32 %v5383, 16
        %v6196 = vrot.slane %v6194, 4
        %v6197 = vshll.u32 %v5383, 16
        %v6199 = vrot.slane %v6197, 5
        %v6200 = vor.u32 %v6196, %v6199
        %v6201 = vrot.slane %v6200, 4
        %v6202 = vsel %vm1226, %v6201, %v5685
        %v6204 = vshll.u32 %v5403, 16
        %v6206 = vrot.slane %v6204, 5
        %v6207 = vsel %vm1226, %v5691, %v6206
        %v6208 = vshrl.u32 %v5403, 16
        %v6210 = vrot.slane %v6208, 4
        %v6211 = vor.u32 %v6210, %v6206
        %v6212 = vrot.slane %v6211, 4
        %v6214 = vshrl.u32 %v5384, 16
        %v6216 = vrot.slane %v6214, 4
        %v6217 = vshll.u32 %v5384, 16
        %v6219 = vrot.slane %v6217, 5
        %v6220 = vor.u32 %v6216, %v6219
        %v6221 = vrot.slane %v6220, 4
        %v6222 = vsel %vm1226, %v6221, %v5709
        %v6224 = vshll.u32 %v5404, 16
        %v6226 = vrot.slane %v6224, 5
        %v6227 = vsel %vm1226, %v5715, %v6226
        %v6228 = vshrl.u32 %v5404, 16
        %v6230 = vrot.slane %v6228, 4
        %v6231 = vor.u32 %v6230, %v6226
        %v6232 = vrot.slane %v6231, 4
        %v6234 = vshrl.u32 %v5385, 16
        %v6236 = vrot.slane %v6234, 4
        %v6237 = vshll.u32 %v5385, 16
        %v6239 = vrot.slane %v6237, 5
        %v6240 = vor.u32 %v6236, %v6239
        %v6241 = vrot.slane %v6240, 4
        %v6242 = vsel %vm1226, %v6241, %v5733
        %v6244 = vshll.u32 %v5405, 16
        %v6246 = vrot.slane %v6244, 5
        %v6247 = vsel %vm1226, %v5739, %v6246
        %v6248 = vshrl.u32 %v5405, 16
        %v6250 = vrot.slane %v6248, 4
        %v6251 = vor.u32 %v6250, %v6246
        %v6252 = vrot.slane %v6251, 4
        %v6254 = vshrl.u32 %v5386, 16
        %v6256 = vrot.slane %v6254, 4
        %v6257 = vshll.u32 %v5386, 16
        %v6259 = vrot.slane %v6257, 5
        %v6260 = vor.u32 %v6256, %v6259
        %v6261 = vrot.slane %v6260, 4
        %v6262 = vsel %vm1226, %v6261, %v5757
        %v6264 = vshll.u32 %v5406, 16
        %v6266 = vrot.slane %v6264, 5
        %v6267 = vsel %vm1226, %v5763, %v6266
        %v6268 = vshrl.u32 %v5406, 16
        %v6270 = vrot.slane %v6268, 4
        %v6271 = vor.u32 %v6270, %v6266
        %v6272 = vrot.slane %v6271, 4
        %v6274 = vshrl.u32 %v5387, 16
        %v6276 = vrot.slane %v6274, 4
        %v6277 = vshll.u32 %v5387, 16
        %v6279 = vrot.slane %v6277, 5
        %v6280 = vor.u32 %v6276, %v6279
        %v6281 = vrot.slane %v6280, 4
        %v6282 = vsel %vm1226, %v6281, %v5781
        %v6284 = vshll.u32 %v5407, 16
        %v6286 = vrot.slane %v6284, 5
        %v6287 = vsel %vm1226, %v5787, %v6286
        %v6288 = vshrl.u32 %v5407, 16
        %v6290 = vrot.slane %v6288, 4
        %v6291 = vor.u32 %v6290, %v6286
        %v6292 = vrot.slane %v6291, 4
        %v6294 = vshrl.u32 %v5388, 16
        %v6296 = vrot.slane %v6294, 4
        %v6297 = vshll.u32 %v5388, 16
        %v6299 = vrot.slane %v6297, 5
        %v6300 = vor.u32 %v6296, %v6299
        %v6301 = vrot.slane %v6300, 4
        %v6302 = vsel %vm1226, %v6301, %v5805
        %v6304 = vshll.u32 %v5408, 16
        %v6306 = vrot.slane %v6304, 5
        %v6307 = vsel %vm1226, %v5811, %v6306
        %v6308 = vshrl.u32 %v5408, 16
        %v6310 = vrot.slane %v6308, 4
        %v6311 = vor.u32 %v6310, %v6306
        %v6312 = vrot.slane %v6311, 4
        %v6314 = vshrl.u32 %v5389, 16
        %v6316 = vrot.slane %v6314, 4
        %v6317 = vshll.u32 %v5389, 16
        %v6319 = vrot.slane %v6317, 5
        %v6320 = vor.u32 %v6316, %v6319
        %v6321 = vrot.slane %v6320, 4
        %v6322 = vsel %vm1226, %v6321, %v5829
        %v6324 = vshll.u32 %v5409, 16
        %v6326 = vrot.slane %v6324, 5
        %v6327 = vsel %vm1226, %v5835, %v6326
        %v6328 = vshrl.u32 %v5409, 16
        %v6330 = vrot.slane %v6328, 4
        %v6331 = vor.u32 %v6330, %v6326
        %v6332 = vrot.slane %v6331, 4
        %v6334 = vshrl.u32 %v5390, 16
        %v6336 = vrot.slane %v6334, 4
        %v6337 = vshll.u32 %v5390, 16
        %v6339 = vrot.slane %v6337, 5
        %v6340 = vor.u32 %v6336, %v6339
        %v6341 = vrot.slane %v6340, 4
        %v6342 = vsel %vm1226, %v6341, %v5853
        %v6344 = vshll.u32 %v5410, 16
        %v6346 = vrot.slane %v6344, 5
        %v6347 = vsel %vm1226, %v5859, %v6346
        %v6348 = vshrl.u32 %v5410, 16
        %v6350 = vrot.slane %v6348, 4
        %v6351 = vor.u32 %v6350, %v6346
        %v6352 = vrot.slane %v6351, 4
        %v6354 = vshrl.u32 %v5391, 16
        %v6356 = vrot.slane %v6354, 4
        %v6357 = vshll.u32 %v5391, 16
        %v6359 = vrot.slane %v6357, 5
        %v6360 = vor.u32 %v6356, %v6359
        %v6361 = vrot.slane %v6360, 4
        %v6362 = vsel %vm1226, %v6361, %v5877
        %v6364 = vshll.u32 %v5411, 16
        %v6366 = vrot.slane %v6364, 5
        %v6367 = vsel %vm1226, %v5883, %v6366
        %v6368 = vshrl.u32 %v5411, 16
        %v6370 = vrot.slane %v6368, 4
        %v6371 = vor.u32 %v6370, %v6366
        %v6372 = vrot.slane %v6371, 4
        %v6374 = vshrl.u32 %v5392, 16
        %v6376 = vrot.slane %v6374, 4
        %v6377 = vshll.u32 %v5392, 16
        %v6379 = vrot.slane %v6377, 5
        %v6380 = vor.u32 %v6376, %v6379
        %v6381 = vrot.slane %v6380, 4
        %v6382 = vsel %vm1226, %v6381, %v5901
        %v6384 = vshll.u32 %v5412, 16
        %v6386 = vrot.slane %v6384, 5
        %v6387 = vsel %vm1226, %v5907, %v6386
        %v6388 = vshrl.u32 %v5412, 16
        %v6390 = vrot.slane %v6388, 4
        %v6391 = vor.u32 %v6390, %v6386
        %v6392 = vrot.slane %v6391, 4
        %v6453 = vmax.bf16 %v5373, %v6002
        %v6454 = vmax.bf16 %v5314, %v6007
        %v6455 = vmax.bf16 %v5353, %v6012
        %v6456 = vmax.bf16 %v5374, %v6022
        %v6457 = vmax.bf16 %v5316, %v6027
        %v6458 = vmax.bf16 %v5354, %v6032
        %v6459 = vmax.bf16 %v5375, %v6042
        %v6460 = vmax.bf16 %v5318, %v6047
        %v6461 = vmax.bf16 %v5355, %v6052
        %v6462 = vmax.bf16 %v5376, %v6062
        %v6463 = vmax.bf16 %v5320, %v6067
        %v6464 = vmax.bf16 %v5356, %v6072
        %v6465 = vmax.bf16 %v5377, %v6082
        %v6466 = vmax.bf16 %v5322, %v6087
        %v6467 = vmax.bf16 %v5357, %v6092
        %v6468 = vmax.bf16 %v5378, %v6102
        %v6469 = vmax.bf16 %v5324, %v6107
        %v6470 = vmax.bf16 %v5358, %v6112
        %v6471 = vmax.bf16 %v5379, %v6122
        %v6472 = vmax.bf16 %v5326, %v6127
        %v6473 = vmax.bf16 %v5359, %v6132
        %v6474 = vmax.bf16 %v5380, %v6142
        %v6475 = vmax.bf16 %v5328, %v6147
        %v6476 = vmax.bf16 %v5360, %v6152
        %v6477 = vmax.bf16 %v5381, %v6162
        %v6478 = vmax.bf16 %v5330, %v6167
        %v6479 = vmax.bf16 %v5361, %v6172
        %v6480 = vmax.bf16 %v5382, %v6182
        %v6481 = vmax.bf16 %v5332, %v6187
        %v6482 = vmax.bf16 %v5362, %v6192
        %v6483 = vmax.bf16 %v5383, %v6202
        %v6484 = vmax.bf16 %v5334, %v6207
        %v6485 = vmax.bf16 %v5363, %v6212
        %v6486 = vmax.bf16 %v5384, %v6222
        %v6487 = vmax.bf16 %v5336, %v6227
        %v6488 = vmax.bf16 %v5364, %v6232
        %v6489 = vmax.bf16 %v5385, %v6242
        %v6490 = vmax.bf16 %v5338, %v6247
        %v6491 = vmax.bf16 %v5365, %v6252
        %v6492 = vmax.bf16 %v5386, %v6262
        %v6493 = vmax.bf16 %v5340, %v6267
        %v6494 = vmax.bf16 %v5366, %v6272
        %v6495 = vmax.bf16 %v5387, %v6282
        %v6496 = vmax.bf16 %v5342, %v6287
        %v6497 = vmax.bf16 %v5367, %v6292
        %v6498 = vmax.bf16 %v5388, %v6302
        %v6499 = vmax.bf16 %v5344, %v6307
        %v6500 = vmax.bf16 %v5368, %v6312
        %v6501 = vmax.bf16 %v5389, %v6322
        %v6502 = vmax.bf16 %v5346, %v6327
        %v6503 = vmax.bf16 %v5369, %v6332
        %v6504 = vmax.bf16 %v5390, %v6342
        %v6505 = vmax.bf16 %v5348, %v6347
        %v6506 = vmax.bf16 %v5370, %v6352
        %v6507 = vmax.bf16 %v5391, %v6362
        %v6508 = vmax.bf16 %v5350, %v6367
        %v6509 = vmax.bf16 %v5371, %v6372
        %v6510 = vmax.bf16 %v5392, %v6382
        %v6511 = vmax.bf16 %v5352, %v6387
        %v6512 = vmax.bf16 %v5372, %v6392
        %v6573 = vrot.slane %v6453, 5
        %v6574 = vrot.slane %v6573, 4
        %v6575 = vrot.slane %v6454, 5
        %v6576 = vsel %vm2369, %v6574, %v6575
        %v6577 = vrot.slane %v6575, 4
        %v6578 = vrot.slane %v6455, 5
        %v6579 = vsel %vm2369, %v6577, %v6578
        %v6580 = vrot.slane %v6456, 5
        %v6581 = vrot.slane %v6580, 4
        %v6582 = vrot.slane %v6457, 5
        %v6583 = vsel %vm2369, %v6581, %v6582
        %v6584 = vrot.slane %v6582, 4
        %v6585 = vrot.slane %v6458, 5
        %v6586 = vsel %vm2369, %v6584, %v6585
        %v6587 = vrot.slane %v6459, 5
        %v6588 = vrot.slane %v6587, 4
        %v6589 = vrot.slane %v6460, 5
        %v6590 = vsel %vm2369, %v6588, %v6589
        %v6591 = vrot.slane %v6589, 4
        %v6592 = vrot.slane %v6461, 5
        %v6593 = vsel %vm2369, %v6591, %v6592
        %v6594 = vrot.slane %v6462, 5
        %v6595 = vrot.slane %v6594, 4
        %v6596 = vrot.slane %v6463, 5
        %v6597 = vsel %vm2369, %v6595, %v6596
        %v6598 = vrot.slane %v6596, 4
        %v6599 = vrot.slane %v6464, 5
        %v6600 = vsel %vm2369, %v6598, %v6599
        %v6601 = vrot.slane %v6465, 5
        %v6602 = vrot.slane %v6601, 4
        %v6603 = vrot.slane %v6466, 5
        %v6604 = vsel %vm2369, %v6602, %v6603
        %v6605 = vrot.slane %v6603, 4
        %v6606 = vrot.slane %v6467, 5
        %v6607 = vsel %vm2369, %v6605, %v6606
        %v6608 = vrot.slane %v6468, 5
        %v6609 = vrot.slane %v6608, 4
        %v6610 = vrot.slane %v6469, 5
        %v6611 = vsel %vm2369, %v6609, %v6610
        %v6612 = vrot.slane %v6610, 4
        %v6613 = vrot.slane %v6470, 5
        %v6614 = vsel %vm2369, %v6612, %v6613
        %v6615 = vrot.slane %v6471, 5
        %v6616 = vrot.slane %v6615, 4
        %v6617 = vrot.slane %v6472, 5
        %v6618 = vsel %vm2369, %v6616, %v6617
        %v6619 = vrot.slane %v6617, 4
        %v6620 = vrot.slane %v6473, 5
        %v6621 = vsel %vm2369, %v6619, %v6620
        %v6622 = vrot.slane %v6474, 5
        %v6623 = vrot.slane %v6622, 4
        %v6624 = vrot.slane %v6475, 5
        %v6625 = vsel %vm2369, %v6623, %v6624
        %v6626 = vrot.slane %v6624, 4
        %v6627 = vrot.slane %v6476, 5
        %v6628 = vsel %vm2369, %v6626, %v6627
        %v6629 = vrot.slane %v6477, 5
        %v6630 = vrot.slane %v6629, 4
        %v6631 = vrot.slane %v6478, 5
        %v6632 = vsel %vm2369, %v6630, %v6631
        %v6633 = vrot.slane %v6631, 4
        %v6634 = vrot.slane %v6479, 5
        %v6635 = vsel %vm2369, %v6633, %v6634
        %v6636 = vrot.slane %v6480, 5
        %v6637 = vrot.slane %v6636, 4
        %v6638 = vrot.slane %v6481, 5
        %v6639 = vsel %vm2369, %v6637, %v6638
        %v6640 = vrot.slane %v6638, 4
        %v6641 = vrot.slane %v6482, 5
        %v6642 = vsel %vm2369, %v6640, %v6641
        %v6643 = vrot.slane %v6483, 5
        %v6644 = vrot.slane %v6643, 4
        %v6645 = vrot.slane %v6484, 5
        %v6646 = vsel %vm2369, %v6644, %v6645
        %v6647 = vrot.slane %v6645, 4
        %v6648 = vrot.slane %v6485, 5
        %v6649 = vsel %vm2369, %v6647, %v6648
        %v6650 = vrot.slane %v6486, 5
        %v6651 = vrot.slane %v6650, 4
        %v6652 = vrot.slane %v6487, 5
        %v6653 = vsel %vm2369, %v6651, %v6652
        %v6654 = vrot.slane %v6652, 4
        %v6655 = vrot.slane %v6488, 5
        %v6656 = vsel %vm2369, %v6654, %v6655
        %v6657 = vrot.slane %v6489, 5
        %v6658 = vrot.slane %v6657, 4
        %v6659 = vrot.slane %v6490, 5
        %v6660 = vsel %vm2369, %v6658, %v6659
        %v6661 = vrot.slane %v6659, 4
        %v6662 = vrot.slane %v6491, 5
        %v6663 = vsel %vm2369, %v6661, %v6662
        %v6664 = vrot.slane %v6492, 5
        %v6665 = vrot.slane %v6664, 4
        %v6666 = vrot.slane %v6493, 5
        %v6667 = vsel %vm2369, %v6665, %v6666
        %v6668 = vrot.slane %v6666, 4
        %v6669 = vrot.slane %v6494, 5
        %v6670 = vsel %vm2369, %v6668, %v6669
        %v6671 = vrot.slane %v6495, 5
        %v6672 = vrot.slane %v6671, 4
        %v6673 = vrot.slane %v6496, 5
        %v6674 = vsel %vm2369, %v6672, %v6673
        %v6675 = vrot.slane %v6673, 4
        %v6676 = vrot.slane %v6497, 5
        %v6677 = vsel %vm2369, %v6675, %v6676
        %v6678 = vrot.slane %v6498, 5
        %v6679 = vrot.slane %v6678, 4
        %v6680 = vrot.slane %v6499, 5
        %v6681 = vsel %vm2369, %v6679, %v6680
        %v6682 = vrot.slane %v6680, 4
        %v6683 = vrot.slane %v6500, 5
        %v6684 = vsel %vm2369, %v6682, %v6683
        %v6685 = vrot.slane %v6501, 5
        %v6686 = vrot.slane %v6685, 4
        %v6687 = vrot.slane %v6502, 5
        %v6688 = vsel %vm2369, %v6686, %v6687
        %v6689 = vrot.slane %v6687, 4
        %v6690 = vrot.slane %v6503, 5
        %v6691 = vsel %vm2369, %v6689, %v6690
        %v6692 = vrot.slane %v6504, 5
        %v6693 = vrot.slane %v6692, 4
        %v6694 = vrot.slane %v6505, 5
        %v6695 = vsel %vm2369, %v6693, %v6694
        %v6696 = vrot.slane %v6694, 4
        %v6697 = vrot.slane %v6506, 5
        %v6698 = vsel %vm2369, %v6696, %v6697
        %v6699 = vrot.slane %v6507, 5
        %v6700 = vrot.slane %v6699, 4
        %v6701 = vrot.slane %v6508, 5
        %v6702 = vsel %vm2369, %v6700, %v6701
        %v6703 = vrot.slane %v6701, 4
        %v6704 = vrot.slane %v6509, 5
        %v6705 = vsel %vm2369, %v6703, %v6704
        %v6706 = vrot.slane %v6510, 5
        %v6707 = vrot.slane %v6706, 4
        %v6708 = vrot.slane %v6511, 5
        %v6709 = vsel %vm2369, %v6707, %v6708
        %v6710 = vrot.slane %v6708, 4
        %v6711 = vrot.slane %v6512, 5
        %v6712 = vsel %vm2369, %v6710, %v6711
        %v6753 = vmax.bf16 %v5953, %v6576
        %v6754 = vmax.bf16 %v5954, %v6579
        %v6755 = vmax.bf16 %v5955, %v6583
        %v6756 = vmax.bf16 %v5956, %v6586
        %v6757 = vmax.bf16 %v5957, %v6590
        %v6758 = vmax.bf16 %v5958, %v6593
        %v6759 = vmax.bf16 %v5959, %v6597
        %v6760 = vmax.bf16 %v5960, %v6600
        %v6761 = vmax.bf16 %v5961, %v6604
        %v6762 = vmax.bf16 %v5962, %v6607
        %v6763 = vmax.bf16 %v5963, %v6611
        %v6764 = vmax.bf16 %v5964, %v6614
        %v6765 = vmax.bf16 %v5965, %v6618
        %v6766 = vmax.bf16 %v5966, %v6621
        %v6767 = vmax.bf16 %v5967, %v6625
        %v6768 = vmax.bf16 %v5968, %v6628
        %v6769 = vmax.bf16 %v5969, %v6632
        %v6770 = vmax.bf16 %v5970, %v6635
        %v6771 = vmax.bf16 %v5971, %v6639
        %v6772 = vmax.bf16 %v5972, %v6642
        %v6773 = vmax.bf16 %v5973, %v6646
        %v6774 = vmax.bf16 %v5974, %v6649
        %v6775 = vmax.bf16 %v5975, %v6653
        %v6776 = vmax.bf16 %v5976, %v6656
        %v6777 = vmax.bf16 %v5977, %v6660
        %v6778 = vmax.bf16 %v5978, %v6663
        %v6779 = vmax.bf16 %v5979, %v6667
        %v6780 = vmax.bf16 %v5980, %v6670
        %v6781 = vmax.bf16 %v5981, %v6674
        %v6782 = vmax.bf16 %v5982, %v6677
        %v6783 = vmax.bf16 %v5983, %v6681
        %v6784 = vmax.bf16 %v5984, %v6684
        %v6785 = vmax.bf16 %v5985, %v6688
        %v6786 = vmax.bf16 %v5986, %v6691
        %v6787 = vmax.bf16 %v5987, %v6695
        %v6788 = vmax.bf16 %v5988, %v6698
        %v6789 = vmax.bf16 %v5989, %v6702
        %v6790 = vmax.bf16 %v5990, %v6705
        %v6791 = vmax.bf16 %v5991, %v6709
        %v6792 = vmax.bf16 %v5992, %v6712
        %v6853 = vrot.slane %v5413, 6
        %v6854 = vrot.slane %v6853, 4
        %v6855 = vrot.slane %v5314, 6
        %v6856 = vsel %vm2652, %v6854, %v6855
        %v6857 = vrot.slane %v6855, 4
        %v6858 = vrot.slane %v5393, 6
        %v6859 = vsel %vm2652, %v6857, %v6858
        %v6860 = vrot.slane %v5414, 6
        %v6861 = vrot.slane %v6860, 4
        %v6862 = vrot.slane %v5316, 6
        %v6863 = vsel %vm2652, %v6861, %v6862
        %v6864 = vrot.slane %v6862, 4
        %v6865 = vrot.slane %v5394, 6
        %v6866 = vsel %vm2652, %v6864, %v6865
        %v6867 = vrot.slane %v5415, 6
        %v6868 = vrot.slane %v6867, 4
        %v6869 = vrot.slane %v5318, 6
        %v6870 = vsel %vm2652, %v6868, %v6869
        %v6871 = vrot.slane %v6869, 4
        %v6872 = vrot.slane %v5395, 6
        %v6873 = vsel %vm2652, %v6871, %v6872
        %v6874 = vrot.slane %v5416, 6
        %v6875 = vrot.slane %v6874, 4
        %v6876 = vrot.slane %v5320, 6
        %v6877 = vsel %vm2652, %v6875, %v6876
        %v6878 = vrot.slane %v6876, 4
        %v6879 = vrot.slane %v5396, 6
        %v6880 = vsel %vm2652, %v6878, %v6879
        %v6881 = vrot.slane %v5417, 6
        %v6882 = vrot.slane %v6881, 4
        %v6883 = vrot.slane %v5322, 6
        %v6884 = vsel %vm2652, %v6882, %v6883
        %v6885 = vrot.slane %v6883, 4
        %v6886 = vrot.slane %v5397, 6
        %v6887 = vsel %vm2652, %v6885, %v6886
        %v6888 = vrot.slane %v5418, 6
        %v6889 = vrot.slane %v6888, 4
        %v6890 = vrot.slane %v5324, 6
        %v6891 = vsel %vm2652, %v6889, %v6890
        %v6892 = vrot.slane %v6890, 4
        %v6893 = vrot.slane %v5398, 6
        %v6894 = vsel %vm2652, %v6892, %v6893
        %v6895 = vrot.slane %v5419, 6
        %v6896 = vrot.slane %v6895, 4
        %v6897 = vrot.slane %v5326, 6
        %v6898 = vsel %vm2652, %v6896, %v6897
        %v6899 = vrot.slane %v6897, 4
        %v6900 = vrot.slane %v5399, 6
        %v6901 = vsel %vm2652, %v6899, %v6900
        %v6902 = vrot.slane %v5420, 6
        %v6903 = vrot.slane %v6902, 4
        %v6904 = vrot.slane %v5328, 6
        %v6905 = vsel %vm2652, %v6903, %v6904
        %v6906 = vrot.slane %v6904, 4
        %v6907 = vrot.slane %v5400, 6
        %v6908 = vsel %vm2652, %v6906, %v6907
        %v6909 = vrot.slane %v5421, 6
        %v6910 = vrot.slane %v6909, 4
        %v6911 = vrot.slane %v5330, 6
        %v6912 = vsel %vm2652, %v6910, %v6911
        %v6913 = vrot.slane %v6911, 4
        %v6914 = vrot.slane %v5401, 6
        %v6915 = vsel %vm2652, %v6913, %v6914
        %v6916 = vrot.slane %v5422, 6
        %v6917 = vrot.slane %v6916, 4
        %v6918 = vrot.slane %v5332, 6
        %v6919 = vsel %vm2652, %v6917, %v6918
        %v6920 = vrot.slane %v6918, 4
        %v6921 = vrot.slane %v5402, 6
        %v6922 = vsel %vm2652, %v6920, %v6921
        %v6923 = vrot.slane %v5423, 6
        %v6924 = vrot.slane %v6923, 4
        %v6925 = vrot.slane %v5334, 6
        %v6926 = vsel %vm2652, %v6924, %v6925
        %v6927 = vrot.slane %v6925, 4
        %v6928 = vrot.slane %v5403, 6
        %v6929 = vsel %vm2652, %v6927, %v6928
        %v6930 = vrot.slane %v5424, 6
        %v6931 = vrot.slane %v6930, 4
        %v6932 = vrot.slane %v5336, 6
        %v6933 = vsel %vm2652, %v6931, %v6932
        %v6934 = vrot.slane %v6932, 4
        %v6935 = vrot.slane %v5404, 6
        %v6936 = vsel %vm2652, %v6934, %v6935
        %v6937 = vrot.slane %v5425, 6
        %v6938 = vrot.slane %v6937, 4
        %v6939 = vrot.slane %v5338, 6
        %v6940 = vsel %vm2652, %v6938, %v6939
        %v6941 = vrot.slane %v6939, 4
        %v6942 = vrot.slane %v5405, 6
        %v6943 = vsel %vm2652, %v6941, %v6942
        %v6944 = vrot.slane %v5426, 6
        %v6945 = vrot.slane %v6944, 4
        %v6946 = vrot.slane %v5340, 6
        %v6947 = vsel %vm2652, %v6945, %v6946
        %v6948 = vrot.slane %v6946, 4
        %v6949 = vrot.slane %v5406, 6
        %v6950 = vsel %vm2652, %v6948, %v6949
        %v6951 = vrot.slane %v5427, 6
        %v6952 = vrot.slane %v6951, 4
        %v6953 = vrot.slane %v5342, 6
        %v6954 = vsel %vm2652, %v6952, %v6953
        %v6955 = vrot.slane %v6953, 4
        %v6956 = vrot.slane %v5407, 6
        %v6957 = vsel %vm2652, %v6955, %v6956
        %v6958 = vrot.slane %v5428, 6
        %v6959 = vrot.slane %v6958, 4
        %v6960 = vrot.slane %v5344, 6
        %v6961 = vsel %vm2652, %v6959, %v6960
        %v6962 = vrot.slane %v6960, 4
        %v6963 = vrot.slane %v5408, 6
        %v6964 = vsel %vm2652, %v6962, %v6963
        %v6965 = vrot.slane %v5429, 6
        %v6966 = vrot.slane %v6965, 4
        %v6967 = vrot.slane %v5346, 6
        %v6968 = vsel %vm2652, %v6966, %v6967
        %v6969 = vrot.slane %v6967, 4
        %v6970 = vrot.slane %v5409, 6
        %v6971 = vsel %vm2652, %v6969, %v6970
        %v6972 = vrot.slane %v5430, 6
        %v6973 = vrot.slane %v6972, 4
        %v6974 = vrot.slane %v5348, 6
        %v6975 = vsel %vm2652, %v6973, %v6974
        %v6976 = vrot.slane %v6974, 4
        %v6977 = vrot.slane %v5410, 6
        %v6978 = vsel %vm2652, %v6976, %v6977
        %v6979 = vrot.slane %v5431, 6
        %v6980 = vrot.slane %v6979, 4
        %v6981 = vrot.slane %v5350, 6
        %v6982 = vsel %vm2652, %v6980, %v6981
        %v6983 = vrot.slane %v6981, 4
        %v6984 = vrot.slane %v5411, 6
        %v6985 = vsel %vm2652, %v6983, %v6984
        %v6986 = vrot.slane %v5432, 6
        %v6987 = vrot.slane %v6986, 4
        %v6988 = vrot.slane %v5352, 6
        %v6989 = vsel %vm2652, %v6987, %v6988
        %v6990 = vrot.slane %v6988, 4
        %v6991 = vrot.slane %v5412, 6
        %v6992 = vsel %vm2652, %v6990, %v6991
        %v7033 = vmax.bf16 %v6753, %v6856
        %v7034 = vmax.bf16 %v6754, %v6859
        %v7035 = vmax.bf16 %v6755, %v6863
        %v7036 = vmax.bf16 %v6756, %v6866
        %v7037 = vmax.bf16 %v6757, %v6870
        %v7038 = vmax.bf16 %v6758, %v6873
        %v7039 = vmax.bf16 %v6759, %v6877
        %v7040 = vmax.bf16 %v6760, %v6880
        %v7041 = vmax.bf16 %v6761, %v6884
        %v7042 = vmax.bf16 %v6762, %v6887
        %v7043 = vmax.bf16 %v6763, %v6891
        %v7044 = vmax.bf16 %v6764, %v6894
        %v7045 = vmax.bf16 %v6765, %v6898
        %v7046 = vmax.bf16 %v6766, %v6901
        %v7047 = vmax.bf16 %v6767, %v6905
        %v7048 = vmax.bf16 %v6768, %v6908
        %v7049 = vmax.bf16 %v6769, %v6912
        %v7050 = vmax.bf16 %v6770, %v6915
        %v7051 = vmax.bf16 %v6771, %v6919
        %v7052 = vmax.bf16 %v6772, %v6922
        %v7053 = vmax.bf16 %v6773, %v6926
        %v7054 = vmax.bf16 %v6774, %v6929
        %v7055 = vmax.bf16 %v6775, %v6933
        %v7056 = vmax.bf16 %v6776, %v6936
        %v7057 = vmax.bf16 %v6777, %v6940
        %v7058 = vmax.bf16 %v6778, %v6943
        %v7059 = vmax.bf16 %v6779, %v6947
        %v7060 = vmax.bf16 %v6780, %v6950
        %v7061 = vmax.bf16 %v6781, %v6954
        %v7062 = vmax.bf16 %v6782, %v6957
        %v7063 = vmax.bf16 %v6783, %v6961
        %v7064 = vmax.bf16 %v6784, %v6964
        %v7065 = vmax.bf16 %v6785, %v6968
        %v7066 = vmax.bf16 %v6786, %v6971
        %v7067 = vmax.bf16 %v6787, %v6975
        %v7068 = vmax.bf16 %v6788, %v6978
        %v7069 = vmax.bf16 %v6789, %v6982
        %v7070 = vmax.bf16 %v6790, %v6985
        %v7071 = vmax.bf16 %v6791, %v6989
        %v7072 = vmax.bf16 %v6792, %v6992
        %v7073 = vmax.bf16 %v7033, %v7035
        %v7074 = vmax.bf16 %v7034, %v7036
        %v7075 = vmax.bf16 %v7035, %v7037
        %v7076 = vmax.bf16 %v7036, %v7038
        %v7077 = vmax.bf16 %v7037, %v7039
        %v7078 = vmax.bf16 %v7038, %v7040
        %v7079 = vmax.bf16 %v7039, %v7041
        %v7080 = vmax.bf16 %v7040, %v7042
        %v7081 = vmax.bf16 %v7041, %v7043
        %v7082 = vmax.bf16 %v7042, %v7044
        %v7083 = vmax.bf16 %v7043, %v7045
        %v7084 = vmax.bf16 %v7044, %v7046
        %v7085 = vmax.bf16 %v7045, %v7047
        %v7086 = vmax.bf16 %v7046, %v7048
        %v7087 = vmax.bf16 %v7047, %v7049
        %v7088 = vmax.bf16 %v7048, %v7050
        %v7089 = vmax.bf16 %v7049, %v7051
        %v7090 = vmax.bf16 %v7050, %v7052
        %v7091 = vmax.bf16 %v7051, %v7053
        %v7092 = vmax.bf16 %v7052, %v7054
        %v7093 = vmax.bf16 %v7053, %v7055
        %v7094 = vmax.bf16 %v7054, %v7056
        %v7095 = vmax.bf16 %v7055, %v7057
        %v7096 = vmax.bf16 %v7056, %v7058
        %v7097 = vmax.bf16 %v7057, %v7059
        %v7098 = vmax.bf16 %v7058, %v7060
        %v7099 = vmax.bf16 %v7059, %v7061
        %v7100 = vmax.bf16 %v7060, %v7062
        %v7101 = vmax.bf16 %v7061, %v7063
        %v7102 = vmax.bf16 %v7062, %v7064
        %v7103 = vmax.bf16 %v7063, %v7065
        %v7104 = vmax.bf16 %v7064, %v7066
        %v7105 = vmax.bf16 %v7065, %v7067
        %v7106 = vmax.bf16 %v7066, %v7068
        %v7107 = vmax.bf16 %v7067, %v7069
        %v7108 = vmax.bf16 %v7068, %v7070
        %v7109 = vmax.bf16 %v7073, %v7077
        %v7110 = vmax.bf16 %v7074, %v7078
        %v7111 = vmax.bf16 %v7075, %v7079
        %v7112 = vmax.bf16 %v7076, %v7080
        %v7113 = vmax.bf16 %v7077, %v7081
        %v7114 = vmax.bf16 %v7078, %v7082
        %v7115 = vmax.bf16 %v7079, %v7083
        %v7116 = vmax.bf16 %v7080, %v7084
        %v7117 = vmax.bf16 %v7081, %v7085
        %v7118 = vmax.bf16 %v7082, %v7086
        %v7119 = vmax.bf16 %v7083, %v7087
        %v7120 = vmax.bf16 %v7084, %v7088
        %v7121 = vmax.bf16 %v7085, %v7089
        %v7122 = vmax.bf16 %v7086, %v7090
        %v7123 = vmax.bf16 %v7087, %v7091
        %v7124 = vmax.bf16 %v7088, %v7092
        %v7125 = vmax.bf16 %v7089, %v7093
        %v7126 = vmax.bf16 %v7090, %v7094
        %v7127 = vmax.bf16 %v7091, %v7095
        %v7128 = vmax.bf16 %v7092, %v7096
        %v7129 = vmax.bf16 %v7093, %v7097
        %v7130 = vmax.bf16 %v7094, %v7098
        %v7131 = vmax.bf16 %v7095, %v7099
        %v7132 = vmax.bf16 %v7096, %v7100
        %v7133 = vmax.bf16 %v7097, %v7101
        %v7134 = vmax.bf16 %v7098, %v7102
        %v7135 = vmax.bf16 %v7099, %v7103
        %v7136 = vmax.bf16 %v7100, %v7104
        %v7137 = vmax.bf16 %v7101, %v7105
        %v7138 = vmax.bf16 %v7102, %v7106
        %v7139 = vmax.bf16 %v7103, %v7107
        %v7140 = vmax.bf16 %v7104, %v7108
        %v7141 = vmax.bf16 %v7109, %v7041
        %v7142 = vmax.bf16 %v7110, %v7042
        %v7143 = vmax.bf16 %v7111, %v7043
        %v7144 = vmax.bf16 %v7112, %v7044
        %v7145 = vmax.bf16 %v7113, %v7045
        %v7146 = vmax.bf16 %v7114, %v7046
        %v7147 = vmax.bf16 %v7115, %v7047
        %v7148 = vmax.bf16 %v7116, %v7048
        %v7149 = vmax.bf16 %v7117, %v7049
        %v7150 = vmax.bf16 %v7118, %v7050
        %v7151 = vmax.bf16 %v7119, %v7051
        %v7152 = vmax.bf16 %v7120, %v7052
        %v7153 = vmax.bf16 %v7121, %v7053
        %v7154 = vmax.bf16 %v7122, %v7054
        %v7155 = vmax.bf16 %v7123, %v7055
        %v7156 = vmax.bf16 %v7124, %v7056
        %v7157 = vmax.bf16 %v7125, %v7057
        %v7158 = vmax.bf16 %v7126, %v7058
        %v7159 = vmax.bf16 %v7127, %v7059
        %v7160 = vmax.bf16 %v7128, %v7060
        %v7161 = vmax.bf16 %v7129, %v7061
        %v7162 = vmax.bf16 %v7130, %v7062
        %v7163 = vmax.bf16 %v7131, %v7063
        %v7164 = vmax.bf16 %v7132, %v7064
        %v7165 = vmax.bf16 %v7133, %v7065
        %v7166 = vmax.bf16 %v7134, %v7066
        %v7167 = vmax.bf16 %v7135, %v7067
        %v7168 = vmax.bf16 %v7136, %v7068
        %v7169 = vmax.bf16 %v7137, %v7069
        %v7170 = vmax.bf16 %v7138, %v7070
        %v7171 = vmax.bf16 %v7139, %v7071
        %v7172 = vmax.bf16 %v7140, %v7072
        %7173 = vst [vmem:[#allocation3 + $0xc] sm:$0xf] %v7141
        %7174 = vst [vmem:[#allocation3 + $0x1c] sm:$0xf] %v7142
        %7175 = vst [vmem:[#allocation3 + $0x2c] sm:$0xf] %v7143
        %7176 = vst [vmem:[#allocation3 + $0x3c] sm:$0xf] %v7144
        %7177 = vst [vmem:[#allocation3 + $0x4c] sm:$0xf] %v7145
        %7178 = vst [vmem:[#allocation3 + $0x5c] sm:$0xf] %v7146
        %7179 = vst [vmem:[#allocation3 + $0x6c] sm:$0xf] %v7147
        %7180 = vst [vmem:[#allocation3 + $0x7c] sm:$0xf] %v7148
        %7181 = vst [vmem:[#allocation3 + $0x8c] sm:$0xf] %v7149
        %7182 = vst [vmem:[#allocation3 + $0x9c] sm:$0xf] %v7150
        %7183 = vst [vmem:[#allocation3 + $0xac] sm:$0xf] %v7151
        %7184 = vst [vmem:[#allocation3 + $0xbc] sm:$0xf] %v7152
        %7185 = vst [vmem:[#allocation3 + $0xcc] sm:$0xf] %v7153
        %7186 = vst [vmem:[#allocation3 + $0xdc] sm:$0xf] %v7154
        %7187 = vst [vmem:[#allocation3 + $0xec] sm:$0xf] %v7155
        %7188 = vst [vmem:[#allocation3 + $0xfc] sm:$0xf] %v7156
        %7189 = vst [vmem:[#allocation3 + $0x10c] sm:$0xf] %v7157
        %7190 = vst [vmem:[#allocation3 + $0x11c] sm:$0xf] %v7158
        %7191 = vst [vmem:[#allocation3 + $0x12c] sm:$0xf] %v7159
        %7192 = vst [vmem:[#allocation3 + $0x13c] sm:$0xf] %v7160
        %7193 = vst [vmem:[#allocation3 + $0x14c] sm:$0xf] %v7161
        %7194 = vst [vmem:[#allocation3 + $0x15c] sm:$0xf] %v7162
        %7195 = vst [vmem:[#allocation3 + $0x16c] sm:$0xf] %v7163
        %7196 = vst [vmem:[#allocation3 + $0x17c] sm:$0xf] %v7164
        %7197 = vst [vmem:[#allocation3 + $0x18c] sm:$0xf] %v7165
        %7198 = vst [vmem:[#allocation3 + $0x19c] sm:$0xf] %v7166
        %7199 = vst [vmem:[#allocation3 + $0x1ac] sm:$0xf] %v7167
        %7200 = vst [vmem:[#allocation3 + $0x1bc] sm:$0xf] %v7168
        %7201 = vst [vmem:[#allocation3 + $0x1cc] sm:$0xf] %v7169
        %7202 = vst [vmem:[#allocation3 + $0x1dc] sm:$0xf] %v7170
        %7203 = vst [vmem:[#allocation3 + $0x1ec] sm:$0xf] %v7171
        %7204 = vst [vmem:[#allocation3 + $0x1fc] sm:$0xf] %v7172
        %v7205 = vld [vmem:[#allocation3] sm:$0xff]
        %v7206 = vld [vmem:[#allocation3 + $0x8] sm:$0xff]
        %v7207 = vld [vmem:[#allocation3 + $0x10] sm:$0xff]
        %v7208 = vld [vmem:[#allocation3 + $0x18] sm:$0xff]
        %v7209 = vld [vmem:[#allocation3 + $0x20] sm:$0xff]
        %v7210 = vld [vmem:[#allocation3 + $0x28] sm:$0xff]
        %v7211 = vld [vmem:[#allocation3 + $0x30] sm:$0xff]
        %v7212 = vld [vmem:[#allocation3 + $0x38] sm:$0xff]
        %v7213 = vld [vmem:[#allocation3 + $0x40] sm:$0xff]
        %v7214 = vld [vmem:[#allocation3 + $0x48] sm:$0xff]
        %v7215 = vld [vmem:[#allocation3 + $0x50] sm:$0xff]
        %v7216 = vld [vmem:[#allocation3 + $0x58] sm:$0xff]
        %v7217 = vld [vmem:[#allocation3 + $0x60] sm:$0xff]
        %v7218 = vld [vmem:[#allocation3 + $0x68] sm:$0xff]
        %v7219 = vld [vmem:[#allocation3 + $0x70] sm:$0xff]
        %v7220 = vld [vmem:[#allocation3 + $0x78] sm:$0xff]
        %v7221 = vld [vmem:[#allocation3 + $0x80] sm:$0xff]
        %v7222 = vld [vmem:[#allocation3 + $0x88] sm:$0xff]
        %v7223 = vld [vmem:[#allocation3 + $0x90] sm:$0xff]
        %v7224 = vld [vmem:[#allocation3 + $0x98] sm:$0xff]
        %v7225 = vld [vmem:[#allocation3 + $0xa0] sm:$0xff]
        %v7226 = vld [vmem:[#allocation3 + $0xa8] sm:$0xff]
        %v7227 = vld [vmem:[#allocation3 + $0xb0] sm:$0xff]
        %v7228 = vld [vmem:[#allocation3 + $0xb8] sm:$0xff]
        %v7229 = vld [vmem:[#allocation3 + $0xc0] sm:$0xff]
        %v7230 = vld [vmem:[#allocation3 + $0xc8] sm:$0xff]
        %v7231 = vld [vmem:[#allocation3 + $0xd0] sm:$0xff]
        %v7232 = vld [vmem:[#allocation3 + $0xd8] sm:$0xff]
        %v7233 = vld [vmem:[#allocation3 + $0xe0] sm:$0xff]
        %v7234 = vld [vmem:[#allocation3 + $0xe8] sm:$0xff]
        %v7235 = vld [vmem:[#allocation3 + $0xf0] sm:$0xff]
        %v7236 = vld [vmem:[#allocation3 + $0xf8] sm:$0xff]
        %v7237 = vld [vmem:[#allocation3 + $0x100] sm:$0xff]
        %v7238 = vld [vmem:[#allocation3 + $0x108] sm:$0xff]
        %v7239 = vld [vmem:[#allocation3 + $0x110] sm:$0xff]
        %v7240 = vld [vmem:[#allocation3 + $0x118] sm:$0xff]
        %v7241 = vld [vmem:[#allocation3 + $0x120] sm:$0xff]
        %v7242 = vld [vmem:[#allocation3 + $0x128] sm:$0xff]
        %v7243 = vld [vmem:[#allocation3 + $0x130] sm:$0xff]
        %v7244 = vld [vmem:[#allocation3 + $0x138] sm:$0xff]
        %v7245 = vld [vmem:[#allocation3 + $0x140] sm:$0xff]
        %v7246 = vld [vmem:[#allocation3 + $0x148] sm:$0xff]
        %v7247 = vld [vmem:[#allocation3 + $0x150] sm:$0xff]
        %v7248 = vld [vmem:[#allocation3 + $0x158] sm:$0xff]
        %v7249 = vld [vmem:[#allocation3 + $0x160] sm:$0xff]
        %v7250 = vld [vmem:[#allocation3 + $0x168] sm:$0xff]
        %v7251 = vld [vmem:[#allocation3 + $0x170] sm:$0xff]
        %v7252 = vld [vmem:[#allocation3 + $0x178] sm:$0xff]
        %v7253 = vld [vmem:[#allocation3 + $0x180] sm:$0xff]
        %v7254 = vld [vmem:[#allocation3 + $0x188] sm:$0xff]
        %v7255 = vld [vmem:[#allocation3 + $0x190] sm:$0xff]
        %v7256 = vld [vmem:[#allocation3 + $0x198] sm:$0xff]
        %v7257 = vld [vmem:[#allocation3 + $0x1a0] sm:$0xff]
        %v7258 = vld [vmem:[#allocation3 + $0x1a8] sm:$0xff]
        %v7259 = vld [vmem:[#allocation3 + $0x1b0] sm:$0xff]
        %v7260 = vld [vmem:[#allocation3 + $0x1b8] sm:$0xff]
        %v7261 = vld [vmem:[#allocation3 + $0x1c0] sm:$0xff]
        %v7262 = vld [vmem:[#allocation3 + $0x1c8] sm:$0xff]
        %v7263 = vld [vmem:[#allocation3 + $0x1d0] sm:$0xff]
        %v7264 = vld [vmem:[#allocation3 + $0x1d8] sm:$0xff]
        %v7265 = vld [vmem:[#allocation3 + $0x1e0] sm:$0xff]
        %v7266 = vld [vmem:[#allocation3 + $0x1e8] sm:$0xff]
        %v7267 = vld [vmem:[#allocation3 + $0x1f0] sm:$0xff]
        %v7268 = vld [vmem:[#allocation3 + $0x1f8] sm:$0xff]
        %v7269 = vld [vmem:[%s3] sm:$0xf]
        %v7270 = vld [vmem:[%s3 + $0x4] sm:$0xf]
        %v7271 = vld [vmem:[%s3 + $0x8] sm:$0xf]
        %v7272 = vld [vmem:[%s3 + $0xc] sm:$0xf]
        %v7273 = vld [vmem:[%s3 + $0x10] sm:$0xf]
        %v7274 = vld [vmem:[%s3 + $0x14] sm:$0xf]
        %v7275 = vld [vmem:[%s3 + $0x18] sm:$0xf]
        %v7276 = vld [vmem:[%s3 + $0x1c] sm:$0xf]
        %v7277 = vld [vmem:[%s3 + $0x20] sm:$0xf]
        %v7278 = vld [vmem:[%s3 + $0x24] sm:$0xf]
        %v7279 = vld [vmem:[%s3 + $0x28] sm:$0xf]
        %v7280 = vld [vmem:[%s3 + $0x2c] sm:$0xf]
        %v7281 = vld [vmem:[%s3 + $0x30] sm:$0xf]
        %v7282 = vld [vmem:[%s3 + $0x34] sm:$0xf]
        %v7283 = vld [vmem:[%s3 + $0x38] sm:$0xf]
        %v7284 = vld [vmem:[%s3 + $0x3c] sm:$0xf]
        %v7285 = vld [vmem:[%s3 + $0x40] sm:$0xf]
        %v7286 = vld [vmem:[%s3 + $0x44] sm:$0xf]
        %v7287 = vld [vmem:[%s3 + $0x48] sm:$0xf]
        %v7288 = vld [vmem:[%s3 + $0x4c] sm:$0xf]
        %v7289 = vld [vmem:[%s3 + $0x50] sm:$0xf]
        %v7290 = vld [vmem:[%s3 + $0x54] sm:$0xf]
        %v7291 = vld [vmem:[%s3 + $0x58] sm:$0xf]
        %v7292 = vld [vmem:[%s3 + $0x5c] sm:$0xf]
        %v7293 = vld [vmem:[%s3 + $0x60] sm:$0xf]
        %v7294 = vld [vmem:[%s3 + $0x64] sm:$0xf]
        %v7295 = vld [vmem:[%s3 + $0x68] sm:$0xf]
        %v7296 = vld [vmem:[%s3 + $0x6c] sm:$0xf]
        %v7297 = vld [vmem:[%s3 + $0x70] sm:$0xf]
        %v7298 = vld [vmem:[%s3 + $0x74] sm:$0xf]
        %v7299 = vld [vmem:[%s3 + $0x78] sm:$0xf]
        %v7300 = vld [vmem:[%s3 + $0x7c] sm:$0xf]
        %v7301 = vld [vmem:[%s3 + $0x80] sm:$0xf]
        %v7302 = vld [vmem:[%s3 + $0x84] sm:$0xf]
        %v7303 = vld [vmem:[%s3 + $0x88] sm:$0xf]
        %v7304 = vld [vmem:[%s3 + $0x8c] sm:$0xf]
        %v7305 = vld [vmem:[%s3 + $0x90] sm:$0xf]
        %v7306 = vld [vmem:[%s3 + $0x94] sm:$0xf]
        %v7307 = vld [vmem:[%s3 + $0x98] sm:$0xf]
        %v7308 = vld [vmem:[%s3 + $0x9c] sm:$0xf]
        %v7309 = vld [vmem:[%s3 + $0xa0] sm:$0xf]
        %v7310 = vld [vmem:[%s3 + $0xa4] sm:$0xf]
        %v7311 = vld [vmem:[%s3 + $0xa8] sm:$0xf]
        %v7312 = vld [vmem:[%s3 + $0xac] sm:$0xf]
        %v7313 = vld [vmem:[%s3 + $0xb0] sm:$0xf]
        %v7314 = vld [vmem:[%s3 + $0xb4] sm:$0xf]
        %v7315 = vld [vmem:[%s3 + $0xb8] sm:$0xf]
        %v7316 = vld [vmem:[%s3 + $0xbc] sm:$0xf]
        %v7317 = vld [vmem:[%s3 + $0xc0] sm:$0xf]
        %v7318 = vld [vmem:[%s3 + $0xc4] sm:$0xf]
        %v7319 = vld [vmem:[%s3 + $0xc8] sm:$0xf]
        %v7320 = vld [vmem:[%s3 + $0xcc] sm:$0xf]
        %v7321 = vld [vmem:[%s3 + $0xd0] sm:$0xf]
        %v7322 = vld [vmem:[%s3 + $0xd4] sm:$0xf]
        %v7323 = vld [vmem:[%s3 + $0xd8] sm:$0xf]
        %v7324 = vld [vmem:[%s3 + $0xdc] sm:$0xf]
        %v7325 = vld [vmem:[%s3 + $0xe0] sm:$0xf]
        %v7326 = vld [vmem:[%s3 + $0xe4] sm:$0xf]
        %v7327 = vld [vmem:[%s3 + $0xe8] sm:$0xf]
        %v7328 = vld [vmem:[%s3 + $0xec] sm:$0xf]
        %v7329 = vld [vmem:[%s3 + $0xf0] sm:$0xf]
        %v7330 = vld [vmem:[%s3 + $0xf4] sm:$0xf]
        %v7331 = vld [vmem:[%s3 + $0xf8] sm:$0xf]
        %v7332 = vld [vmem:[%s3 + $0xfc] sm:$0xf]
        %v7333 = vld [vmem:[%s4] sm:$0x1]
        %v7335 = vlaneseq
        %v7336 = vshrl.u32 %v7335, 7
        %v7337 = vsub.s32 0, %v7336
        %v7338 = vrot.slane %v7333, %v7337
        %v7404 = vunpack.c.l.b16 %v7205
        %v7405 = vunpack.c.h.b16 %v7205
        %v7406 = vunpack.c.l.b16 %v7206
        %v7407 = vunpack.c.h.b16 %v7206
        %v7408 = vunpack.c.l.b16 %v7207
        %v7409 = vunpack.c.h.b16 %v7207
        %v7410 = vunpack.c.l.b16 %v7208
        %v7411 = vunpack.c.h.b16 %v7208
        %v7412 = vunpack.c.l.b16 %v7209
        %v7413 = vunpack.c.h.b16 %v7209
        %v7414 = vunpack.c.l.b16 %v7210
        %v7415 = vunpack.c.h.b16 %v7210
        %v7416 = vunpack.c.l.b16 %v7211
        %v7417 = vunpack.c.h.b16 %v7211
        %v7418 = vunpack.c.l.b16 %v7212
        %v7419 = vunpack.c.h.b16 %v7212
        %v7420 = vunpack.c.l.b16 %v7213
        %v7421 = vunpack.c.h.b16 %v7213
        %v7422 = vunpack.c.l.b16 %v7214
        %v7423 = vunpack.c.h.b16 %v7214
        %v7424 = vunpack.c.l.b16 %v7215
        %v7425 = vunpack.c.h.b16 %v7215
        %v7426 = vunpack.c.l.b16 %v7216
        %v7427 = vunpack.c.h.b16 %v7216
        %v7428 = vunpack.c.l.b16 %v7217
        %v7429 = vunpack.c.h.b16 %v7217
        %v7430 = vunpack.c.l.b16 %v7218
        %v7431 = vunpack.c.h.b16 %v7218
        %v7432 = vunpack.c.l.b16 %v7219
        %v7433 = vunpack.c.h.b16 %v7219
        %v7434 = vunpack.c.l.b16 %v7220
        %v7435 = vunpack.c.h.b16 %v7220
        %v7436 = vunpack.c.l.b16 %v7221
        %v7437 = vunpack.c.h.b16 %v7221
        %v7438 = vunpack.c.l.b16 %v7222
        %v7439 = vunpack.c.h.b16 %v7222
        %v7440 = vunpack.c.l.b16 %v7223
        %v7441 = vunpack.c.h.b16 %v7223
        %v7442 = vunpack.c.l.b16 %v7224
        %v7443 = vunpack.c.h.b16 %v7224
        %v7444 = vunpack.c.l.b16 %v7225
        %v7445 = vunpack.c.h.b16 %v7225
        %v7446 = vunpack.c.l.b16 %v7226
        %v7447 = vunpack.c.h.b16 %v7226
        %v7448 = vunpack.c.l.b16 %v7227
        %v7449 = vunpack.c.h.b16 %v7227
        %v7450 = vunpack.c.l.b16 %v7228
        %v7451 = vunpack.c.h.b16 %v7228
        %v7452 = vunpack.c.l.b16 %v7229
        %v7453 = vunpack.c.h.b16 %v7229
        %v7454 = vunpack.c.l.b16 %v7230
        %v7455 = vunpack.c.h.b16 %v7230
        %v7456 = vunpack.c.l.b16 %v7231
        %v7457 = vunpack.c.h.b16 %v7231
        %v7458 = vunpack.c.l.b16 %v7232
        %v7459 = vunpack.c.h.b16 %v7232
        %v7460 = vunpack.c.l.b16 %v7233
        %v7461 = vunpack.c.h.b16 %v7233
        %v7462 = vunpack.c.l.b16 %v7234
        %v7463 = vunpack.c.h.b16 %v7234
        %v7464 = vunpack.c.l.b16 %v7235
        %v7465 = vunpack.c.h.b16 %v7235
        %v7466 = vunpack.c.l.b16 %v7236
        %v7467 = vunpack.c.h.b16 %v7236
        %v7468 = vunpack.c.l.b16 %v7237
        %v7469 = vunpack.c.h.b16 %v7237
        %v7470 = vunpack.c.l.b16 %v7238
        %v7471 = vunpack.c.h.b16 %v7238
        %v7472 = vunpack.c.l.b16 %v7239
        %v7473 = vunpack.c.h.b16 %v7239
        %v7474 = vunpack.c.l.b16 %v7240
        %v7475 = vunpack.c.h.b16 %v7240
        %v7476 = vunpack.c.l.b16 %v7241
        %v7477 = vunpack.c.h.b16 %v7241
        %v7478 = vunpack.c.l.b16 %v7242
        %v7479 = vunpack.c.h.b16 %v7242
        %v7480 = vunpack.c.l.b16 %v7243
        %v7481 = vunpack.c.h.b16 %v7243
        %v7482 = vunpack.c.l.b16 %v7244
        %v7483 = vunpack.c.h.b16 %v7244
        %v7484 = vunpack.c.l.b16 %v7245
        %v7485 = vunpack.c.h.b16 %v7245
        %v7486 = vunpack.c.l.b16 %v7246
        %v7487 = vunpack.c.h.b16 %v7246
        %v7488 = vunpack.c.l.b16 %v7247
        %v7489 = vunpack.c.h.b16 %v7247
        %v7490 = vunpack.c.l.b16 %v7248
        %v7491 = vunpack.c.h.b16 %v7248
        %v7492 = vunpack.c.l.b16 %v7249
        %v7493 = vunpack.c.h.b16 %v7249
        %v7494 = vunpack.c.l.b16 %v7250
        %v7495 = vunpack.c.h.b16 %v7250
        %v7496 = vunpack.c.l.b16 %v7251
        %v7497 = vunpack.c.h.b16 %v7251
        %v7498 = vunpack.c.l.b16 %v7252
        %v7499 = vunpack.c.h.b16 %v7252
        %v7500 = vunpack.c.l.b16 %v7253
        %v7501 = vunpack.c.h.b16 %v7253
        %v7502 = vunpack.c.l.b16 %v7254
        %v7503 = vunpack.c.h.b16 %v7254
        %v7504 = vunpack.c.l.b16 %v7255
        %v7505 = vunpack.c.h.b16 %v7255
        %v7506 = vunpack.c.l.b16 %v7256
        %v7507 = vunpack.c.h.b16 %v7256
        %v7508 = vunpack.c.l.b16 %v7257
        %v7509 = vunpack.c.h.b16 %v7257
        %v7510 = vunpack.c.l.b16 %v7258
        %v7511 = vunpack.c.h.b16 %v7258
        %v7512 = vunpack.c.l.b16 %v7259
        %v7513 = vunpack.c.h.b16 %v7259
        %v7514 = vunpack.c.l.b16 %v7260
        %v7515 = vunpack.c.h.b16 %v7260
        %v7516 = vunpack.c.l.b16 %v7261
        %v7517 = vunpack.c.h.b16 %v7261
        %v7518 = vunpack.c.l.b16 %v7262
        %v7519 = vunpack.c.h.b16 %v7262
        %v7520 = vunpack.c.l.b16 %v7263
        %v7521 = vunpack.c.h.b16 %v7263
        %v7522 = vunpack.c.l.b16 %v7264
        %v7523 = vunpack.c.h.b16 %v7264
        %v7524 = vunpack.c.l.b16 %v7265
        %v7525 = vunpack.c.h.b16 %v7265
        %v7526 = vunpack.c.l.b16 %v7266
        %v7527 = vunpack.c.h.b16 %v7266
        %v7528 = vunpack.c.l.b16 %v7267
        %v7529 = vunpack.c.h.b16 %v7267
        %v7530 = vunpack.c.l.b16 %v7268
        %v7531 = vunpack.c.h.b16 %v7268
        %v7532 = vpack.c.b16 %v7408, %v7404
        %v7533 = vpack.c.b16 %v7409, %v7405
        %v7534 = vpack.c.b16 %v7410, %v7406
        %v7535 = vpack.c.b16 %v7411, %v7407
        %v7536 = vpack.c.b16 %v7416, %v7412
        %v7537 = vpack.c.b16 %v7417, %v7413
        %v7538 = vpack.c.b16 %v7418, %v7414
        %v7539 = vpack.c.b16 %v7419, %v7415
        %v7540 = vpack.c.b16 %v7424, %v7420
        %v7541 = vpack.c.b16 %v7425, %v7421
        %v7542 = vpack.c.b16 %v7426, %v7422
        %v7543 = vpack.c.b16 %v7427, %v7423
        %v7544 = vpack.c.b16 %v7432, %v7428
        %v7545 = vpack.c.b16 %v7433, %v7429
        %v7546 = vpack.c.b16 %v7434, %v7430
        %v7547 = vpack.c.b16 %v7435, %v7431
        %v7548 = vpack.c.b16 %v7440, %v7436
        %v7549 = vpack.c.b16 %v7441, %v7437
        %v7550 = vpack.c.b16 %v7442, %v7438
        %v7551 = vpack.c.b16 %v7443, %v7439
        %v7552 = vpack.c.b16 %v7448, %v7444
        %v7553 = vpack.c.b16 %v7449, %v7445
        %v7554 = vpack.c.b16 %v7450, %v7446
        %v7555 = vpack.c.b16 %v7451, %v7447
        %v7556 = vpack.c.b16 %v7456, %v7452
        %v7557 = vpack.c.b16 %v7457, %v7453
        %v7558 = vpack.c.b16 %v7458, %v7454
        %v7559 = vpack.c.b16 %v7459, %v7455
        %v7560 = vpack.c.b16 %v7464, %v7460
        %v7561 = vpack.c.b16 %v7465, %v7461
        %v7562 = vpack.c.b16 %v7466, %v7462
        %v7563 = vpack.c.b16 %v7467, %v7463
        %v7564 = vpack.c.b16 %v7472, %v7468
        %v7565 = vpack.c.b16 %v7473, %v7469
        %v7566 = vpack.c.b16 %v7474, %v7470
        %v7567 = vpack.c.b16 %v7475, %v7471
        %v7568 = vpack.c.b16 %v7480, %v7476
        %v7569 = vpack.c.b16 %v7481, %v7477
        %v7570 = vpack.c.b16 %v7482, %v7478
        %v7571 = vpack.c.b16 %v7483, %v7479
        %v7572 = vpack.c.b16 %v7488, %v7484
        %v7573 = vpack.c.b16 %v7489, %v7485
        %v7574 = vpack.c.b16 %v7490, %v7486
        %v7575 = vpack.c.b16 %v7491, %v7487
        %v7576 = vpack.c.b16 %v7496, %v7492
        %v7577 = vpack.c.b16 %v7497, %v7493
        %v7578 = vpack.c.b16 %v7498, %v7494
        %v7579 = vpack.c.b16 %v7499, %v7495
        %v7580 = vpack.c.b16 %v7504, %v7500
        %v7581 = vpack.c.b16 %v7505, %v7501
        %v7582 = vpack.c.b16 %v7506, %v7502
        %v7583 = vpack.c.b16 %v7507, %v7503
        %v7584 = vpack.c.b16 %v7512, %v7508
        %v7585 = vpack.c.b16 %v7513, %v7509
        %v7586 = vpack.c.b16 %v7514, %v7510
        %v7587 = vpack.c.b16 %v7515, %v7511
        %v7588 = vpack.c.b16 %v7520, %v7516
        %v7589 = vpack.c.b16 %v7521, %v7517
        %v7590 = vpack.c.b16 %v7522, %v7518
        %v7591 = vpack.c.b16 %v7523, %v7519
        %v7592 = vpack.c.b16 %v7528, %v7524
        %v7593 = vpack.c.b16 %v7529, %v7525
        %v7594 = vpack.c.b16 %v7530, %v7526
        %v7595 = vpack.c.b16 %v7531, %v7527
        %v7724 = vunpack.c.l.b16 %v7269
        %v7725 = vunpack.c.l.b16 %v7270
        %v7726 = vunpack.c.l.b16 %v7271
        %v7727 = vunpack.c.l.b16 %v7272
        %v7728 = vunpack.c.l.b16 %v7273
        %v7729 = vunpack.c.l.b16 %v7274
        %v7730 = vunpack.c.l.b16 %v7275
        %v7731 = vunpack.c.l.b16 %v7276
        %v7732 = vunpack.c.l.b16 %v7277
        %v7733 = vunpack.c.l.b16 %v7278
        %v7734 = vunpack.c.l.b16 %v7279
        %v7735 = vunpack.c.l.b16 %v7280
        %v7736 = vunpack.c.l.b16 %v7281
        %v7737 = vunpack.c.l.b16 %v7282
        %v7738 = vunpack.c.l.b16 %v7283
        %v7739 = vunpack.c.l.b16 %v7284
        %v7740 = vunpack.c.l.b16 %v7285
        %v7741 = vunpack.c.l.b16 %v7286
        %v7742 = vunpack.c.l.b16 %v7287
        %v7743 = vunpack.c.l.b16 %v7288
        %v7744 = vunpack.c.l.b16 %v7289
        %v7745 = vunpack.c.l.b16 %v7290
        %v7746 = vunpack.c.l.b16 %v7291
        %v7747 = vunpack.c.l.b16 %v7292
        %v7748 = vunpack.c.l.b16 %v7293
        %v7749 = vunpack.c.l.b16 %v7294
        %v7750 = vunpack.c.l.b16 %v7295
        %v7751 = vunpack.c.l.b16 %v7296
        %v7752 = vunpack.c.l.b16 %v7297
        %v7753 = vunpack.c.l.b16 %v7298
        %v7754 = vunpack.c.l.b16 %v7299
        %v7755 = vunpack.c.l.b16 %v7300
        %v7756 = vunpack.c.l.b16 %v7301
        %v7757 = vunpack.c.l.b16 %v7302
        %v7758 = vunpack.c.l.b16 %v7303
        %v7759 = vunpack.c.l.b16 %v7304
        %v7760 = vunpack.c.l.b16 %v7305
        %v7761 = vunpack.c.l.b16 %v7306
        %v7762 = vunpack.c.l.b16 %v7307
        %v7763 = vunpack.c.l.b16 %v7308
        %v7764 = vunpack.c.l.b16 %v7309
        %v7765 = vunpack.c.l.b16 %v7310
        %v7766 = vunpack.c.l.b16 %v7311
        %v7767 = vunpack.c.l.b16 %v7312
        %v7768 = vunpack.c.l.b16 %v7313
        %v7769 = vunpack.c.l.b16 %v7314
        %v7770 = vunpack.c.l.b16 %v7315
        %v7771 = vunpack.c.l.b16 %v7316
        %v7772 = vunpack.c.l.b16 %v7317
        %v7773 = vunpack.c.l.b16 %v7318
        %v7774 = vunpack.c.l.b16 %v7319
        %v7775 = vunpack.c.l.b16 %v7320
        %v7776 = vunpack.c.l.b16 %v7321
        %v7777 = vunpack.c.l.b16 %v7322
        %v7778 = vunpack.c.l.b16 %v7323
        %v7779 = vunpack.c.l.b16 %v7324
        %v7780 = vunpack.c.l.b16 %v7325
        %v7781 = vunpack.c.l.b16 %v7326
        %v7782 = vunpack.c.l.b16 %v7327
        %v7783 = vunpack.c.l.b16 %v7328
        %v7784 = vunpack.c.l.b16 %v7329
        %v7785 = vunpack.c.l.b16 %v7330
        %v7786 = vunpack.c.l.b16 %v7331
        %v7787 = vunpack.c.l.b16 %v7332
        %v7788 = vpack.c.b16 %v7725, %v7724
        %v7789 = vpack.c.b16 %v7727, %v7726
        %v7790 = vpack.c.b16 %v7729, %v7728
        %v7791 = vpack.c.b16 %v7731, %v7730
        %v7792 = vpack.c.b16 %v7733, %v7732
        %v7793 = vpack.c.b16 %v7735, %v7734
        %v7794 = vpack.c.b16 %v7737, %v7736
        %v7795 = vpack.c.b16 %v7739, %v7738
        %v7796 = vpack.c.b16 %v7741, %v7740
        %v7797 = vpack.c.b16 %v7743, %v7742
        %v7798 = vpack.c.b16 %v7745, %v7744
        %v7799 = vpack.c.b16 %v7747, %v7746
        %v7800 = vpack.c.b16 %v7749, %v7748
        %v7801 = vpack.c.b16 %v7751, %v7750
        %v7802 = vpack.c.b16 %v7753, %v7752
        %v7803 = vpack.c.b16 %v7755, %v7754
        %v7804 = vpack.c.b16 %v7757, %v7756
        %v7805 = vpack.c.b16 %v7759, %v7758
        %v7806 = vpack.c.b16 %v7761, %v7760
        %v7807 = vpack.c.b16 %v7763, %v7762
        %v7808 = vpack.c.b16 %v7765, %v7764
        %v7809 = vpack.c.b16 %v7767, %v7766
        %v7810 = vpack.c.b16 %v7769, %v7768
        %v7811 = vpack.c.b16 %v7771, %v7770
        %v7812 = vpack.c.b16 %v7773, %v7772
        %v7813 = vpack.c.b16 %v7775, %v7774
        %v7814 = vpack.c.b16 %v7777, %v7776
        %v7815 = vpack.c.b16 %v7779, %v7778
        %v7816 = vpack.c.b16 %v7781, %v7780
        %v7817 = vpack.c.b16 %v7783, %v7782
        %v7818 = vpack.c.b16 %v7785, %v7784
        %v7819 = vpack.c.b16 %v7787, %v7786
        %7852 = vmatprep.subr.bf16.mxu0 0
        %7853 = vmatpush1.bf16.msra.mxu0 %v7795
        %7854 = vmatprep.subr.bf16.mxu0 0
        %7855 = vmatpush1.bf16.msra.mxu0 %v7794
        %7856 = vmatprep.subr.bf16.mxu0 0
        %7857 = vmatpush1.bf16.msra.mxu0 %v7793
        %7858 = vmatprep.subr.bf16.mxu0 0
        %7859 = vmatpush1.bf16.msra.mxu0 %v7792
        %7860 = vmatprep.subr.bf16.mxu0 0
        %7861 = vmatpush1.bf16.msra.mxu0 %v7791
        %7862 = vmatprep.subr.bf16.mxu0 0
        %7863 = vmatpush1.bf16.msra.mxu0 %v7790
        %7864 = vmatprep.subr.bf16.mxu0 0
        %7865 = vmatpush1.bf16.msra.mxu0 %v7789
        %7866 = vmatprep.subr.bf16.mxu0 0
        %7867 = vmatpush1.bf16.msra.mxu0 %v7788
        %7868 = vmatprep.subr.bf16.mxu0 0
        %7869 = vmatpush2.bf16.msra.mxu0 %v7803
        %7870 = vmatprep.subr.bf16.mxu0 0
        %7871 = vmatpush2.bf16.msra.mxu0 %v7802
        %7872 = vmatprep.subr.bf16.mxu0 0
        %7873 = vmatpush2.bf16.msra.mxu0 %v7801
        %7874 = vmatprep.subr.bf16.mxu0 0
        %7875 = vmatpush2.bf16.msra.mxu0 %v7800
        %7876 = vmatprep.subr.bf16.mxu0 0
        %7877 = vmatpush2.bf16.msra.mxu0 %v7799
        %7878 = vmatprep.subr.bf16.mxu0 0
        %7879 = vmatpush2.bf16.msra.mxu0 %v7798
        %7880 = vmatprep.subr.bf16.mxu0 0
        %7881 = vmatpush2.bf16.msra.mxu0 %v7797
        %7882 = vmatprep.subr.bf16.mxu0 0
        %7883 = vmatpush2.bf16.msra.mxu0 %v7796
        %7884 = vmatprep.mubr.bf16.mxu0 %v7533
        %7885 = vmatmul.mubr.bf16.gmra.mxu0 %v7532
        %v7886 = vpop.f32.mrf.mxu0
        %v7887 = vadd.f32 %v7338, %v7886
        %v7888 = vpop.f32.mrf.mxu0
        %v7889 = vpop.f32.mrf.mxu0
        %v7890 = vadd.f32 %v7338, %v7889
        %v7891 = vpop.f32.mrf.mxu0
        %7892 = vmatprep.mubr.bf16.mxu0 %v7537
        %7893 = vmatmul.mubr.bf16.gmra.mxu0 %v7536
        %v7894 = vpop.f32.mrf.mxu0
        %v7895 = vadd.f32 %v7338, %v7894
        %v7896 = vpop.f32.mrf.mxu0
        %v7897 = vpop.f32.mrf.mxu0
        %v7898 = vadd.f32 %v7338, %v7897
        %v7899 = vpop.f32.mrf.mxu0
        %7900 = vmatprep.mubr.bf16.mxu0 %v7541
        %7901 = vmatmul.mubr.bf16.gmra.mxu0 %v7540
        %v7902 = vpop.f32.mrf.mxu0
        %v7903 = vadd.f32 %v7338, %v7902
        %v7904 = vpop.f32.mrf.mxu0
        %v7905 = vpop.f32.mrf.mxu0
        %v7906 = vadd.f32 %v7338, %v7905
        %v7907 = vpop.f32.mrf.mxu0
        %7908 = vmatprep.mubr.bf16.mxu0 %v7545
        %7909 = vmatmul.mubr.bf16.gmra.mxu0 %v7544
        %v7910 = vpop.f32.mrf.mxu0
        %v7911 = vadd.f32 %v7338, %v7910
        %v7912 = vpop.f32.mrf.mxu0
        %v7913 = vpop.f32.mrf.mxu0
        %v7914 = vadd.f32 %v7338, %v7913
        %v7915 = vpop.f32.mrf.mxu0
        %7916 = vmatprep.mubr.bf16.mxu0 %v7549
        %7917 = vmatmul.mubr.bf16.gmra.mxu0 %v7548
        %v7918 = vpop.f32.mrf.mxu0
        %v7919 = vadd.f32 %v7338, %v7918
        %v7920 = vpop.f32.mrf.mxu0
        %v7921 = vpop.f32.mrf.mxu0
        %v7922 = vadd.f32 %v7338, %v7921
        %v7923 = vpop.f32.mrf.mxu0
        %7924 = vmatprep.mubr.bf16.mxu0 %v7553
        %7925 = vmatmul.mubr.bf16.gmra.mxu0 %v7552
        %v7926 = vpop.f32.mrf.mxu0
        %v7927 = vadd.f32 %v7338, %v7926
        %v7928 = vpop.f32.mrf.mxu0
        %v7929 = vpop.f32.mrf.mxu0
        %v7930 = vadd.f32 %v7338, %v7929
        %v7931 = vpop.f32.mrf.mxu0
        %7932 = vmatprep.mubr.bf16.mxu0 %v7557
        %7933 = vmatmul.mubr.bf16.gmra.mxu0 %v7556
        %v7934 = vpop.f32.mrf.mxu0
        %v7935 = vadd.f32 %v7338, %v7934
        %v7936 = vpop.f32.mrf.mxu0
        %v7937 = vpop.f32.mrf.mxu0
        %v7938 = vadd.f32 %v7338, %v7937
        %v7939 = vpop.f32.mrf.mxu0
        %7940 = vmatprep.mubr.bf16.mxu0 %v7561
        %7941 = vmatmul.mubr.bf16.gmra.mxu0 %v7560
        %v7942 = vpop.f32.mrf.mxu0
        %v7943 = vadd.f32 %v7338, %v7942
        %v7944 = vpop.f32.mrf.mxu0
        %v7945 = vpop.f32.mrf.mxu0
        %v7946 = vadd.f32 %v7338, %v7945
        %v7947 = vpop.f32.mrf.mxu0
        %7948 = vmatprep.mubr.bf16.mxu0 %v7565
        %7949 = vmatmul.mubr.bf16.gmra.mxu0 %v7564
        %v7950 = vpop.f32.mrf.mxu0
        %v7951 = vadd.f32 %v7338, %v7950
        %v7952 = vpop.f32.mrf.mxu0
        %v7953 = vpop.f32.mrf.mxu0
        %v7954 = vadd.f32 %v7338, %v7953
        %v7955 = vpop.f32.mrf.mxu0
        %7956 = vmatprep.mubr.bf16.mxu0 %v7569
        %7957 = vmatmul.mubr.bf16.gmra.mxu0 %v7568
        %v7958 = vpop.f32.mrf.mxu0
        %v7959 = vadd.f32 %v7338, %v7958
        %v7960 = vpop.f32.mrf.mxu0
        %v7961 = vpop.f32.mrf.mxu0
        %v7962 = vadd.f32 %v7338, %v7961
        %v7963 = vpop.f32.mrf.mxu0
        %7964 = vmatprep.mubr.bf16.mxu0 %v7573
        %7965 = vmatmul.mubr.bf16.gmra.mxu0 %v7572
        %v7966 = vpop.f32.mrf.mxu0
        %v7967 = vadd.f32 %v7338, %v7966
        %v7968 = vpop.f32.mrf.mxu0
        %v7969 = vpop.f32.mrf.mxu0
        %v7970 = vadd.f32 %v7338, %v7969
        %v7971 = vpop.f32.mrf.mxu0
        %7972 = vmatprep.mubr.bf16.mxu0 %v7577
        %7973 = vmatmul.mubr.bf16.gmra.mxu0 %v7576
        %v7974 = vpop.f32.mrf.mxu0
        %v7975 = vadd.f32 %v7338, %v7974
        %v7976 = vpop.f32.mrf.mxu0
        %v7977 = vpop.f32.mrf.mxu0
        %v7978 = vadd.f32 %v7338, %v7977
        %v7979 = vpop.f32.mrf.mxu0
        %7980 = vmatprep.mubr.bf16.mxu0 %v7581
        %7981 = vmatmul.mubr.bf16.gmra.mxu0 %v7580
        %v7982 = vpop.f32.mrf.mxu0
        %v7983 = vadd.f32 %v7338, %v7982
        %v7984 = vpop.f32.mrf.mxu0
        %v7985 = vpop.f32.mrf.mxu0
        %v7986 = vadd.f32 %v7338, %v7985
        %v7987 = vpop.f32.mrf.mxu0
        %7988 = vmatprep.mubr.bf16.mxu0 %v7585
        %7989 = vmatmul.mubr.bf16.gmra.mxu0 %v7584
        %v7990 = vpop.f32.mrf.mxu0
        %v7991 = vadd.f32 %v7338, %v7990
        %v7992 = vpop.f32.mrf.mxu0
        %v7993 = vpop.f32.mrf.mxu0
        %v7994 = vadd.f32 %v7338, %v7993
        %v7995 = vpop.f32.mrf.mxu0
        %7996 = vmatprep.mubr.bf16.mxu0 %v7589
        %7997 = vmatmul.mubr.bf16.gmra.mxu0 %v7588
        %v7998 = vpop.f32.mrf.mxu0
        %v7999 = vadd.f32 %v7338, %v7998
        %v8000 = vpop.f32.mrf.mxu0
        %v8001 = vpop.f32.mrf.mxu0
        %v8002 = vadd.f32 %v7338, %v8001
        %v8003 = vpop.f32.mrf.mxu0
        %8004 = vmatprep.mubr.bf16.mxu0 %v7593
        %8005 = vmatmul.mubr.bf16.gmra.mxu0 %v7592
        %v8006 = vpop.f32.mrf.mxu0
        %v8007 = vadd.f32 %v7338, %v8006
        %v8008 = vpop.f32.mrf.mxu0
        %v8009 = vpop.f32.mrf.mxu0
        %v8010 = vadd.f32 %v7338, %v8009
        %v8011 = vpop.f32.mrf.mxu0
        %8012 = vdwg.mxu0
        %8013 = vmatprep.subr.bf16.mxu0 0
        %8014 = vmatpush1.bf16.msra.mxu0 %v7811
        %8015 = vmatprep.subr.bf16.mxu0 0
        %8016 = vmatpush1.bf16.msra.mxu0 %v7810
        %8017 = vmatprep.subr.bf16.mxu0 0
        %8018 = vmatpush1.bf16.msra.mxu0 %v7809
        %8019 = vmatprep.subr.bf16.mxu0 0
        %8020 = vmatpush1.bf16.msra.mxu0 %v7808
        %8021 = vmatprep.subr.bf16.mxu0 0
        %8022 = vmatpush1.bf16.msra.mxu0 %v7807
        %8023 = vmatprep.subr.bf16.mxu0 0
        %8024 = vmatpush1.bf16.msra.mxu0 %v7806
        %8025 = vmatprep.subr.bf16.mxu0 0
        %8026 = vmatpush1.bf16.msra.mxu0 %v7805
        %8027 = vmatprep.subr.bf16.mxu0 0
        %8028 = vmatpush1.bf16.msra.mxu0 %v7804
        %8029 = vmatprep.subr.bf16.mxu0 0
        %8030 = vmatpush2.bf16.msra.mxu0 %v7819
        %8031 = vmatprep.subr.bf16.mxu0 0
        %8032 = vmatpush2.bf16.msra.mxu0 %v7818
        %8033 = vmatprep.subr.bf16.mxu0 0
        %8034 = vmatpush2.bf16.msra.mxu0 %v7817
        %8035 = vmatprep.subr.bf16.mxu0 0
        %8036 = vmatpush2.bf16.msra.mxu0 %v7816
        %8037 = vmatprep.subr.bf16.mxu0 0
        %8038 = vmatpush2.bf16.msra.mxu0 %v7815
        %8039 = vmatprep.subr.bf16.mxu0 0
        %8040 = vmatpush2.bf16.msra.mxu0 %v7814
        %8041 = vmatprep.subr.bf16.mxu0 0
        %8042 = vmatpush2.bf16.msra.mxu0 %v7813
        %8043 = vmatprep.subr.bf16.mxu0 0
        %8044 = vmatpush2.bf16.msra.mxu0 %v7812
        %8045 = vmatprep.mubr.bf16.mxu0 %v7535
        %8046 = vmatmul.mubr.bf16.gmra.mxu0 %v7534
        %v8047 = vpop.f32.mrf.mxu0
        %v8048 = vadd.f32 %v7887, %v8047
        %v8049 = vpop.f32.mrf.mxu0
        %v8050 = vpop.f32.mrf.mxu0
        %v8051 = vadd.f32 %v7890, %v8050
        %v8052 = vpop.f32.mrf.mxu0
        %8053 = vmatprep.mubr.bf16.mxu0 %v7539
        %8054 = vmatmul.mubr.bf16.gmra.mxu0 %v7538
        %v8055 = vpop.f32.mrf.mxu0
        %v8056 = vadd.f32 %v7895, %v8055
        %v8057 = vpop.f32.mrf.mxu0
        %v8058 = vpop.f32.mrf.mxu0
        %v8059 = vadd.f32 %v7898, %v8058
        %v8060 = vpop.f32.mrf.mxu0
        %8061 = vmatprep.mubr.bf16.mxu0 %v7543
        %8062 = vmatmul.mubr.bf16.gmra.mxu0 %v7542
        %v8063 = vpop.f32.mrf.mxu0
        %v8064 = vadd.f32 %v7903, %v8063
        %v8065 = vpop.f32.mrf.mxu0
        %v8066 = vpop.f32.mrf.mxu0
        %v8067 = vadd.f32 %v7906, %v8066
        %v8068 = vpop.f32.mrf.mxu0
        %8069 = vmatprep.mubr.bf16.mxu0 %v7547
        %8070 = vmatmul.mubr.bf16.gmra.mxu0 %v7546
        %v8071 = vpop.f32.mrf.mxu0
        %v8072 = vadd.f32 %v7911, %v8071
        %v8073 = vpop.f32.mrf.mxu0
        %v8074 = vpop.f32.mrf.mxu0
        %v8075 = vadd.f32 %v7914, %v8074
        %v8076 = vpop.f32.mrf.mxu0
        %8077 = vmatprep.mubr.bf16.mxu0 %v7551
        %8078 = vmatmul.mubr.bf16.gmra.mxu0 %v7550
        %v8079 = vpop.f32.mrf.mxu0
        %v8080 = vadd.f32 %v7919, %v8079
        %v8081 = vpop.f32.mrf.mxu0
        %v8082 = vpop.f32.mrf.mxu0
        %v8083 = vadd.f32 %v7922, %v8082
        %v8084 = vpop.f32.mrf.mxu0
        %8085 = vmatprep.mubr.bf16.mxu0 %v7555
        %8086 = vmatmul.mubr.bf16.gmra.mxu0 %v7554
        %v8087 = vpop.f32.mrf.mxu0
        %v8088 = vadd.f32 %v7927, %v8087
        %v8089 = vpop.f32.mrf.mxu0
        %v8090 = vpop.f32.mrf.mxu0
        %v8091 = vadd.f32 %v7930, %v8090
        %v8092 = vpop.f32.mrf.mxu0
        %8093 = vmatprep.mubr.bf16.mxu0 %v7559
        %8094 = vmatmul.mubr.bf16.gmra.mxu0 %v7558
        %v8095 = vpop.f32.mrf.mxu0
        %v8096 = vadd.f32 %v7935, %v8095
        %v8097 = vpop.f32.mrf.mxu0
        %v8098 = vpop.f32.mrf.mxu0
        %v8099 = vadd.f32 %v7938, %v8098
        %v8100 = vpop.f32.mrf.mxu0
        %8101 = vmatprep.mubr.bf16.mxu0 %v7563
        %8102 = vmatmul.mubr.bf16.gmra.mxu0 %v7562
        %v8103 = vpop.f32.mrf.mxu0
        %v8104 = vadd.f32 %v7943, %v8103
        %v8105 = vpop.f32.mrf.mxu0
        %v8106 = vpop.f32.mrf.mxu0
        %v8107 = vadd.f32 %v7946, %v8106
        %v8108 = vpop.f32.mrf.mxu0
        %8109 = vmatprep.mubr.bf16.mxu0 %v7567
        %8110 = vmatmul.mubr.bf16.gmra.mxu0 %v7566
        %v8111 = vpop.f32.mrf.mxu0
        %v8112 = vadd.f32 %v7951, %v8111
        %v8113 = vpop.f32.mrf.mxu0
        %v8114 = vpop.f32.mrf.mxu0
        %v8115 = vadd.f32 %v7954, %v8114
        %v8116 = vpop.f32.mrf.mxu0
        %8117 = vmatprep.mubr.bf16.mxu0 %v7571
        %8118 = vmatmul.mubr.bf16.gmra.mxu0 %v7570
        %v8119 = vpop.f32.mrf.mxu0
        %v8120 = vadd.f32 %v7959, %v8119
        %v8121 = vpop.f32.mrf.mxu0
        %v8122 = vpop.f32.mrf.mxu0
        %v8123 = vadd.f32 %v7962, %v8122
        %v8124 = vpop.f32.mrf.mxu0
        %8125 = vmatprep.mubr.bf16.mxu0 %v7575
        %8126 = vmatmul.mubr.bf16.gmra.mxu0 %v7574
        %v8127 = vpop.f32.mrf.mxu0
        %v8128 = vadd.f32 %v7967, %v8127
        %v8129 = vpop.f32.mrf.mxu0
        %v8130 = vpop.f32.mrf.mxu0
        %v8131 = vadd.f32 %v7970, %v8130
        %v8132 = vpop.f32.mrf.mxu0
        %8133 = vmatprep.mubr.bf16.mxu0 %v7579
        %8134 = vmatmul.mubr.bf16.gmra.mxu0 %v7578
        %v8135 = vpop.f32.mrf.mxu0
        %v8136 = vadd.f32 %v7975, %v8135
        %v8137 = vpop.f32.mrf.mxu0
        %v8138 = vpop.f32.mrf.mxu0
        %v8139 = vadd.f32 %v7978, %v8138
        %v8140 = vpop.f32.mrf.mxu0
        %8141 = vmatprep.mubr.bf16.mxu0 %v7583
        %8142 = vmatmul.mubr.bf16.gmra.mxu0 %v7582
        %v8143 = vpop.f32.mrf.mxu0
        %v8144 = vadd.f32 %v7983, %v8143
        %v8145 = vpop.f32.mrf.mxu0
        %v8146 = vpop.f32.mrf.mxu0
        %v8147 = vadd.f32 %v7986, %v8146
        %v8148 = vpop.f32.mrf.mxu0
        %8149 = vmatprep.mubr.bf16.mxu0 %v7587
        %8150 = vmatmul.mubr.bf16.gmra.mxu0 %v7586
        %v8151 = vpop.f32.mrf.mxu0
        %v8152 = vadd.f32 %v7991, %v8151
        %v8153 = vpop.f32.mrf.mxu0
        %v8154 = vpop.f32.mrf.mxu0
        %v8155 = vadd.f32 %v7994, %v8154
        %v8156 = vpop.f32.mrf.mxu0
        %8157 = vmatprep.mubr.bf16.mxu0 %v7591
        %8158 = vmatmul.mubr.bf16.gmra.mxu0 %v7590
        %v8159 = vpop.f32.mrf.mxu0
        %v8160 = vadd.f32 %v7999, %v8159
        %v8161 = vpop.f32.mrf.mxu0
        %v8162 = vpop.f32.mrf.mxu0
        %v8163 = vadd.f32 %v8002, %v8162
        %v8164 = vpop.f32.mrf.mxu0
        %8165 = vmatprep.mubr.bf16.mxu0 %v7595
        %8166 = vmatmul.mubr.bf16.gmra.mxu0 %v7594
        %v8167 = vpop.f32.mrf.mxu0
        %v8168 = vadd.f32 %v8007, %v8167
        %v8169 = vpop.f32.mrf.mxu0
        %v8170 = vpop.f32.mrf.mxu0
        %v8171 = vadd.f32 %v8010, %v8170
        %v8172 = vpop.f32.mrf.mxu0
        %8173 = vdwg.mxu0
        %v8174 = vmul.f32 %v8048, 0.5
        %v8175 = vmul.f32 %v8051, 0.5
        %v8176 = vmul.f32 %v8056, 0.5
        %v8177 = vmul.f32 %v8059, 0.5
        %v8178 = vmul.f32 %v8064, 0.5
        %v8179 = vmul.f32 %v8067, 0.5
        %v8180 = vmul.f32 %v8072, 0.5
        %v8181 = vmul.f32 %v8075, 0.5
        %v8182 = vmul.f32 %v8080, 0.5
        %v8183 = vmul.f32 %v8083, 0.5
        %v8184 = vmul.f32 %v8088, 0.5
        %v8185 = vmul.f32 %v8091, 0.5
        %v8186 = vmul.f32 %v8096, 0.5
        %v8187 = vmul.f32 %v8099, 0.5
        %v8188 = vmul.f32 %v8104, 0.5
        %v8189 = vmul.f32 %v8107, 0.5
        %v8190 = vmul.f32 %v8112, 0.5
        %v8191 = vmul.f32 %v8115, 0.5
        %v8192 = vmul.f32 %v8120, 0.5
        %v8193 = vmul.f32 %v8123, 0.5
        %v8194 = vmul.f32 %v8128, 0.5
        %v8195 = vmul.f32 %v8131, 0.5
        %v8196 = vmul.f32 %v8136, 0.5
        %v8197 = vmul.f32 %v8139, 0.5
        %v8198 = vmul.f32 %v8144, 0.5
        %v8199 = vmul.f32 %v8147, 0.5
        %v8200 = vmul.f32 %v8152, 0.5
        %v8201 = vmul.f32 %v8155, 0.5
        %v8202 = vmul.f32 %v8160, 0.5
        %v8203 = vmul.f32 %v8163, 0.5
        %v8204 = vmul.f32 %v8168, 0.5
        %v8205 = vmul.f32 %v8171, 0.5
        %v8206 = vtanh.pop %v8174
        %v8207 = vtanh.pop %v8175
        %v8208 = vtanh.pop %v8176
        %v8209 = vtanh.pop %v8177
        %v8210 = vtanh.pop %v8178
        %v8211 = vtanh.pop %v8179
        %v8212 = vtanh.pop %v8180
        %v8213 = vtanh.pop %v8181
        %v8214 = vtanh.pop %v8182
        %v8215 = vtanh.pop %v8183
        %v8216 = vtanh.pop %v8184
        %v8217 = vtanh.pop %v8185
        %v8218 = vtanh.pop %v8186
        %v8219 = vtanh.pop %v8187
        %v8220 = vtanh.pop %v8188
        %v8221 = vtanh.pop %v8189
        %v8222 = vtanh.pop %v8190
        %v8223 = vtanh.pop %v8191
        %v8224 = vtanh.pop %v8192
        %v8225 = vtanh.pop %v8193
        %v8226 = vtanh.pop %v8194
        %v8227 = vtanh.pop %v8195
        %v8228 = vtanh.pop %v8196
        %v8229 = vtanh.pop %v8197
        %v8230 = vtanh.pop %v8198
        %v8231 = vtanh.pop %v8199
        %v8232 = vtanh.pop %v8200
        %v8233 = vtanh.pop %v8201
        %v8234 = vtanh.pop %v8202
        %v8235 = vtanh.pop %v8203
        %v8236 = vtanh.pop %v8204
        %v8237 = vtanh.pop %v8205
        %v8238 = vadd.f32 %v8206, 1.0
        %v8239 = vadd.f32 %v8207, 1.0
        %v8240 = vadd.f32 %v8208, 1.0
        %v8241 = vadd.f32 %v8209, 1.0
        %v8242 = vadd.f32 %v8210, 1.0
        %v8243 = vadd.f32 %v8211, 1.0
        %v8244 = vadd.f32 %v8212, 1.0
        %v8245 = vadd.f32 %v8213, 1.0
        %v8246 = vadd.f32 %v8214, 1.0
        %v8247 = vadd.f32 %v8215, 1.0
        %v8248 = vadd.f32 %v8216, 1.0
        %v8249 = vadd.f32 %v8217, 1.0
        %v8250 = vadd.f32 %v8218, 1.0
        %v8251 = vadd.f32 %v8219, 1.0
        %v8252 = vadd.f32 %v8220, 1.0
        %v8253 = vadd.f32 %v8221, 1.0
        %v8254 = vadd.f32 %v8222, 1.0
        %v8255 = vadd.f32 %v8223, 1.0
        %v8256 = vadd.f32 %v8224, 1.0
        %v8257 = vadd.f32 %v8225, 1.0
        %v8258 = vadd.f32 %v8226, 1.0
        %v8259 = vadd.f32 %v8227, 1.0
        %v8260 = vadd.f32 %v8228, 1.0
        %v8261 = vadd.f32 %v8229, 1.0
        %v8262 = vadd.f32 %v8230, 1.0
        %v8263 = vadd.f32 %v8231, 1.0
        %v8264 = vadd.f32 %v8232, 1.0
        %v8265 = vadd.f32 %v8233, 1.0
        %v8266 = vadd.f32 %v8234, 1.0
        %v8267 = vadd.f32 %v8235, 1.0
        %v8268 = vadd.f32 %v8236, 1.0
        %v8269 = vadd.f32 %v8237, 1.0
        %v8270 = vmul.f32 %v8238, 0.5
        %v8271 = vmul.f32 %v8239, 0.5
        %v8272 = vmul.f32 %v8240, 0.5
        %v8273 = vmul.f32 %v8241, 0.5
        %v8274 = vmul.f32 %v8242, 0.5
        %v8275 = vmul.f32 %v8243, 0.5
        %v8276 = vmul.f32 %v8244, 0.5
        %v8277 = vmul.f32 %v8245, 0.5
        %v8278 = vmul.f32 %v8246, 0.5
        %v8279 = vmul.f32 %v8247, 0.5
        %v8280 = vmul.f32 %v8248, 0.5
        %v8281 = vmul.f32 %v8249, 0.5
        %v8282 = vmul.f32 %v8250, 0.5
        %v8283 = vmul.f32 %v8251, 0.5
        %v8284 = vmul.f32 %v8252, 0.5
        %v8285 = vmul.f32 %v8253, 0.5
        %v8286 = vmul.f32 %v8254, 0.5
        %v8287 = vmul.f32 %v8255, 0.5
        %v8288 = vmul.f32 %v8256, 0.5
        %v8289 = vmul.f32 %v8257, 0.5
        %v8290 = vmul.f32 %v8258, 0.5
        %v8291 = vmul.f32 %v8259, 0.5
        %v8292 = vmul.f32 %v8260, 0.5
        %v8293 = vmul.f32 %v8261, 0.5
        %v8294 = vmul.f32 %v8262, 0.5
        %v8295 = vmul.f32 %v8263, 0.5
        %v8296 = vmul.f32 %v8264, 0.5
        %v8297 = vmul.f32 %v8265, 0.5
        %v8298 = vmul.f32 %v8266, 0.5
        %v8299 = vmul.f32 %v8267, 0.5
        %v8300 = vmul.f32 %v8268, 0.5
        %v8301 = vmul.f32 %v8269, 0.5
        %v8302 = vmul.f32 %v8048, %v8270
        %v8303 = vmul.f32 %v8051, %v8271
        %v8304 = vmul.f32 %v8056, %v8272
        %v8305 = vmul.f32 %v8059, %v8273
        %v8306 = vmul.f32 %v8064, %v8274
        %v8307 = vmul.f32 %v8067, %v8275
        %v8308 = vmul.f32 %v8072, %v8276
        %v8309 = vmul.f32 %v8075, %v8277
        %v8310 = vmul.f32 %v8080, %v8278
        %v8311 = vmul.f32 %v8083, %v8279
        %v8312 = vmul.f32 %v8088, %v8280
        %v8313 = vmul.f32 %v8091, %v8281
        %v8314 = vmul.f32 %v8096, %v8282
        %v8315 = vmul.f32 %v8099, %v8283
        %v8316 = vmul.f32 %v8104, %v8284
        %v8317 = vmul.f32 %v8107, %v8285
        %v8318 = vmul.f32 %v8112, %v8286
        %v8319 = vmul.f32 %v8115, %v8287
        %v8320 = vmul.f32 %v8120, %v8288
        %v8321 = vmul.f32 %v8123, %v8289
        %v8322 = vmul.f32 %v8128, %v8290
        %v8323 = vmul.f32 %v8131, %v8291
        %v8324 = vmul.f32 %v8136, %v8292
        %v8325 = vmul.f32 %v8139, %v8293
        %v8326 = vmul.f32 %v8144, %v8294
        %v8327 = vmul.f32 %v8147, %v8295
        %v8328 = vmul.f32 %v8152, %v8296
        %v8329 = vmul.f32 %v8155, %v8297
        %v8330 = vmul.f32 %v8160, %v8298
        %v8331 = vmul.f32 %v8163, %v8299
        %v8332 = vmul.f32 %v8168, %v8300
        %v8333 = vmul.f32 %v8171, %v8301
        %8334 = vst [vmem:[%s217] sm:$0xff] %v8302
        %8335 = vst [vmem:[%s217 + $0x8] sm:$0xff] %v8303
        %8336 = vst [vmem:[%s217 + $0x10] sm:$0xff] %v8304
        %8337 = vst [vmem:[%s217 + $0x18] sm:$0xff] %v8305
        %8338 = vst [vmem:[%s217 + $0x20] sm:$0xff] %v8306
        %8339 = vst [vmem:[%s217 + $0x28] sm:$0xff] %v8307
        %8340 = vst [vmem:[%s217 + $0x30] sm:$0xff] %v8308
        %8341 = vst [vmem:[%s217 + $0x38] sm:$0xff] %v8309
        %8342 = vst [vmem:[%s217 + $0x40] sm:$0xff] %v8310
        %8343 = vst [vmem:[%s217 + $0x48] sm:$0xff] %v8311
        %8344 = vst [vmem:[%s217 + $0x50] sm:$0xff] %v8312
        %8345 = vst [vmem:[%s217 + $0x58] sm:$0xff] %v8313
        %8346 = vst [vmem:[%s217 + $0x60] sm:$0xff] %v8314
        %8347 = vst [vmem:[%s217 + $0x68] sm:$0xff] %v8315
        %8348 = vst [vmem:[%s217 + $0x70] sm:$0xff] %v8316
        %8349 = vst [vmem:[%s217 + $0x78] sm:$0xff] %v8317
        %8350 = vst [vmem:[%s217 + $0x80] sm:$0xff] %v8318
        %8351 = vst [vmem:[%s217 + $0x88] sm:$0xff] %v8319
        %8352 = vst [vmem:[%s217 + $0x90] sm:$0xff] %v8320
        %8353 = vst [vmem:[%s217 + $0x98] sm:$0xff] %v8321
        %8354 = vst [vmem:[%s217 + $0xa0] sm:$0xff] %v8322
        %8355 = vst [vmem:[%s217 + $0xa8] sm:$0xff] %v8323
        %8356 = vst [vmem:[%s217 + $0xb0] sm:$0xff] %v8324
        %8357 = vst [vmem:[%s217 + $0xb8] sm:$0xff] %v8325
        %8358 = vst [vmem:[%s217 + $0xc0] sm:$0xff] %v8326
        %8359 = vst [vmem:[%s217 + $0xc8] sm:$0xff] %v8327
        %8360 = vst [vmem:[%s217 + $0xd0] sm:$0xff] %v8328
        %8361 = vst [vmem:[%s217 + $0xd8] sm:$0xff] %v8329
        %8362 = vst [vmem:[%s217 + $0xe0] sm:$0xff] %v8330
        %8363 = vst [vmem:[%s217 + $0xe8] sm:$0xff] %v8331
        %8364 = vst [vmem:[%s217 + $0xf0] sm:$0xff] %v8332
        %8365 = vst [vmem:[%s217 + $0xf8] sm:$0xff] %v8333
        %s8366 = sand.u32 %s137, 1
        %s8367 = scalar_lea.sflag [#allocation5], %s8366
        %s8368 = sand.u32 %s137, 1
        %s8369 = smul.addr %s8368, 256
        %s8370 = scalar_lea.vmem [#allocation4], %s8369
        // Predicated region
        $region41: #{tpu_custom_call.1} parent=39 // pred_check
          %p8371 = pneg %p147
        $region42: #{tpu_custom_call.1} parent=39 // pred_check_branch
          %8373 = sbr.rel (%p8371) target = $region44
        $region43: #{tpu_custom_call.1} parent=39 // pred_region
          %s8375 = ssub.s32 4096, 4096
          %8376 = vsyncadd %s8367, %s8375
          %s8377 = smul.addr %s19, 32
          %s8378 = smul.addr %s8377, 128
          %s8379 = scalar_lea.hbm %s5, %s8378
          %s8380 = sshll.u32 %s8370, 4
          %s8381 = int_to_ptr.vmem [resolvable:$true] %s8380
          %8386 = dma.vmem_to_hbm [thread:$0]  %s8381, 4096, %s8379, %s8367, 128, 128, 8
        $region44: #{tpu_custom_call.1} parent=39 // pred_fallthru
          _
      $region40: #{tpu_custom_call.1} parent=5 // pred_fallthru
        _
      %p8387 = scmp.le.s32.totalorder 2, %s14
      // Predicated region
      $region45: #{tpu_custom_call.1} parent=5 // pred_check
        %p8388 = pneg %p8387
      $region46: #{tpu_custom_call.1} parent=5 // pred_check_branch
        %8390 = sbr.rel (%p8388) target = $region48
      $region47: #{tpu_custom_call.1} parent=5 // pred_region
        %s8391 = ssub.s32 %s14, 2
        // Predicated region
        $region49: #{tpu_custom_call.1} parent=47 // pred_check
          %p8392 = pneg %p153
        $region50: #{tpu_custom_call.1} parent=47 // pred_check_branch
          %8394 = sbr.rel (%p8392) target = $region52
        $region51: #{tpu_custom_call.1} parent=47 // pred_region
          %s8395 = sand.u32 %s138, 1
          %s8396 = scalar_lea.sflag [#allocation5], %s8395
          %s8397 = sand.u32 %s138, 1
          %s8398 = smul.addr %s8397, 256
          %s8399 = scalar_lea.vmem [#allocation4], %s8398
          %8400 = dma.done %s8396, 4096
        $region52: #{tpu_custom_call.1} parent=47 // pred_fallthru
          _
      $region48: #{tpu_custom_call.1} parent=5 // pred_fallthru
        _
    $region6: #{tpu_custom_call.1} parent=1 // loop_footer
      %s18 = sadd.s32 1, %s14
    $region7: #{tpu_custom_call.1} parent=1 // loop_footer_branch
      %13 = sbr.rel target = $region3
    $region8: #{tpu_custom_call.1} parent=1 // loop_exit
      _
    %8401 = vsyncpa [#allocation5], 1
    %s8402 = scalar_lea.sflag [#allocation5], 1
    %8403 = vsyncpa %s8402, 1

</llo_original>
